<compile_context>
chip_gen: v6e
topology: v6e:2x2x1
jax: 0.10.0
libtpu: 0.0.40
codegen_flags: <defaults>
</compile_context>

<pallas_src>
import math
from functools import partial

import jax
import jax.numpy as jnp
from jax.experimental import pallas as pl
from jax.experimental.pallas import tpu as pltpu


_MASK_VALUE = -1e30                 # finite "minus infinity" (no NaN hazard)
_VMEM_LIMIT = 64 * 1024 * 1024      # raise v5e's 16 MiB default; worst-case usage
                                    # at tile<=256 is ~30 MiB, fits v7x's 64 MiB.


def _time_tile(T: int, max_tile: int = 256) -> int:
    """Largest time tile <= max_tile that divides T (multiple of 16), else full T."""
    for t in (256, 128, 64, 32, 16):
        if t <= max_tile and T % t == 0:
            return t
    return T


# ----------------------------------------------------------------------------
# Kernel 1: QKV projection, output in head-major (B, H, T, hd) layout
# ----------------------------------------------------------------------------
def _qkv_proj_kernel(x_ref, wq_ref, wk_ref, wv_ref, bq_ref, bk_ref, bv_ref,
                     q_ref, k_ref, v_ref):
    _, n_heads, _, head_dim = q_ref.shape
    x = x_ref[0]                                                # (tq, C), native dtype
    for w_ref, b_ref, o_ref in ((wq_ref, bq_ref, q_ref),
                                (wk_ref, bk_ref, k_ref),
                                (wv_ref, bv_ref, v_ref)):
        y = jnp.dot(x, w_ref[...], preferred_element_type=jnp.float32) \
            + b_ref[...].astype(jnp.float32)                    # (tq, C) f32 accum
        for h in range(n_heads):                                # head-major store
            o_ref[0, h] = y[:, h * head_dim:(h + 1) * head_dim].astype(o_ref.dtype)


def qkv_projection(x, wq, wk, wv, bq, bk, bv, n_heads):
    B, T, C = x.shape
    hd = C // n_heads
    tq = _time_tile(T)
    nq = T // tq
    out_shape = tuple(jax.ShapeDtypeStruct((B, n_heads, T, hd), x.dtype)
                      for _ in range(3))
    out_specs = tuple(pl.BlockSpec((1, n_heads, tq, hd), lambda b, i: (b, 0, i, 0))
                      for _ in range(3))
    # NOTE: weight index_maps are constant; with very large C consider
    # pipeline_mode=pl.Buffered(1) on them to halve their VMEM footprint.
    in_specs = [
        pl.BlockSpec((1, tq, C), lambda b, i: (b, i, 0)),
        pl.BlockSpec((C, C), lambda b, i: (0, 0)),
        pl.BlockSpec((C, C), lambda b, i: (0, 0)),
        pl.BlockSpec((C, C), lambda b, i: (0, 0)),
        pl.BlockSpec((1, C), lambda b, i: (0, 0)),
        pl.BlockSpec((1, C), lambda b, i: (0, 0)),
        pl.BlockSpec((1, C), lambda b, i: (0, 0)),
    ]
    return pl.pallas_call(
        _qkv_proj_kernel,
        out_shape=out_shape,
        grid=(B, nq),
        in_specs=in_specs,
        out_specs=out_specs,
        compiler_params=pltpu.CompilerParams(
            dimension_semantics=("parallel", "parallel"),
            vmem_limit_bytes=_VMEM_LIMIT),
    )(x, wq, wk, wv, bq, bk, bv)


# ----------------------------------------------------------------------------
# Kernel 2: flash-style causal attention with fused (proj @ combine) projection
# ----------------------------------------------------------------------------
def _flash_attn_kernel(q_ref, k_ref, v_ref, wo_ref, o_ref, m_sc, l_sc, acc_sc):
    _, n_heads, tq, hd = q_ref.shape
    tk = k_ref.shape[2]
    qi = pl.program_id(1)
    ki = pl.program_id(2)
    nk = pl.num_programs(2)

    @pl.when(ki == 0)
    def _init():
        m_sc[...] = jnp.full(m_sc.shape, _MASK_VALUE, m_sc.dtype)
        l_sc[...] = jnp.zeros(l_sc.shape, l_sc.dtype)
        acc_sc[...] = jnp.zeros(acc_sc.shape, acc_sc.dtype)

    # Causal: key blocks strictly in the future contribute nothing -> skip compute.
    # (The block DMA still happens; acceptable overhead, could be removed with a
    #  data-dependent index_map if it ever shows up in profiles.)
    @pl.when(ki <= qi)
    def _compute():
        q = q_ref[0]                                            # (H, tq, hd)
        k = k_ref[0]                                            # (H, tk, hd)
        v = v_ref[0]                                            # (H, tk, hd)
        # 1/sqrt(hd) is already folded into the q-projection weights.
        s = jnp.einsum('hqd,hkd->hqk', q, k,
                       preferred_element_type=jnp.float32)      # (H, tq, tk) f32

        row = jax.lax.broadcasted_iota(jnp.int32, (tq, tk), 0) + qi * tq
        col = jax.lax.broadcasted_iota(jnp.int32, (tq, tk), 1) + ki * tk
        keep = (col <= row)[None, :, :]                         # (1, tq, tk)
        s = jnp.where(keep, s, _MASK_VALUE)

        m_prev = m_sc[...]                                      # (H, tq, 1)
        m_new = jnp.maximum(m_prev, s.max(axis=-1, keepdims=True))
        alpha = jnp.exp(m_prev - m_new)                         # (H, tq, 1)
        p = jnp.exp(s - m_new)                                  # masked -> exp(-huge)=0
        l_sc[...] = alpha * l_sc[...] + p.sum(axis=-1, keepdims=True)
        acc_sc[...] = alpha * acc_sc[...] + jnp.einsum(
            'hqk,hkd->hqd', p.astype(v.dtype), v,
            preferred_element_type=jnp.float32)
        m_sc[...] = m_new

    @pl.when(ki == nk - 1)
    def _finalize():
        inv_l = pl.reciprocal(l_sc[...], approx=True)           # EUP slot
        out = acc_sc[...] * inv_l                               # (H, tq, hd) f32
        # Fused output projection (wproj @ combine slice), accumulated per head:
        # equivalent to concat(heads) @ W' without any concat / relayout.
        y = jnp.zeros((tq, wo_ref.shape[1]), jnp.float32)
        for h in range(n_heads):
            y = y + jnp.dot(out[h].astype(wo_ref.dtype),
                            wo_ref[h * hd:(h + 1) * hd, :],
                            preferred_element_type=jnp.float32)
        o_ref[0] = y.astype(o_ref.dtype)


def flash_attention_fused_proj(q, k, v, w_fused):
    """q/k/v: (B, H, T, hd); w_fused: (H*hd, C_out). Returns (B, T, C_out) f32."""
    B, H, T, hd = q.shape
    C_in, C_out = w_fused.shape
    assert C_in == H * hd
    tq = _time_tile(T)
    nq = T // tq
    return pl.pallas_call(
        _flash_attn_kernel,
        out_shape=jax.ShapeDtypeStruct((B, T, C_out), jnp.float32),
        grid=(B, nq, nq),
        in_specs=[
            pl.BlockSpec((1, H, tq, hd), lambda b, qi, ki: (b, 0, qi, 0)),
            pl.BlockSpec((1, H, tq, hd), lambda b, qi, ki: (b, 0, ki, 0)),
            pl.BlockSpec((1, H, tq, hd), lambda b, qi, ki: (b, 0, ki, 0)),
            pl.BlockSpec((C_in, C_out), lambda b, qi, ki: (0, 0)),
        ],
        out_specs=pl.BlockSpec((1, tq, C_out), lambda b, qi, ki: (b, qi, 0)),
        scratch_shapes=[
            pltpu.VMEM((H, tq, 1), jnp.float32),   # running max
            pltpu.VMEM((H, tq, 1), jnp.float32),   # running sum
            pltpu.VMEM((H, tq, hd), jnp.float32),  # un-normalized output accumulator
        ],
        compiler_params=pltpu.CompilerParams(
            dimension_semantics=("parallel", "parallel", "arbitrary"),
            vmem_limit_bytes=_VMEM_LIMIT),
    )(q, k, v, w_fused)


# ----------------------------------------------------------------------------
# Plain-JAX glue: pooling / interpolation (exact F.avg_pool1d / F.interpolate
# semantics for this configuration).
# ----------------------------------------------------------------------------
def avg_pool_time(x, scale):
    """F.avg_pool1d(x.transpose(1,2), k=scale, stride=scale).transpose(1,2) in (B,T,C)."""
    B, T, C = x.shape
    T_out = T // scale
    return x[:, :T_out * scale, :].reshape(B, T_out, scale, C).mean(axis=2)


def _interp_matrix(T_out, T_in):
    """(T_out, T_in) matrix reproducing F.interpolate(mode='linear', align_corners=False)."""
    scale = T_in / T_out
    dst = jnp.arange(T_out, dtype=jnp.float32)
    src = jnp.maximum(scale * (dst + 0.5) - 0.5, 0.0)    # PyTorch clamps negative src
    idx0 = jnp.clip(jnp.floor(src).astype(jnp.int32), 0, T_in - 1)
    idx1 = jnp.minimum(idx0 + 1, T_in - 1)
    lam1 = src - idx0.astype(jnp.float32)
    lam0 = 1.0 - lam1
    m = jnp.zeros((T_out, T_in), jnp.float32)
    m = m.at[jnp.arange(T_out), idx0].add(lam0)
    m = m.at[jnp.arange(T_out), idx1].add(lam1)
    return m


def linear_interp_time(x, size):
    """Gather-based interpolation (used by the pure-JAX reference only)."""
    B, T_in, C = x.shape
    scale = T_in / size
    dst = jnp.arange(size, dtype=jnp.float32)
    src = jnp.maximum(scale * (dst + 0.5) - 0.5, 0.0)
    idx0 = jnp.clip(jnp.floor(src).astype(jnp.int32), 0, T_in - 1)
    idx1 = jnp.minimum(idx0 + 1, T_in - 1)
    lam1 = src - idx0.astype(jnp.float32)
    lam0 = 1.0 - lam1
    return lam0[None, :, None] * x[:, idx0, :] + lam1[None, :, None] * x[:, idx1, :]


# ----------------------------------------------------------------------------
# MultiScaleAttention forward
# ----------------------------------------------------------------------------
def multi_scale_attention(x, params, scales, n_heads, compute_dtype=None):
    B, T, C = x.shape
    hd = C // n_heads
    cdt = compute_dtype or x.dtype
    inv_sqrt_d = 1.0 / math.sqrt(hd)

    combine_w = params["combine_w"].astype(jnp.float32)    # (len(scales)*C, C)
    combine_b = params["combine_b"].astype(jnp.float32)    # (1, C)

    # TODO(synk): the avg-pool / interp could be folded into the Pallas pipeline
    # (pool on the VMEM tile, interp as a banded matmul fused with the output);
    # here they stay as cheap plain-JAX ops (interp is already a matmul, not a gather).
    y = jnp.zeros((B, T, C), jnp.float32)
    bias_total = combine_b                                  # folded bias (exact)
    for s_idx, (scale, p) in enumerate(zip(scales, params["attn"])):
        cw = combine_w[s_idx * C:(s_idx + 1) * C, :]        # (C, C) combine slice
        w_fused = p["wproj"].astype(jnp.float32) @ cw       # fold proj into combine
        bias_total = bias_total + p["bproj"].astype(jnp.float32) @ cw

        x_s = avg_pool_time(x, scale) if scale > 1 else x

        wqkv = p["wqkv"].astype(jnp.float32)
        bqkv = p["bqkv"].astype(jnp.float32)
        wq = (wqkv[:, :C] * inv_sqrt_d).astype(cdt)         # fold 1/sqrt(hd) into q
        wk = wqkv[:, C:2 * C].astype(cdt)
        wv = wqkv[:, 2 * C:].astype(cdt)
        bq = (bqkv[:, :C] * inv_sqrt_d).astype(cdt)
        bk = bqkv[:, C:2 * C].astype(cdt)
        bv = bqkv[:, 2 * C:].astype(cdt)

        q, k, v = qkv_projection(x_s.astype(cdt), wq, wk, wv, bq, bk, bv, n_heads)
        attn = flash_attention_fused_proj(q, k, v, w_fused.astype(cdt))  # (B,T_s,C) f32

        if scale > 1:
            attn = jnp.einsum('ts,bsc->btc', _interp_matrix(T, x_s.shape[1]), attn)
        y = y + attn
    return (y + bias_total).astype(x.dtype)


# ----------------------------------------------------------------------------
# Pure-JAX reference (independent path: full softmax, gather interp, un-fused combine)
# ----------------------------------------------------------------------------
def _ref_attn(x, p, n_heads):
    B, T, C = x.shape
    hd = C // n_heads
    qkv = x @ p["wqkv"] + p["bqkv"]
    qkv = qkv.reshape(B, T, 3, n_heads, hd).transpose(2, 0, 3, 1, 4)
    q, k, v = qkv[0], qkv[1], qkv[2]
    att = jnp.einsum("bhqd,bhkd->bhqk", q, k) / math.sqrt(hd)
    mask = jnp.triu(jnp.ones((T, T), bool), 1)
    att = jnp.where(mask[None, None], -jnp.inf, att)
    att = jax.nn.softmax(att, axis=-1)
    out = jnp.einsum("bhqk,bhkd->bhqd", att, v).transpose(0, 2, 1, 3).reshape(B, T, C)
    return out @ p["wproj"] + p["bproj"]


def _ref_forward(x, params, scales, n_heads):
    B, T, C = x.shape
    outs = []
    for scale, p in zip(scales, params["attn"]):
        if scale > 1:
            a = _ref_attn(avg_pool_time(x, scale), p, n_heads)
            a = linear_interp_time(a, T)
        else:
            a = _ref_attn(x, p, n_heads)
        outs.append(a)
    ms = jnp.concatenate(outs, axis=-1)
    return ms @ params["combine_w"] + params["combine_b"]


# ----------------------------------------------------------------------------
# Deterministic parameter init (shapes from the module's __init__)
# ----------------------------------------------------------------------------
def init_linear(key, fan_in, fan_out):
    kw, kb = jax.random.split(key)
    bound = 1.0 / math.sqrt(fan_in)
    w = jax.random.uniform(kw, (fan_in, fan_out), jnp.float32, -bound, bound)
    b = jax.random.uniform(kb, (1, fan_out), jnp.float32, -bound, bound)
    return w, b


def init_params(key, d_model, n_heads, scales):
    params = {"attn": []}
    for _ in scales:
        key, k1, k2 = jax.random.split(key, 3)
        wqkv, bqkv = init_linear(k1, d_model, 3 * d_model)
        wproj, bproj = init_linear(k2, d_model, d_model)
        params["attn"].append({"wqkv": wqkv, "bqkv": bqkv,
                               "wproj": wproj, "bproj": bproj})
    key, kc = jax.random.split(key)
    params["combine_w"], params["combine_b"] = init_linear(
        kc, len(scales) * d_model, d_model)
    return params


# ----------------------------------------------------------------------------
if __name__ == "__main__":
    B, T, d_model, n_heads = 2, 8, 32, 4
    scales = (1, 2, 4)

    key = jax.random.PRNGKey(0)
    kx, kp = jax.random.split(key)
    x = jax.random.normal(kx, (B, T, d_model), dtype=jnp.float32)
    params = init_params(kp, d_model, n_heads, list(scales))

    fwd = jax.jit(multi_scale_attention,
                  static_argnames=("scales", "n_heads", "compute_dtype"))

    # fp32 operands (accumulation is always f32; only softmax normalization uses
    # the approximate EUP reciprocal, hence the 1e-2 tolerance).
    out = jax.block_until_ready(fwd(x, params, scales=scales, n_heads=n_heads))
    assert out.shape == (B, T, d_model), out.shape

    ref = jax.block_until_ready(_ref_forward(x, params, scales, n_heads))
    diff_f32 = float(jnp.max(jnp.abs(out - ref)))
    assert jnp.allclose(out, ref, atol=1e-2, rtol=1e-2), f"fp32 max abs diff {diff_f32}"

    # bf16 operands (MXU-native path), f32 accumulation inside the kernels.
    out_bf16 = jax.block_until_ready(
        fwd(x, params, scales=scales, n_heads=n_heads, compute_dtype=jnp.bfloat16))
    diff_bf16 = float(jnp.max(jnp.abs(out_bf16.astype(jnp.float32) - ref)))
    assert jnp.allclose(out_bf16.astype(jnp.float32), ref, atol=5e-2, rtol=5e-2), \
        f"bf16 max abs diff {diff_bf16}"

    # TODO(synk): dropout is treated as identity (eval-mode semantics); the
    # stochastic training-mode dropout has no deterministic Pallas equivalent here.
    print("KERNEL_OK")
</pallas_src>

<mosaic_0001>
module attributes {stable_mosaic.version = 11 : i64} {
  func.func private @main(%arg0: i32) attributes {dimension_semantics = [#tpu.dimension_semantics<core_parallel>], iteration_bounds = array<i64: 2>, tpu.core_type = #tpu.core_type<sc_scalar_subcore>, window_params = []} {
    return
  }
}

module attributes {stable_mosaic.version = 11 : i64} {
  func.func private @main(%arg0: i32) attributes {dimension_semantics = [#tpu.dimension_semantics<core_parallel>], iteration_bounds = array<i64: 2>, tpu.core_type = #tpu.core_type<sc_scalar_subcore>, window_params = []} {
    return
  }
}

module attributes {stable_mosaic.version = 11 : i64} {
  func.func @_qkv_proj_kernel(%arg0: i32, %arg1: i32, %arg2: memref<1x8x32xf32, #tpu.memory_space<vmem>>, %arg3: memref<32x32xf32, #tpu.memory_space<vmem>>, %arg4: memref<32x32xf32, #tpu.memory_space<vmem>>, %arg5: memref<32x32xf32, #tpu.memory_space<vmem>>, %arg6: memref<1x32xf32, #tpu.memory_space<vmem>>, %arg7: memref<1x32xf32, #tpu.memory_space<vmem>>, %arg8: memref<1x32xf32, #tpu.memory_space<vmem>>, %arg9: memref<1x4x8x8xf32, #tpu.memory_space<vmem>>, %arg10: memref<1x4x8x8xf32, #tpu.memory_space<vmem>>, %arg11: memref<1x4x8x8xf32, #tpu.memory_space<vmem>>) attributes {dimension_semantics = [#tpu.dimension_semantics<parallel>, #tpu.dimension_semantics<parallel>], iteration_bounds = array<i64: 2, 1>, scalar_prefetch = 0 : i64, scratch_operands = 0 : i64, tpu.core_type = #tpu.core_type<tc>, window_params = [{transform_indices = @transform_0, window_bounds = array<i64: 1, 8, 32>}, {pipeline_mode = #tpu.pipeline_mode<synchronous>, transform_indices = @transform_1, window_bounds = array<i64: 32, 32>}, {pipeline_mode = #tpu.pipeline_mode<synchronous>, transform_indices = @transform_2, window_bounds = array<i64: 32, 32>}, {pipeline_mode = #tpu.pipeline_mode<synchronous>, transform_indices = @transform_3, window_bounds = array<i64: 32, 32>}, {pipeline_mode = #tpu.pipeline_mode<synchronous>, transform_indices = @transform_4, window_bounds = array<i64: 1, 32>}, {pipeline_mode = #tpu.pipeline_mode<synchronous>, transform_indices = @transform_5, window_bounds = array<i64: 1, 32>}, {pipeline_mode = #tpu.pipeline_mode<synchronous>, transform_indices = @transform_6, window_bounds = array<i64: 1, 32>}, {transform_indices = @transform_7, window_bounds = array<i64: 1, 4, 8, 8>}, {transform_indices = @transform_8, window_bounds = array<i64: 1, 4, 8, 8>}, {transform_indices = @transform_9, window_bounds = array<i64: 1, 4, 8, 8>}]} {
    %c0 = arith.constant 0 : index
    %c0_0 = arith.constant 0 : index
    %c0_1 = arith.constant 0 : index
    %0 = vector.load %arg2[%c0, %c0_0, %c0_1] : memref<1x8x32xf32, #tpu.memory_space<vmem>>, vector<1x8x32xf32>
    %1 = vector.shape_cast %0 : vector<1x8x32xf32> to vector<8x32xf32>
    %c0_2 = arith.constant 0 : index
    %c0_3 = arith.constant 0 : index
    %2 = vector.load %arg3[%c0_2, %c0_3] : memref<32x32xf32, #tpu.memory_space<vmem>>, vector<32x32xf32>
    %cst = arith.constant dense<0.000000e+00> : vector<8x32xf32>
    %3 = tpu.matmul %1, %2, %cst {dimension_numbers = #tpu.dot_dimension_numbers<[1], [0], [0], [1], [0, 0, 1, 1], [], []>} : vector<8x32xf32>, vector<32x32xf32>, vector<8x32xf32> -> vector<8x32xf32>
    %c0_4 = arith.constant 0 : index
    %c0_5 = arith.constant 0 : index
    %4 = vector.load %arg6[%c0_4, %c0_5] : memref<1x32xf32, #tpu.memory_space<vmem>>, vector<1x32xf32>
    %5 = vector.broadcast %4 : vector<1x32xf32> to vector<8x32xf32>
    %6 = arith.addf %3, %5 : vector<8x32xf32>
    %7 = vector.extract_strided_slice %6 {offsets = [0, 0], sizes = [8, 8], strides = [1, 1]} : vector<8x32xf32> to vector<8x8xf32>
    %c0_6 = arith.constant 0 : index
    %c0_7 = arith.constant 0 : index
    %c0_8 = arith.constant 0 : index
    %c0_9 = arith.constant 0 : index
    %8 = vector.load %arg9[%c0_6, %c0_7, %c0_8, %c0_9] : memref<1x4x8x8xf32, #tpu.memory_space<vmem>>, vector<1x1x8x8xf32>
    %9 = vector.shape_cast %8 : vector<1x1x8x8xf32> to vector<8x8xf32>
    %10 = vector.shape_cast %7 : vector<8x8xf32> to vector<1x1x8x8xf32>
    tpu.vector_store %arg9[%c0_6, %c0_7, %c0_8, %c0_9], %10 {strides = array<i32>} : memref<1x4x8x8xf32, #tpu.memory_space<vmem>>, vector<1x1x8x8xf32>,
    %11 = vector.extract_strided_slice %6 {offsets = [0, 8], sizes = [8, 8], strides = [1, 1]} : vector<8x32xf32> to vector<8x8xf32>
    %c0_10 = arith.constant 0 : index
    %c1 = arith.constant 1 : index
    %c0_11 = arith.constant 0 : index
    %c0_12 = arith.constant 0 : index
    %12 = vector.load %arg9[%c0_10, %c1, %c0_11, %c0_12] : memref<1x4x8x8xf32, #tpu.memory_space<vmem>>, vector<1x1x8x8xf32>
    %13 = vector.shape_cast %12 : vector<1x1x8x8xf32> to vector<8x8xf32>
    %14 = vector.shape_cast %11 : vector<8x8xf32> to vector<1x1x8x8xf32>
    tpu.vector_store %arg9[%c0_10, %c1, %c0_11, %c0_12], %14 {strides = array<i32>} : memref<1x4x8x8xf32, #tpu.memory_space<vmem>>, vector<1x1x8x8xf32>,
    %15 = vector.extract_strided_slice %6 {offsets = [0, 16], sizes = [8, 8], strides = [1, 1]} : vector<8x32xf32> to vector<8x8xf32>
    %c0_13 = arith.constant 0 : index
    %c2 = arith.constant 2 : index
    %c0_14 = arith.constant 0 : index
    %c0_15 = arith.constant 0 : index
    %16 = vector.load %arg9[%c0_13, %c2, %c0_14, %c0_15] : memref<1x4x8x8xf32, #tpu.memory_space<vmem>>, vector<1x1x8x8xf32>
    %17 = vector.shape_cast %16 : vector<1x1x8x8xf32> to vector<8x8xf32>
    %18 = vector.shape_cast %15 : vector<8x8xf32> to vector<1x1x8x8xf32>
    tpu.vector_store %arg9[%c0_13, %c2, %c0_14, %c0_15], %18 {strides = array<i32>} : memref<1x4x8x8xf32, #tpu.memory_space<vmem>>, vector<1x1x8x8xf32>,
    %19 = vector.extract_strided_slice %6 {offsets = [0, 24], sizes = [8, 8], strides = [1, 1]} : vector<8x32xf32> to vector<8x8xf32>
    %c0_16 = arith.constant 0 : index
    %c3 = arith.constant 3 : index
    %c0_17 = arith.constant 0 : index
    %c0_18 = arith.constant 0 : index
    %20 = vector.load %arg9[%c0_16, %c3, %c0_17, %c0_18] : memref<1x4x8x8xf32, #tpu.memory_space<vmem>>, vector<1x1x8x8xf32>
    %21 = vector.shape_cast %20 : vector<1x1x8x8xf32> to vector<8x8xf32>
    %22 = vector.shape_cast %19 : vector<8x8xf32> to vector<1x1x8x8xf32>
    tpu.vector_store %arg9[%c0_16, %c3, %c0_17, %c0_18], %22 {strides = array<i32>} : memref<1x4x8x8xf32, #tpu.memory_space<vmem>>, vector<1x1x8x8xf32>,
    %c0_19 = arith.constant 0 : index
    %c0_20 = arith.constant 0 : index
    %23 = vector.load %arg4[%c0_19, %c0_20] : memref<32x32xf32, #tpu.memory_space<vmem>>, vector<32x32xf32>
    %cst_21 = arith.constant dense<0.000000e+00> : vector<8x32xf32>
    %24 = tpu.matmul %1, %23, %cst_21 {dimension_numbers = #tpu.dot_dimension_numbers<[1], [0], [0], [1], [0, 0, 1, 1], [], []>} : vector<8x32xf32>, vector<32x32xf32>, vector<8x32xf32> -> vector<8x32xf32>
    %c0_22 = arith.constant 0 : index
    %c0_23 = arith.constant 0 : index
    %25 = vector.load %arg7[%c0_22, %c0_23] : memref<1x32xf32, #tpu.memory_space<vmem>>, vector<1x32xf32>
    %26 = vector.broadcast %25 : vector<1x32xf32> to vector<8x32xf32>
    %27 = arith.addf %24, %26 : vector<8x32xf32>
    %28 = vector.extract_strided_slice %27 {offsets = [0, 0], sizes = [8, 8], strides = [1, 1]} : vector<8x32xf32> to vector<8x8xf32>
    %c0_24 = arith.constant 0 : index
    %c0_25 = arith.constant 0 : index
    %c0_26 = arith.constant 0 : index
    %c0_27 = arith.constant 0 : index
    %29 = vector.load %arg10[%c0_24, %c0_25, %c0_26, %c0_27] : memref<1x4x8x8xf32, #tpu.memory_space<vmem>>, vector<1x1x8x8xf32>
    %30 = vector.shape_cast %29 : vector<1x1x8x8xf32> to vector<8x8xf32>
    %31 = vector.shape_cast %28 : vector<8x8xf32> to vector<1x1x8x8xf32>
    tpu.vector_store %arg10[%c0_24, %c0_25, %c0_26, %c0_27], %31 {strides = array<i32>} : memref<1x4x8x8xf32, #tpu.memory_space<vmem>>, vector<1x1x8x8xf32>,
    %32 = vector.extract_strided_slice %27 {offsets = [0, 8], sizes = [8, 8], strides = [1, 1]} : vector<8x32xf32> to vector<8x8xf32>
    %c0_28 = arith.constant 0 : index
    %c1_29 = arith.constant 1 : index
    %c0_30 = arith.constant 0 : index
    %c0_31 = arith.constant 0 : index
    %33 = vector.load %arg10[%c0_28, %c1_29, %c0_30, %c0_31] : memref<1x4x8x8xf32, #tpu.memory_space<vmem>>, vector<1x1x8x8xf32>
    %34 = vector.shape_cast %33 : vector<1x1x8x8xf32> to vector<8x8xf32>
    %35 = vector.shape_cast %32 : vector<8x8xf32> to vector<1x1x8x8xf32>
    tpu.vector_store %arg10[%c0_28, %c1_29, %c0_30, %c0_31], %35 {strides = array<i32>} : memref<1x4x8x8xf32, #tpu.memory_space<vmem>>, vector<1x1x8x8xf32>,
    %36 = vector.extract_strided_slice %27 {offsets = [0, 16], sizes = [8, 8], strides = [1, 1]} : vector<8x32xf32> to vector<8x8xf32>
    %c0_32 = arith.constant 0 : index
    %c2_33 = arith.constant 2 : index
    %c0_34 = arith.constant 0 : index
    %c0_35 = arith.constant 0 : index
    %37 = vector.load %arg10[%c0_32, %c2_33, %c0_34, %c0_35] : memref<1x4x8x8xf32, #tpu.memory_space<vmem>>, vector<1x1x8x8xf32>
    %38 = vector.shape_cast %37 : vector<1x1x8x8xf32> to vector<8x8xf32>
    %39 = vector.shape_cast %36 : vector<8x8xf32> to vector<1x1x8x8xf32>
    tpu.vector_store %arg10[%c0_32, %c2_33, %c0_34, %c0_35], %39 {strides = array<i32>} : memref<1x4x8x8xf32, #tpu.memory_space<vmem>>, vector<1x1x8x8xf32>,
    %40 = vector.extract_strided_slice %27 {offsets = [0, 24], sizes = [8, 8], strides = [1, 1]} : vector<8x32xf32> to vector<8x8xf32>
    %c0_36 = arith.constant 0 : index
    %c3_37 = arith.constant 3 : index
    %c0_38 = arith.constant 0 : index
    %c0_39 = arith.constant 0 : index
    %41 = vector.load %arg10[%c0_36, %c3_37, %c0_38, %c0_39] : memref<1x4x8x8xf32, #tpu.memory_space<vmem>>, vector<1x1x8x8xf32>
    %42 = vector.shape_cast %41 : vector<1x1x8x8xf32> to vector<8x8xf32>
    %43 = vector.shape_cast %40 : vector<8x8xf32> to vector<1x1x8x8xf32>
    tpu.vector_store %arg10[%c0_36, %c3_37, %c0_38, %c0_39], %43 {strides = array<i32>} : memref<1x4x8x8xf32, #tpu.memory_space<vmem>>, vector<1x1x8x8xf32>,
    %c0_40 = arith.constant 0 : index
    %c0_41 = arith.constant 0 : index
    %44 = vector.load %arg5[%c0_40, %c0_41] : memref<32x32xf32, #tpu.memory_space<vmem>>, vector<32x32xf32>
    %cst_42 = arith.constant dense<0.000000e+00> : vector<8x32xf32>
    %45 = tpu.matmul %1, %44, %cst_42 {dimension_numbers = #tpu.dot_dimension_numbers<[1], [0], [0], [1], [0, 0, 1, 1], [], []>} : vector<8x32xf32>, vector<32x32xf32>, vector<8x32xf32> -> vector<8x32xf32>
    %c0_43 = arith.constant 0 : index
    %c0_44 = arith.constant 0 : index
    %46 = vector.load %arg8[%c0_43, %c0_44] : memref<1x32xf32, #tpu.memory_space<vmem>>, vector<1x32xf32>
    %47 = vector.broadcast %46 : vector<1x32xf32> to vector<8x32xf32>
    %48 = arith.addf %45, %47 : vector<8x32xf32>
    %49 = vector.extract_strided_slice %48 {offsets = [0, 0], sizes = [8, 8], strides = [1, 1]} : vector<8x32xf32> to vector<8x8xf32>
    %c0_45 = arith.constant 0 : index
    %c0_46 = arith.constant 0 : index
    %c0_47 = arith.constant 0 : index
    %c0_48 = arith.constant 0 : index
    %50 = vector.load %arg11[%c0_45, %c0_46, %c0_47, %c0_48] : memref<1x4x8x8xf32, #tpu.memory_space<vmem>>, vector<1x1x8x8xf32>
    %51 = vector.shape_cast %50 : vector<1x1x8x8xf32> to vector<8x8xf32>
    %52 = vector.shape_cast %49 : vector<8x8xf32> to vector<1x1x8x8xf32>
    tpu.vector_store %arg11[%c0_45, %c0_46, %c0_47, %c0_48], %52 {strides = array<i32>} : memref<1x4x8x8xf32, #tpu.memory_space<vmem>>, vector<1x1x8x8xf32>,
    %53 = vector.extract_strided_slice %48 {offsets = [0, 8], sizes = [8, 8], strides = [1, 1]} : vector<8x32xf32> to vector<8x8xf32>
    %c0_49 = arith.constant 0 : index
    %c1_50 = arith.constant 1 : index
    %c0_51 = arith.constant 0 : index
    %c0_52 = arith.constant 0 : index
    %54 = vector.load %arg11[%c0_49, %c1_50, %c0_51, %c0_52] : memref<1x4x8x8xf32, #tpu.memory_space<vmem>>, vector<1x1x8x8xf32>
    %55 = vector.shape_cast %54 : vector<1x1x8x8xf32> to vector<8x8xf32>
    %56 = vector.shape_cast %53 : vector<8x8xf32> to vector<1x1x8x8xf32>
    tpu.vector_store %arg11[%c0_49, %c1_50, %c0_51, %c0_52], %56 {strides = array<i32>} : memref<1x4x8x8xf32, #tpu.memory_space<vmem>>, vector<1x1x8x8xf32>,
    %57 = vector.extract_strided_slice %48 {offsets = [0, 16], sizes = [8, 8], strides = [1, 1]} : vector<8x32xf32> to vector<8x8xf32>
    %c0_53 = arith.constant 0 : index
    %c2_54 = arith.constant 2 : index
    %c0_55 = arith.constant 0 : index
    %c0_56 = arith.constant 0 : index
    %58 = vector.load %arg11[%c0_53, %c2_54, %c0_55, %c0_56] : memref<1x4x8x8xf32, #tpu.memory_space<vmem>>, vector<1x1x8x8xf32>
    %59 = vector.shape_cast %58 : vector<1x1x8x8xf32> to vector<8x8xf32>
    %60 = vector.shape_cast %57 : vector<8x8xf32> to vector<1x1x8x8xf32>
    tpu.vector_store %arg11[%c0_53, %c2_54, %c0_55, %c0_56], %60 {strides = array<i32>} : memref<1x4x8x8xf32, #tpu.memory_space<vmem>>, vector<1x1x8x8xf32>,
    %61 = vector.extract_strided_slice %48 {offsets = [0, 24], sizes = [8, 8], strides = [1, 1]} : vector<8x32xf32> to vector<8x8xf32>
    %c0_57 = arith.constant 0 : index
    %c3_58 = arith.constant 3 : index
    %c0_59 = arith.constant 0 : index
    %c0_60 = arith.constant 0 : index
    %62 = vector.load %arg11[%c0_57, %c3_58, %c0_59, %c0_60] : memref<1x4x8x8xf32, #tpu.memory_space<vmem>>, vector<1x1x8x8xf32>
    %63 = vector.shape_cast %62 : vector<1x1x8x8xf32> to vector<8x8xf32>
    %64 = vector.shape_cast %61 : vector<8x8xf32> to vector<1x1x8x8xf32>
    tpu.vector_store %arg11[%c0_57, %c3_58, %c0_59, %c0_60], %64 {strides = array<i32>} : memref<1x4x8x8xf32, #tpu.memory_space<vmem>>, vector<1x1x8x8xf32>,
    return
  }
  func.func @transform_0(%arg0: i32, %arg1: i32) -> (i32, i32, i32) {
    %c0_i32 = arith.constant 0 : i32
    %c0_i32_0 = arith.constant 0 : i32
    return %arg0, %arg1, %c0_i32 : i32, i32, i32
  }
  func.func @transform_1(%arg0: i32, %arg1: i32) -> (i32, i32) {
    %c0_i32 = arith.constant 0 : i32
    %c0_i32_0 = arith.constant 0 : i32
    %c0_i32_1 = arith.constant 0 : i32
    return %c0_i32, %c0_i32_0 : i32, i32
  }
  func.func @transform_2(%arg0: i32, %arg1: i32) -> (i32, i32) {
    %c0_i32 = arith.constant 0 : i32
    %c0_i32_0 = arith.constant 0 : i32
    %c0_i32_1 = arith.constant 0 : i32
    return %c0_i32, %c0_i32_0 : i32, i32
  }
  func.func @transform_3(%arg0: i32, %arg1: i32) -> (i32, i32) {
    %c0_i32 = arith.constant 0 : i32
    %c0_i32_0 = arith.constant 0 : i32
    %c0_i32_1 = arith.constant 0 : i32
    return %c0_i32, %c0_i32_0 : i32, i32
  }
  func.func @transform_4(%arg0: i32, %arg1: i32) -> (i32, i32) {
    %c0_i32 = arith.constant 0 : i32
    %c0_i32_0 = arith.constant 0 : i32
    %c0_i32_1 = arith.constant 0 : i32
    return %c0_i32, %c0_i32_0 : i32, i32
  }
  func.func @transform_5(%arg0: i32, %arg1: i32) -> (i32, i32) {
    %c0_i32 = arith.constant 0 : i32
    %c0_i32_0 = arith.constant 0 : i32
    %c0_i32_1 = arith.constant 0 : i32
    return %c0_i32, %c0_i32_0 : i32, i32
  }
  func.func @transform_6(%arg0: i32, %arg1: i32) -> (i32, i32) {
    %c0_i32 = arith.constant 0 : i32
    %c0_i32_0 = arith.constant 0 : i32
    %c0_i32_1 = arith.constant 0 : i32
    return %c0_i32, %c0_i32_0 : i32, i32
  }
  func.func @transform_7(%arg0: i32, %arg1: i32) -> (i32, i32, i32, i32) {
    %c0_i32 = arith.constant 0 : i32
    %c0_i32_0 = arith.constant 0 : i32
    %c0_i32_1 = arith.constant 0 : i32
    return %arg0, %c0_i32, %arg1, %c0_i32_0 : i32, i32, i32, i32
  }
  func.func @transform_8(%arg0: i32, %arg1: i32) -> (i32, i32, i32, i32) {
    %c0_i32 = arith.constant 0 : i32
    %c0_i32_0 = arith.constant 0 : i32
    %c0_i32_1 = arith.constant 0 : i32
    return %arg0, %c0_i32, %arg1, %c0_i32_0 : i32, i32, i32, i32
  }
  func.func @transform_9(%arg0: i32, %arg1: i32) -> (i32, i32, i32, i32) {
    %c0_i32 = arith.constant 0 : i32
    %c0_i32_0 = arith.constant 0 : i32
    %c0_i32_1 = arith.constant 0 : i32
    return %arg0, %c0_i32, %arg1, %c0_i32_0 : i32, i32, i32, i32
  }
}

module attributes {stable_mosaic.version = 11 : i64} {
  func.func @_flash_attn_kernel(%arg0: i32, %arg1: i32, %arg2: i32, %arg3: memref<1x4x8x8xf32, #tpu.memory_space<vmem>>, %arg4: memref<1x4x8x8xf32, #tpu.memory_space<vmem>>, %arg5: memref<1x4x8x8xf32, #tpu.memory_space<vmem>>, %arg6: memref<32x32xf32, #tpu.memory_space<vmem>>, %arg7: memref<1x8x32xf32, #tpu.memory_space<vmem>>, %arg8: memref<4x8x1xf32, #tpu.memory_space<vmem>>, %arg9: memref<4x8x1xf32, #tpu.memory_space<vmem>>, %arg10: memref<4x8x8xf32, #tpu.memory_space<vmem>>) attributes {dimension_semantics = [#tpu.dimension_semantics<parallel>, #tpu.dimension_semantics<parallel>, #tpu.dimension_semantics<arbitrary>], iteration_bounds = array<i64: 2, 1, 1>, scalar_prefetch = 0 : i64, scratch_operands = 3 : i64, tpu.core_type = #tpu.core_type<tc>, window_params = [{transform_indices = @transform_0, window_bounds = array<i64: 1, 4, 8, 8>}, {transform_indices = @transform_1, window_bounds = array<i64: 1, 4, 8, 8>}, {transform_indices = @transform_2, window_bounds = array<i64: 1, 4, 8, 8>}, {pipeline_mode = #tpu.pipeline_mode<synchronous>, transform_indices = @transform_3, window_bounds = array<i64: 32, 32>}, {transform_indices = @transform_4, window_bounds = array<i64: 1, 8, 32>}]} {
    %c0_i32 = arith.constant 0 : i32
    %0 = arith.cmpi eq, %arg2, %c0_i32 : i32
    %1 = arith.extui %0 : i1 to i32
    %c0_i32_0 = arith.constant 0 : i32
    %2 = arith.cmpi ne, %1, %c0_i32_0 : i32
    scf.if %2 {
      %cst = arith.constant -1.000000e+30 : f32
      %9 = vector.broadcast %cst : f32 to vector<4x8x1xf32>
      %c0 = arith.constant 0 : index
      %c0_4 = arith.constant 0 : index
      %c0_5 = arith.constant 0 : index
      %10 = vector.load %arg8[%c0, %c0_4, %c0_5] : memref<4x8x1xf32, #tpu.memory_space<vmem>>, vector<4x8x1xf32>
      tpu.vector_store %arg8[%c0, %c0_4, %c0_5], %9 {strides = array<i32>} : memref<4x8x1xf32, #tpu.memory_space<vmem>>, vector<4x8x1xf32>,
      %cst_6 = arith.constant 0.000000e+00 : f32
      %11 = vector.broadcast %cst_6 : f32 to vector<4x8x1xf32>
      %c0_7 = arith.constant 0 : index
      %c0_8 = arith.constant 0 : index
      %c0_9 = arith.constant 0 : index
      %12 = vector.load %arg9[%c0_7, %c0_8, %c0_9] : memref<4x8x1xf32, #tpu.memory_space<vmem>>, vector<4x8x1xf32>
      tpu.vector_store %arg9[%c0_7, %c0_8, %c0_9], %11 {strides = array<i32>} : memref<4x8x1xf32, #tpu.memory_space<vmem>>, vector<4x8x1xf32>,
      %cst_10 = arith.constant 0.000000e+00 : f32
      %13 = vector.broadcast %cst_10 : f32 to vector<4x8x8xf32>
      %c0_11 = arith.constant 0 : index
      %c0_12 = arith.constant 0 : index
      %c0_13 = arith.constant 0 : index
      %14 = vector.load %arg10[%c0_11, %c0_12, %c0_13] : memref<4x8x8xf32, #tpu.memory_space<vmem>>, vector<4x8x8xf32>
      tpu.vector_store %arg10[%c0_11, %c0_12, %c0_13], %13 {strides = array<i32>} : memref<4x8x8xf32, #tpu.memory_space<vmem>>, vector<4x8x8xf32>,
    } else {
    }
    %3 = arith.cmpi sle, %arg2, %arg1 : i32
    %4 = arith.extui %3 : i1 to i32
    %c0_i32_1 = arith.constant 0 : i32
    %5 = arith.cmpi ne, %4, %c0_i32_1 : i32
    scf.if %5 {
      %c0 = arith.constant 0 : index
      %c0_4 = arith.constant 0 : index
      %c0_5 = arith.constant 0 : index
      %c0_6 = arith.constant 0 : index
      %9 = vector.load %arg3[%c0, %c0_4, %c0_5, %c0_6] : memref<1x4x8x8xf32, #tpu.memory_space<vmem>>, vector<1x4x8x8xf32>
      %10 = vector.shape_cast %9 : vector<1x4x8x8xf32> to vector<4x8x8xf32>
      %c0_7 = arith.constant 0 : index
      %c0_8 = arith.constant 0 : index
      %c0_9 = arith.constant 0 : index
      %c0_10 = arith.constant 0 : index
      %11 = vector.load %arg4[%c0_7, %c0_8, %c0_9, %c0_10] : memref<1x4x8x8xf32, #tpu.memory_space<vmem>>, vector<1x4x8x8xf32>
      %12 = vector.shape_cast %11 : vector<1x4x8x8xf32> to vector<4x8x8xf32>
      %c0_11 = arith.constant 0 : index
      %c0_12 = arith.constant 0 : index
      %c0_13 = arith.constant 0 : index
      %c0_14 = arith.constant 0 : index
      %13 = vector.load %arg5[%c0_11, %c0_12, %c0_13, %c0_14] : memref<1x4x8x8xf32, #tpu.memory_space<vmem>>, vector<1x4x8x8xf32>
      %14 = vector.shape_cast %13 : vector<1x4x8x8xf32> to vector<4x8x8xf32>
      "tpu.trace_start"() <{level = 10 : i32, message = "hqd,hkd->hqk"}> : () -> ()
      %cst = arith.constant dense<0.000000e+00> : vector<4x8x8xf32>
      %15 = tpu.matmul %10, %12, %cst {dimension_numbers = #tpu.dot_dimension_numbers<[2], [2], [1], [1], [0, 0, 0, 1, 1, 1], [0], [0]>} : vector<4x8x8xf32>, vector<4x8x8xf32>, vector<4x8x8xf32> -> vector<4x8x8xf32>
      "tpu.trace_stop"() : () -> ()
      %16 = tpu.iota {dimensions = array<i32: 0>} : vector<8x8xi32>
      %c8_i32 = arith.constant 8 : i32
      %17 = arith.muli %arg1, %c8_i32 : i32
      %18 = vector.broadcast %17 : i32 to vector<8x8xi32>
      %19 = arith.addi %16, %18 : vector<8x8xi32>
      %20 = tpu.iota {dimensions = array<i32: 1>} : vector<8x8xi32>
      %c8_i32_15 = arith.constant 8 : i32
      %21 = arith.muli %arg2, %c8_i32_15 : i32
      %22 = vector.broadcast %21 : i32 to vector<8x8xi32>
      %23 = arith.addi %20, %22 : vector<8x8xi32>
      %24 = arith.cmpi sle, %23, %19 : vector<8x8xi32>
      %25 = vector.shape_cast %24 : vector<8x8xi1> to vector<1x8x8xi1>
      %cst_16 = arith.constant -1.000000e+30 : f32
      %26 = vector.shape_cast %25 : vector<1x8x8xi1> to vector<1x8x8xi1>
      %27 = vector.broadcast %26 : vector<1x8x8xi1> to vector<4x8x8xi1>
      %28 = vector.broadcast %cst_16 : f32 to vector<4x8x8xf32>
      %29 = arith.select %27, %15, %28 : vector<4x8x8xi1>, vector<4x8x8xf32>
      %c0_17 = arith.constant 0 : index
      %c0_18 = arith.constant 0 : index
      %c0_19 = arith.constant 0 : index
      %30 = vector.load %arg8[%c0_17, %c0_18, %c0_19] : memref<4x8x1xf32, #tpu.memory_space<vmem>>, vector<4x8x1xf32>
      %cst_20 = arith.constant dense<0xFF800000> : vector<4x8xf32>
      %31 = vector.multi_reduction <maximumf>, %29, %cst_20 [2] : vector<4x8x8xf32> to vector<4x8xf32>
      %32 = vector.shape_cast %31 : vector<4x8xf32> to vector<4x8x1xf32>
      %33 = arith.maximumf %30, %32 : vector<4x8x1xf32>
      %34 = arith.subf %30, %33 : vector<4x8x1xf32>
      %35 = math.exp %34 : vector<4x8x1xf32>
      %36 = vector.broadcast %33 : vector<4x8x1xf32> to vector<4x8x8xf32>
      %37 = arith.subf %29, %36 : vector<4x8x8xf32>
      %38 = math.exp %37 : vector<4x8x8xf32>
      %c0_21 = arith.constant 0 : index
      %c0_22 = arith.constant 0 : index
      %c0_23 = arith.constant 0 : index
      %39 = vector.load %arg9[%c0_21, %c0_22, %c0_23] : memref<4x8x1xf32, #tpu.memory_space<vmem>>, vector<4x8x1xf32>
      %40 = arith.mulf %35, %39 : vector<4x8x1xf32>
      %cst_24 = arith.constant dense<0.000000e+00> : vector<4x8xf32>
      %41 = vector.multi_reduction <add>, %38, %cst_24 [2] : vector<4x8x8xf32> to vector<4x8xf32>
      %42 = vector.shape_cast %41 : vector<4x8xf32> to vector<4x8x1xf32>
      %43 = arith.addf %40, %42 : vector<4x8x1xf32>
      %c0_25 = arith.constant 0 : index
      %c0_26 = arith.constant 0 : index
      %c0_27 = arith.constant 0 : index
      %44 = vector.load %arg9[%c0_25, %c0_26, %c0_27] : memref<4x8x1xf32, #tpu.memory_space<vmem>>, vector<4x8x1xf32>
      tpu.vector_store %arg9[%c0_25, %c0_26, %c0_27], %43 {strides = array<i32>} : memref<4x8x1xf32, #tpu.memory_space<vmem>>, vector<4x8x1xf32>,
      %c0_28 = arith.constant 0 : index
      %c0_29 = arith.constant 0 : index
      %c0_30 = arith.constant 0 : index
      %45 = vector.load %arg10[%c0_28, %c0_29, %c0_30] : memref<4x8x8xf32, #tpu.memory_space<vmem>>, vector<4x8x8xf32>
      %46 = vector.broadcast %35 : vector<4x8x1xf32> to vector<4x8x8xf32>
      %47 = arith.mulf %46, %45 : vector<4x8x8xf32>
      "tpu.trace_start"() <{level = 10 : i32, message = "hqk,hkd->hqd"}> : () -> ()
      %cst_31 = arith.constant dense<0.000000e+00> : vector<4x8x8xf32>
      %48 = tpu.matmul %38, %14, %cst_31 {dimension_numbers = #tpu.dot_dimension_numbers<[2], [1], [1], [2], [0, 0, 0, 1, 1, 2], [0], [0]>} : vector<4x8x8xf32>, vector<4x8x8xf32>, vector<4x8x8xf32> -> vector<4x8x8xf32>
      "tpu.trace_stop"() : () -> ()
      %49 = arith.addf %47, %48 : vector<4x8x8xf32>
      %c0_32 = arith.constant 0 : index
      %c0_33 = arith.constant 0 : index
      %c0_34 = arith.constant 0 : index
      %50 = vector.load %arg10[%c0_32, %c0_33, %c0_34] : memref<4x8x8xf32, #tpu.memory_space<vmem>>, vector<4x8x8xf32>
      tpu.vector_store %arg10[%c0_32, %c0_33, %c0_34], %49 {strides = array<i32>} : memref<4x8x8xf32, #tpu.memory_space<vmem>>, vector<4x8x8xf32>,
      %c0_35 = arith.constant 0 : index
      %c0_36 = arith.constant 0 : index
      %c0_37 = arith.constant 0 : index
      %51 = vector.load %arg8[%c0_35, %c0_36, %c0_37] : memref<4x8x1xf32, #tpu.memory_space<vmem>>, vector<4x8x1xf32>
      tpu.vector_store %arg8[%c0_35, %c0_36, %c0_37], %33 {strides = array<i32>} : memref<4x8x1xf32, #tpu.memory_space<vmem>>, vector<4x8x1xf32>,
    } else {
    }
    %c0_i32_2 = arith.constant 0 : i32
    %6 = arith.cmpi eq, %arg2, %c0_i32_2 : i32
    %7 = arith.extui %6 : i1 to i32
    %c0_i32_3 = arith.constant 0 : i32
    %8 = arith.cmpi ne, %7, %c0_i32_3 : i32
    scf.if %8 {
      %c0 = arith.constant 0 : index
      %c0_4 = arith.constant 0 : index
      %c0_5 = arith.constant 0 : index
      %9 = vector.load %arg9[%c0, %c0_4, %c0_5] : memref<4x8x1xf32, #tpu.memory_space<vmem>>, vector<4x8x1xf32>
      %10 = tpu.reciprocal %9 {approx = true} : vector<4x8x1xf32> -> vector<4x8x1xf32>
      %c0_6 = arith.constant 0 : index
      %c0_7 = arith.constant 0 : index
      %c0_8 = arith.constant 0 : index
      %11 = vector.load %arg10[%c0_6, %c0_7, %c0_8] : memref<4x8x8xf32, #tpu.memory_space<vmem>>, vector<4x8x8xf32>
      %12 = vector.broadcast %10 : vector<4x8x1xf32> to vector<4x8x8xf32>
      %13 = arith.mulf %11, %12 : vector<4x8x8xf32>
      %cst = arith.constant 0.000000e+00 : f32
      %14 = vector.broadcast %cst : f32 to vector<8x32xf32>
      %15 = vector.extract_strided_slice %13 {offsets = [0, 0, 0], sizes = [1, 8, 8], strides = [1, 1, 1]} : vector<4x8x8xf32> to vector<1x8x8xf32>
      %16 = vector.shape_cast %15 : vector<1x8x8xf32> to vector<8x8xf32>
      %c0_9 = arith.constant 0 : index
      %c0_10 = arith.constant 0 : index
      %17 = vector.load %arg6[%c0_9, %c0_10] : memref<32x32xf32, #tpu.memory_space<vmem>>, vector<8x32xf32>
      %cst_11 = arith.constant dense<0.000000e+00> : vector<8x32xf32>
      %18 = tpu.matmul %16, %17, %cst_11 {dimension_numbers = #tpu.dot_dimension_numbers<[1], [0], [0], [1], [0, 0, 1, 1], [], []>} : vector<8x8xf32>, vector<8x32xf32>, vector<8x32xf32> -> vector<8x32xf32>
      %19 = arith.addf %14, %18 : vector<8x32xf32>
      %20 = vector.extract_strided_slice %13 {offsets = [1, 0, 0], sizes = [1, 8, 8], strides = [1, 1, 1]} : vector<4x8x8xf32> to vector<1x8x8xf32>
      %21 = vector.shape_cast %20 : vector<1x8x8xf32> to vector<8x8xf32>
      %c8 = arith.constant 8 : index
      %c0_12 = arith.constant 0 : index
      %22 = vector.load %arg6[%c8, %c0_12] : memref<32x32xf32, #tpu.memory_space<vmem>>, vector<8x32xf32>
      %cst_13 = arith.constant dense<0.000000e+00> : vector<8x32xf32>
      %23 = tpu.matmul %21, %22, %cst_13 {dimension_numbers = #tpu.dot_dimension_numbers<[1], [0], [0], [1], [0, 0, 1, 1], [], []>} : vector<8x8xf32>, vector<8x32xf32>, vector<8x32xf32> -> vector<8x32xf32>
      %24 = arith.addf %19, %23 : vector<8x32xf32>
      %25 = vector.extract_strided_slice %13 {offsets = [2, 0, 0], sizes = [1, 8, 8], strides = [1, 1, 1]} : vector<4x8x8xf32> to vector<1x8x8xf32>
      %26 = vector.shape_cast %25 : vector<1x8x8xf32> to vector<8x8xf32>
      %c16 = arith.constant 16 : index
      %c0_14 = arith.constant 0 : index
      %27 = vector.load %arg6[%c16, %c0_14] : memref<32x32xf32, #tpu.memory_space<vmem>>, vector<8x32xf32>
      %cst_15 = arith.constant dense<0.000000e+00> : vector<8x32xf32>
      %28 = tpu.matmul %26, %27, %cst_15 {dimension_numbers = #tpu.dot_dimension_numbers<[1], [0], [0], [1], [0, 0, 1, 1], [], []>} : vector<8x8xf32>, vector<8x32xf32>, vector<8x32xf32> -> vector<8x32xf32>
      %29 = arith.addf %24, %28 : vector<8x32xf32>
      %30 = vector.extract_strided_slice %13 {offsets = [3, 0, 0], sizes = [1, 8, 8], strides = [1, 1, 1]} : vector<4x8x8xf32> to vector<1x8x8xf32>
      %31 = vector.shape_cast %30 : vector<1x8x8xf32> to vector<8x8xf32>
      %c24 = arith.constant 24 : index
      %c0_16 = arith.constant 0 : index
      %32 = vector.load %arg6[%c24, %c0_16] : memref<32x32xf32, #tpu.memory_space<vmem>>, vector<8x32xf32>
      %cst_17 = arith.constant dense<0.000000e+00> : vector<8x32xf32>
      %33 = tpu.matmul %31, %32, %cst_17 {dimension_numbers = #tpu.dot_dimension_numbers<[1], [0], [0], [1], [0, 0, 1, 1], [], []>} : vector<8x8xf32>, vector<8x32xf32>, vector<8x32xf32> -> vector<8x32xf32>
      %34 = arith.addf %29, %33 : vector<8x32xf32>
      %c0_18 = arith.constant 0 : index
      %c0_19 = arith.constant 0 : index
      %c0_20 = arith.constant 0 : index
      %35 = vector.load %arg7[%c0_18, %c0_19, %c0_20] : memref<1x8x32xf32, #tpu.memory_space<vmem>>, vector<1x8x32xf32>
      %36 = vector.shape_cast %35 : vector<1x8x32xf32> to vector<8x32xf32>
      %37 = vector.shape_cast %34 : vector<8x32xf32> to vector<1x8x32xf32>
      tpu.vector_store %arg7[%c0_18, %c0_19, %c0_20], %37 {strides = array<i32>} : memref<1x8x32xf32, #tpu.memory_space<vmem>>, vector<1x8x32xf32>,
    } else {
    }
    return
  }
  func.func @transform_0(%arg0: i32, %arg1: i32, %arg2: i32) -> (i32, i32, i32, i32) {
    %c0_i32 = arith.constant 0 : i32
    %c0_i32_0 = arith.constant 0 : i32
    %c0_i32_1 = arith.constant 0 : i32
    return %arg0, %c0_i32, %arg1, %c0_i32_0 : i32, i32, i32, i32
  }
  func.func @transform_1(%arg0: i32, %arg1: i32, %arg2: i32) -> (i32, i32, i32, i32) {
    %c0_i32 = arith.constant 0 : i32
    %c0_i32_0 = arith.constant 0 : i32
    %c0_i32_1 = arith.constant 0 : i32
    return %arg0, %c0_i32, %arg2, %c0_i32_0 : i32, i32, i32, i32
  }
  func.func @transform_2(%arg0: i32, %arg1: i32, %arg2: i32) -> (i32, i32, i32, i32) {
    %c0_i32 = arith.constant 0 : i32
    %c0_i32_0 = arith.constant 0 : i32
    %c0_i32_1 = arith.constant 0 : i32
    return %arg0, %c0_i32, %arg2, %c0_i32_0 : i32, i32, i32, i32
  }
  func.func @transform_3(%arg0: i32, %arg1: i32, %arg2: i32) -> (i32, i32) {
    %c0_i32 = arith.constant 0 : i32
    %c0_i32_0 = arith.constant 0 : i32
    %c0_i32_1 = arith.constant 0 : i32
    return %c0_i32, %c0_i32_0 : i32, i32
  }
  func.func @transform_4(%arg0: i32, %arg1: i32, %arg2: i32) -> (i32, i32, i32) {
    %c0_i32 = arith.constant 0 : i32
    %c0_i32_0 = arith.constant 0 : i32
    return %arg0, %arg1, %c0_i32 : i32, i32, i32
  }
}

module attributes {stable_mosaic.version = 11 : i64} {
  func.func @_qkv_proj_kernel(%arg0: i32, %arg1: i32, %arg2: memref<1x4x32xf32, #tpu.memory_space<vmem>>, %arg3: memref<32x32xf32, #tpu.memory_space<vmem>>, %arg4: memref<32x32xf32, #tpu.memory_space<vmem>>, %arg5: memref<32x32xf32, #tpu.memory_space<vmem>>, %arg6: memref<1x32xf32, #tpu.memory_space<vmem>>, %arg7: memref<1x32xf32, #tpu.memory_space<vmem>>, %arg8: memref<1x32xf32, #tpu.memory_space<vmem>>, %arg9: memref<1x4x4x8xf32, #tpu.memory_space<vmem>>, %arg10: memref<1x4x4x8xf32, #tpu.memory_space<vmem>>, %arg11: memref<1x4x4x8xf32, #tpu.memory_space<vmem>>) attributes {dimension_semantics = [#tpu.dimension_semantics<parallel>, #tpu.dimension_semantics<parallel>], iteration_bounds = array<i64: 2, 1>, scalar_prefetch = 0 : i64, scratch_operands = 0 : i64, tpu.core_type = #tpu.core_type<tc>, window_params = [{transform_indices = @transform_0, window_bounds = array<i64: 1, 4, 32>}, {pipeline_mode = #tpu.pipeline_mode<synchronous>, transform_indices = @transform_1, window_bounds = array<i64: 32, 32>}, {pipeline_mode = #tpu.pipeline_mode<synchronous>, transform_indices = @transform_2, window_bounds = array<i64: 32, 32>}, {pipeline_mode = #tpu.pipeline_mode<synchronous>, transform_indices = @transform_3, window_bounds = array<i64: 32, 32>}, {pipeline_mode = #tpu.pipeline_mode<synchronous>, transform_indices = @transform_4, window_bounds = array<i64: 1, 32>}, {pipeline_mode = #tpu.pipeline_mode<synchronous>, transform_indices = @transform_5, window_bounds = array<i64: 1, 32>}, {pipeline_mode = #tpu.pipeline_mode<synchronous>, transform_indices = @transform_6, window_bounds = array<i64: 1, 32>}, {transform_indices = @transform_7, window_bounds = array<i64: 1, 4, 4, 8>}, {transform_indices = @transform_8, window_bounds = array<i64: 1, 4, 4, 8>}, {transform_indices = @transform_9, window_bounds = array<i64: 1, 4, 4, 8>}]} {
    %c0 = arith.constant 0 : index
    %c0_0 = arith.constant 0 : index
    %c0_1 = arith.constant 0 : index
    %0 = vector.load %arg2[%c0, %c0_0, %c0_1] : memref<1x4x32xf32, #tpu.memory_space<vmem>>, vector<1x4x32xf32>
    %1 = vector.shape_cast %0 : vector<1x4x32xf32> to vector<4x32xf32>
    %c0_2 = arith.constant 0 : index
    %c0_3 = arith.constant 0 : index
    %2 = vector.load %arg3[%c0_2, %c0_3] : memref<32x32xf32, #tpu.memory_space<vmem>>, vector<32x32xf32>
    %cst = arith.constant dense<0.000000e+00> : vector<4x32xf32>
    %3 = tpu.matmul %1, %2, %cst {dimension_numbers = #tpu.dot_dimension_numbers<[1], [0], [0], [1], [0, 0, 1, 1], [], []>} : vector<4x32xf32>, vector<32x32xf32>, vector<4x32xf32> -> vector<4x32xf32>
    %c0_4 = arith.constant 0 : index
    %c0_5 = arith.constant 0 : index
    %4 = vector.load %arg6[%c0_4, %c0_5] : memref<1x32xf32, #tpu.memory_space<vmem>>, vector<1x32xf32>
    %5 = vector.broadcast %4 : vector<1x32xf32> to vector<4x32xf32>
    %6 = arith.addf %3, %5 : vector<4x32xf32>
    %7 = vector.extract_strided_slice %6 {offsets = [0, 0], sizes = [4, 8], strides = [1, 1]} : vector<4x32xf32> to vector<4x8xf32>
    %c0_6 = arith.constant 0 : index
    %c0_7 = arith.constant 0 : index
    %c0_8 = arith.constant 0 : index
    %c0_9 = arith.constant 0 : index
    %8 = vector.load %arg9[%c0_6, %c0_7, %c0_8, %c0_9] : memref<1x4x4x8xf32, #tpu.memory_space<vmem>>, vector<1x1x4x8xf32>
    %9 = vector.shape_cast %8 : vector<1x1x4x8xf32> to vector<4x8xf32>
    %10 = vector.shape_cast %7 : vector<4x8xf32> to vector<1x1x4x8xf32>
    tpu.vector_store %arg9[%c0_6, %c0_7, %c0_8, %c0_9], %10 {strides = array<i32>} : memref<1x4x4x8xf32, #tpu.memory_space<vmem>>, vector<1x1x4x8xf32>,
    %11 = vector.extract_strided_slice %6 {offsets = [0, 8], sizes = [4, 8], strides = [1, 1]} : vector<4x32xf32> to vector<4x8xf32>
    %c0_10 = arith.constant 0 : index
    %c1 = arith.constant 1 : index
    %c0_11 = arith.constant 0 : index
    %c0_12 = arith.constant 0 : index
    %12 = vector.load %arg9[%c0_10, %c1, %c0_11, %c0_12] : memref<1x4x4x8xf32, #tpu.memory_space<vmem>>, vector<1x1x4x8xf32>
    %13 = vector.shape_cast %12 : vector<1x1x4x8xf32> to vector<4x8xf32>
    %14 = vector.shape_cast %11 : vector<4x8xf32> to vector<1x1x4x8xf32>
    tpu.vector_store %arg9[%c0_10, %c1, %c0_11, %c0_12], %14 {strides = array<i32>} : memref<1x4x4x8xf32, #tpu.memory_space<vmem>>, vector<1x1x4x8xf32>,
    %15 = vector.extract_strided_slice %6 {offsets = [0, 16], sizes = [4, 8], strides = [1, 1]} : vector<4x32xf32> to vector<4x8xf32>
    %c0_13 = arith.constant 0 : index
    %c2 = arith.constant 2 : index
    %c0_14 = arith.constant 0 : index
    %c0_15 = arith.constant 0 : index
    %16 = vector.load %arg9[%c0_13, %c2, %c0_14, %c0_15] : memref<1x4x4x8xf32, #tpu.memory_space<vmem>>, vector<1x1x4x8xf32>
    %17 = vector.shape_cast %16 : vector<1x1x4x8xf32> to vector<4x8xf32>
    %18 = vector.shape_cast %15 : vector<4x8xf32> to vector<1x1x4x8xf32>
    tpu.vector_store %arg9[%c0_13, %c2, %c0_14, %c0_15], %18 {strides = array<i32>} : memref<1x4x4x8xf32, #tpu.memory_space<vmem>>, vector<1x1x4x8xf32>,
    %19 = vector.extract_strided_slice %6 {offsets = [0, 24], sizes = [4, 8], strides = [1, 1]} : vector<4x32xf32> to vector<4x8xf32>
    %c0_16 = arith.constant 0 : index
    %c3 = arith.constant 3 : index
    %c0_17 = arith.constant 0 : index
    %c0_18 = arith.constant 0 : index
    %20 = vector.load %arg9[%c0_16, %c3, %c0_17, %c0_18] : memref<1x4x4x8xf32, #tpu.memory_space<vmem>>, vector<1x1x4x8xf32>
    %21 = vector.shape_cast %20 : vector<1x1x4x8xf32> to vector<4x8xf32>
    %22 = vector.shape_cast %19 : vector<4x8xf32> to vector<1x1x4x8xf32>
    tpu.vector_store %arg9[%c0_16, %c3, %c0_17, %c0_18], %22 {strides = array<i32>} : memref<1x4x4x8xf32, #tpu.memory_space<vmem>>, vector<1x1x4x8xf32>,
    %c0_19 = arith.constant 0 : index
    %c0_20 = arith.constant 0 : index
    %23 = vector.load %arg4[%c0_19, %c0_20] : memref<32x32xf32, #tpu.memory_space<vmem>>, vector<32x32xf32>
    %cst_21 = arith.constant dense<0.000000e+00> : vector<4x32xf32>
    %24 = tpu.matmul %1, %23, %cst_21 {dimension_numbers = #tpu.dot_dimension_numbers<[1], [0], [0], [1], [0, 0, 1, 1], [], []>} : vector<4x32xf32>, vector<32x32xf32>, vector<4x32xf32> -> vector<4x32xf32>
    %c0_22 = arith.constant 0 : index
    %c0_23 = arith.constant 0 : index
    %25 = vector.load %arg7[%c0_22, %c0_23] : memref<1x32xf32, #tpu.memory_space<vmem>>, vector<1x32xf32>
    %26 = vector.broadcast %25 : vector<1x32xf32> to vector<4x32xf32>
    %27 = arith.addf %24, %26 : vector<4x32xf32>
    %28 = vector.extract_strided_slice %27 {offsets = [0, 0], sizes = [4, 8], strides = [1, 1]} : vector<4x32xf32> to vector<4x8xf32>
    %c0_24 = arith.constant 0 : index
    %c0_25 = arith.constant 0 : index
    %c0_26 = arith.constant 0 : index
    %c0_27 = arith.constant 0 : index
    %29 = vector.load %arg10[%c0_24, %c0_25, %c0_26, %c0_27] : memref<1x4x4x8xf32, #tpu.memory_space<vmem>>, vector<1x1x4x8xf32>
    %30 = vector.shape_cast %29 : vector<1x1x4x8xf32> to vector<4x8xf32>
    %31 = vector.shape_cast %28 : vector<4x8xf32> to vector<1x1x4x8xf32>
    tpu.vector_store %arg10[%c0_24, %c0_25, %c0_26, %c0_27], %31 {strides = array<i32>} : memref<1x4x4x8xf32, #tpu.memory_space<vmem>>, vector<1x1x4x8xf32>,
    %32 = vector.extract_strided_slice %27 {offsets = [0, 8], sizes = [4, 8], strides = [1, 1]} : vector<4x32xf32> to vector<4x8xf32>
    %c0_28 = arith.constant 0 : index
    %c1_29 = arith.constant 1 : index
    %c0_30 = arith.constant 0 : index
    %c0_31 = arith.constant 0 : index
    %33 = vector.load %arg10[%c0_28, %c1_29, %c0_30, %c0_31] : memref<1x4x4x8xf32, #tpu.memory_space<vmem>>, vector<1x1x4x8xf32>
    %34 = vector.shape_cast %33 : vector<1x1x4x8xf32> to vector<4x8xf32>
    %35 = vector.shape_cast %32 : vector<4x8xf32> to vector<1x1x4x8xf32>
    tpu.vector_store %arg10[%c0_28, %c1_29, %c0_30, %c0_31], %35 {strides = array<i32>} : memref<1x4x4x8xf32, #tpu.memory_space<vmem>>, vector<1x1x4x8xf32>,
    %36 = vector.extract_strided_slice %27 {offsets = [0, 16], sizes = [4, 8], strides = [1, 1]} : vector<4x32xf32> to vector<4x8xf32>
    %c0_32 = arith.constant 0 : index
    %c2_33 = arith.constant 2 : index
    %c0_34 = arith.constant 0 : index
    %c0_35 = arith.constant 0 : index
    %37 = vector.load %arg10[%c0_32, %c2_33, %c0_34, %c0_35] : memref<1x4x4x8xf32, #tpu.memory_space<vmem>>, vector<1x1x4x8xf32>
    %38 = vector.shape_cast %37 : vector<1x1x4x8xf32> to vector<4x8xf32>
    %39 = vector.shape_cast %36 : vector<4x8xf32> to vector<1x1x4x8xf32>
    tpu.vector_store %arg10[%c0_32, %c2_33, %c0_34, %c0_35], %39 {strides = array<i32>} : memref<1x4x4x8xf32, #tpu.memory_space<vmem>>, vector<1x1x4x8xf32>,
    %40 = vector.extract_strided_slice %27 {offsets = [0, 24], sizes = [4, 8], strides = [1, 1]} : vector<4x32xf32> to vector<4x8xf32>
    %c0_36 = arith.constant 0 : index
    %c3_37 = arith.constant 3 : index
    %c0_38 = arith.constant 0 : index
    %c0_39 = arith.constant 0 : index
    %41 = vector.load %arg10[%c0_36, %c3_37, %c0_38, %c0_39] : memref<1x4x4x8xf32, #tpu.memory_space<vmem>>, vector<1x1x4x8xf32>
    %42 = vector.shape_cast %41 : vector<1x1x4x8xf32> to vector<4x8xf32>
    %43 = vector.shape_cast %40 : vector<4x8xf32> to vector<1x1x4x8xf32>
    tpu.vector_store %arg10[%c0_36, %c3_37, %c0_38, %c0_39], %43 {strides = array<i32>} : memref<1x4x4x8xf32, #tpu.memory_space<vmem>>, vector<1x1x4x8xf32>,
    %c0_40 = arith.constant 0 : index
    %c0_41 = arith.constant 0 : index
    %44 = vector.load %arg5[%c0_40, %c0_41] : memref<32x32xf32, #tpu.memory_space<vmem>>, vector<32x32xf32>
    %cst_42 = arith.constant dense<0.000000e+00> : vector<4x32xf32>
    %45 = tpu.matmul %1, %44, %cst_42 {dimension_numbers = #tpu.dot_dimension_numbers<[1], [0], [0], [1], [0, 0, 1, 1], [], []>} : vector<4x32xf32>, vector<32x32xf32>, vector<4x32xf32> -> vector<4x32xf32>
    %c0_43 = arith.constant 0 : index
    %c0_44 = arith.constant 0 : index
    %46 = vector.load %arg8[%c0_43, %c0_44] : memref<1x32xf32, #tpu.memory_space<vmem>>, vector<1x32xf32>
    %47 = vector.broadcast %46 : vector<1x32xf32> to vector<4x32xf32>
    %48 = arith.addf %45, %47 : vector<4x32xf32>
    %49 = vector.extract_strided_slice %48 {offsets = [0, 0], sizes = [4, 8], strides = [1, 1]} : vector<4x32xf32> to vector<4x8xf32>
    %c0_45 = arith.constant 0 : index
    %c0_46 = arith.constant 0 : index
    %c0_47 = arith.constant 0 : index
    %c0_48 = arith.constant 0 : index
    %50 = vector.load %arg11[%c0_45, %c0_46, %c0_47, %c0_48] : memref<1x4x4x8xf32, #tpu.memory_space<vmem>>, vector<1x1x4x8xf32>
    %51 = vector.shape_cast %50 : vector<1x1x4x8xf32> to vector<4x8xf32>
    %52 = vector.shape_cast %49 : vector<4x8xf32> to vector<1x1x4x8xf32>
    tpu.vector_store %arg11[%c0_45, %c0_46, %c0_47, %c0_48], %52 {strides = array<i32>} : memref<1x4x4x8xf32, #tpu.memory_space<vmem>>, vector<1x1x4x8xf32>,
    %53 = vector.extract_strided_slice %48 {offsets = [0, 8], sizes = [4, 8], strides = [1, 1]} : vector<4x32xf32> to vector<4x8xf32>
    %c0_49 = arith.constant 0 : index
    %c1_50 = arith.constant 1 : index
    %c0_51 = arith.constant 0 : index
    %c0_52 = arith.constant 0 : index
    %54 = vector.load %arg11[%c0_49, %c1_50, %c0_51, %c0_52] : memref<1x4x4x8xf32, #tpu.memory_space<vmem>>, vector<1x1x4x8xf32>
    %55 = vector.shape_cast %54 : vector<1x1x4x8xf32> to vector<4x8xf32>
    %56 = vector.shape_cast %53 : vector<4x8xf32> to vector<1x1x4x8xf32>
    tpu.vector_store %arg11[%c0_49, %c1_50, %c0_51, %c0_52], %56 {strides = array<i32>} : memref<1x4x4x8xf32, #tpu.memory_space<vmem>>, vector<1x1x4x8xf32>,
    %57 = vector.extract_strided_slice %48 {offsets = [0, 16], sizes = [4, 8], strides = [1, 1]} : vector<4x32xf32> to vector<4x8xf32>
    %c0_53 = arith.constant 0 : index
    %c2_54 = arith.constant 2 : index
    %c0_55 = arith.constant 0 : index
    %c0_56 = arith.constant 0 : index
    %58 = vector.load %arg11[%c0_53, %c2_54, %c0_55, %c0_56] : memref<1x4x4x8xf32, #tpu.memory_space<vmem>>, vector<1x1x4x8xf32>
    %59 = vector.shape_cast %58 : vector<1x1x4x8xf32> to vector<4x8xf32>
    %60 = vector.shape_cast %57 : vector<4x8xf32> to vector<1x1x4x8xf32>
    tpu.vector_store %arg11[%c0_53, %c2_54, %c0_55, %c0_56], %60 {strides = array<i32>} : memref<1x4x4x8xf32, #tpu.memory_space<vmem>>, vector<1x1x4x8xf32>,
    %61 = vector.extract_strided_slice %48 {offsets = [0, 24], sizes = [4, 8], strides = [1, 1]} : vector<4x32xf32> to vector<4x8xf32>
    %c0_57 = arith.constant 0 : index
    %c3_58 = arith.constant 3 : index
    %c0_59 = arith.constant 0 : index
    %c0_60 = arith.constant 0 : index
    %62 = vector.load %arg11[%c0_57, %c3_58, %c0_59, %c0_60] : memref<1x4x4x8xf32, #tpu.memory_space<vmem>>, vector<1x1x4x8xf32>
    %63 = vector.shape_cast %62 : vector<1x1x4x8xf32> to vector<4x8xf32>
    %64 = vector.shape_cast %61 : vector<4x8xf32> to vector<1x1x4x8xf32>
    tpu.vector_store %arg11[%c0_57, %c3_58, %c0_59, %c0_60], %64 {strides = array<i32>} : memref<1x4x4x8xf32, #tpu.memory_space<vmem>>, vector<1x1x4x8xf32>,
    return
  }
  func.func @transform_0(%arg0: i32, %arg1: i32) -> (i32, i32, i32) {
    %c0_i32 = arith.constant 0 : i32
    %c0_i32_0 = arith.constant 0 : i32
    return %arg0, %arg1, %c0_i32 : i32, i32, i32
  }
  func.func @transform_1(%arg0: i32, %arg1: i32) -> (i32, i32) {
    %c0_i32 = arith.constant 0 : i32
    %c0_i32_0 = arith.constant 0 : i32
    %c0_i32_1 = arith.constant 0 : i32
    return %c0_i32, %c0_i32_0 : i32, i32
  }
  func.func @transform_2(%arg0: i32, %arg1: i32) -> (i32, i32) {
    %c0_i32 = arith.constant 0 : i32
    %c0_i32_0 = arith.constant 0 : i32
    %c0_i32_1 = arith.constant 0 : i32
    return %c0_i32, %c0_i32_0 : i32, i32
  }
  func.func @transform_3(%arg0: i32, %arg1: i32) -> (i32, i32) {
    %c0_i32 = arith.constant 0 : i32
    %c0_i32_0 = arith.constant 0 : i32
    %c0_i32_1 = arith.constant 0 : i32
    return %c0_i32, %c0_i32_0 : i32, i32
  }
  func.func @transform_4(%arg0: i32, %arg1: i32) -> (i32, i32) {
    %c0_i32 = arith.constant 0 : i32
    %c0_i32_0 = arith.constant 0 : i32
    %c0_i32_1 = arith.constant 0 : i32
    return %c0_i32, %c0_i32_0 : i32, i32
  }
  func.func @transform_5(%arg0: i32, %arg1: i32) -> (i32, i32) {
    %c0_i32 = arith.constant 0 : i32
    %c0_i32_0 = arith.constant 0 : i32
    %c0_i32_1 = arith.constant 0 : i32
    return %c0_i32, %c0_i32_0 : i32, i32
  }
  func.func @transform_6(%arg0: i32, %arg1: i32) -> (i32, i32) {
    %c0_i32 = arith.constant 0 : i32
    %c0_i32_0 = arith.constant 0 : i32
    %c0_i32_1 = arith.constant 0 : i32
    return %c0_i32, %c0_i32_0 : i32, i32
  }
  func.func @transform_7(%arg0: i32, %arg1: i32) -> (i32, i32, i32, i32) {
    %c0_i32 = arith.constant 0 : i32
    %c0_i32_0 = arith.constant 0 : i32
    %c0_i32_1 = arith.constant 0 : i32
    return %arg0, %c0_i32, %arg1, %c0_i32_0 : i32, i32, i32, i32
  }
  func.func @transform_8(%arg0: i32, %arg1: i32) -> (i32, i32, i32, i32) {
    %c0_i32 = arith.constant 0 : i32
    %c0_i32_0 = arith.constant 0 : i32
    %c0_i32_1 = arith.constant 0 : i32
    return %arg0, %c0_i32, %arg1, %c0_i32_0 : i32, i32, i32, i32
  }
  func.func @transform_9(%arg0: i32, %arg1: i32) -> (i32, i32, i32, i32) {
    %c0_i32 = arith.constant 0 : i32
    %c0_i32_0 = arith.constant 0 : i32
    %c0_i32_1 = arith.constant 0 : i32
    return %arg0, %c0_i32, %arg1, %c0_i32_0 : i32, i32, i32, i32
  }
}

module attributes {stable_mosaic.version = 11 : i64} {
  func.func @_flash_attn_kernel(%arg0: i32, %arg1: i32, %arg2: i32, %arg3: memref<1x4x4x8xf32, #tpu.memory_space<vmem>>, %arg4: memref<1x4x4x8xf32, #tpu.memory_space<vmem>>, %arg5: memref<1x4x4x8xf32, #tpu.memory_space<vmem>>, %arg6: memref<32x32xf32, #tpu.memory_space<vmem>>, %arg7: memref<1x4x32xf32, #tpu.memory_space<vmem>>, %arg8: memref<4x4x1xf32, #tpu.memory_space<vmem>>, %arg9: memref<4x4x1xf32, #tpu.memory_space<vmem>>, %arg10: memref<4x4x8xf32, #tpu.memory_space<vmem>>) attributes {dimension_semantics = [#tpu.dimension_semantics<parallel>, #tpu.dimension_semantics<parallel>, #tpu.dimension_semantics<arbitrary>], iteration_bounds = array<i64: 2, 1, 1>, scalar_prefetch = 0 : i64, scratch_operands = 3 : i64, tpu.core_type = #tpu.core_type<tc>, window_params = [{transform_indices = @transform_0, window_bounds = array<i64: 1, 4, 4, 8>}, {transform_indices = @transform_1, window_bounds = array<i64: 1, 4, 4, 8>}, {transform_indices = @transform_2, window_bounds = array<i64: 1, 4, 4, 8>}, {pipeline_mode = #tpu.pipeline_mode<synchronous>, transform_indices = @transform_3, window_bounds = array<i64: 32, 32>}, {transform_indices = @transform_4, window_bounds = array<i64: 1, 4, 32>}]} {
    %c0_i32 = arith.constant 0 : i32
    %0 = arith.cmpi eq, %arg2, %c0_i32 : i32
    %1 = arith.extui %0 : i1 to i32
    %c0_i32_0 = arith.constant 0 : i32
    %2 = arith.cmpi ne, %1, %c0_i32_0 : i32
    scf.if %2 {
      %cst = arith.constant -1.000000e+30 : f32
      %9 = vector.broadcast %cst : f32 to vector<4x4x1xf32>
      %c0 = arith.constant 0 : index
      %c0_4 = arith.constant 0 : index
      %c0_5 = arith.constant 0 : index
      %10 = vector.load %arg8[%c0, %c0_4, %c0_5] : memref<4x4x1xf32, #tpu.memory_space<vmem>>, vector<4x4x1xf32>
      tpu.vector_store %arg8[%c0, %c0_4, %c0_5], %9 {strides = array<i32>} : memref<4x4x1xf32, #tpu.memory_space<vmem>>, vector<4x4x1xf32>,
      %cst_6 = arith.constant 0.000000e+00 : f32
      %11 = vector.broadcast %cst_6 : f32 to vector<4x4x1xf32>
      %c0_7 = arith.constant 0 : index
      %c0_8 = arith.constant 0 : index
      %c0_9 = arith.constant 0 : index
      %12 = vector.load %arg9[%c0_7, %c0_8, %c0_9] : memref<4x4x1xf32, #tpu.memory_space<vmem>>, vector<4x4x1xf32>
      tpu.vector_store %arg9[%c0_7, %c0_8, %c0_9], %11 {strides = array<i32>} : memref<4x4x1xf32, #tpu.memory_space<vmem>>, vector<4x4x1xf32>,
      %cst_10 = arith.constant 0.000000e+00 : f32
      %13 = vector.broadcast %cst_10 : f32 to vector<4x4x8xf32>
      %c0_11 = arith.constant 0 : index
      %c0_12 = arith.constant 0 : index
      %c0_13 = arith.constant 0 : index
      %14 = vector.load %arg10[%c0_11, %c0_12, %c0_13] : memref<4x4x8xf32, #tpu.memory_space<vmem>>, vector<4x4x8xf32>
      tpu.vector_store %arg10[%c0_11, %c0_12, %c0_13], %13 {strides = array<i32>} : memref<4x4x8xf32, #tpu.memory_space<vmem>>, vector<4x4x8xf32>,
    } else {
    }
    %3 = arith.cmpi sle, %arg2, %arg1 : i32
    %4 = arith.extui %3 : i1 to i32
    %c0_i32_1 = arith.constant 0 : i32
    %5 = arith.cmpi ne, %4, %c0_i32_1 : i32
    scf.if %5 {
      %c0 = arith.constant 0 : index
      %c0_4 = arith.constant 0 : index
      %c0_5 = arith.constant 0 : index
      %c0_6 = arith.constant 0 : index
      %9 = vector.load %arg3[%c0, %c0_4, %c0_5, %c0_6] : memref<1x4x4x8xf32, #tpu.memory_space<vmem>>, vector<1x4x4x8xf32>
      %10 = vector.shape_cast %9 : vector<1x4x4x8xf32> to vector<4x4x8xf32>
      %c0_7 = arith.constant 0 : index
      %c0_8 = arith.constant 0 : index
      %c0_9 = arith.constant 0 : index
      %c0_10 = arith.constant 0 : index
      %11 = vector.load %arg4[%c0_7, %c0_8, %c0_9, %c0_10] : memref<1x4x4x8xf32, #tpu.memory_space<vmem>>, vector<1x4x4x8xf32>
      %12 = vector.shape_cast %11 : vector<1x4x4x8xf32> to vector<4x4x8xf32>
      %c0_11 = arith.constant 0 : index
      %c0_12 = arith.constant 0 : index
      %c0_13 = arith.constant 0 : index
      %c0_14 = arith.constant 0 : index
      %13 = vector.load %arg5[%c0_11, %c0_12, %c0_13, %c0_14] : memref<1x4x4x8xf32, #tpu.memory_space<vmem>>, vector<1x4x4x8xf32>
      %14 = vector.shape_cast %13 : vector<1x4x4x8xf32> to vector<4x4x8xf32>
      "tpu.trace_start"() <{level = 10 : i32, message = "hqd,hkd->hqk"}> : () -> ()
      %cst = arith.constant dense<0.000000e+00> : vector<4x4x4xf32>
      %15 = tpu.matmul %10, %12, %cst {dimension_numbers = #tpu.dot_dimension_numbers<[2], [2], [1], [1], [0, 0, 0, 1, 1, 1], [0], [0]>} : vector<4x4x8xf32>, vector<4x4x8xf32>, vector<4x4x4xf32> -> vector<4x4x4xf32>
      "tpu.trace_stop"() : () -> ()
      %16 = tpu.iota {dimensions = array<i32: 0>} : vector<4x4xi32>
      %c4_i32 = arith.constant 4 : i32
      %17 = arith.muli %arg1, %c4_i32 : i32
      %18 = vector.broadcast %17 : i32 to vector<4x4xi32>
      %19 = arith.addi %16, %18 : vector<4x4xi32>
      %20 = tpu.iota {dimensions = array<i32: 1>} : vector<4x4xi32>
      %c4_i32_15 = arith.constant 4 : i32
      %21 = arith.muli %arg2, %c4_i32_15 : i32
      %22 = vector.broadcast %21 : i32 to vector<4x4xi32>
      %23 = arith.addi %20, %22 : vector<4x4xi32>
      %24 = arith.cmpi sle, %23, %19 : vector<4x4xi32>
      %25 = vector.shape_cast %24 : vector<4x4xi1> to vector<1x4x4xi1>
      %cst_16 = arith.constant -1.000000e+30 : f32
      %26 = vector.shape_cast %25 : vector<1x4x4xi1> to vector<1x4x4xi1>
      %27 = vector.broadcast %26 : vector<1x4x4xi1> to vector<4x4x4xi1>
      %28 = vector.broadcast %cst_16 : f32 to vector<4x4x4xf32>
      %29 = arith.select %27, %15, %28 : vector<4x4x4xi1>, vector<4x4x4xf32>
      %c0_17 = arith.constant 0 : index
      %c0_18 = arith.constant 0 : index
      %c0_19 = arith.constant 0 : index
      %30 = vector.load %arg8[%c0_17, %c0_18, %c0_19] : memref<4x4x1xf32, #tpu.memory_space<vmem>>, vector<4x4x1xf32>
      %cst_20 = arith.constant dense<0xFF800000> : vector<4x4xf32>
      %31 = vector.multi_reduction <maximumf>, %29, %cst_20 [2] : vector<4x4x4xf32> to vector<4x4xf32>
      %32 = vector.shape_cast %31 : vector<4x4xf32> to vector<4x4x1xf32>
      %33 = arith.maximumf %30, %32 : vector<4x4x1xf32>
      %34 = arith.subf %30, %33 : vector<4x4x1xf32>
      %35 = math.exp %34 : vector<4x4x1xf32>
      %36 = vector.broadcast %33 : vector<4x4x1xf32> to vector<4x4x4xf32>
      %37 = arith.subf %29, %36 : vector<4x4x4xf32>
      %38 = math.exp %37 : vector<4x4x4xf32>
      %c0_21 = arith.constant 0 : index
      %c0_22 = arith.constant 0 : index
      %c0_23 = arith.constant 0 : index
      %39 = vector.load %arg9[%c0_21, %c0_22, %c0_23] : memref<4x4x1xf32, #tpu.memory_space<vmem>>, vector<4x4x1xf32>
      %40 = arith.mulf %35, %39 : vector<4x4x1xf32>
      %cst_24 = arith.constant dense<0.000000e+00> : vector<4x4xf32>
      %41 = vector.multi_reduction <add>, %38, %cst_24 [2] : vector<4x4x4xf32> to vector<4x4xf32>
      %42 = vector.shape_cast %41 : vector<4x4xf32> to vector<4x4x1xf32>
      %43 = arith.addf %40, %42 : vector<4x4x1xf32>
      %c0_25 = arith.constant 0 : index
      %c0_26 = arith.constant 0 : index
      %c0_27 = arith.constant 0 : index
      %44 = vector.load %arg9[%c0_25, %c0_26, %c0_27] : memref<4x4x1xf32, #tpu.memory_space<vmem>>, vector<4x4x1xf32>
      tpu.vector_store %arg9[%c0_25, %c0_26, %c0_27], %43 {strides = array<i32>} : memref<4x4x1xf32, #tpu.memory_space<vmem>>, vector<4x4x1xf32>,
      %c0_28 = arith.constant 0 : index
      %c0_29 = arith.constant 0 : index
      %c0_30 = arith.constant 0 : index
      %45 = vector.load %arg10[%c0_28, %c0_29, %c0_30] : memref<4x4x8xf32, #tpu.memory_space<vmem>>, vector<4x4x8xf32>
      %46 = vector.broadcast %35 : vector<4x4x1xf32> to vector<4x4x8xf32>
      %47 = arith.mulf %46, %45 : vector<4x4x8xf32>
      "tpu.trace_start"() <{level = 10 : i32, message = "hqk,hkd->hqd"}> : () -> ()
      %cst_31 = arith.constant dense<0.000000e+00> : vector<4x4x8xf32>
      %48 = tpu.matmul %38, %14, %cst_31 {dimension_numbers = #tpu.dot_dimension_numbers<[2], [1], [1], [2], [0, 0, 0, 1, 1, 2], [0], [0]>} : vector<4x4x4xf32>, vector<4x4x8xf32>, vector<4x4x8xf32> -> vector<4x4x8xf32>
      "tpu.trace_stop"() : () -> ()
      %49 = arith.addf %47, %48 : vector<4x4x8xf32>
      %c0_32 = arith.constant 0 : index
      %c0_33 = arith.constant 0 : index
      %c0_34 = arith.constant 0 : index
      %50 = vector.load %arg10[%c0_32, %c0_33, %c0_34] : memref<4x4x8xf32, #tpu.memory_space<vmem>>, vector<4x4x8xf32>
      tpu.vector_store %arg10[%c0_32, %c0_33, %c0_34], %49 {strides = array<i32>} : memref<4x4x8xf32, #tpu.memory_space<vmem>>, vector<4x4x8xf32>,
      %c0_35 = arith.constant 0 : index
      %c0_36 = arith.constant 0 : index
      %c0_37 = arith.constant 0 : index
      %51 = vector.load %arg8[%c0_35, %c0_36, %c0_37] : memref<4x4x1xf32, #tpu.memory_space<vmem>>, vector<4x4x1xf32>
      tpu.vector_store %arg8[%c0_35, %c0_36, %c0_37], %33 {strides = array<i32>} : memref<4x4x1xf32, #tpu.memory_space<vmem>>, vector<4x4x1xf32>,
    } else {
    }
    %c0_i32_2 = arith.constant 0 : i32
    %6 = arith.cmpi eq, %arg2, %c0_i32_2 : i32
    %7 = arith.extui %6 : i1 to i32
    %c0_i32_3 = arith.constant 0 : i32
    %8 = arith.cmpi ne, %7, %c0_i32_3 : i32
    scf.if %8 {
      %c0 = arith.constant 0 : index
      %c0_4 = arith.constant 0 : index
      %c0_5 = arith.constant 0 : index
      %9 = vector.load %arg9[%c0, %c0_4, %c0_5] : memref<4x4x1xf32, #tpu.memory_space<vmem>>, vector<4x4x1xf32>
      %10 = tpu.reciprocal %9 {approx = true} : vector<4x4x1xf32> -> vector<4x4x1xf32>
      %c0_6 = arith.constant 0 : index
      %c0_7 = arith.constant 0 : index
      %c0_8 = arith.constant 0 : index
      %11 = vector.load %arg10[%c0_6, %c0_7, %c0_8] : memref<4x4x8xf32, #tpu.memory_space<vmem>>, vector<4x4x8xf32>
      %12 = vector.broadcast %10 : vector<4x4x1xf32> to vector<4x4x8xf32>
      %13 = arith.mulf %11, %12 : vector<4x4x8xf32>
      %cst = arith.constant 0.000000e+00 : f32
      %14 = vector.broadcast %cst : f32 to vector<4x32xf32>
      %15 = vector.extract_strided_slice %13 {offsets = [0, 0, 0], sizes = [1, 4, 8], strides = [1, 1, 1]} : vector<4x4x8xf32> to vector<1x4x8xf32>
      %16 = vector.shape_cast %15 : vector<1x4x8xf32> to vector<4x8xf32>
      %c0_9 = arith.constant 0 : index
      %c0_10 = arith.constant 0 : index
      %17 = vector.load %arg6[%c0_9, %c0_10] : memref<32x32xf32, #tpu.memory_space<vmem>>, vector<8x32xf32>
      %cst_11 = arith.constant dense<0.000000e+00> : vector<4x32xf32>
      %18 = tpu.matmul %16, %17, %cst_11 {dimension_numbers = #tpu.dot_dimension_numbers<[1], [0], [0], [1], [0, 0, 1, 1], [], []>} : vector<4x8xf32>, vector<8x32xf32>, vector<4x32xf32> -> vector<4x32xf32>
      %19 = arith.addf %14, %18 : vector<4x32xf32>
      %20 = vector.extract_strided_slice %13 {offsets = [1, 0, 0], sizes = [1, 4, 8], strides = [1, 1, 1]} : vector<4x4x8xf32> to vector<1x4x8xf32>
      %21 = vector.shape_cast %20 : vector<1x4x8xf32> to vector<4x8xf32>
      %c8 = arith.constant 8 : index
      %c0_12 = arith.constant 0 : index
      %22 = vector.load %arg6[%c8, %c0_12] : memref<32x32xf32, #tpu.memory_space<vmem>>, vector<8x32xf32>
      %cst_13 = arith.constant dense<0.000000e+00> : vector<4x32xf32>
      %23 = tpu.matmul %21, %22, %cst_13 {dimension_numbers = #tpu.dot_dimension_numbers<[1], [0], [0], [1], [0, 0, 1, 1], [], []>} : vector<4x8xf32>, vector<8x32xf32>, vector<4x32xf32> -> vector<4x32xf32>
      %24 = arith.addf %19, %23 : vector<4x32xf32>
      %25 = vector.extract_strided_slice %13 {offsets = [2, 0, 0], sizes = [1, 4, 8], strides = [1, 1, 1]} : vector<4x4x8xf32> to vector<1x4x8xf32>
      %26 = vector.shape_cast %25 : vector<1x4x8xf32> to vector<4x8xf32>
      %c16 = arith.constant 16 : index
      %c0_14 = arith.constant 0 : index
      %27 = vector.load %arg6[%c16, %c0_14] : memref<32x32xf32, #tpu.memory_space<vmem>>, vector<8x32xf32>
      %cst_15 = arith.constant dense<0.000000e+00> : vector<4x32xf32>
      %28 = tpu.matmul %26, %27, %cst_15 {dimension_numbers = #tpu.dot_dimension_numbers<[1], [0], [0], [1], [0, 0, 1, 1], [], []>} : vector<4x8xf32>, vector<8x32xf32>, vector<4x32xf32> -> vector<4x32xf32>
      %29 = arith.addf %24, %28 : vector<4x32xf32>
      %30 = vector.extract_strided_slice %13 {offsets = [3, 0, 0], sizes = [1, 4, 8], strides = [1, 1, 1]} : vector<4x4x8xf32> to vector<1x4x8xf32>
      %31 = vector.shape_cast %30 : vector<1x4x8xf32> to vector<4x8xf32>
      %c24 = arith.constant 24 : index
      %c0_16 = arith.constant 0 : index
      %32 = vector.load %arg6[%c24, %c0_16] : memref<32x32xf32, #tpu.memory_space<vmem>>, vector<8x32xf32>
      %cst_17 = arith.constant dense<0.000000e+00> : vector<4x32xf32>
      %33 = tpu.matmul %31, %32, %cst_17 {dimension_numbers = #tpu.dot_dimension_numbers<[1], [0], [0], [1], [0, 0, 1, 1], [], []>} : vector<4x8xf32>, vector<8x32xf32>, vector<4x32xf32> -> vector<4x32xf32>
      %34 = arith.addf %29, %33 : vector<4x32xf32>
      %c0_18 = arith.constant 0 : index
      %c0_19 = arith.constant 0 : index
      %c0_20 = arith.constant 0 : index
      %35 = vector.load %arg7[%c0_18, %c0_19, %c0_20] : memref<1x4x32xf32, #tpu.memory_space<vmem>>, vector<1x4x32xf32>
      %36 = vector.shape_cast %35 : vector<1x4x32xf32> to vector<4x32xf32>
      %37 = vector.shape_cast %34 : vector<4x32xf32> to vector<1x4x32xf32>
      tpu.vector_store %arg7[%c0_18, %c0_19, %c0_20], %37 {strides = array<i32>} : memref<1x4x32xf32, #tpu.memory_space<vmem>>, vector<1x4x32xf32>,
    } else {
    }
    return
  }
  func.func @transform_0(%arg0: i32, %arg1: i32, %arg2: i32) -> (i32, i32, i32, i32) {
    %c0_i32 = arith.constant 0 : i32
    %c0_i32_0 = arith.constant 0 : i32
    %c0_i32_1 = arith.constant 0 : i32
    return %arg0, %c0_i32, %arg1, %c0_i32_0 : i32, i32, i32, i32
  }
  func.func @transform_1(%arg0: i32, %arg1: i32, %arg2: i32) -> (i32, i32, i32, i32) {
    %c0_i32 = arith.constant 0 : i32
    %c0_i32_0 = arith.constant 0 : i32
    %c0_i32_1 = arith.constant 0 : i32
    return %arg0, %c0_i32, %arg2, %c0_i32_0 : i32, i32, i32, i32
  }
  func.func @transform_2(%arg0: i32, %arg1: i32, %arg2: i32) -> (i32, i32, i32, i32) {
    %c0_i32 = arith.constant 0 : i32
    %c0_i32_0 = arith.constant 0 : i32
    %c0_i32_1 = arith.constant 0 : i32
    return %arg0, %c0_i32, %arg2, %c0_i32_0 : i32, i32, i32, i32
  }
  func.func @transform_3(%arg0: i32, %arg1: i32, %arg2: i32) -> (i32, i32) {
    %c0_i32 = arith.constant 0 : i32
    %c0_i32_0 = arith.constant 0 : i32
    %c0_i32_1 = arith.constant 0 : i32
    return %c0_i32, %c0_i32_0 : i32, i32
  }
  func.func @transform_4(%arg0: i32, %arg1: i32, %arg2: i32) -> (i32, i32, i32) {
    %c0_i32 = arith.constant 0 : i32
    %c0_i32_0 = arith.constant 0 : i32
    return %arg0, %arg1, %c0_i32 : i32, i32, i32
  }
}

module attributes {stable_mosaic.version = 11 : i64} {
  func.func @_qkv_proj_kernel(%arg0: i32, %arg1: i32, %arg2: memref<1x2x32xf32, #tpu.memory_space<vmem>>, %arg3: memref<32x32xf32, #tpu.memory_space<vmem>>, %arg4: memref<32x32xf32, #tpu.memory_space<vmem>>, %arg5: memref<32x32xf32, #tpu.memory_space<vmem>>, %arg6: memref<1x32xf32, #tpu.memory_space<vmem>>, %arg7: memref<1x32xf32, #tpu.memory_space<vmem>>, %arg8: memref<1x32xf32, #tpu.memory_space<vmem>>, %arg9: memref<1x4x2x8xf32, #tpu.memory_space<vmem>>, %arg10: memref<1x4x2x8xf32, #tpu.memory_space<vmem>>, %arg11: memref<1x4x2x8xf32, #tpu.memory_space<vmem>>) attributes {dimension_semantics = [#tpu.dimension_semantics<parallel>, #tpu.dimension_semantics<parallel>], iteration_bounds = array<i64: 2, 1>, scalar_prefetch = 0 : i64, scratch_operands = 0 : i64, tpu.core_type = #tpu.core_type<tc>, window_params = [{transform_indices = @transform_0, window_bounds = array<i64: 1, 2, 32>}, {pipeline_mode = #tpu.pipeline_mode<synchronous>, transform_indices = @transform_1, window_bounds = array<i64: 32, 32>}, {pipeline_mode = #tpu.pipeline_mode<synchronous>, transform_indices = @transform_2, window_bounds = array<i64: 32, 32>}, {pipeline_mode = #tpu.pipeline_mode<synchronous>, transform_indices = @transform_3, window_bounds = array<i64: 32, 32>}, {pipeline_mode = #tpu.pipeline_mode<synchronous>, transform_indices = @transform_4, window_bounds = array<i64: 1, 32>}, {pipeline_mode = #tpu.pipeline_mode<synchronous>, transform_indices = @transform_5, window_bounds = array<i64: 1, 32>}, {pipeline_mode = #tpu.pipeline_mode<synchronous>, transform_indices = @transform_6, window_bounds = array<i64: 1, 32>}, {transform_indices = @transform_7, window_bounds = array<i64: 1, 4, 2, 8>}, {transform_indices = @transform_8, window_bounds = array<i64: 1, 4, 2, 8>}, {transform_indices = @transform_9, window_bounds = array<i64: 1, 4, 2, 8>}]} {
    %c0 = arith.constant 0 : index
    %c0_0 = arith.constant 0 : index
    %c0_1 = arith.constant 0 : index
    %0 = vector.load %arg2[%c0, %c0_0, %c0_1] : memref<1x2x32xf32, #tpu.memory_space<vmem>>, vector<1x2x32xf32>
    %1 = vector.shape_cast %0 : vector<1x2x32xf32> to vector<2x32xf32>
    %c0_2 = arith.constant 0 : index
    %c0_3 = arith.constant 0 : index
    %2 = vector.load %arg3[%c0_2, %c0_3] : memref<32x32xf32, #tpu.memory_space<vmem>>, vector<32x32xf32>
    %cst = arith.constant dense<0.000000e+00> : vector<2x32xf32>
    %3 = tpu.matmul %1, %2, %cst {dimension_numbers = #tpu.dot_dimension_numbers<[1], [0], [0], [1], [0, 0, 1, 1], [], []>} : vector<2x32xf32>, vector<32x32xf32>, vector<2x32xf32> -> vector<2x32xf32>
    %c0_4 = arith.constant 0 : index
    %c0_5 = arith.constant 0 : index
    %4 = vector.load %arg6[%c0_4, %c0_5] : memref<1x32xf32, #tpu.memory_space<vmem>>, vector<1x32xf32>
    %5 = vector.broadcast %4 : vector<1x32xf32> to vector<2x32xf32>
    %6 = arith.addf %3, %5 : vector<2x32xf32>
    %7 = vector.extract_strided_slice %6 {offsets = [0, 0], sizes = [2, 8], strides = [1, 1]} : vector<2x32xf32> to vector<2x8xf32>
    %c0_6 = arith.constant 0 : index
    %c0_7 = arith.constant 0 : index
    %c0_8 = arith.constant 0 : index
    %c0_9 = arith.constant 0 : index
    %8 = vector.load %arg9[%c0_6, %c0_7, %c0_8, %c0_9] : memref<1x4x2x8xf32, #tpu.memory_space<vmem>>, vector<1x1x2x8xf32>
    %9 = vector.shape_cast %8 : vector<1x1x2x8xf32> to vector<2x8xf32>
    %10 = vector.shape_cast %7 : vector<2x8xf32> to vector<1x1x2x8xf32>
    tpu.vector_store %arg9[%c0_6, %c0_7, %c0_8, %c0_9], %10 {strides = array<i32>} : memref<1x4x2x8xf32, #tpu.memory_space<vmem>>, vector<1x1x2x8xf32>,
    %11 = vector.extract_strided_slice %6 {offsets = [0, 8], sizes = [2, 8], strides = [1, 1]} : vector<2x32xf32> to vector<2x8xf32>
    %c0_10 = arith.constant 0 : index
    %c1 = arith.constant 1 : index
    %c0_11 = arith.constant 0 : index
    %c0_12 = arith.constant 0 : index
    %12 = vector.load %arg9[%c0_10, %c1, %c0_11, %c0_12] : memref<1x4x2x8xf32, #tpu.memory_space<vmem>>, vector<1x1x2x8xf32>
    %13 = vector.shape_cast %12 : vector<1x1x2x8xf32> to vector<2x8xf32>
    %14 = vector.shape_cast %11 : vector<2x8xf32> to vector<1x1x2x8xf32>
    tpu.vector_store %arg9[%c0_10, %c1, %c0_11, %c0_12], %14 {strides = array<i32>} : memref<1x4x2x8xf32, #tpu.memory_space<vmem>>, vector<1x1x2x8xf32>,
    %15 = vector.extract_strided_slice %6 {offsets = [0, 16], sizes = [2, 8], strides = [1, 1]} : vector<2x32xf32> to vector<2x8xf32>
    %c0_13 = arith.constant 0 : index
    %c2 = arith.constant 2 : index
    %c0_14 = arith.constant 0 : index
    %c0_15 = arith.constant 0 : index
    %16 = vector.load %arg9[%c0_13, %c2, %c0_14, %c0_15] : memref<1x4x2x8xf32, #tpu.memory_space<vmem>>, vector<1x1x2x8xf32>
    %17 = vector.shape_cast %16 : vector<1x1x2x8xf32> to vector<2x8xf32>
    %18 = vector.shape_cast %15 : vector<2x8xf32> to vector<1x1x2x8xf32>
    tpu.vector_store %arg9[%c0_13, %c2, %c0_14, %c0_15], %18 {strides = array<i32>} : memref<1x4x2x8xf32, #tpu.memory_space<vmem>>, vector<1x1x2x8xf32>,
    %19 = vector.extract_strided_slice %6 {offsets = [0, 24], sizes = [2, 8], strides = [1, 1]} : vector<2x32xf32> to vector<2x8xf32>
    %c0_16 = arith.constant 0 : index
    %c3 = arith.constant 3 : index
    %c0_17 = arith.constant 0 : index
    %c0_18 = arith.constant 0 : index
    %20 = vector.load %arg9[%c0_16, %c3, %c0_17, %c0_18] : memref<1x4x2x8xf32, #tpu.memory_space<vmem>>, vector<1x1x2x8xf32>
    %21 = vector.shape_cast %20 : vector<1x1x2x8xf32> to vector<2x8xf32>
    %22 = vector.shape_cast %19 : vector<2x8xf32> to vector<1x1x2x8xf32>
    tpu.vector_store %arg9[%c0_16, %c3, %c0_17, %c0_18], %22 {strides = array<i32>} : memref<1x4x2x8xf32, #tpu.memory_space<vmem>>, vector<1x1x2x8xf32>,
    %c0_19 = arith.constant 0 : index
    %c0_20 = arith.constant 0 : index
    %23 = vector.load %arg4[%c0_19, %c0_20] : memref<32x32xf32, #tpu.memory_space<vmem>>, vector<32x32xf32>
    %cst_21 = arith.constant dense<0.000000e+00> : vector<2x32xf32>
    %24 = tpu.matmul %1, %23, %cst_21 {dimension_numbers = #tpu.dot_dimension_numbers<[1], [0], [0], [1], [0, 0, 1, 1], [], []>} : vector<2x32xf32>, vector<32x32xf32>, vector<2x32xf32> -> vector<2x32xf32>
    %c0_22 = arith.constant 0 : index
    %c0_23 = arith.constant 0 : index
    %25 = vector.load %arg7[%c0_22, %c0_23] : memref<1x32xf32, #tpu.memory_space<vmem>>, vector<1x32xf32>
    %26 = vector.broadcast %25 : vector<1x32xf32> to vector<2x32xf32>
    %27 = arith.addf %24, %26 : vector<2x32xf32>
    %28 = vector.extract_strided_slice %27 {offsets = [0, 0], sizes = [2, 8], strides = [1, 1]} : vector<2x32xf32> to vector<2x8xf32>
    %c0_24 = arith.constant 0 : index
    %c0_25 = arith.constant 0 : index
    %c0_26 = arith.constant 0 : index
    %c0_27 = arith.constant 0 : index
    %29 = vector.load %arg10[%c0_24, %c0_25, %c0_26, %c0_27] : memref<1x4x2x8xf32, #tpu.memory_space<vmem>>, vector<1x1x2x8xf32>
    %30 = vector.shape_cast %29 : vector<1x1x2x8xf32> to vector<2x8xf32>
    %31 = vector.shape_cast %28 : vector<2x8xf32> to vector<1x1x2x8xf32>
    tpu.vector_store %arg10[%c0_24, %c0_25, %c0_26, %c0_27], %31 {strides = array<i32>} : memref<1x4x2x8xf32, #tpu.memory_space<vmem>>, vector<1x1x2x8xf32>,
    %32 = vector.extract_strided_slice %27 {offsets = [0, 8], sizes = [2, 8], strides = [1, 1]} : vector<2x32xf32> to vector<2x8xf32>
    %c0_28 = arith.constant 0 : index
    %c1_29 = arith.constant 1 : index
    %c0_30 = arith.constant 0 : index
    %c0_31 = arith.constant 0 : index
    %33 = vector.load %arg10[%c0_28, %c1_29, %c0_30, %c0_31] : memref<1x4x2x8xf32, #tpu.memory_space<vmem>>, vector<1x1x2x8xf32>
    %34 = vector.shape_cast %33 : vector<1x1x2x8xf32> to vector<2x8xf32>
    %35 = vector.shape_cast %32 : vector<2x8xf32> to vector<1x1x2x8xf32>
    tpu.vector_store %arg10[%c0_28, %c1_29, %c0_30, %c0_31], %35 {strides = array<i32>} : memref<1x4x2x8xf32, #tpu.memory_space<vmem>>, vector<1x1x2x8xf32>,
    %36 = vector.extract_strided_slice %27 {offsets = [0, 16], sizes = [2, 8], strides = [1, 1]} : vector<2x32xf32> to vector<2x8xf32>
    %c0_32 = arith.constant 0 : index
    %c2_33 = arith.constant 2 : index
    %c0_34 = arith.constant 0 : index
    %c0_35 = arith.constant 0 : index
    %37 = vector.load %arg10[%c0_32, %c2_33, %c0_34, %c0_35] : memref<1x4x2x8xf32, #tpu.memory_space<vmem>>, vector<1x1x2x8xf32>
    %38 = vector.shape_cast %37 : vector<1x1x2x8xf32> to vector<2x8xf32>
    %39 = vector.shape_cast %36 : vector<2x8xf32> to vector<1x1x2x8xf32>
    tpu.vector_store %arg10[%c0_32, %c2_33, %c0_34, %c0_35], %39 {strides = array<i32>} : memref<1x4x2x8xf32, #tpu.memory_space<vmem>>, vector<1x1x2x8xf32>,
    %40 = vector.extract_strided_slice %27 {offsets = [0, 24], sizes = [2, 8], strides = [1, 1]} : vector<2x32xf32> to vector<2x8xf32>
    %c0_36 = arith.constant 0 : index
    %c3_37 = arith.constant 3 : index
    %c0_38 = arith.constant 0 : index
    %c0_39 = arith.constant 0 : index
    %41 = vector.load %arg10[%c0_36, %c3_37, %c0_38, %c0_39] : memref<1x4x2x8xf32, #tpu.memory_space<vmem>>, vector<1x1x2x8xf32>
    %42 = vector.shape_cast %41 : vector<1x1x2x8xf32> to vector<2x8xf32>
    %43 = vector.shape_cast %40 : vector<2x8xf32> to vector<1x1x2x8xf32>
    tpu.vector_store %arg10[%c0_36, %c3_37, %c0_38, %c0_39], %43 {strides = array<i32>} : memref<1x4x2x8xf32, #tpu.memory_space<vmem>>, vector<1x1x2x8xf32>,
    %c0_40 = arith.constant 0 : index
    %c0_41 = arith.constant 0 : index
    %44 = vector.load %arg5[%c0_40, %c0_41] : memref<32x32xf32, #tpu.memory_space<vmem>>, vector<32x32xf32>
    %cst_42 = arith.constant dense<0.000000e+00> : vector<2x32xf32>
    %45 = tpu.matmul %1, %44, %cst_42 {dimension_numbers = #tpu.dot_dimension_numbers<[1], [0], [0], [1], [0, 0, 1, 1], [], []>} : vector<2x32xf32>, vector<32x32xf32>, vector<2x32xf32> -> vector<2x32xf32>
    %c0_43 = arith.constant 0 : index
    %c0_44 = arith.constant 0 : index
    %46 = vector.load %arg8[%c0_43, %c0_44] : memref<1x32xf32, #tpu.memory_space<vmem>>, vector<1x32xf32>
    %47 = vector.broadcast %46 : vector<1x32xf32> to vector<2x32xf32>
    %48 = arith.addf %45, %47 : vector<2x32xf32>
    %49 = vector.extract_strided_slice %48 {offsets = [0, 0], sizes = [2, 8], strides = [1, 1]} : vector<2x32xf32> to vector<2x8xf32>
    %c0_45 = arith.constant 0 : index
    %c0_46 = arith.constant 0 : index
    %c0_47 = arith.constant 0 : index
    %c0_48 = arith.constant 0 : index
    %50 = vector.load %arg11[%c0_45, %c0_46, %c0_47, %c0_48] : memref<1x4x2x8xf32, #tpu.memory_space<vmem>>, vector<1x1x2x8xf32>
    %51 = vector.shape_cast %50 : vector<1x1x2x8xf32> to vector<2x8xf32>
    %52 = vector.shape_cast %49 : vector<2x8xf32> to vector<1x1x2x8xf32>
    tpu.vector_store %arg11[%c0_45, %c0_46, %c0_47, %c0_48], %52 {strides = array<i32>} : memref<1x4x2x8xf32, #tpu.memory_space<vmem>>, vector<1x1x2x8xf32>,
    %53 = vector.extract_strided_slice %48 {offsets = [0, 8], sizes = [2, 8], strides = [1, 1]} : vector<2x32xf32> to vector<2x8xf32>
    %c0_49 = arith.constant 0 : index
    %c1_50 = arith.constant 1 : index
    %c0_51 = arith.constant 0 : index
    %c0_52 = arith.constant 0 : index
    %54 = vector.load %arg11[%c0_49, %c1_50, %c0_51, %c0_52] : memref<1x4x2x8xf32, #tpu.memory_space<vmem>>, vector<1x1x2x8xf32>
    %55 = vector.shape_cast %54 : vector<1x1x2x8xf32> to vector<2x8xf32>
    %56 = vector.shape_cast %53 : vector<2x8xf32> to vector<1x1x2x8xf32>
    tpu.vector_store %arg11[%c0_49, %c1_50, %c0_51, %c0_52], %56 {strides = array<i32>} : memref<1x4x2x8xf32, #tpu.memory_space<vmem>>, vector<1x1x2x8xf32>,
    %57 = vector.extract_strided_slice %48 {offsets = [0, 16], sizes = [2, 8], strides = [1, 1]} : vector<2x32xf32> to vector<2x8xf32>
    %c0_53 = arith.constant 0 : index
    %c2_54 = arith.constant 2 : index
    %c0_55 = arith.constant 0 : index
    %c0_56 = arith.constant 0 : index
    %58 = vector.load %arg11[%c0_53, %c2_54, %c0_55, %c0_56] : memref<1x4x2x8xf32, #tpu.memory_space<vmem>>, vector<1x1x2x8xf32>
    %59 = vector.shape_cast %58 : vector<1x1x2x8xf32> to vector<2x8xf32>
    %60 = vector.shape_cast %57 : vector<2x8xf32> to vector<1x1x2x8xf32>
    tpu.vector_store %arg11[%c0_53, %c2_54, %c0_55, %c0_56], %60 {strides = array<i32>} : memref<1x4x2x8xf32, #tpu.memory_space<vmem>>, vector<1x1x2x8xf32>,
    %61 = vector.extract_strided_slice %48 {offsets = [0, 24], sizes = [2, 8], strides = [1, 1]} : vector<2x32xf32> to vector<2x8xf32>
    %c0_57 = arith.constant 0 : index
    %c3_58 = arith.constant 3 : index
    %c0_59 = arith.constant 0 : index
    %c0_60 = arith.constant 0 : index
    %62 = vector.load %arg11[%c0_57, %c3_58, %c0_59, %c0_60] : memref<1x4x2x8xf32, #tpu.memory_space<vmem>>, vector<1x1x2x8xf32>
    %63 = vector.shape_cast %62 : vector<1x1x2x8xf32> to vector<2x8xf32>
    %64 = vector.shape_cast %61 : vector<2x8xf32> to vector<1x1x2x8xf32>
    tpu.vector_store %arg11[%c0_57, %c3_58, %c0_59, %c0_60], %64 {strides = array<i32>} : memref<1x4x2x8xf32, #tpu.memory_space<vmem>>, vector<1x1x2x8xf32>,
    return
  }
  func.func @transform_0(%arg0: i32, %arg1: i32) -> (i32, i32, i32) {
    %c0_i32 = arith.constant 0 : i32
    %c0_i32_0 = arith.constant 0 : i32
    return %arg0, %arg1, %c0_i32 : i32, i32, i32
  }
  func.func @transform_1(%arg0: i32, %arg1: i32) -> (i32, i32) {
    %c0_i32 = arith.constant 0 : i32
    %c0_i32_0 = arith.constant 0 : i32
    %c0_i32_1 = arith.constant 0 : i32
    return %c0_i32, %c0_i32_0 : i32, i32
  }
  func.func @transform_2(%arg0: i32, %arg1: i32) -> (i32, i32) {
    %c0_i32 = arith.constant 0 : i32
    %c0_i32_0 = arith.constant 0 : i32
    %c0_i32_1 = arith.constant 0 : i32
    return %c0_i32, %c0_i32_0 : i32, i32
  }
  func.func @transform_3(%arg0: i32, %arg1: i32) -> (i32, i32) {
    %c0_i32 = arith.constant 0 : i32
    %c0_i32_0 = arith.constant 0 : i32
    %c0_i32_1 = arith.constant 0 : i32
    return %c0_i32, %c0_i32_0 : i32, i32
  }
  func.func @transform_4(%arg0: i32, %arg1: i32) -> (i32, i32) {
    %c0_i32 = arith.constant 0 : i32
    %c0_i32_0 = arith.constant 0 : i32
    %c0_i32_1 = arith.constant 0 : i32
    return %c0_i32, %c0_i32_0 : i32, i32
  }
  func.func @transform_5(%arg0: i32, %arg1: i32) -> (i32, i32) {
    %c0_i32 = arith.constant 0 : i32
    %c0_i32_0 = arith.constant 0 : i32
    %c0_i32_1 = arith.constant 0 : i32
    return %c0_i32, %c0_i32_0 : i32, i32
  }
  func.func @transform_6(%arg0: i32, %arg1: i32) -> (i32, i32) {
    %c0_i32 = arith.constant 0 : i32
    %c0_i32_0 = arith.constant 0 : i32
    %c0_i32_1 = arith.constant 0 : i32
    return %c0_i32, %c0_i32_0 : i32, i32
  }
  func.func @transform_7(%arg0: i32, %arg1: i32) -> (i32, i32, i32, i32) {
    %c0_i32 = arith.constant 0 : i32
    %c0_i32_0 = arith.constant 0 : i32
    %c0_i32_1 = arith.constant 0 : i32
    return %arg0, %c0_i32, %arg1, %c0_i32_0 : i32, i32, i32, i32
  }
  func.func @transform_8(%arg0: i32, %arg1: i32) -> (i32, i32, i32, i32) {
    %c0_i32 = arith.constant 0 : i32
    %c0_i32_0 = arith.constant 0 : i32
    %c0_i32_1 = arith.constant 0 : i32
    return %arg0, %c0_i32, %arg1, %c0_i32_0 : i32, i32, i32, i32
  }
  func.func @transform_9(%arg0: i32, %arg1: i32) -> (i32, i32, i32, i32) {
    %c0_i32 = arith.constant 0 : i32
    %c0_i32_0 = arith.constant 0 : i32
    %c0_i32_1 = arith.constant 0 : i32
    return %arg0, %c0_i32, %arg1, %c0_i32_0 : i32, i32, i32, i32
  }
}

module attributes {stable_mosaic.version = 11 : i64} {
  func.func @_flash_attn_kernel(%arg0: i32, %arg1: i32, %arg2: i32, %arg3: memref<1x4x2x8xf32, #tpu.memory_space<vmem>>, %arg4: memref<1x4x2x8xf32, #tpu.memory_space<vmem>>, %arg5: memref<1x4x2x8xf32, #tpu.memory_space<vmem>>, %arg6: memref<32x32xf32, #tpu.memory_space<vmem>>, %arg7: memref<1x2x32xf32, #tpu.memory_space<vmem>>, %arg8: memref<4x2x1xf32, #tpu.memory_space<vmem>>, %arg9: memref<4x2x1xf32, #tpu.memory_space<vmem>>, %arg10: memref<4x2x8xf32, #tpu.memory_space<vmem>>) attributes {dimension_semantics = [#tpu.dimension_semantics<parallel>, #tpu.dimension_semantics<parallel>, #tpu.dimension_semantics<arbitrary>], iteration_bounds = array<i64: 2, 1, 1>, scalar_prefetch = 0 : i64, scratch_operands = 3 : i64, tpu.core_type = #tpu.core_type<tc>, window_params = [{transform_indices = @transform_0, window_bounds = array<i64: 1, 4, 2, 8>}, {transform_indices = @transform_1, window_bounds = array<i64: 1, 4, 2, 8>}, {transform_indices = @transform_2, window_bounds = array<i64: 1, 4, 2, 8>}, {pipeline_mode = #tpu.pipeline_mode<synchronous>, transform_indices = @transform_3, window_bounds = array<i64: 32, 32>}, {transform_indices = @transform_4, window_bounds = array<i64: 1, 2, 32>}]} {
    %c0_i32 = arith.constant 0 : i32
    %0 = arith.cmpi eq, %arg2, %c0_i32 : i32
    %1 = arith.extui %0 : i1 to i32
    %c0_i32_0 = arith.constant 0 : i32
    %2 = arith.cmpi ne, %1, %c0_i32_0 : i32
    scf.if %2 {
      %cst = arith.constant -1.000000e+30 : f32
      %9 = vector.broadcast %cst : f32 to vector<4x2x1xf32>
      %c0 = arith.constant 0 : index
      %c0_4 = arith.constant 0 : index
      %c0_5 = arith.constant 0 : index
      %10 = vector.load %arg8[%c0, %c0_4, %c0_5] : memref<4x2x1xf32, #tpu.memory_space<vmem>>, vector<4x2x1xf32>
      tpu.vector_store %arg8[%c0, %c0_4, %c0_5], %9 {strides = array<i32>} : memref<4x2x1xf32, #tpu.memory_space<vmem>>, vector<4x2x1xf32>,
      %cst_6 = arith.constant 0.000000e+00 : f32
      %11 = vector.broadcast %cst_6 : f32 to vector<4x2x1xf32>
      %c0_7 = arith.constant 0 : index
      %c0_8 = arith.constant 0 : index
      %c0_9 = arith.constant 0 : index
      %12 = vector.load %arg9[%c0_7, %c0_8, %c0_9] : memref<4x2x1xf32, #tpu.memory_space<vmem>>, vector<4x2x1xf32>
      tpu.vector_store %arg9[%c0_7, %c0_8, %c0_9], %11 {strides = array<i32>} : memref<4x2x1xf32, #tpu.memory_space<vmem>>, vector<4x2x1xf32>,
      %cst_10 = arith.constant 0.000000e+00 : f32
      %13 = vector.broadcast %cst_10 : f32 to vector<4x2x8xf32>
      %c0_11 = arith.constant 0 : index
      %c0_12 = arith.constant 0 : index
      %c0_13 = arith.constant 0 : index
      %14 = vector.load %arg10[%c0_11, %c0_12, %c0_13] : memref<4x2x8xf32, #tpu.memory_space<vmem>>, vector<4x2x8xf32>
      tpu.vector_store %arg10[%c0_11, %c0_12, %c0_13], %13 {strides = array<i32>} : memref<4x2x8xf32, #tpu.memory_space<vmem>>, vector<4x2x8xf32>,
    } else {
    }
    %3 = arith.cmpi sle, %arg2, %arg1 : i32
    %4 = arith.extui %3 : i1 to i32
    %c0_i32_1 = arith.constant 0 : i32
    %5 = arith.cmpi ne, %4, %c0_i32_1 : i32
    scf.if %5 {
      %c0 = arith.constant 0 : index
      %c0_4 = arith.constant 0 : index
      %c0_5 = arith.constant 0 : index
      %c0_6 = arith.constant 0 : index
      %9 = vector.load %arg3[%c0, %c0_4, %c0_5, %c0_6] : memref<1x4x2x8xf32, #tpu.memory_space<vmem>>, vector<1x4x2x8xf32>
      %10 = vector.shape_cast %9 : vector<1x4x2x8xf32> to vector<4x2x8xf32>
      %c0_7 = arith.constant 0 : index
      %c0_8 = arith.constant 0 : index
      %c0_9 = arith.constant 0 : index
      %c0_10 = arith.constant 0 : index
      %11 = vector.load %arg4[%c0_7, %c0_8, %c0_9, %c0_10] : memref<1x4x2x8xf32, #tpu.memory_space<vmem>>, vector<1x4x2x8xf32>
      %12 = vector.shape_cast %11 : vector<1x4x2x8xf32> to vector<4x2x8xf32>
      %c0_11 = arith.constant 0 : index
      %c0_12 = arith.constant 0 : index
      %c0_13 = arith.constant 0 : index
      %c0_14 = arith.constant 0 : index
      %13 = vector.load %arg5[%c0_11, %c0_12, %c0_13, %c0_14] : memref<1x4x2x8xf32, #tpu.memory_space<vmem>>, vector<1x4x2x8xf32>
      %14 = vector.shape_cast %13 : vector<1x4x2x8xf32> to vector<4x2x8xf32>
      "tpu.trace_start"() <{level = 10 : i32, message = "hqd,hkd->hqk"}> : () -> ()
      %cst = arith.constant dense<0.000000e+00> : vector<4x2x2xf32>
      %15 = tpu.matmul %10, %12, %cst {dimension_numbers = #tpu.dot_dimension_numbers<[2], [2], [1], [1], [0, 0, 0, 1, 1, 1], [0], [0]>} : vector<4x2x8xf32>, vector<4x2x8xf32>, vector<4x2x2xf32> -> vector<4x2x2xf32>
      "tpu.trace_stop"() : () -> ()
      %16 = tpu.iota {dimensions = array<i32: 0>} : vector<2x2xi32>
      %c2_i32 = arith.constant 2 : i32
      %17 = arith.muli %arg1, %c2_i32 : i32
      %18 = vector.broadcast %17 : i32 to vector<2x2xi32>
      %19 = arith.addi %16, %18 : vector<2x2xi32>
      %20 = tpu.iota {dimensions = array<i32: 1>} : vector<2x2xi32>
      %c2_i32_15 = arith.constant 2 : i32
      %21 = arith.muli %arg2, %c2_i32_15 : i32
      %22 = vector.broadcast %21 : i32 to vector<2x2xi32>
      %23 = arith.addi %20, %22 : vector<2x2xi32>
      %24 = arith.cmpi sle, %23, %19 : vector<2x2xi32>
      %25 = vector.shape_cast %24 : vector<2x2xi1> to vector<1x2x2xi1>
      %cst_16 = arith.constant -1.000000e+30 : f32
      %26 = vector.shape_cast %25 : vector<1x2x2xi1> to vector<1x2x2xi1>
      %27 = vector.broadcast %26 : vector<1x2x2xi1> to vector<4x2x2xi1>
      %28 = vector.broadcast %cst_16 : f32 to vector<4x2x2xf32>
      %29 = arith.select %27, %15, %28 : vector<4x2x2xi1>, vector<4x2x2xf32>
      %c0_17 = arith.constant 0 : index
      %c0_18 = arith.constant 0 : index
      %c0_19 = arith.constant 0 : index
      %30 = vector.load %arg8[%c0_17, %c0_18, %c0_19] : memref<4x2x1xf32, #tpu.memory_space<vmem>>, vector<4x2x1xf32>
      %cst_20 = arith.constant dense<0xFF800000> : vector<4x2xf32>
      %31 = vector.multi_reduction <maximumf>, %29, %cst_20 [2] : vector<4x2x2xf32> to vector<4x2xf32>
      %32 = vector.shape_cast %31 : vector<4x2xf32> to vector<4x2x1xf32>
      %33 = arith.maximumf %30, %32 : vector<4x2x1xf32>
      %34 = arith.subf %30, %33 : vector<4x2x1xf32>
      %35 = math.exp %34 : vector<4x2x1xf32>
      %36 = vector.broadcast %33 : vector<4x2x1xf32> to vector<4x2x2xf32>
      %37 = arith.subf %29, %36 : vector<4x2x2xf32>
      %38 = math.exp %37 : vector<4x2x2xf32>
      %c0_21 = arith.constant 0 : index
      %c0_22 = arith.constant 0 : index
      %c0_23 = arith.constant 0 : index
      %39 = vector.load %arg9[%c0_21, %c0_22, %c0_23] : memref<4x2x1xf32, #tpu.memory_space<vmem>>, vector<4x2x1xf32>
      %40 = arith.mulf %35, %39 : vector<4x2x1xf32>
      %cst_24 = arith.constant dense<0.000000e+00> : vector<4x2xf32>
      %41 = vector.multi_reduction <add>, %38, %cst_24 [2] : vector<4x2x2xf32> to vector<4x2xf32>
      %42 = vector.shape_cast %41 : vector<4x2xf32> to vector<4x2x1xf32>
      %43 = arith.addf %40, %42 : vector<4x2x1xf32>
      %c0_25 = arith.constant 0 : index
      %c0_26 = arith.constant 0 : index
      %c0_27 = arith.constant 0 : index
      %44 = vector.load %arg9[%c0_25, %c0_26, %c0_27] : memref<4x2x1xf32, #tpu.memory_space<vmem>>, vector<4x2x1xf32>
      tpu.vector_store %arg9[%c0_25, %c0_26, %c0_27], %43 {strides = array<i32>} : memref<4x2x1xf32, #tpu.memory_space<vmem>>, vector<4x2x1xf32>,
      %c0_28 = arith.constant 0 : index
      %c0_29 = arith.constant 0 : index
      %c0_30 = arith.constant 0 : index
      %45 = vector.load %arg10[%c0_28, %c0_29, %c0_30] : memref<4x2x8xf32, #tpu.memory_space<vmem>>, vector<4x2x8xf32>
      %46 = vector.broadcast %35 : vector<4x2x1xf32> to vector<4x2x8xf32>
      %47 = arith.mulf %46, %45 : vector<4x2x8xf32>
      "tpu.trace_start"() <{level = 10 : i32, message = "hqk,hkd->hqd"}> : () -> ()
      %cst_31 = arith.constant dense<0.000000e+00> : vector<4x2x8xf32>
      %48 = tpu.matmul %38, %14, %cst_31 {dimension_numbers = #tpu.dot_dimension_numbers<[2], [1], [1], [2], [0, 0, 0, 1, 1, 2], [0], [0]>} : vector<4x2x2xf32>, vector<4x2x8xf32>, vector<4x2x8xf32> -> vector<4x2x8xf32>
      "tpu.trace_stop"() : () -> ()
      %49 = arith.addf %47, %48 : vector<4x2x8xf32>
      %c0_32 = arith.constant 0 : index
      %c0_33 = arith.constant 0 : index
      %c0_34 = arith.constant 0 : index
      %50 = vector.load %arg10[%c0_32, %c0_33, %c0_34] : memref<4x2x8xf32, #tpu.memory_space<vmem>>, vector<4x2x8xf32>
      tpu.vector_store %arg10[%c0_32, %c0_33, %c0_34], %49 {strides = array<i32>} : memref<4x2x8xf32, #tpu.memory_space<vmem>>, vector<4x2x8xf32>,
      %c0_35 = arith.constant 0 : index
      %c0_36 = arith.constant 0 : index
      %c0_37 = arith.constant 0 : index
      %51 = vector.load %arg8[%c0_35, %c0_36, %c0_37] : memref<4x2x1xf32, #tpu.memory_space<vmem>>, vector<4x2x1xf32>
      tpu.vector_store %arg8[%c0_35, %c0_36, %c0_37], %33 {strides = array<i32>} : memref<4x2x1xf32, #tpu.memory_space<vmem>>, vector<4x2x1xf32>,
    } else {
    }
    %c0_i32_2 = arith.constant 0 : i32
    %6 = arith.cmpi eq, %arg2, %c0_i32_2 : i32
    %7 = arith.extui %6 : i1 to i32
    %c0_i32_3 = arith.constant 0 : i32
    %8 = arith.cmpi ne, %7, %c0_i32_3 : i32
    scf.if %8 {
      %c0 = arith.constant 0 : index
      %c0_4 = arith.constant 0 : index
      %c0_5 = arith.constant 0 : index
      %9 = vector.load %arg9[%c0, %c0_4, %c0_5] : memref<4x2x1xf32, #tpu.memory_space<vmem>>, vector<4x2x1xf32>
      %10 = tpu.reciprocal %9 {approx = true} : vector<4x2x1xf32> -> vector<4x2x1xf32>
      %c0_6 = arith.constant 0 : index
      %c0_7 = arith.constant 0 : index
      %c0_8 = arith.constant 0 : index
      %11 = vector.load %arg10[%c0_6, %c0_7, %c0_8] : memref<4x2x8xf32, #tpu.memory_space<vmem>>, vector<4x2x8xf32>
      %12 = vector.broadcast %10 : vector<4x2x1xf32> to vector<4x2x8xf32>
      %13 = arith.mulf %11, %12 : vector<4x2x8xf32>
      %cst = arith.constant 0.000000e+00 : f32
      %14 = vector.broadcast %cst : f32 to vector<2x32xf32>
      %15 = vector.extract_strided_slice %13 {offsets = [0, 0, 0], sizes = [1, 2, 8], strides = [1, 1, 1]} : vector<4x2x8xf32> to vector<1x2x8xf32>
      %16 = vector.shape_cast %15 : vector<1x2x8xf32> to vector<2x8xf32>
      %c0_9 = arith.constant 0 : index
      %c0_10 = arith.constant 0 : index
      %17 = vector.load %arg6[%c0_9, %c0_10] : memref<32x32xf32, #tpu.memory_space<vmem>>, vector<8x32xf32>
      %cst_11 = arith.constant dense<0.000000e+00> : vector<2x32xf32>
      %18 = tpu.matmul %16, %17, %cst_11 {dimension_numbers = #tpu.dot_dimension_numbers<[1], [0], [0], [1], [0, 0, 1, 1], [], []>} : vector<2x8xf32>, vector<8x32xf32>, vector<2x32xf32> -> vector<2x32xf32>
      %19 = arith.addf %14, %18 : vector<2x32xf32>
      %20 = vector.extract_strided_slice %13 {offsets = [1, 0, 0], sizes = [1, 2, 8], strides = [1, 1, 1]} : vector<4x2x8xf32> to vector<1x2x8xf32>
      %21 = vector.shape_cast %20 : vector<1x2x8xf32> to vector<2x8xf32>
      %c8 = arith.constant 8 : index
      %c0_12 = arith.constant 0 : index
      %22 = vector.load %arg6[%c8, %c0_12] : memref<32x32xf32, #tpu.memory_space<vmem>>, vector<8x32xf32>
      %cst_13 = arith.constant dense<0.000000e+00> : vector<2x32xf32>
      %23 = tpu.matmul %21, %22, %cst_13 {dimension_numbers = #tpu.dot_dimension_numbers<[1], [0], [0], [1], [0, 0, 1, 1], [], []>} : vector<2x8xf32>, vector<8x32xf32>, vector<2x32xf32> -> vector<2x32xf32>
      %24 = arith.addf %19, %23 : vector<2x32xf32>
      %25 = vector.extract_strided_slice %13 {offsets = [2, 0, 0], sizes = [1, 2, 8], strides = [1, 1, 1]} : vector<4x2x8xf32> to vector<1x2x8xf32>
      %26 = vector.shape_cast %25 : vector<1x2x8xf32> to vector<2x8xf32>
      %c16 = arith.constant 16 : index
      %c0_14 = arith.constant 0 : index
      %27 = vector.load %arg6[%c16, %c0_14] : memref<32x32xf32, #tpu.memory_space<vmem>>, vector<8x32xf32>
      %cst_15 = arith.constant dense<0.000000e+00> : vector<2x32xf32>
      %28 = tpu.matmul %26, %27, %cst_15 {dimension_numbers = #tpu.dot_dimension_numbers<[1], [0], [0], [1], [0, 0, 1, 1], [], []>} : vector<2x8xf32>, vector<8x32xf32>, vector<2x32xf32> -> vector<2x32xf32>
      %29 = arith.addf %24, %28 : vector<2x32xf32>
      %30 = vector.extract_strided_slice %13 {offsets = [3, 0, 0], sizes = [1, 2, 8], strides = [1, 1, 1]} : vector<4x2x8xf32> to vector<1x2x8xf32>
      %31 = vector.shape_cast %30 : vector<1x2x8xf32> to vector<2x8xf32>
      %c24 = arith.constant 24 : index
      %c0_16 = arith.constant 0 : index
      %32 = vector.load %arg6[%c24, %c0_16] : memref<32x32xf32, #tpu.memory_space<vmem>>, vector<8x32xf32>
      %cst_17 = arith.constant dense<0.000000e+00> : vector<2x32xf32>
      %33 = tpu.matmul %31, %32, %cst_17 {dimension_numbers = #tpu.dot_dimension_numbers<[1], [0], [0], [1], [0, 0, 1, 1], [], []>} : vector<2x8xf32>, vector<8x32xf32>, vector<2x32xf32> -> vector<2x32xf32>
      %34 = arith.addf %29, %33 : vector<2x32xf32>
      %c0_18 = arith.constant 0 : index
      %c0_19 = arith.constant 0 : index
      %c0_20 = arith.constant 0 : index
      %35 = vector.load %arg7[%c0_18, %c0_19, %c0_20] : memref<1x2x32xf32, #tpu.memory_space<vmem>>, vector<1x2x32xf32>
      %36 = vector.shape_cast %35 : vector<1x2x32xf32> to vector<2x32xf32>
      %37 = vector.shape_cast %34 : vector<2x32xf32> to vector<1x2x32xf32>
      tpu.vector_store %arg7[%c0_18, %c0_19, %c0_20], %37 {strides = array<i32>} : memref<1x2x32xf32, #tpu.memory_space<vmem>>, vector<1x2x32xf32>,
    } else {
    }
    return
  }
  func.func @transform_0(%arg0: i32, %arg1: i32, %arg2: i32) -> (i32, i32, i32, i32) {
    %c0_i32 = arith.constant 0 : i32
    %c0_i32_0 = arith.constant 0 : i32
    %c0_i32_1 = arith.constant 0 : i32
    return %arg0, %c0_i32, %arg1, %c0_i32_0 : i32, i32, i32, i32
  }
  func.func @transform_1(%arg0: i32, %arg1: i32, %arg2: i32) -> (i32, i32, i32, i32) {
    %c0_i32 = arith.constant 0 : i32
    %c0_i32_0 = arith.constant 0 : i32
    %c0_i32_1 = arith.constant 0 : i32
    return %arg0, %c0_i32, %arg2, %c0_i32_0 : i32, i32, i32, i32
  }
  func.func @transform_2(%arg0: i32, %arg1: i32, %arg2: i32) -> (i32, i32, i32, i32) {
    %c0_i32 = arith.constant 0 : i32
    %c0_i32_0 = arith.constant 0 : i32
    %c0_i32_1 = arith.constant 0 : i32
    return %arg0, %c0_i32, %arg2, %c0_i32_0 : i32, i32, i32, i32
  }
  func.func @transform_3(%arg0: i32, %arg1: i32, %arg2: i32) -> (i32, i32) {
    %c0_i32 = arith.constant 0 : i32
    %c0_i32_0 = arith.constant 0 : i32
    %c0_i32_1 = arith.constant 0 : i32
    return %c0_i32, %c0_i32_0 : i32, i32
  }
  func.func @transform_4(%arg0: i32, %arg1: i32, %arg2: i32) -> (i32, i32, i32) {
    %c0_i32 = arith.constant 0 : i32
    %c0_i32_0 = arith.constant 0 : i32
    return %arg0, %arg1, %c0_i32 : i32, i32, i32
  }
}

</mosaic_0001>

<llo_original>
// kernel: multi_scale_attention.6
$region0: #{multi_scale_attention.6}
  #allocation0 [shape = 'u32[]', space=smem, size = 0x4, offset = 0x4, fixed_abs, tag = 'smem constant byte address 0x4 - core index']
  #allocation1 [shape = 'u32[144,128]{1,0:T(1,128)}', space=vmem, size = 0x12000, scoped, tag = 'internal scratch']
  %s0 = inlined_call_operand.vmem [shape: f32[2,8,32], index: 0, kind: input, shape index: {}]
  %s1 = inlined_call_operand.vmem [shape: f32[32,32], index: 1, kind: input, shape index: {}]
  %s2 = inlined_call_operand.vmem [shape: f32[32,32], index: 2, kind: input, shape index: {}]
  %s3 = inlined_call_operand.vmem [shape: f32[32,32], index: 3, kind: input, shape index: {}]
  %s4 = inlined_call_operand.vmem [shape: f32[1,32], index: 4, kind: input, shape index: {}]
  %s5 = inlined_call_operand.vmem [shape: f32[1,32], index: 5, kind: input, shape index: {}]
  %s6 = inlined_call_operand.vmem [shape: f32[1,32], index: 6, kind: input, shape index: {}]
  %s7 = inlined_call_operand.vmem [shape: f32[2,4,8,8], index: 7, kind: output, shape index: {0}]
  %s8 = inlined_call_operand.vmem [shape: f32[2,4,8,8], index: 8, kind: output, shape index: {1}]
  %s9 = inlined_call_operand.vmem [shape: f32[2,4,8,8], index: 9, kind: output, shape index: {2}]
  %10 = xla_tuple %s7, %s8, %s9
  %s11 = sld [smem:[#allocation0]]
  $region77: #{multi_scale_attention.6} parent=0
    _
  %s13 = ssub.s32 1, %s11
  %s14 = scalar_select 0, %s13, %s11
  loop: start=0, step=1, limit=4
  $region2: #{multi_scale_attention.6} parent=0 // loop_pre_header
    _
  $region3: #{multi_scale_attention.6} parent=0 // loop_header
    %s16 = sphi 0, %s20
    %p17 = scmp.ge.s32.totalorder %s16, 4
    %s23 = sphi 0, %s35
    %s24 = sphi 0, %s31
    %s25 = sphi 0, %s23
    %s26 = sphi 0, %s24
    %s27 = sphi 0, %s25
    %s28 = sphi 0, %s26
    %s40 = sphi 0, %s42
    %s43 = sphi 0, %s40
    %s44 = sphi 0, %s43
    %s60 = sphi 0, %s44
    %s64 = sphi 0, %s64
    %s66 = sphi 0, %s64
    %s67 = sphi 0, %s66
    %s81 = sphi 0, %s67
    %s85 = sphi 0, %s85
    %s87 = sphi 0, %s85
    %s88 = sphi 0, %s87
    %s102 = sphi 0, %s88
    %s106 = sphi 0, %s106
    %s108 = sphi 0, %s106
    %s109 = sphi 0, %s108
    %s123 = sphi 0, %s109
    %s127 = sphi 0, %s127
    %s129 = sphi 0, %s127
    %s130 = sphi 0, %s129
    %s144 = sphi 0, %s130
    %s148 = sphi 0, %s148
    %s150 = sphi 0, %s148
    %s151 = sphi 0, %s150
    %s165 = sphi 0, %s151
    %s169 = sphi 0, %s169
    %s171 = sphi 0, %s169
    %s172 = sphi 0, %s171
    %s186 = sphi 0, %s172
    %s194 = sphi 0, %s196
    %s197 = sphi 0, %s194
    %s198 = sphi 0, %s197
    %s214 = sphi 0, %s198
    %s222 = sphi 0, %s224
    %s225 = sphi 0, %s222
    %s226 = sphi 0, %s225
    %s242 = sphi 0, %s226
    %s250 = sphi 0, %s252
    %s253 = sphi 0, %s250
    %s254 = sphi 0, %s253
    %s270 = sphi 0, %s254
  $region4: #{multi_scale_attention.6} parent=0 // loop_header_branch
    %19 = sbr.rel (%p17) target = $region8
  $region5: #{multi_scale_attention.6} parent=0 // loop_body
    %s21 = ssub.s32 %s16, 1
    %s22 = ssub.s32 %s16, 2
    %s29 = sadd.s32 1, %s24
    %p30 = scmp.ge.s32.totalorder %s29, 1
    %s31 = scalar_select %p30, 0, %s29
    %s32 = sadd.s32 1, %s23
    %s33 = scalar_select %p30, %s32, %s23
    %p34 = scmp.ge.s32.totalorder %s33, 2
    %s35 = scalar_select %p34, 0, %s33
    %s36 = ssub.s32 %s23, %s35
    %s37 = ssub.s32 %s24, %s31
    %s38 = sor.u32 %s36, %s37
    %p39 = scmp.eq.s32.totalorder %s38, 0
    %s41 = sadd.s32 %s40, 1
    %s42 = scalar_select %p39, %s40, %s41
    %p45 = pneg %p39
    %p46 = scmp.eq.s32.totalorder %s16, 1
    %p47 = por %p45, %p46
    %p48 = scmp.ne.s32.totalorder %s40, %s43
    %p49 = scmp.eq.s32.totalorder %s16, 0
    %p50 = por %p48, %p49
    %p51 = scmp.ne.s32.totalorder %s40, %s43
    %p52 = scmp.eq.s32.totalorder %s21, 1
    %p53 = por %p51, %p52
    %p54 = scmp.ne.s32.totalorder %s43, %s44
    %p55 = scmp.eq.s32.totalorder %s21, 0
    %p56 = por %p54, %p55
    %p57 = scmp.ne.s32.totalorder %s43, %s44
    %p58 = scmp.eq.s32.totalorder %s22, 1
    %p59 = por %p57, %p58
    %p61 = scmp.ne.s32.totalorder %s44, %s60
    %p62 = scmp.eq.s32.totalorder %s22, 0
    %p63 = por %p61, %p62
    %s65 = sadd.s32 %s64, 1
    %p68 = scmp.eq.s32.totalorder %s16, 1
    %p69 = scmp.ne.s32.totalorder %s64, %s66
    %p70 = scmp.eq.s32.totalorder %s16, 0
    %p71 = por %p69, %p70
    %p72 = scmp.ne.s32.totalorder %s64, %s66
    %p73 = scmp.eq.s32.totalorder %s21, 1
    %p74 = por %p72, %p73
    %p75 = scmp.ne.s32.totalorder %s66, %s67
    %p76 = scmp.eq.s32.totalorder %s21, 0
    %p77 = por %p75, %p76
    %p78 = scmp.ne.s32.totalorder %s66, %s67
    %p79 = scmp.eq.s32.totalorder %s22, 1
    %p80 = por %p78, %p79
    %p82 = scmp.ne.s32.totalorder %s67, %s81
    %p83 = scmp.eq.s32.totalorder %s22, 0
    %p84 = por %p82, %p83
    %s86 = sadd.s32 %s85, 1
    %p89 = scmp.eq.s32.totalorder %s16, 1
    %p90 = scmp.ne.s32.totalorder %s85, %s87
    %p91 = scmp.eq.s32.totalorder %s16, 0
    %p92 = por %p90, %p91
    %p93 = scmp.ne.s32.totalorder %s85, %s87
    %p94 = scmp.eq.s32.totalorder %s21, 1
    %p95 = por %p93, %p94
    %p96 = scmp.ne.s32.totalorder %s87, %s88
    %p97 = scmp.eq.s32.totalorder %s21, 0
    %p98 = por %p96, %p97
    %p99 = scmp.ne.s32.totalorder %s87, %s88
    %p100 = scmp.eq.s32.totalorder %s22, 1
    %p101 = por %p99, %p100
    %p103 = scmp.ne.s32.totalorder %s88, %s102
    %p104 = scmp.eq.s32.totalorder %s22, 0
    %p105 = por %p103, %p104
    %s107 = sadd.s32 %s106, 1
    %p110 = scmp.eq.s32.totalorder %s16, 1
    %p111 = scmp.ne.s32.totalorder %s106, %s108
    %p112 = scmp.eq.s32.totalorder %s16, 0
    %p113 = por %p111, %p112
    %p114 = scmp.ne.s32.totalorder %s106, %s108
    %p115 = scmp.eq.s32.totalorder %s21, 1
    %p116 = por %p114, %p115
    %p117 = scmp.ne.s32.totalorder %s108, %s109
    %p118 = scmp.eq.s32.totalorder %s21, 0
    %p119 = por %p117, %p118
    %p120 = scmp.ne.s32.totalorder %s108, %s109
    %p121 = scmp.eq.s32.totalorder %s22, 1
    %p122 = por %p120, %p121
    %p124 = scmp.ne.s32.totalorder %s109, %s123
    %p125 = scmp.eq.s32.totalorder %s22, 0
    %p126 = por %p124, %p125
    %s128 = sadd.s32 %s127, 1
    %p131 = scmp.eq.s32.totalorder %s16, 1
    %p132 = scmp.ne.s32.totalorder %s127, %s129
    %p133 = scmp.eq.s32.totalorder %s16, 0
    %p134 = por %p132, %p133
    %p135 = scmp.ne.s32.totalorder %s127, %s129
    %p136 = scmp.eq.s32.totalorder %s21, 1
    %p137 = por %p135, %p136
    %p138 = scmp.ne.s32.totalorder %s129, %s130
    %p139 = scmp.eq.s32.totalorder %s21, 0
    %p140 = por %p138, %p139
    %p141 = scmp.ne.s32.totalorder %s129, %s130
    %p142 = scmp.eq.s32.totalorder %s22, 1
    %p143 = por %p141, %p142
    %p145 = scmp.ne.s32.totalorder %s130, %s144
    %p146 = scmp.eq.s32.totalorder %s22, 0
    %p147 = por %p145, %p146
    %s149 = sadd.s32 %s148, 1
    %p152 = scmp.eq.s32.totalorder %s16, 1
    %p153 = scmp.ne.s32.totalorder %s148, %s150
    %p154 = scmp.eq.s32.totalorder %s16, 0
    %p155 = por %p153, %p154
    %p156 = scmp.ne.s32.totalorder %s148, %s150
    %p157 = scmp.eq.s32.totalorder %s21, 1
    %p158 = por %p156, %p157
    %p159 = scmp.ne.s32.totalorder %s150, %s151
    %p160 = scmp.eq.s32.totalorder %s21, 0
    %p161 = por %p159, %p160
    %p162 = scmp.ne.s32.totalorder %s150, %s151
    %p163 = scmp.eq.s32.totalorder %s22, 1
    %p164 = por %p162, %p163
    %p166 = scmp.ne.s32.totalorder %s151, %s165
    %p167 = scmp.eq.s32.totalorder %s22, 0
    %p168 = por %p166, %p167
    %s170 = sadd.s32 %s169, 1
    %p173 = scmp.eq.s32.totalorder %s16, 1
    %p174 = scmp.ne.s32.totalorder %s169, %s171
    %p175 = scmp.eq.s32.totalorder %s16, 0
    %p176 = por %p174, %p175
    %p177 = scmp.ne.s32.totalorder %s169, %s171
    %p178 = scmp.eq.s32.totalorder %s21, 1
    %p179 = por %p177, %p178
    %p180 = scmp.ne.s32.totalorder %s171, %s172
    %p181 = scmp.eq.s32.totalorder %s21, 0
    %p182 = por %p180, %p181
    %p183 = scmp.ne.s32.totalorder %s171, %s172
    %p184 = scmp.eq.s32.totalorder %s22, 1
    %p185 = por %p183, %p184
    %p187 = scmp.ne.s32.totalorder %s172, %s186
    %p188 = scmp.eq.s32.totalorder %s22, 0
    %p189 = por %p187, %p188
    %s190 = ssub.s32 %s23, %s35
    %s191 = ssub.s32 %s24, %s31
    %s192 = sor.u32 %s190, %s191
    %p193 = scmp.eq.s32.totalorder %s192, 0
    %s195 = sadd.s32 %s194, 1
    %s196 = scalar_select %p193, %s194, %s195
    %p199 = pneg %p193
    %p200 = scmp.eq.s32.totalorder %s16, 1
    %p201 = por %p199, %p200
    %p202 = scmp.ne.s32.totalorder %s194, %s197
    %p203 = scmp.eq.s32.totalorder %s16, 0
    %p204 = por %p202, %p203
    %p205 = scmp.ne.s32.totalorder %s194, %s197
    %p206 = scmp.eq.s32.totalorder %s21, 1
    %p207 = por %p205, %p206
    %p208 = scmp.ne.s32.totalorder %s197, %s198
    %p209 = scmp.eq.s32.totalorder %s21, 0
    %p210 = por %p208, %p209
    %p211 = scmp.ne.s32.totalorder %s197, %s198
    %p212 = scmp.eq.s32.totalorder %s22, 1
    %p213 = por %p211, %p212
    %p215 = scmp.ne.s32.totalorder %s198, %s214
    %p216 = scmp.eq.s32.totalorder %s22, 0
    %p217 = por %p215, %p216
    %s218 = ssub.s32 %s23, %s35
    %s219 = ssub.s32 %s24, %s31
    %s220 = sor.u32 %s218, %s219
    %p221 = scmp.eq.s32.totalorder %s220, 0
    %s223 = sadd.s32 %s222, 1
    %s224 = scalar_select %p221, %s222, %s223
    %p227 = pneg %p221
    %p228 = scmp.eq.s32.totalorder %s16, 1
    %p229 = por %p227, %p228
    %p230 = scmp.ne.s32.totalorder %s222, %s225
    %p231 = scmp.eq.s32.totalorder %s16, 0
    %p232 = por %p230, %p231
    %p233 = scmp.ne.s32.totalorder %s222, %s225
    %p234 = scmp.eq.s32.totalorder %s21, 1
    %p235 = por %p233, %p234
    %p236 = scmp.ne.s32.totalorder %s225, %s226
    %p237 = scmp.eq.s32.totalorder %s21, 0
    %p238 = por %p236, %p237
    %p239 = scmp.ne.s32.totalorder %s225, %s226
    %p240 = scmp.eq.s32.totalorder %s22, 1
    %p241 = por %p239, %p240
    %p243 = scmp.ne.s32.totalorder %s226, %s242
    %p244 = scmp.eq.s32.totalorder %s22, 0
    %p245 = por %p243, %p244
    %s246 = ssub.s32 %s23, %s35
    %s247 = ssub.s32 %s24, %s31
    %s248 = sor.u32 %s246, %s247
    %p249 = scmp.eq.s32.totalorder %s248, 0
    %s251 = sadd.s32 %s250, 1
    %s252 = scalar_select %p249, %s250, %s251
    %p255 = pneg %p249
    %p256 = scmp.eq.s32.totalorder %s16, 1
    %p257 = por %p255, %p256
    %p258 = scmp.ne.s32.totalorder %s250, %s253
    %p259 = scmp.eq.s32.totalorder %s16, 0
    %p260 = por %p258, %p259
    %p261 = scmp.ne.s32.totalorder %s250, %s253
    %p262 = scmp.eq.s32.totalorder %s21, 1
    %p263 = por %p261, %p262
    %p264 = scmp.ne.s32.totalorder %s253, %s254
    %p265 = scmp.eq.s32.totalorder %s21, 0
    %p266 = por %p264, %p265
    %p267 = scmp.ne.s32.totalorder %s253, %s254
    %p268 = scmp.eq.s32.totalorder %s22, 1
    %p269 = por %p267, %p268
    %p271 = scmp.ne.s32.totalorder %s254, %s270
    %p272 = scmp.eq.s32.totalorder %s22, 0
    %p273 = por %p271, %p272
    %p274 = scmp.le.s32.totalorder 1, %s16
    %p275 = scmp.lt.s32.totalorder %s16, 3
    %p276 = pnand %p274, %p275
    %p277 = pneg %p276
    // Predicated region
    $region9: #{multi_scale_attention.6} parent=5 // pred_check
      _
    $region10: #{multi_scale_attention.6} parent=5 // pred_check_branch
      %279 = sbr.rel (%p276) target = $region12
    $region11: #{multi_scale_attention.6} parent=5 // pred_region
      %s280 = ssub.s32 %s16, 1
      // Predicated region
      $region13: #{multi_scale_attention.6} parent=11 // pred_check
        %p281 = pneg %p77
      $region14: #{multi_scale_attention.6} parent=11 // pred_check_branch
        %283 = sbr.rel (%p281) target = $region16
      $region15: #{multi_scale_attention.6} parent=11 // pred_region
        _
      $region16: #{multi_scale_attention.6} parent=11 // pred_fallthru
        _
      // Predicated region
      $region17: #{multi_scale_attention.6} parent=11 // pred_check
        %p284 = pneg %p98
      $region18: #{multi_scale_attention.6} parent=11 // pred_check_branch
        %286 = sbr.rel (%p284) target = $region20
      $region19: #{multi_scale_attention.6} parent=11 // pred_region
        _
      $region20: #{multi_scale_attention.6} parent=11 // pred_fallthru
        _
      // Predicated region
      $region21: #{multi_scale_attention.6} parent=11 // pred_check
        %p287 = pneg %p119
      $region22: #{multi_scale_attention.6} parent=11 // pred_check_branch
        %289 = sbr.rel (%p287) target = $region24
      $region23: #{multi_scale_attention.6} parent=11 // pred_region
        _
      $region24: #{multi_scale_attention.6} parent=11 // pred_fallthru
        _
      // Predicated region
      $region25: #{multi_scale_attention.6} parent=11 // pred_check
        %p290 = pneg %p140
      $region26: #{multi_scale_attention.6} parent=11 // pred_check_branch
        %292 = sbr.rel (%p290) target = $region28
      $region27: #{multi_scale_attention.6} parent=11 // pred_region
        _
      $region28: #{multi_scale_attention.6} parent=11 // pred_fallthru
        _
      // Predicated region
      $region29: #{multi_scale_attention.6} parent=11 // pred_check
        %p293 = pneg %p161
      $region30: #{multi_scale_attention.6} parent=11 // pred_check_branch
        %295 = sbr.rel (%p293) target = $region32
      $region31: #{multi_scale_attention.6} parent=11 // pred_region
        _
      $region32: #{multi_scale_attention.6} parent=11 // pred_fallthru
        _
      // Predicated region
      $region33: #{multi_scale_attention.6} parent=11 // pred_check
        %p296 = pneg %p182
      $region34: #{multi_scale_attention.6} parent=11 // pred_check_branch
        %298 = sbr.rel (%p296) target = $region36
      $region35: #{multi_scale_attention.6} parent=11 // pred_region
        _
      $region36: #{multi_scale_attention.6} parent=11 // pred_fallthru
        _
    $region12: #{multi_scale_attention.6} parent=5 // pred_fallthru
      _
    %p299 = scmp.lt.s32.totalorder %s16, 2
    // Predicated region
    $region37: #{multi_scale_attention.6} parent=5 // pred_check
      %p300 = pneg %p299
    $region38: #{multi_scale_attention.6} parent=5 // pred_check_branch
      %302 = sbr.rel (%p300) target = $region40
    $region39: #{multi_scale_attention.6} parent=5 // pred_region
      // Predicated region
      $region41: #{multi_scale_attention.6} parent=39 // pred_check
        %p303 = pneg %p50
      $region42: #{multi_scale_attention.6} parent=39 // pred_check_branch
        %305 = sbr.rel (%p303) target = $region44
      $region43: #{multi_scale_attention.6} parent=39 // pred_region
        %p306 = scmp.lt.s32.totalorder %s23, 1
        %s307 = scalar_select %p306, %s23, 1
        %p308 = scmp.lt.s32.totalorder %s24, 0
        %s309 = scalar_select %p308, %s24, 0
        %s310 = sadd.s32 %s309, %s307
        %s311 = smul.addr %s310, 8
        %s312 = scalar_lea.vmem %s0, %s311
      $region44: #{multi_scale_attention.6} parent=39 // pred_fallthru
        _
    $region40: #{multi_scale_attention.6} parent=5 // pred_fallthru
      _
    %p313 = scmp.le.s32.totalorder 1, %s16
    %p314 = scmp.lt.s32.totalorder %s16, 3
    %p315 = pnand %p313, %p314
    %p316 = pneg %p315
    // Predicated region
    $region45: #{multi_scale_attention.6} parent=5 // pred_check
      _
    $region46: #{multi_scale_attention.6} parent=5 // pred_check_branch
      %318 = sbr.rel (%p315) target = $region48
    $region47: #{multi_scale_attention.6} parent=5 // pred_region
      %s319 = ssub.s32 %s16, 1
      %p320 = scmp.lt.s32.totalorder %s25, 1
      %s321 = scalar_select %p320, %s25, 1
      %p322 = scmp.lt.s32.totalorder %s26, 0
      %s323 = scalar_select %p322, %s26, 0
      %s324 = sadd.s32 %s323, %s321
      %s325 = smul.addr %s324, 8
      %s326 = scalar_lea.vmem %s0, %s325
      %p327 = pneg %p56
      %p328 = pneg %p53
      %p329 = pneg %p77
      %p330 = pneg %p74
      %p331 = pneg %p98
      %p332 = pneg %p95
      %p333 = pneg %p119
      %p334 = pneg %p116
      %p335 = pneg %p140
      %p336 = pneg %p137
      %p337 = pneg %p161
      %p338 = pneg %p158
      %p339 = pneg %p182
      %p340 = pneg %p179
      %p341 = pneg %p210
      %p342 = pneg %p207
      %p343 = scmp.lt.s32.totalorder %s25, 1
      %s344 = scalar_select %p343, %s25, 1
      %p345 = scmp.lt.s32.totalorder %s26, 0
      %s346 = scalar_select %p345, %s26, 0
      %s347 = smul.addr %s344, 4
      %s348 = sadd.s32 %s346, %s347
      %s349 = smul.addr %s348, 8
      %s350 = scalar_lea.vmem %s7, %s349
      %p351 = pneg %p238
      %p352 = pneg %p235
      %p353 = scmp.lt.s32.totalorder %s25, 1
      %s354 = scalar_select %p353, %s25, 1
      %p355 = scmp.lt.s32.totalorder %s26, 0
      %s356 = scalar_select %p355, %s26, 0
      %s357 = smul.addr %s354, 4
      %s358 = sadd.s32 %s356, %s357
      %s359 = smul.addr %s358, 8
      %s360 = scalar_lea.vmem %s8, %s359
      %p361 = pneg %p266
      %p362 = pneg %p263
      %p363 = scmp.lt.s32.totalorder %s25, 1
      %s364 = scalar_select %p363, %s25, 1
      %p365 = scmp.lt.s32.totalorder %s26, 0
      %s366 = scalar_select %p365, %s26, 0
      %s367 = smul.addr %s364, 4
      %s368 = sadd.s32 %s366, %s367
      %s369 = smul.addr %s368, 8
      %s370 = scalar_lea.vmem %s9, %s369
      %p371 = scmp.lt.s32.totalorder %s25, 1
      %s372 = scalar_select %p371, %s25, 1
      %p373 = scmp.lt.s32.totalorder %s26, 0
      %s374 = scalar_select %p373, %s26, 0
      %s375 = sadd.s32 %s374, %s372
      %s376 = smul.addr %s375, 8
      %s377 = scalar_lea.vmem %s0, %s376
      %p378 = scmp.lt.s32.totalorder %s25, 1
      %s379 = scalar_select %p378, %s25, 1
      %p380 = scmp.lt.s32.totalorder %s26, 0
      %s381 = scalar_select %p380, %s26, 0
      %s382 = smul.addr %s379, 4
      %s383 = sadd.s32 %s381, %s382
      %s384 = smul.addr %s383, 8
      %s385 = scalar_lea.vmem %s7, %s384
      %p386 = scmp.lt.s32.totalorder %s25, 1
      %s387 = scalar_select %p386, %s25, 1
      %p388 = scmp.lt.s32.totalorder %s26, 0
      %s389 = scalar_select %p388, %s26, 0
      %s390 = smul.addr %s387, 4
      %s391 = sadd.s32 %s389, %s390
      %s392 = smul.addr %s391, 8
      %s393 = scalar_lea.vmem %s8, %s392
      %p394 = scmp.lt.s32.totalorder %s25, 1
      %s395 = scalar_select %p394, %s25, 1
      %p396 = scmp.lt.s32.totalorder %s26, 0
      %s397 = scalar_select %p396, %s26, 0
      %s398 = smul.addr %s395, 4
      %s399 = sadd.s32 %s397, %s398
      %s400 = smul.addr %s399, 8
      %s401 = scalar_lea.vmem %s9, %s400
      %v402 = vld [vmem:[%s377] sm:$0xff]
      %v403 = vld [vmem:[%s1] sm:$0xff]
      %v404 = vld [vmem:[%s1 + $0x8] sm:$0xff]
      %v405 = vld [vmem:[%s1 + $0x10] sm:$0xff]
      %v406 = vld [vmem:[%s1 + $0x18] sm:$0xff]
      %v407 = vld [vmem:[%s4] sm:$0x1]
      %v409 = vlaneseq
      %v410 = vshrl.u32 %v409, 7
      %v411 = vsub.s32 0, %v410
      %v412 = vrot.slane %v407, %v411
      %vm414 = vcmask 261120
      %v416 = vsel %vm414, %v402, 0
      %418 = vmatprep.subr.mxu0 0.0
      %419 = vmatpush1.msra.mxu0 0.0
      %420 = vmatprep.subr.mxu0 0.0
      %421 = vmatpush1.msra.mxu0 0.0
      %422 = vmatprep.subr.mxu0 0.0
      %423 = vmatpush1.msra.mxu0 0.0
      %424 = vmatprep.subr.mxu0 0.0
      %425 = vmatpush1.msra.mxu0 0.0
      %426 = vmatprep.subr.mxu0 0.0
      %427 = vmatpush1.msra.mxu0 0.0
      %428 = vmatprep.subr.mxu0 0.0
      %429 = vmatpush1.msra.mxu0 0.0
      %430 = vmatprep.subr.mxu0 0.0
      %431 = vmatpush1.msra.mxu0 0.0
      %432 = vmatprep.subr.mxu0 0.0
      %433 = vmatpush1.msra.mxu0 0.0
      %434 = vmatprep.subr.mxu0 0.0
      %435 = vmatpush1.msra.mxu0 0.0
      %436 = vmatprep.subr.mxu0 0.0
      %437 = vmatpush1.msra.mxu0 0.0
      %438 = vmatprep.subr.mxu0 0.0
      %439 = vmatpush1.msra.mxu0 0.0
      %440 = vmatprep.subr.mxu0 0.0
      %441 = vmatpush1.msra.mxu0 0.0
      %442 = vmatprep.subr.mxu0 0.0
      %443 = vmatpush1.msra.mxu0 %v406
      %444 = vmatprep.subr.mxu0 0.0
      %445 = vmatpush1.msra.mxu0 %v405
      %446 = vmatprep.subr.mxu0 0.0
      %447 = vmatpush1.msra.mxu0 %v404
      %448 = vmatprep.subr.mxu0 0.0
      %449 = vmatpush1.msra.mxu0 %v403
      %450 = vmatprep.subr.mxu0 0.0
      %451 = vmatpush2.msra.mxu0 0.0
      %452 = vmatprep.subr.mxu0 0.0
      %453 = vmatpush2.msra.mxu0 0.0
      %454 = vmatprep.subr.mxu0 0.0
      %455 = vmatpush2.msra.mxu0 0.0
      %456 = vmatprep.subr.mxu0 0.0
      %457 = vmatpush2.msra.mxu0 0.0
      %458 = vmatprep.subr.mxu0 0.0
      %459 = vmatpush2.msra.mxu0 0.0
      %460 = vmatprep.subr.mxu0 0.0
      %461 = vmatpush2.msra.mxu0 0.0
      %462 = vmatprep.subr.mxu0 0.0
      %463 = vmatpush2.msra.mxu0 0.0
      %464 = vmatprep.subr.mxu0 0.0
      %465 = vmatpush2.msra.mxu0 0.0
      %466 = vmatprep.subr.mxu0 0.0
      %467 = vmatpush2.msra.mxu0 0.0
      %468 = vmatprep.subr.mxu0 0.0
      %469 = vmatpush2.msra.mxu0 0.0
      %470 = vmatprep.subr.mxu0 0.0
      %471 = vmatpush2.msra.mxu0 0.0
      %472 = vmatprep.subr.mxu0 0.0
      %473 = vmatpush2.msra.mxu0 0.0
      %474 = vmatprep.subr.mxu0 0.0
      %475 = vmatpush2.msra.mxu0 0.0
      %476 = vmatprep.subr.mxu0 0.0
      %477 = vmatpush2.msra.mxu0 0.0
      %478 = vmatprep.subr.mxu0 0.0
      %479 = vmatpush2.msra.mxu0 0.0
      %480 = vmatprep.subr.mxu0 0.0
      %481 = vmatpush2.msra.mxu0 0.0
      %482 = vmatprep.mubr.f32.mxu0 0.0
      %483 = vmatmul.mubr.f32.gmra.mxu0 %v416
      %v484 = vpop.f32.mrf.mxu0
      %v485 = vadd.f32 %v412, %v484
      %v486 = vpop.f32.mrf.mxu0
      %487 = vdwg.mxu0
      %vm488 = vcmask 64512
      %489 = vst.msk [vmem:[%s385] sm:$0xff] %vm488, %v485
      %491 = vrot.lane.b32.xlu0 %v485, 120
      %v492 = vpop.permute.xlu0 %491
      %s494 = scalar_lea.vmem %s385, 8
      %495 = vst.msk [vmem:[%s494] sm:$0xff] %vm488, %v492
      %496 = vrot.lane.b32.xlu0 %v485, 112
      %v497 = vpop.permute.xlu0 %496
      %s499 = scalar_lea.vmem %s385, 16
      %500 = vst.msk [vmem:[%s499] sm:$0xff] %vm488, %v497
      %501 = vrot.lane.b32.xlu0 %v485, 104
      %v502 = vpop.permute.xlu0 %501
      %s504 = scalar_lea.vmem %s385, 24
      %505 = vst.msk [vmem:[%s504] sm:$0xff] %vm488, %v502
      %v506 = vld [vmem:[%s2] sm:$0xff]
      %v507 = vld [vmem:[%s2 + $0x8] sm:$0xff]
      %v508 = vld [vmem:[%s2 + $0x10] sm:$0xff]
      %v509 = vld [vmem:[%s2 + $0x18] sm:$0xff]
      %v510 = vld [vmem:[%s5] sm:$0x1]
      %v512 = vlaneseq
      %v513 = vshrl.u32 %v512, 7
      %v514 = vsub.s32 0, %v513
      %v515 = vrot.slane %v510, %v514
      %517 = vmatprep.subr.mxu0 0.0
      %518 = vmatpush1.msra.mxu0 0.0
      %519 = vmatprep.subr.mxu0 0.0
      %520 = vmatpush1.msra.mxu0 0.0
      %521 = vmatprep.subr.mxu0 0.0
      %522 = vmatpush1.msra.mxu0 0.0
      %523 = vmatprep.subr.mxu0 0.0
      %524 = vmatpush1.msra.mxu0 0.0
      %525 = vmatprep.subr.mxu0 0.0
      %526 = vmatpush1.msra.mxu0 0.0
      %527 = vmatprep.subr.mxu0 0.0
      %528 = vmatpush1.msra.mxu0 0.0
      %529 = vmatprep.subr.mxu0 0.0
      %530 = vmatpush1.msra.mxu0 0.0
      %531 = vmatprep.subr.mxu0 0.0
      %532 = vmatpush1.msra.mxu0 0.0
      %533 = vmatprep.subr.mxu0 0.0
      %534 = vmatpush1.msra.mxu0 0.0
      %535 = vmatprep.subr.mxu0 0.0
      %536 = vmatpush1.msra.mxu0 0.0
      %537 = vmatprep.subr.mxu0 0.0
      %538 = vmatpush1.msra.mxu0 0.0
      %539 = vmatprep.subr.mxu0 0.0
      %540 = vmatpush1.msra.mxu0 0.0
      %541 = vmatprep.subr.mxu0 0.0
      %542 = vmatpush1.msra.mxu0 %v509
      %543 = vmatprep.subr.mxu0 0.0
      %544 = vmatpush1.msra.mxu0 %v508
      %545 = vmatprep.subr.mxu0 0.0
      %546 = vmatpush1.msra.mxu0 %v507
      %547 = vmatprep.subr.mxu0 0.0
      %548 = vmatpush1.msra.mxu0 %v506
      %549 = vmatprep.subr.mxu0 0.0
      %550 = vmatpush2.msra.mxu0 0.0
      %551 = vmatprep.subr.mxu0 0.0
      %552 = vmatpush2.msra.mxu0 0.0
      %553 = vmatprep.subr.mxu0 0.0
      %554 = vmatpush2.msra.mxu0 0.0
      %555 = vmatprep.subr.mxu0 0.0
      %556 = vmatpush2.msra.mxu0 0.0
      %557 = vmatprep.subr.mxu0 0.0
      %558 = vmatpush2.msra.mxu0 0.0
      %559 = vmatprep.subr.mxu0 0.0
      %560 = vmatpush2.msra.mxu0 0.0
      %561 = vmatprep.subr.mxu0 0.0
      %562 = vmatpush2.msra.mxu0 0.0
      %563 = vmatprep.subr.mxu0 0.0
      %564 = vmatpush2.msra.mxu0 0.0
      %565 = vmatprep.subr.mxu0 0.0
      %566 = vmatpush2.msra.mxu0 0.0
      %567 = vmatprep.subr.mxu0 0.0
      %568 = vmatpush2.msra.mxu0 0.0
      %569 = vmatprep.subr.mxu0 0.0
      %570 = vmatpush2.msra.mxu0 0.0
      %571 = vmatprep.subr.mxu0 0.0
      %572 = vmatpush2.msra.mxu0 0.0
      %573 = vmatprep.subr.mxu0 0.0
      %574 = vmatpush2.msra.mxu0 0.0
      %575 = vmatprep.subr.mxu0 0.0
      %576 = vmatpush2.msra.mxu0 0.0
      %577 = vmatprep.subr.mxu0 0.0
      %578 = vmatpush2.msra.mxu0 0.0
      %579 = vmatprep.subr.mxu0 0.0
      %580 = vmatpush2.msra.mxu0 0.0
      %581 = vmatprep.mubr.f32.mxu0 0.0
      %582 = vmatmul.mubr.f32.gmra.mxu0 %v416
      %v583 = vpop.f32.mrf.mxu0
      %v584 = vadd.f32 %v515, %v583
      %v585 = vpop.f32.mrf.mxu0
      %586 = vdwg.mxu0
      %587 = vst.msk [vmem:[%s393] sm:$0xff] %vm488, %v584
      %589 = vrot.lane.b32.xlu0 %v584, 120
      %v590 = vpop.permute.xlu0 %589
      %s592 = scalar_lea.vmem %s393, 8
      %593 = vst.msk [vmem:[%s592] sm:$0xff] %vm488, %v590
      %594 = vrot.lane.b32.xlu0 %v584, 112
      %v595 = vpop.permute.xlu0 %594
      %s597 = scalar_lea.vmem %s393, 16
      %598 = vst.msk [vmem:[%s597] sm:$0xff] %vm488, %v595
      %599 = vrot.lane.b32.xlu0 %v584, 104
      %v600 = vpop.permute.xlu0 %599
      %s602 = scalar_lea.vmem %s393, 24
      %603 = vst.msk [vmem:[%s602] sm:$0xff] %vm488, %v600
      %v604 = vld [vmem:[%s3] sm:$0xff]
      %v605 = vld [vmem:[%s3 + $0x8] sm:$0xff]
      %v606 = vld [vmem:[%s3 + $0x10] sm:$0xff]
      %v607 = vld [vmem:[%s3 + $0x18] sm:$0xff]
      %v608 = vld [vmem:[%s6] sm:$0x1]
      %v610 = vlaneseq
      %v611 = vshrl.u32 %v610, 7
      %v612 = vsub.s32 0, %v611
      %v613 = vrot.slane %v608, %v612
      %615 = vmatprep.subr.mxu0 0.0
      %616 = vmatpush1.msra.mxu0 0.0
      %617 = vmatprep.subr.mxu0 0.0
      %618 = vmatpush1.msra.mxu0 0.0
      %619 = vmatprep.subr.mxu0 0.0
      %620 = vmatpush1.msra.mxu0 0.0
      %621 = vmatprep.subr.mxu0 0.0
      %622 = vmatpush1.msra.mxu0 0.0
      %623 = vmatprep.subr.mxu0 0.0
      %624 = vmatpush1.msra.mxu0 0.0
      %625 = vmatprep.subr.mxu0 0.0
      %626 = vmatpush1.msra.mxu0 0.0
      %627 = vmatprep.subr.mxu0 0.0
      %628 = vmatpush1.msra.mxu0 0.0
      %629 = vmatprep.subr.mxu0 0.0
      %630 = vmatpush1.msra.mxu0 0.0
      %631 = vmatprep.subr.mxu0 0.0
      %632 = vmatpush1.msra.mxu0 0.0
      %633 = vmatprep.subr.mxu0 0.0
      %634 = vmatpush1.msra.mxu0 0.0
      %635 = vmatprep.subr.mxu0 0.0
      %636 = vmatpush1.msra.mxu0 0.0
      %637 = vmatprep.subr.mxu0 0.0
      %638 = vmatpush1.msra.mxu0 0.0
      %639 = vmatprep.subr.mxu0 0.0
      %640 = vmatpush1.msra.mxu0 %v607
      %641 = vmatprep.subr.mxu0 0.0
      %642 = vmatpush1.msra.mxu0 %v606
      %643 = vmatprep.subr.mxu0 0.0
      %644 = vmatpush1.msra.mxu0 %v605
      %645 = vmatprep.subr.mxu0 0.0
      %646 = vmatpush1.msra.mxu0 %v604
      %647 = vmatprep.subr.mxu0 0.0
      %648 = vmatpush2.msra.mxu0 0.0
      %649 = vmatprep.subr.mxu0 0.0
      %650 = vmatpush2.msra.mxu0 0.0
      %651 = vmatprep.subr.mxu0 0.0
      %652 = vmatpush2.msra.mxu0 0.0
      %653 = vmatprep.subr.mxu0 0.0
      %654 = vmatpush2.msra.mxu0 0.0
      %655 = vmatprep.subr.mxu0 0.0
      %656 = vmatpush2.msra.mxu0 0.0
      %657 = vmatprep.subr.mxu0 0.0
      %658 = vmatpush2.msra.mxu0 0.0
      %659 = vmatprep.subr.mxu0 0.0
      %660 = vmatpush2.msra.mxu0 0.0
      %661 = vmatprep.subr.mxu0 0.0
      %662 = vmatpush2.msra.mxu0 0.0
      %663 = vmatprep.subr.mxu0 0.0
      %664 = vmatpush2.msra.mxu0 0.0
      %665 = vmatprep.subr.mxu0 0.0
      %666 = vmatpush2.msra.mxu0 0.0
      %667 = vmatprep.subr.mxu0 0.0
      %668 = vmatpush2.msra.mxu0 0.0
      %669 = vmatprep.subr.mxu0 0.0
      %670 = vmatpush2.msra.mxu0 0.0
      %671 = vmatprep.subr.mxu0 0.0
      %672 = vmatpush2.msra.mxu0 0.0
      %673 = vmatprep.subr.mxu0 0.0
      %674 = vmatpush2.msra.mxu0 0.0
      %675 = vmatprep.subr.mxu0 0.0
      %676 = vmatpush2.msra.mxu0 0.0
      %677 = vmatprep.subr.mxu0 0.0
      %678 = vmatpush2.msra.mxu0 0.0
      %679 = vmatprep.mubr.f32.mxu0 0.0
      %680 = vmatmul.mubr.f32.gmra.mxu0 %v416
      %v681 = vpop.f32.mrf.mxu0
      %v682 = vadd.f32 %v613, %v681
      %v683 = vpop.f32.mrf.mxu0
      %684 = vdwg.mxu0
      %685 = vst.msk [vmem:[%s401] sm:$0xff] %vm488, %v682
      %687 = vrot.lane.b32.xlu0 %v682, 120
      %v688 = vpop.permute.xlu0 %687
      %s690 = scalar_lea.vmem %s401, 8
      %691 = vst.msk [vmem:[%s690] sm:$0xff] %vm488, %v688
      %692 = vrot.lane.b32.xlu0 %v682, 112
      %v693 = vpop.permute.xlu0 %692
      %s695 = scalar_lea.vmem %s401, 16
      %696 = vst.msk [vmem:[%s695] sm:$0xff] %vm488, %v693
      %697 = vrot.lane.b32.xlu0 %v682, 104
      %v698 = vpop.permute.xlu0 %697
      %s700 = scalar_lea.vmem %s401, 24
      %701 = vst.msk [vmem:[%s700] sm:$0xff] %vm488, %v698
      %p702 = scmp.lt.s32.totalorder %s25, 1
      %s703 = scalar_select %p702, %s25, 1
      %p704 = scmp.lt.s32.totalorder %s26, 0
      %s705 = scalar_select %p704, %s26, 0
      %s706 = smul.addr %s703, 4
      %s707 = sadd.s32 %s705, %s706
      %s708 = smul.addr %s707, 8
      %s709 = scalar_lea.vmem %s7, %s708
      %p710 = scmp.lt.s32.totalorder %s25, 1
      %s711 = scalar_select %p710, %s25, 1
      %p712 = scmp.lt.s32.totalorder %s26, 0
      %s713 = scalar_select %p712, %s26, 0
      %s714 = smul.addr %s711, 4
      %s715 = sadd.s32 %s713, %s714
      %s716 = smul.addr %s715, 8
      %s717 = scalar_lea.vmem %s8, %s716
      %p718 = scmp.lt.s32.totalorder %s25, 1
      %s719 = scalar_select %p718, %s25, 1
      %p720 = scmp.lt.s32.totalorder %s26, 0
      %s721 = scalar_select %p720, %s26, 0
      %s722 = smul.addr %s719, 4
      %s723 = sadd.s32 %s721, %s722
      %s724 = smul.addr %s723, 8
      %s725 = scalar_lea.vmem %s9, %s724
      // Predicated region
      $region49: #{multi_scale_attention.6} parent=47 // pred_check
        %p726 = pneg %p207
      $region50: #{multi_scale_attention.6} parent=47 // pred_check_branch
        %728 = sbr.rel (%p726) target = $region52
      $region51: #{multi_scale_attention.6} parent=47 // pred_region
        _
      $region52: #{multi_scale_attention.6} parent=47 // pred_fallthru
        _
      // Predicated region
      $region53: #{multi_scale_attention.6} parent=47 // pred_check
        %p729 = pneg %p235
      $region54: #{multi_scale_attention.6} parent=47 // pred_check_branch
        %731 = sbr.rel (%p729) target = $region56
      $region55: #{multi_scale_attention.6} parent=47 // pred_region
        _
      $region56: #{multi_scale_attention.6} parent=47 // pred_fallthru
        _
      // Predicated region
      $region57: #{multi_scale_attention.6} parent=47 // pred_check
        %p732 = pneg %p263
      $region58: #{multi_scale_attention.6} parent=47 // pred_check_branch
        %734 = sbr.rel (%p732) target = $region60
      $region59: #{multi_scale_attention.6} parent=47 // pred_region
        _
      $region60: #{multi_scale_attention.6} parent=47 // pred_fallthru
        _
    $region48: #{multi_scale_attention.6} parent=5 // pred_fallthru
      _
    %p735 = scmp.le.s32.totalorder 2, %s16
    // Predicated region
    $region61: #{multi_scale_attention.6} parent=5 // pred_check
      %p736 = pneg %p735
    $region62: #{multi_scale_attention.6} parent=5 // pred_check_branch
      %738 = sbr.rel (%p736) target = $region64
    $region63: #{multi_scale_attention.6} parent=5 // pred_region
      %s739 = ssub.s32 %s16, 2
      // Predicated region
      $region65: #{multi_scale_attention.6} parent=63 // pred_check
        %p740 = pneg %p213
      $region66: #{multi_scale_attention.6} parent=63 // pred_check_branch
        %742 = sbr.rel (%p740) target = $region68
      $region67: #{multi_scale_attention.6} parent=63 // pred_region
        %p743 = scmp.lt.s32.totalorder %s27, 1
        %s744 = scalar_select %p743, %s27, 1
        %p745 = scmp.lt.s32.totalorder %s28, 0
        %s746 = scalar_select %p745, %s28, 0
        %s747 = smul.addr %s744, 4
        %s748 = sadd.s32 %s746, %s747
        %s749 = smul.addr %s748, 8
        %s750 = scalar_lea.vmem %s7, %s749
      $region68: #{multi_scale_attention.6} parent=63 // pred_fallthru
        _
      // Predicated region
      $region69: #{multi_scale_attention.6} parent=63 // pred_check
        %p751 = pneg %p241
      $region70: #{multi_scale_attention.6} parent=63 // pred_check_branch
        %753 = sbr.rel (%p751) target = $region72
      $region71: #{multi_scale_attention.6} parent=63 // pred_region
        %p754 = scmp.lt.s32.totalorder %s27, 1
        %s755 = scalar_select %p754, %s27, 1
        %p756 = scmp.lt.s32.totalorder %s28, 0
        %s757 = scalar_select %p756, %s28, 0
        %s758 = smul.addr %s755, 4
        %s759 = sadd.s32 %s757, %s758
        %s760 = smul.addr %s759, 8
        %s761 = scalar_lea.vmem %s8, %s760
      $region72: #{multi_scale_attention.6} parent=63 // pred_fallthru
        _
      // Predicated region
      $region73: #{multi_scale_attention.6} parent=63 // pred_check
        %p762 = pneg %p269
      $region74: #{multi_scale_attention.6} parent=63 // pred_check_branch
        %764 = sbr.rel (%p762) target = $region76
      $region75: #{multi_scale_attention.6} parent=63 // pred_region
        %p765 = scmp.lt.s32.totalorder %s27, 1
        %s766 = scalar_select %p765, %s27, 1
        %p767 = scmp.lt.s32.totalorder %s28, 0
        %s768 = scalar_select %p767, %s28, 0
        %s769 = smul.addr %s766, 4
        %s770 = sadd.s32 %s768, %s769
        %s771 = smul.addr %s770, 8
        %s772 = scalar_lea.vmem %s9, %s771
      $region76: #{multi_scale_attention.6} parent=63 // pred_fallthru
        _
    $region64: #{multi_scale_attention.6} parent=5 // pred_fallthru
      _
  $region6: #{multi_scale_attention.6} parent=0 // loop_footer
    %s20 = sadd.s32 1, %s16
  $region7: #{multi_scale_attention.6} parent=0 // loop_footer_branch
    %15 = sbr.rel target = $region3
  $region8: #{multi_scale_attention.6} parent=0 // loop_exit
    _

// kernel: multi_scale_attention.8
$region0: #{multi_scale_attention.8}
  #allocation0 [shape = 'u32[]', space=smem, size = 0x4, offset = 0x4, fixed_abs, tag = 'smem constant byte address 0x4 - core index']
  #allocation1 [shape = 'u32[144,128]{1,0:T(1,128)}', space=vmem, size = 0x12000, scoped, tag = 'internal scratch']
  %s0 = inlined_call_operand.vmem [shape: f32[2,4,32], index: 0, kind: input, shape index: {}]
  %s1 = inlined_call_operand.vmem [shape: f32[32,32], index: 1, kind: input, shape index: {}]
  %s2 = inlined_call_operand.vmem [shape: f32[32,32], index: 2, kind: input, shape index: {}]
  %s3 = inlined_call_operand.vmem [shape: f32[32,32], index: 3, kind: input, shape index: {}]
  %s4 = inlined_call_operand.vmem [shape: f32[1,32], index: 4, kind: input, shape index: {}]
  %s5 = inlined_call_operand.vmem [shape: f32[1,32], index: 5, kind: input, shape index: {}]
  %s6 = inlined_call_operand.vmem [shape: f32[1,32], index: 6, kind: input, shape index: {}]
  %s7 = inlined_call_operand.vmem [shape: f32[2,4,4,8], index: 7, kind: output, shape index: {0}]
  %s8 = inlined_call_operand.vmem [shape: f32[2,4,4,8], index: 8, kind: output, shape index: {1}]
  %s9 = inlined_call_operand.vmem [shape: f32[2,4,4,8], index: 9, kind: output, shape index: {2}]
  %10 = xla_tuple %s7, %s8, %s9
  %s11 = sld [smem:[#allocation0]]
  $region77: #{multi_scale_attention.8} parent=0
    _
  %s13 = ssub.s32 1, %s11
  %s14 = scalar_select 0, %s13, %s11
  loop: start=0, step=1, limit=4
  $region2: #{multi_scale_attention.8} parent=0 // loop_pre_header
    _
  $region3: #{multi_scale_attention.8} parent=0 // loop_header
    %s16 = sphi 0, %s20
    %p17 = scmp.ge.s32.totalorder %s16, 4
    %s23 = sphi 0, %s35
    %s24 = sphi 0, %s31
    %s25 = sphi 0, %s23
    %s26 = sphi 0, %s24
    %s27 = sphi 0, %s25
    %s28 = sphi 0, %s26
    %s40 = sphi 0, %s42
    %s43 = sphi 0, %s40
    %s44 = sphi 0, %s43
    %s60 = sphi 0, %s44
    %s64 = sphi 0, %s64
    %s66 = sphi 0, %s64
    %s67 = sphi 0, %s66
    %s81 = sphi 0, %s67
    %s85 = sphi 0, %s85
    %s87 = sphi 0, %s85
    %s88 = sphi 0, %s87
    %s102 = sphi 0, %s88
    %s106 = sphi 0, %s106
    %s108 = sphi 0, %s106
    %s109 = sphi 0, %s108
    %s123 = sphi 0, %s109
    %s127 = sphi 0, %s127
    %s129 = sphi 0, %s127
    %s130 = sphi 0, %s129
    %s144 = sphi 0, %s130
    %s148 = sphi 0, %s148
    %s150 = sphi 0, %s148
    %s151 = sphi 0, %s150
    %s165 = sphi 0, %s151
    %s169 = sphi 0, %s169
    %s171 = sphi 0, %s169
    %s172 = sphi 0, %s171
    %s186 = sphi 0, %s172
    %s194 = sphi 0, %s196
    %s197 = sphi 0, %s194
    %s198 = sphi 0, %s197
    %s214 = sphi 0, %s198
    %s222 = sphi 0, %s224
    %s225 = sphi 0, %s222
    %s226 = sphi 0, %s225
    %s242 = sphi 0, %s226
    %s250 = sphi 0, %s252
    %s253 = sphi 0, %s250
    %s254 = sphi 0, %s253
    %s270 = sphi 0, %s254
  $region4: #{multi_scale_attention.8} parent=0 // loop_header_branch
    %19 = sbr.rel (%p17) target = $region8
  $region5: #{multi_scale_attention.8} parent=0 // loop_body
    %s21 = ssub.s32 %s16, 1
    %s22 = ssub.s32 %s16, 2
    %s29 = sadd.s32 1, %s24
    %p30 = scmp.ge.s32.totalorder %s29, 1
    %s31 = scalar_select %p30, 0, %s29
    %s32 = sadd.s32 1, %s23
    %s33 = scalar_select %p30, %s32, %s23
    %p34 = scmp.ge.s32.totalorder %s33, 2
    %s35 = scalar_select %p34, 0, %s33
    %s36 = ssub.s32 %s23, %s35
    %s37 = ssub.s32 %s24, %s31
    %s38 = sor.u32 %s36, %s37
    %p39 = scmp.eq.s32.totalorder %s38, 0
    %s41 = sadd.s32 %s40, 1
    %s42 = scalar_select %p39, %s40, %s41
    %p45 = pneg %p39
    %p46 = scmp.eq.s32.totalorder %s16, 1
    %p47 = por %p45, %p46
    %p48 = scmp.ne.s32.totalorder %s40, %s43
    %p49 = scmp.eq.s32.totalorder %s16, 0
    %p50 = por %p48, %p49
    %p51 = scmp.ne.s32.totalorder %s40, %s43
    %p52 = scmp.eq.s32.totalorder %s21, 1
    %p53 = por %p51, %p52
    %p54 = scmp.ne.s32.totalorder %s43, %s44
    %p55 = scmp.eq.s32.totalorder %s21, 0
    %p56 = por %p54, %p55
    %p57 = scmp.ne.s32.totalorder %s43, %s44
    %p58 = scmp.eq.s32.totalorder %s22, 1
    %p59 = por %p57, %p58
    %p61 = scmp.ne.s32.totalorder %s44, %s60
    %p62 = scmp.eq.s32.totalorder %s22, 0
    %p63 = por %p61, %p62
    %s65 = sadd.s32 %s64, 1
    %p68 = scmp.eq.s32.totalorder %s16, 1
    %p69 = scmp.ne.s32.totalorder %s64, %s66
    %p70 = scmp.eq.s32.totalorder %s16, 0
    %p71 = por %p69, %p70
    %p72 = scmp.ne.s32.totalorder %s64, %s66
    %p73 = scmp.eq.s32.totalorder %s21, 1
    %p74 = por %p72, %p73
    %p75 = scmp.ne.s32.totalorder %s66, %s67
    %p76 = scmp.eq.s32.totalorder %s21, 0
    %p77 = por %p75, %p76
    %p78 = scmp.ne.s32.totalorder %s66, %s67
    %p79 = scmp.eq.s32.totalorder %s22, 1
    %p80 = por %p78, %p79
    %p82 = scmp.ne.s32.totalorder %s67, %s81
    %p83 = scmp.eq.s32.totalorder %s22, 0
    %p84 = por %p82, %p83
    %s86 = sadd.s32 %s85, 1
    %p89 = scmp.eq.s32.totalorder %s16, 1
    %p90 = scmp.ne.s32.totalorder %s85, %s87
    %p91 = scmp.eq.s32.totalorder %s16, 0
    %p92 = por %p90, %p91
    %p93 = scmp.ne.s32.totalorder %s85, %s87
    %p94 = scmp.eq.s32.totalorder %s21, 1
    %p95 = por %p93, %p94
    %p96 = scmp.ne.s32.totalorder %s87, %s88
    %p97 = scmp.eq.s32.totalorder %s21, 0
    %p98 = por %p96, %p97
    %p99 = scmp.ne.s32.totalorder %s87, %s88
    %p100 = scmp.eq.s32.totalorder %s22, 1
    %p101 = por %p99, %p100
    %p103 = scmp.ne.s32.totalorder %s88, %s102
    %p104 = scmp.eq.s32.totalorder %s22, 0
    %p105 = por %p103, %p104
    %s107 = sadd.s32 %s106, 1
    %p110 = scmp.eq.s32.totalorder %s16, 1
    %p111 = scmp.ne.s32.totalorder %s106, %s108
    %p112 = scmp.eq.s32.totalorder %s16, 0
    %p113 = por %p111, %p112
    %p114 = scmp.ne.s32.totalorder %s106, %s108
    %p115 = scmp.eq.s32.totalorder %s21, 1
    %p116 = por %p114, %p115
    %p117 = scmp.ne.s32.totalorder %s108, %s109
    %p118 = scmp.eq.s32.totalorder %s21, 0
    %p119 = por %p117, %p118
    %p120 = scmp.ne.s32.totalorder %s108, %s109
    %p121 = scmp.eq.s32.totalorder %s22, 1
    %p122 = por %p120, %p121
    %p124 = scmp.ne.s32.totalorder %s109, %s123
    %p125 = scmp.eq.s32.totalorder %s22, 0
    %p126 = por %p124, %p125
    %s128 = sadd.s32 %s127, 1
    %p131 = scmp.eq.s32.totalorder %s16, 1
    %p132 = scmp.ne.s32.totalorder %s127, %s129
    %p133 = scmp.eq.s32.totalorder %s16, 0
    %p134 = por %p132, %p133
    %p135 = scmp.ne.s32.totalorder %s127, %s129
    %p136 = scmp.eq.s32.totalorder %s21, 1
    %p137 = por %p135, %p136
    %p138 = scmp.ne.s32.totalorder %s129, %s130
    %p139 = scmp.eq.s32.totalorder %s21, 0
    %p140 = por %p138, %p139
    %p141 = scmp.ne.s32.totalorder %s129, %s130
    %p142 = scmp.eq.s32.totalorder %s22, 1
    %p143 = por %p141, %p142
    %p145 = scmp.ne.s32.totalorder %s130, %s144
    %p146 = scmp.eq.s32.totalorder %s22, 0
    %p147 = por %p145, %p146
    %s149 = sadd.s32 %s148, 1
    %p152 = scmp.eq.s32.totalorder %s16, 1
    %p153 = scmp.ne.s32.totalorder %s148, %s150
    %p154 = scmp.eq.s32.totalorder %s16, 0
    %p155 = por %p153, %p154
    %p156 = scmp.ne.s32.totalorder %s148, %s150
    %p157 = scmp.eq.s32.totalorder %s21, 1
    %p158 = por %p156, %p157
    %p159 = scmp.ne.s32.totalorder %s150, %s151
    %p160 = scmp.eq.s32.totalorder %s21, 0
    %p161 = por %p159, %p160
    %p162 = scmp.ne.s32.totalorder %s150, %s151
    %p163 = scmp.eq.s32.totalorder %s22, 1
    %p164 = por %p162, %p163
    %p166 = scmp.ne.s32.totalorder %s151, %s165
    %p167 = scmp.eq.s32.totalorder %s22, 0
    %p168 = por %p166, %p167
    %s170 = sadd.s32 %s169, 1
    %p173 = scmp.eq.s32.totalorder %s16, 1
    %p174 = scmp.ne.s32.totalorder %s169, %s171
    %p175 = scmp.eq.s32.totalorder %s16, 0
    %p176 = por %p174, %p175
    %p177 = scmp.ne.s32.totalorder %s169, %s171
    %p178 = scmp.eq.s32.totalorder %s21, 1
    %p179 = por %p177, %p178
    %p180 = scmp.ne.s32.totalorder %s171, %s172
    %p181 = scmp.eq.s32.totalorder %s21, 0
    %p182 = por %p180, %p181
    %p183 = scmp.ne.s32.totalorder %s171, %s172
    %p184 = scmp.eq.s32.totalorder %s22, 1
    %p185 = por %p183, %p184
    %p187 = scmp.ne.s32.totalorder %s172, %s186
    %p188 = scmp.eq.s32.totalorder %s22, 0
    %p189 = por %p187, %p188
    %s190 = ssub.s32 %s23, %s35
    %s191 = ssub.s32 %s24, %s31
    %s192 = sor.u32 %s190, %s191
    %p193 = scmp.eq.s32.totalorder %s192, 0
    %s195 = sadd.s32 %s194, 1
    %s196 = scalar_select %p193, %s194, %s195
    %p199 = pneg %p193
    %p200 = scmp.eq.s32.totalorder %s16, 1
    %p201 = por %p199, %p200
    %p202 = scmp.ne.s32.totalorder %s194, %s197
    %p203 = scmp.eq.s32.totalorder %s16, 0
    %p204 = por %p202, %p203
    %p205 = scmp.ne.s32.totalorder %s194, %s197
    %p206 = scmp.eq.s32.totalorder %s21, 1
    %p207 = por %p205, %p206
    %p208 = scmp.ne.s32.totalorder %s197, %s198
    %p209 = scmp.eq.s32.totalorder %s21, 0
    %p210 = por %p208, %p209
    %p211 = scmp.ne.s32.totalorder %s197, %s198
    %p212 = scmp.eq.s32.totalorder %s22, 1
    %p213 = por %p211, %p212
    %p215 = scmp.ne.s32.totalorder %s198, %s214
    %p216 = scmp.eq.s32.totalorder %s22, 0
    %p217 = por %p215, %p216
    %s218 = ssub.s32 %s23, %s35
    %s219 = ssub.s32 %s24, %s31
    %s220 = sor.u32 %s218, %s219
    %p221 = scmp.eq.s32.totalorder %s220, 0
    %s223 = sadd.s32 %s222, 1
    %s224 = scalar_select %p221, %s222, %s223
    %p227 = pneg %p221
    %p228 = scmp.eq.s32.totalorder %s16, 1
    %p229 = por %p227, %p228
    %p230 = scmp.ne.s32.totalorder %s222, %s225
    %p231 = scmp.eq.s32.totalorder %s16, 0
    %p232 = por %p230, %p231
    %p233 = scmp.ne.s32.totalorder %s222, %s225
    %p234 = scmp.eq.s32.totalorder %s21, 1
    %p235 = por %p233, %p234
    %p236 = scmp.ne.s32.totalorder %s225, %s226
    %p237 = scmp.eq.s32.totalorder %s21, 0
    %p238 = por %p236, %p237
    %p239 = scmp.ne.s32.totalorder %s225, %s226
    %p240 = scmp.eq.s32.totalorder %s22, 1
    %p241 = por %p239, %p240
    %p243 = scmp.ne.s32.totalorder %s226, %s242
    %p244 = scmp.eq.s32.totalorder %s22, 0
    %p245 = por %p243, %p244
    %s246 = ssub.s32 %s23, %s35
    %s247 = ssub.s32 %s24, %s31
    %s248 = sor.u32 %s246, %s247
    %p249 = scmp.eq.s32.totalorder %s248, 0
    %s251 = sadd.s32 %s250, 1
    %s252 = scalar_select %p249, %s250, %s251
    %p255 = pneg %p249
    %p256 = scmp.eq.s32.totalorder %s16, 1
    %p257 = por %p255, %p256
    %p258 = scmp.ne.s32.totalorder %s250, %s253
    %p259 = scmp.eq.s32.totalorder %s16, 0
    %p260 = por %p258, %p259
    %p261 = scmp.ne.s32.totalorder %s250, %s253
    %p262 = scmp.eq.s32.totalorder %s21, 1
    %p263 = por %p261, %p262
    %p264 = scmp.ne.s32.totalorder %s253, %s254
    %p265 = scmp.eq.s32.totalorder %s21, 0
    %p266 = por %p264, %p265
    %p267 = scmp.ne.s32.totalorder %s253, %s254
    %p268 = scmp.eq.s32.totalorder %s22, 1
    %p269 = por %p267, %p268
    %p271 = scmp.ne.s32.totalorder %s254, %s270
    %p272 = scmp.eq.s32.totalorder %s22, 0
    %p273 = por %p271, %p272
    %p274 = scmp.le.s32.totalorder 1, %s16
    %p275 = scmp.lt.s32.totalorder %s16, 3
    %p276 = pnand %p274, %p275
    %p277 = pneg %p276
    // Predicated region
    $region9: #{multi_scale_attention.8} parent=5 // pred_check
      _
    $region10: #{multi_scale_attention.8} parent=5 // pred_check_branch
      %279 = sbr.rel (%p276) target = $region12
    $region11: #{multi_scale_attention.8} parent=5 // pred_region
      %s280 = ssub.s32 %s16, 1
      // Predicated region
      $region13: #{multi_scale_attention.8} parent=11 // pred_check
        %p281 = pneg %p77
      $region14: #{multi_scale_attention.8} parent=11 // pred_check_branch
        %283 = sbr.rel (%p281) target = $region16
      $region15: #{multi_scale_attention.8} parent=11 // pred_region
        _
      $region16: #{multi_scale_attention.8} parent=11 // pred_fallthru
        _
      // Predicated region
      $region17: #{multi_scale_attention.8} parent=11 // pred_check
        %p284 = pneg %p98
      $region18: #{multi_scale_attention.8} parent=11 // pred_check_branch
        %286 = sbr.rel (%p284) target = $region20
      $region19: #{multi_scale_attention.8} parent=11 // pred_region
        _
      $region20: #{multi_scale_attention.8} parent=11 // pred_fallthru
        _
      // Predicated region
      $region21: #{multi_scale_attention.8} parent=11 // pred_check
        %p287 = pneg %p119
      $region22: #{multi_scale_attention.8} parent=11 // pred_check_branch
        %289 = sbr.rel (%p287) target = $region24
      $region23: #{multi_scale_attention.8} parent=11 // pred_region
        _
      $region24: #{multi_scale_attention.8} parent=11 // pred_fallthru
        _
      // Predicated region
      $region25: #{multi_scale_attention.8} parent=11 // pred_check
        %p290 = pneg %p140
      $region26: #{multi_scale_attention.8} parent=11 // pred_check_branch
        %292 = sbr.rel (%p290) target = $region28
      $region27: #{multi_scale_attention.8} parent=11 // pred_region
        _
      $region28: #{multi_scale_attention.8} parent=11 // pred_fallthru
        _
      // Predicated region
      $region29: #{multi_scale_attention.8} parent=11 // pred_check
        %p293 = pneg %p161
      $region30: #{multi_scale_attention.8} parent=11 // pred_check_branch
        %295 = sbr.rel (%p293) target = $region32
      $region31: #{multi_scale_attention.8} parent=11 // pred_region
        _
      $region32: #{multi_scale_attention.8} parent=11 // pred_fallthru
        _
      // Predicated region
      $region33: #{multi_scale_attention.8} parent=11 // pred_check
        %p296 = pneg %p182
      $region34: #{multi_scale_attention.8} parent=11 // pred_check_branch
        %298 = sbr.rel (%p296) target = $region36
      $region35: #{multi_scale_attention.8} parent=11 // pred_region
        _
      $region36: #{multi_scale_attention.8} parent=11 // pred_fallthru
        _
    $region12: #{multi_scale_attention.8} parent=5 // pred_fallthru
      _
    %p299 = scmp.lt.s32.totalorder %s16, 2
    // Predicated region
    $region37: #{multi_scale_attention.8} parent=5 // pred_check
      %p300 = pneg %p299
    $region38: #{multi_scale_attention.8} parent=5 // pred_check_branch
      %302 = sbr.rel (%p300) target = $region40
    $region39: #{multi_scale_attention.8} parent=5 // pred_region
      // Predicated region
      $region41: #{multi_scale_attention.8} parent=39 // pred_check
        %p303 = pneg %p50
      $region42: #{multi_scale_attention.8} parent=39 // pred_check_branch
        %305 = sbr.rel (%p303) target = $region44
      $region43: #{multi_scale_attention.8} parent=39 // pred_region
        %p306 = scmp.lt.s32.totalorder %s23, 1
        %s307 = scalar_select %p306, %s23, 1
        %p308 = scmp.lt.s32.totalorder %s24, 0
        %s309 = scalar_select %p308, %s24, 0
        %s310 = sadd.s32 %s309, %s307
        %s311 = smul.addr %s310, 4
        %s312 = scalar_lea.vmem %s0, %s311
      $region44: #{multi_scale_attention.8} parent=39 // pred_fallthru
        _
    $region40: #{multi_scale_attention.8} parent=5 // pred_fallthru
      _
    %p313 = scmp.le.s32.totalorder 1, %s16
    %p314 = scmp.lt.s32.totalorder %s16, 3
    %p315 = pnand %p313, %p314
    %p316 = pneg %p315
    // Predicated region
    $region45: #{multi_scale_attention.8} parent=5 // pred_check
      _
    $region46: #{multi_scale_attention.8} parent=5 // pred_check_branch
      %318 = sbr.rel (%p315) target = $region48
    $region47: #{multi_scale_attention.8} parent=5 // pred_region
      %s319 = ssub.s32 %s16, 1
      %p320 = scmp.lt.s32.totalorder %s25, 1
      %s321 = scalar_select %p320, %s25, 1
      %p322 = scmp.lt.s32.totalorder %s26, 0
      %s323 = scalar_select %p322, %s26, 0
      %s324 = sadd.s32 %s323, %s321
      %s325 = smul.addr %s324, 4
      %s326 = scalar_lea.vmem %s0, %s325
      %p327 = pneg %p56
      %p328 = pneg %p53
      %p329 = pneg %p77
      %p330 = pneg %p74
      %p331 = pneg %p98
      %p332 = pneg %p95
      %p333 = pneg %p119
      %p334 = pneg %p116
      %p335 = pneg %p140
      %p336 = pneg %p137
      %p337 = pneg %p161
      %p338 = pneg %p158
      %p339 = pneg %p182
      %p340 = pneg %p179
      %p341 = pneg %p210
      %p342 = pneg %p207
      %p343 = scmp.lt.s32.totalorder %s25, 1
      %s344 = scalar_select %p343, %s25, 1
      %p345 = scmp.lt.s32.totalorder %s26, 0
      %s346 = scalar_select %p345, %s26, 0
      %s347 = smul.addr %s344, 4
      %s348 = sadd.s32 %s346, %s347
      %s349 = smul.addr %s348, 4
      %s350 = scalar_lea.vmem %s7, %s349
      %p351 = pneg %p238
      %p352 = pneg %p235
      %p353 = scmp.lt.s32.totalorder %s25, 1
      %s354 = scalar_select %p353, %s25, 1
      %p355 = scmp.lt.s32.totalorder %s26, 0
      %s356 = scalar_select %p355, %s26, 0
      %s357 = smul.addr %s354, 4
      %s358 = sadd.s32 %s356, %s357
      %s359 = smul.addr %s358, 4
      %s360 = scalar_lea.vmem %s8, %s359
      %p361 = pneg %p266
      %p362 = pneg %p263
      %p363 = scmp.lt.s32.totalorder %s25, 1
      %s364 = scalar_select %p363, %s25, 1
      %p365 = scmp.lt.s32.totalorder %s26, 0
      %s366 = scalar_select %p365, %s26, 0
      %s367 = smul.addr %s364, 4
      %s368 = sadd.s32 %s366, %s367
      %s369 = smul.addr %s368, 4
      %s370 = scalar_lea.vmem %s9, %s369
      %p371 = scmp.lt.s32.totalorder %s25, 1
      %s372 = scalar_select %p371, %s25, 1
      %p373 = scmp.lt.s32.totalorder %s26, 0
      %s374 = scalar_select %p373, %s26, 0
      %s375 = sadd.s32 %s374, %s372
      %s376 = smul.addr %s375, 4
      %s377 = scalar_lea.vmem %s0, %s376
      %p378 = scmp.lt.s32.totalorder %s25, 1
      %s379 = scalar_select %p378, %s25, 1
      %p380 = scmp.lt.s32.totalorder %s26, 0
      %s381 = scalar_select %p380, %s26, 0
      %s382 = smul.addr %s379, 4
      %s383 = sadd.s32 %s381, %s382
      %s384 = smul.addr %s383, 4
      %s385 = scalar_lea.vmem %s7, %s384
      %p386 = scmp.lt.s32.totalorder %s25, 1
      %s387 = scalar_select %p386, %s25, 1
      %p388 = scmp.lt.s32.totalorder %s26, 0
      %s389 = scalar_select %p388, %s26, 0
      %s390 = smul.addr %s387, 4
      %s391 = sadd.s32 %s389, %s390
      %s392 = smul.addr %s391, 4
      %s393 = scalar_lea.vmem %s8, %s392
      %p394 = scmp.lt.s32.totalorder %s25, 1
      %s395 = scalar_select %p394, %s25, 1
      %p396 = scmp.lt.s32.totalorder %s26, 0
      %s397 = scalar_select %p396, %s26, 0
      %s398 = smul.addr %s395, 4
      %s399 = sadd.s32 %s397, %s398
      %s400 = smul.addr %s399, 4
      %s401 = scalar_lea.vmem %s9, %s400
      %v402 = vld [vmem:[%s377] sm:$0xf]
      %v403 = vld [vmem:[%s1] sm:$0xff]
      %v404 = vld [vmem:[%s1 + $0x8] sm:$0xff]
      %v405 = vld [vmem:[%s1 + $0x10] sm:$0xff]
      %v406 = vld [vmem:[%s1 + $0x18] sm:$0xff]
      %v407 = vld [vmem:[%s4] sm:$0x1]
      %v409 = vlaneseq
      %v410 = vshrl.u32 %v409, 7
      %v411 = vsub.s32 0, %v410
      %v412 = vrot.slane %v407, %v411
      %vm414 = vcmask 261120
      %v416 = vsel %vm414, %v402, 0
      %418 = vmatprep.subr.mxu0 0.0
      %419 = vmatpush1.msra.mxu0 0.0
      %420 = vmatprep.subr.mxu0 0.0
      %421 = vmatpush1.msra.mxu0 0.0
      %422 = vmatprep.subr.mxu0 0.0
      %423 = vmatpush1.msra.mxu0 0.0
      %424 = vmatprep.subr.mxu0 0.0
      %425 = vmatpush1.msra.mxu0 0.0
      %426 = vmatprep.subr.mxu0 0.0
      %427 = vmatpush1.msra.mxu0 0.0
      %428 = vmatprep.subr.mxu0 0.0
      %429 = vmatpush1.msra.mxu0 0.0
      %430 = vmatprep.subr.mxu0 0.0
      %431 = vmatpush1.msra.mxu0 0.0
      %432 = vmatprep.subr.mxu0 0.0
      %433 = vmatpush1.msra.mxu0 0.0
      %434 = vmatprep.subr.mxu0 0.0
      %435 = vmatpush1.msra.mxu0 0.0
      %436 = vmatprep.subr.mxu0 0.0
      %437 = vmatpush1.msra.mxu0 0.0
      %438 = vmatprep.subr.mxu0 0.0
      %439 = vmatpush1.msra.mxu0 0.0
      %440 = vmatprep.subr.mxu0 0.0
      %441 = vmatpush1.msra.mxu0 0.0
      %442 = vmatprep.subr.mxu0 0.0
      %443 = vmatpush1.msra.mxu0 %v406
      %444 = vmatprep.subr.mxu0 0.0
      %445 = vmatpush1.msra.mxu0 %v405
      %446 = vmatprep.subr.mxu0 0.0
      %447 = vmatpush1.msra.mxu0 %v404
      %448 = vmatprep.subr.mxu0 0.0
      %449 = vmatpush1.msra.mxu0 %v403
      %450 = vmatprep.subr.mxu0 0.0
      %451 = vmatpush2.msra.mxu0 0.0
      %452 = vmatprep.subr.mxu0 0.0
      %453 = vmatpush2.msra.mxu0 0.0
      %454 = vmatprep.subr.mxu0 0.0
      %455 = vmatpush2.msra.mxu0 0.0
      %456 = vmatprep.subr.mxu0 0.0
      %457 = vmatpush2.msra.mxu0 0.0
      %458 = vmatprep.subr.mxu0 0.0
      %459 = vmatpush2.msra.mxu0 0.0
      %460 = vmatprep.subr.mxu0 0.0
      %461 = vmatpush2.msra.mxu0 0.0
      %462 = vmatprep.subr.mxu0 0.0
      %463 = vmatpush2.msra.mxu0 0.0
      %464 = vmatprep.subr.mxu0 0.0
      %465 = vmatpush2.msra.mxu0 0.0
      %466 = vmatprep.subr.mxu0 0.0
      %467 = vmatpush2.msra.mxu0 0.0
      %468 = vmatprep.subr.mxu0 0.0
      %469 = vmatpush2.msra.mxu0 0.0
      %470 = vmatprep.subr.mxu0 0.0
      %471 = vmatpush2.msra.mxu0 0.0
      %472 = vmatprep.subr.mxu0 0.0
      %473 = vmatpush2.msra.mxu0 0.0
      %474 = vmatprep.subr.mxu0 0.0
      %475 = vmatpush2.msra.mxu0 0.0
      %476 = vmatprep.subr.mxu0 0.0
      %477 = vmatpush2.msra.mxu0 0.0
      %478 = vmatprep.subr.mxu0 0.0
      %479 = vmatpush2.msra.mxu0 0.0
      %480 = vmatprep.subr.mxu0 0.0
      %481 = vmatpush2.msra.mxu0 0.0
      %482 = vmatprep.mubr.f32.mxu0 0.0
      %483 = vmatmul.mubr.f32.gmra.mxu0 %v416
      %v484 = vpop.f32.mrf.mxu0
      %v485 = vadd.f32 %v412, %v484
      %v486 = vpop.f32.mrf.mxu0
      %487 = vdwg.mxu0
      %vm488 = vcmask 60416
      %489 = vst.msk [vmem:[%s385] sm:$0xf] %vm488, %v485
      %491 = vrot.lane.b32.xlu0 %v485, 120
      %v492 = vpop.permute.xlu0 %491
      %s494 = scalar_lea.vmem %s385, 4
      %495 = vst.msk [vmem:[%s494] sm:$0xf] %vm488, %v492
      %496 = vrot.lane.b32.xlu0 %v485, 112
      %v497 = vpop.permute.xlu0 %496
      %s499 = scalar_lea.vmem %s385, 8
      %500 = vst.msk [vmem:[%s499] sm:$0xf] %vm488, %v497
      %501 = vrot.lane.b32.xlu0 %v485, 104
      %v502 = vpop.permute.xlu0 %501
      %s504 = scalar_lea.vmem %s385, 12
      %505 = vst.msk [vmem:[%s504] sm:$0xf] %vm488, %v502
      %v506 = vld [vmem:[%s2] sm:$0xff]
      %v507 = vld [vmem:[%s2 + $0x8] sm:$0xff]
      %v508 = vld [vmem:[%s2 + $0x10] sm:$0xff]
      %v509 = vld [vmem:[%s2 + $0x18] sm:$0xff]
      %v510 = vld [vmem:[%s5] sm:$0x1]
      %v512 = vlaneseq
      %v513 = vshrl.u32 %v512, 7
      %v514 = vsub.s32 0, %v513
      %v515 = vrot.slane %v510, %v514
      %517 = vmatprep.subr.mxu0 0.0
      %518 = vmatpush1.msra.mxu0 0.0
      %519 = vmatprep.subr.mxu0 0.0
      %520 = vmatpush1.msra.mxu0 0.0
      %521 = vmatprep.subr.mxu0 0.0
      %522 = vmatpush1.msra.mxu0 0.0
      %523 = vmatprep.subr.mxu0 0.0
      %524 = vmatpush1.msra.mxu0 0.0
      %525 = vmatprep.subr.mxu0 0.0
      %526 = vmatpush1.msra.mxu0 0.0
      %527 = vmatprep.subr.mxu0 0.0
      %528 = vmatpush1.msra.mxu0 0.0
      %529 = vmatprep.subr.mxu0 0.0
      %530 = vmatpush1.msra.mxu0 0.0
      %531 = vmatprep.subr.mxu0 0.0
      %532 = vmatpush1.msra.mxu0 0.0
      %533 = vmatprep.subr.mxu0 0.0
      %534 = vmatpush1.msra.mxu0 0.0
      %535 = vmatprep.subr.mxu0 0.0
      %536 = vmatpush1.msra.mxu0 0.0
      %537 = vmatprep.subr.mxu0 0.0
      %538 = vmatpush1.msra.mxu0 0.0
      %539 = vmatprep.subr.mxu0 0.0
      %540 = vmatpush1.msra.mxu0 0.0
      %541 = vmatprep.subr.mxu0 0.0
      %542 = vmatpush1.msra.mxu0 %v509
      %543 = vmatprep.subr.mxu0 0.0
      %544 = vmatpush1.msra.mxu0 %v508
      %545 = vmatprep.subr.mxu0 0.0
      %546 = vmatpush1.msra.mxu0 %v507
      %547 = vmatprep.subr.mxu0 0.0
      %548 = vmatpush1.msra.mxu0 %v506
      %549 = vmatprep.subr.mxu0 0.0
      %550 = vmatpush2.msra.mxu0 0.0
      %551 = vmatprep.subr.mxu0 0.0
      %552 = vmatpush2.msra.mxu0 0.0
      %553 = vmatprep.subr.mxu0 0.0
      %554 = vmatpush2.msra.mxu0 0.0
      %555 = vmatprep.subr.mxu0 0.0
      %556 = vmatpush2.msra.mxu0 0.0
      %557 = vmatprep.subr.mxu0 0.0
      %558 = vmatpush2.msra.mxu0 0.0
      %559 = vmatprep.subr.mxu0 0.0
      %560 = vmatpush2.msra.mxu0 0.0
      %561 = vmatprep.subr.mxu0 0.0
      %562 = vmatpush2.msra.mxu0 0.0
      %563 = vmatprep.subr.mxu0 0.0
      %564 = vmatpush2.msra.mxu0 0.0
      %565 = vmatprep.subr.mxu0 0.0
      %566 = vmatpush2.msra.mxu0 0.0
      %567 = vmatprep.subr.mxu0 0.0
      %568 = vmatpush2.msra.mxu0 0.0
      %569 = vmatprep.subr.mxu0 0.0
      %570 = vmatpush2.msra.mxu0 0.0
      %571 = vmatprep.subr.mxu0 0.0
      %572 = vmatpush2.msra.mxu0 0.0
      %573 = vmatprep.subr.mxu0 0.0
      %574 = vmatpush2.msra.mxu0 0.0
      %575 = vmatprep.subr.mxu0 0.0
      %576 = vmatpush2.msra.mxu0 0.0
      %577 = vmatprep.subr.mxu0 0.0
      %578 = vmatpush2.msra.mxu0 0.0
      %579 = vmatprep.subr.mxu0 0.0
      %580 = vmatpush2.msra.mxu0 0.0
      %581 = vmatprep.mubr.f32.mxu0 0.0
      %582 = vmatmul.mubr.f32.gmra.mxu0 %v416
      %v583 = vpop.f32.mrf.mxu0
      %v584 = vadd.f32 %v515, %v583
      %v585 = vpop.f32.mrf.mxu0
      %586 = vdwg.mxu0
      %587 = vst.msk [vmem:[%s393] sm:$0xf] %vm488, %v584
      %589 = vrot.lane.b32.xlu0 %v584, 120
      %v590 = vpop.permute.xlu0 %589
      %s592 = scalar_lea.vmem %s393, 4
      %593 = vst.msk [vmem:[%s592] sm:$0xf] %vm488, %v590
      %594 = vrot.lane.b32.xlu0 %v584, 112
      %v595 = vpop.permute.xlu0 %594
      %s597 = scalar_lea.vmem %s393, 8
      %598 = vst.msk [vmem:[%s597] sm:$0xf] %vm488, %v595
      %599 = vrot.lane.b32.xlu0 %v584, 104
      %v600 = vpop.permute.xlu0 %599
      %s602 = scalar_lea.vmem %s393, 12
      %603 = vst.msk [vmem:[%s602] sm:$0xf] %vm488, %v600
      %v604 = vld [vmem:[%s3] sm:$0xff]
      %v605 = vld [vmem:[%s3 + $0x8] sm:$0xff]
      %v606 = vld [vmem:[%s3 + $0x10] sm:$0xff]
      %v607 = vld [vmem:[%s3 + $0x18] sm:$0xff]
      %v608 = vld [vmem:[%s6] sm:$0x1]
      %v610 = vlaneseq
      %v611 = vshrl.u32 %v610, 7
      %v612 = vsub.s32 0, %v611
      %v613 = vrot.slane %v608, %v612
      %615 = vmatprep.subr.mxu0 0.0
      %616 = vmatpush1.msra.mxu0 0.0
      %617 = vmatprep.subr.mxu0 0.0
      %618 = vmatpush1.msra.mxu0 0.0
      %619 = vmatprep.subr.mxu0 0.0
      %620 = vmatpush1.msra.mxu0 0.0
      %621 = vmatprep.subr.mxu0 0.0
      %622 = vmatpush1.msra.mxu0 0.0
      %623 = vmatprep.subr.mxu0 0.0
      %624 = vmatpush1.msra.mxu0 0.0
      %625 = vmatprep.subr.mxu0 0.0
      %626 = vmatpush1.msra.mxu0 0.0
      %627 = vmatprep.subr.mxu0 0.0
      %628 = vmatpush1.msra.mxu0 0.0
      %629 = vmatprep.subr.mxu0 0.0
      %630 = vmatpush1.msra.mxu0 0.0
      %631 = vmatprep.subr.mxu0 0.0
      %632 = vmatpush1.msra.mxu0 0.0
      %633 = vmatprep.subr.mxu0 0.0
      %634 = vmatpush1.msra.mxu0 0.0
      %635 = vmatprep.subr.mxu0 0.0
      %636 = vmatpush1.msra.mxu0 0.0
      %637 = vmatprep.subr.mxu0 0.0
      %638 = vmatpush1.msra.mxu0 0.0
      %639 = vmatprep.subr.mxu0 0.0
      %640 = vmatpush1.msra.mxu0 %v607
      %641 = vmatprep.subr.mxu0 0.0
      %642 = vmatpush1.msra.mxu0 %v606
      %643 = vmatprep.subr.mxu0 0.0
      %644 = vmatpush1.msra.mxu0 %v605
      %645 = vmatprep.subr.mxu0 0.0
      %646 = vmatpush1.msra.mxu0 %v604
      %647 = vmatprep.subr.mxu0 0.0
      %648 = vmatpush2.msra.mxu0 0.0
      %649 = vmatprep.subr.mxu0 0.0
      %650 = vmatpush2.msra.mxu0 0.0
      %651 = vmatprep.subr.mxu0 0.0
      %652 = vmatpush2.msra.mxu0 0.0
      %653 = vmatprep.subr.mxu0 0.0
      %654 = vmatpush2.msra.mxu0 0.0
      %655 = vmatprep.subr.mxu0 0.0
      %656 = vmatpush2.msra.mxu0 0.0
      %657 = vmatprep.subr.mxu0 0.0
      %658 = vmatpush2.msra.mxu0 0.0
      %659 = vmatprep.subr.mxu0 0.0
      %660 = vmatpush2.msra.mxu0 0.0
      %661 = vmatprep.subr.mxu0 0.0
      %662 = vmatpush2.msra.mxu0 0.0
      %663 = vmatprep.subr.mxu0 0.0
      %664 = vmatpush2.msra.mxu0 0.0
      %665 = vmatprep.subr.mxu0 0.0
      %666 = vmatpush2.msra.mxu0 0.0
      %667 = vmatprep.subr.mxu0 0.0
      %668 = vmatpush2.msra.mxu0 0.0
      %669 = vmatprep.subr.mxu0 0.0
      %670 = vmatpush2.msra.mxu0 0.0
      %671 = vmatprep.subr.mxu0 0.0
      %672 = vmatpush2.msra.mxu0 0.0
      %673 = vmatprep.subr.mxu0 0.0
      %674 = vmatpush2.msra.mxu0 0.0
      %675 = vmatprep.subr.mxu0 0.0
      %676 = vmatpush2.msra.mxu0 0.0
      %677 = vmatprep.subr.mxu0 0.0
      %678 = vmatpush2.msra.mxu0 0.0
      %679 = vmatprep.mubr.f32.mxu0 0.0
      %680 = vmatmul.mubr.f32.gmra.mxu0 %v416
      %v681 = vpop.f32.mrf.mxu0
      %v682 = vadd.f32 %v613, %v681
      %v683 = vpop.f32.mrf.mxu0
      %684 = vdwg.mxu0
      %685 = vst.msk [vmem:[%s401] sm:$0xf] %vm488, %v682
      %687 = vrot.lane.b32.xlu0 %v682, 120
      %v688 = vpop.permute.xlu0 %687
      %s690 = scalar_lea.vmem %s401, 4
      %691 = vst.msk [vmem:[%s690] sm:$0xf] %vm488, %v688
      %692 = vrot.lane.b32.xlu0 %v682, 112
      %v693 = vpop.permute.xlu0 %692
      %s695 = scalar_lea.vmem %s401, 8
      %696 = vst.msk [vmem:[%s695] sm:$0xf] %vm488, %v693
      %697 = vrot.lane.b32.xlu0 %v682, 104
      %v698 = vpop.permute.xlu0 %697
      %s700 = scalar_lea.vmem %s401, 12
      %701 = vst.msk [vmem:[%s700] sm:$0xf] %vm488, %v698
      %p702 = scmp.lt.s32.totalorder %s25, 1
      %s703 = scalar_select %p702, %s25, 1
      %p704 = scmp.lt.s32.totalorder %s26, 0
      %s705 = scalar_select %p704, %s26, 0
      %s706 = smul.addr %s703, 4
      %s707 = sadd.s32 %s705, %s706
      %s708 = smul.addr %s707, 4
      %s709 = scalar_lea.vmem %s7, %s708
      %p710 = scmp.lt.s32.totalorder %s25, 1
      %s711 = scalar_select %p710, %s25, 1
      %p712 = scmp.lt.s32.totalorder %s26, 0
      %s713 = scalar_select %p712, %s26, 0
      %s714 = smul.addr %s711, 4
      %s715 = sadd.s32 %s713, %s714
      %s716 = smul.addr %s715, 4
      %s717 = scalar_lea.vmem %s8, %s716
      %p718 = scmp.lt.s32.totalorder %s25, 1
      %s719 = scalar_select %p718, %s25, 1
      %p720 = scmp.lt.s32.totalorder %s26, 0
      %s721 = scalar_select %p720, %s26, 0
      %s722 = smul.addr %s719, 4
      %s723 = sadd.s32 %s721, %s722
      %s724 = smul.addr %s723, 4
      %s725 = scalar_lea.vmem %s9, %s724
      // Predicated region
      $region49: #{multi_scale_attention.8} parent=47 // pred_check
        %p726 = pneg %p207
      $region50: #{multi_scale_attention.8} parent=47 // pred_check_branch
        %728 = sbr.rel (%p726) target = $region52
      $region51: #{multi_scale_attention.8} parent=47 // pred_region
        _
      $region52: #{multi_scale_attention.8} parent=47 // pred_fallthru
        _
      // Predicated region
      $region53: #{multi_scale_attention.8} parent=47 // pred_check
        %p729 = pneg %p235
      $region54: #{multi_scale_attention.8} parent=47 // pred_check_branch
        %731 = sbr.rel (%p729) target = $region56
      $region55: #{multi_scale_attention.8} parent=47 // pred_region
        _
      $region56: #{multi_scale_attention.8} parent=47 // pred_fallthru
        _
      // Predicated region
      $region57: #{multi_scale_attention.8} parent=47 // pred_check
        %p732 = pneg %p263
      $region58: #{multi_scale_attention.8} parent=47 // pred_check_branch
        %734 = sbr.rel (%p732) target = $region60
      $region59: #{multi_scale_attention.8} parent=47 // pred_region
        _
      $region60: #{multi_scale_attention.8} parent=47 // pred_fallthru
        _
    $region48: #{multi_scale_attention.8} parent=5 // pred_fallthru
      _
    %p735 = scmp.le.s32.totalorder 2, %s16
    // Predicated region
    $region61: #{multi_scale_attention.8} parent=5 // pred_check
      %p736 = pneg %p735
    $region62: #{multi_scale_attention.8} parent=5 // pred_check_branch
      %738 = sbr.rel (%p736) target = $region64
    $region63: #{multi_scale_attention.8} parent=5 // pred_region
      %s739 = ssub.s32 %s16, 2
      // Predicated region
      $region65: #{multi_scale_attention.8} parent=63 // pred_check
        %p740 = pneg %p213
      $region66: #{multi_scale_attention.8} parent=63 // pred_check_branch
        %742 = sbr.rel (%p740) target = $region68
      $region67: #{multi_scale_attention.8} parent=63 // pred_region
        %p743 = scmp.lt.s32.totalorder %s27, 1
        %s744 = scalar_select %p743, %s27, 1
        %p745 = scmp.lt.s32.totalorder %s28, 0
        %s746 = scalar_select %p745, %s28, 0
        %s747 = smul.addr %s744, 4
        %s748 = sadd.s32 %s746, %s747
        %s749 = smul.addr %s748, 4
        %s750 = scalar_lea.vmem %s7, %s749
      $region68: #{multi_scale_attention.8} parent=63 // pred_fallthru
        _
      // Predicated region
      $region69: #{multi_scale_attention.8} parent=63 // pred_check
        %p751 = pneg %p241
      $region70: #{multi_scale_attention.8} parent=63 // pred_check_branch
        %753 = sbr.rel (%p751) target = $region72
      $region71: #{multi_scale_attention.8} parent=63 // pred_region
        %p754 = scmp.lt.s32.totalorder %s27, 1
        %s755 = scalar_select %p754, %s27, 1
        %p756 = scmp.lt.s32.totalorder %s28, 0
        %s757 = scalar_select %p756, %s28, 0
        %s758 = smul.addr %s755, 4
        %s759 = sadd.s32 %s757, %s758
        %s760 = smul.addr %s759, 4
        %s761 = scalar_lea.vmem %s8, %s760
      $region72: #{multi_scale_attention.8} parent=63 // pred_fallthru
        _
      // Predicated region
      $region73: #{multi_scale_attention.8} parent=63 // pred_check
        %p762 = pneg %p269
      $region74: #{multi_scale_attention.8} parent=63 // pred_check_branch
        %764 = sbr.rel (%p762) target = $region76
      $region75: #{multi_scale_attention.8} parent=63 // pred_region
        %p765 = scmp.lt.s32.totalorder %s27, 1
        %s766 = scalar_select %p765, %s27, 1
        %p767 = scmp.lt.s32.totalorder %s28, 0
        %s768 = scalar_select %p767, %s28, 0
        %s769 = smul.addr %s766, 4
        %s770 = sadd.s32 %s768, %s769
        %s771 = smul.addr %s770, 4
        %s772 = scalar_lea.vmem %s9, %s771
      $region76: #{multi_scale_attention.8} parent=63 // pred_fallthru
        _
    $region64: #{multi_scale_attention.8} parent=5 // pred_fallthru
      _
  $region6: #{multi_scale_attention.8} parent=0 // loop_footer
    %s20 = sadd.s32 1, %s16
  $region7: #{multi_scale_attention.8} parent=0 // loop_footer_branch
    %15 = sbr.rel target = $region3
  $region8: #{multi_scale_attention.8} parent=0 // loop_exit
    _

// kernel: multi_scale_attention.7
$region0: #{multi_scale_attention.7}
  #allocation0 [shape = 'u32[]', space=smem, size = 0x4, offset = 0x4, fixed_abs, tag = 'smem constant byte address 0x4 - core index']
  #allocation1 [shape = 'u32[144,128]{1,0:T(1,128)}', space=vmem, size = 0x12000, scoped, tag = 'internal scratch']
  #allocation2 [shape = 'f32[4,8,1]{2,1,0:T(8,128)}', space=vmem, size = 0x4000, scoped, tag = 'scratch operand']
  #allocation3 [shape = 'f32[4,8,1]{2,1,0:T(8,128)}', space=vmem, size = 0x4000, scoped, tag = 'scratch operand']
  #allocation4 [shape = 'f32[4,8,8]{2,1,0:T(8,128)}', space=vmem, size = 0x4000, scoped, tag = 'scratch operand']
  %s0 = inlined_call_operand.vmem [shape: f32[2,4,8,8], index: 0, kind: input, shape index: {}]
  %s1 = inlined_call_operand.vmem [shape: f32[2,4,8,8], index: 1, kind: input, shape index: {}]
  %s2 = inlined_call_operand.vmem [shape: f32[2,4,8,8], index: 2, kind: input, shape index: {}]
  %s3 = inlined_call_operand.vmem [shape: f32[32,32], index: 3, kind: input, shape index: {}]
  %s4 = inlined_call_operand.vmem [shape: f32[2,8,32], index: 4, kind: output, shape index: {}]
  %s5 = sld [smem:[#allocation0]]
  $region61: #{multi_scale_attention.7} parent=0
    _
  %s7 = ssub.s32 1, %s5
  %s8 = scalar_select 0, %s7, %s5
  loop: start=0, step=1, limit=4
  $region2: #{multi_scale_attention.7} parent=0 // loop_pre_header
    _
  $region3: #{multi_scale_attention.7} parent=0 // loop_header
    %s10 = sphi 0, %s14
    %p11 = scmp.ge.s32.totalorder %s10, 4
    %s17 = sphi 0, %s36
    %s18 = sphi 0, %s32
    %s19 = sphi 0, %s28
    %s20 = sphi 0, %s17
    %s21 = sphi 0, %s18
    %s22 = sphi 0, %s19
    %s23 = sphi 0, %s20
    %s24 = sphi 0, %s21
    %s25 = sphi 0, %s22
    %s41 = sphi 0, %s43
    %s44 = sphi 0, %s41
    %s45 = sphi 0, %s44
    %s61 = sphi 0, %s45
    %s69 = sphi 0, %s71
    %s72 = sphi 0, %s69
    %s73 = sphi 0, %s72
    %s89 = sphi 0, %s73
    %s97 = sphi 0, %s99
    %s100 = sphi 0, %s97
    %s101 = sphi 0, %s100
    %s117 = sphi 0, %s101
    %s121 = sphi 0, %s121
    %s123 = sphi 0, %s121
    %s124 = sphi 0, %s123
    %s138 = sphi 0, %s124
    %s146 = sphi 0, %s148
    %s149 = sphi 0, %s146
    %s150 = sphi 0, %s149
    %s166 = sphi 0, %s150
  $region4: #{multi_scale_attention.7} parent=0 // loop_header_branch
    %13 = sbr.rel (%p11) target = $region8
  $region5: #{multi_scale_attention.7} parent=0 // loop_body
    %s15 = ssub.s32 %s10, 1
    %s16 = ssub.s32 %s10, 2
    %s26 = sadd.s32 1, %s19
    %p27 = scmp.ge.s32.totalorder %s26, 1
    %s28 = scalar_select %p27, 0, %s26
    %s29 = sadd.s32 1, %s18
    %s30 = scalar_select %p27, %s29, %s18
    %p31 = scmp.ge.s32.totalorder %s30, 1
    %s32 = scalar_select %p31, 0, %s30
    %s33 = sadd.s32 1, %s17
    %s34 = scalar_select %p31, %s33, %s17
    %p35 = scmp.ge.s32.totalorder %s34, 2
    %s36 = scalar_select %p35, 0, %s34
    %s37 = ssub.s32 %s17, %s36
    %s38 = ssub.s32 %s18, %s32
    %s39 = sor.u32 %s37, %s38
    %p40 = scmp.eq.s32.totalorder %s39, 0
    %s42 = sadd.s32 %s41, 1
    %s43 = scalar_select %p40, %s41, %s42
    %p46 = pneg %p40
    %p47 = scmp.eq.s32.totalorder %s10, 1
    %p48 = por %p46, %p47
    %p49 = scmp.ne.s32.totalorder %s41, %s44
    %p50 = scmp.eq.s32.totalorder %s10, 0
    %p51 = por %p49, %p50
    %p52 = scmp.ne.s32.totalorder %s41, %s44
    %p53 = scmp.eq.s32.totalorder %s15, 1
    %p54 = por %p52, %p53
    %p55 = scmp.ne.s32.totalorder %s44, %s45
    %p56 = scmp.eq.s32.totalorder %s15, 0
    %p57 = por %p55, %p56
    %p58 = scmp.ne.s32.totalorder %s44, %s45
    %p59 = scmp.eq.s32.totalorder %s16, 1
    %p60 = por %p58, %p59
    %p62 = scmp.ne.s32.totalorder %s45, %s61
    %p63 = scmp.eq.s32.totalorder %s16, 0
    %p64 = por %p62, %p63
    %s65 = ssub.s32 %s17, %s36
    %s66 = ssub.s32 %s19, %s28
    %s67 = sor.u32 %s65, %s66
    %p68 = scmp.eq.s32.totalorder %s67, 0
    %s70 = sadd.s32 %s69, 1
    %s71 = scalar_select %p68, %s69, %s70
    %p74 = pneg %p68
    %p75 = scmp.eq.s32.totalorder %s10, 1
    %p76 = por %p74, %p75
    %p77 = scmp.ne.s32.totalorder %s69, %s72
    %p78 = scmp.eq.s32.totalorder %s10, 0
    %p79 = por %p77, %p78
    %p80 = scmp.ne.s32.totalorder %s69, %s72
    %p81 = scmp.eq.s32.totalorder %s15, 1
    %p82 = por %p80, %p81
    %p83 = scmp.ne.s32.totalorder %s72, %s73
    %p84 = scmp.eq.s32.totalorder %s15, 0
    %p85 = por %p83, %p84
    %p86 = scmp.ne.s32.totalorder %s72, %s73
    %p87 = scmp.eq.s32.totalorder %s16, 1
    %p88 = por %p86, %p87
    %p90 = scmp.ne.s32.totalorder %s73, %s89
    %p91 = scmp.eq.s32.totalorder %s16, 0
    %p92 = por %p90, %p91
    %s93 = ssub.s32 %s17, %s36
    %s94 = ssub.s32 %s19, %s28
    %s95 = sor.u32 %s93, %s94
    %p96 = scmp.eq.s32.totalorder %s95, 0
    %s98 = sadd.s32 %s97, 1
    %s99 = scalar_select %p96, %s97, %s98
    %p102 = pneg %p96
    %p103 = scmp.eq.s32.totalorder %s10, 1
    %p104 = por %p102, %p103
    %p105 = scmp.ne.s32.totalorder %s97, %s100
    %p106 = scmp.eq.s32.totalorder %s10, 0
    %p107 = por %p105, %p106
    %p108 = scmp.ne.s32.totalorder %s97, %s100
    %p109 = scmp.eq.s32.totalorder %s15, 1
    %p110 = por %p108, %p109
    %p111 = scmp.ne.s32.totalorder %s100, %s101
    %p112 = scmp.eq.s32.totalorder %s15, 0
    %p113 = por %p111, %p112
    %p114 = scmp.ne.s32.totalorder %s100, %s101
    %p115 = scmp.eq.s32.totalorder %s16, 1
    %p116 = por %p114, %p115
    %p118 = scmp.ne.s32.totalorder %s101, %s117
    %p119 = scmp.eq.s32.totalorder %s16, 0
    %p120 = por %p118, %p119
    %s122 = sadd.s32 %s121, 1
    %p125 = scmp.eq.s32.totalorder %s10, 1
    %p126 = scmp.ne.s32.totalorder %s121, %s123
    %p127 = scmp.eq.s32.totalorder %s10, 0
    %p128 = por %p126, %p127
    %p129 = scmp.ne.s32.totalorder %s121, %s123
    %p130 = scmp.eq.s32.totalorder %s15, 1
    %p131 = por %p129, %p130
    %p132 = scmp.ne.s32.totalorder %s123, %s124
    %p133 = scmp.eq.s32.totalorder %s15, 0
    %p134 = por %p132, %p133
    %p135 = scmp.ne.s32.totalorder %s123, %s124
    %p136 = scmp.eq.s32.totalorder %s16, 1
    %p137 = por %p135, %p136
    %p139 = scmp.ne.s32.totalorder %s124, %s138
    %p140 = scmp.eq.s32.totalorder %s16, 0
    %p141 = por %p139, %p140
    %s142 = ssub.s32 %s17, %s36
    %s143 = ssub.s32 %s18, %s32
    %s144 = sor.u32 %s142, %s143
    %p145 = scmp.eq.s32.totalorder %s144, 0
    %s147 = sadd.s32 %s146, 1
    %s148 = scalar_select %p145, %s146, %s147
    %p151 = pneg %p145
    %p152 = scmp.eq.s32.totalorder %s10, 1
    %p153 = por %p151, %p152
    %p154 = scmp.ne.s32.totalorder %s146, %s149
    %p155 = scmp.eq.s32.totalorder %s10, 0
    %p156 = por %p154, %p155
    %p157 = scmp.ne.s32.totalorder %s146, %s149
    %p158 = scmp.eq.s32.totalorder %s15, 1
    %p159 = por %p157, %p158
    %p160 = scmp.ne.s32.totalorder %s149, %s150
    %p161 = scmp.eq.s32.totalorder %s15, 0
    %p162 = por %p160, %p161
    %p163 = scmp.ne.s32.totalorder %s149, %s150
    %p164 = scmp.eq.s32.totalorder %s16, 1
    %p165 = por %p163, %p164
    %p167 = scmp.ne.s32.totalorder %s150, %s166
    %p168 = scmp.eq.s32.totalorder %s16, 0
    %p169 = por %p167, %p168
    %p170 = scmp.le.s32.totalorder 1, %s10
    %p171 = scmp.lt.s32.totalorder %s10, 3
    %p172 = pnand %p170, %p171
    %p173 = pneg %p172
    // Predicated region
    $region9: #{multi_scale_attention.7} parent=5 // pred_check
      _
    $region10: #{multi_scale_attention.7} parent=5 // pred_check_branch
      %175 = sbr.rel (%p172) target = $region12
    $region11: #{multi_scale_attention.7} parent=5 // pred_region
      %s176 = ssub.s32 %s10, 1
      // Predicated region
      $region13: #{multi_scale_attention.7} parent=11 // pred_check
        %p177 = pneg %p134
      $region14: #{multi_scale_attention.7} parent=11 // pred_check_branch
        %179 = sbr.rel (%p177) target = $region16
      $region15: #{multi_scale_attention.7} parent=11 // pred_region
        _
      $region16: #{multi_scale_attention.7} parent=11 // pred_fallthru
        _
    $region12: #{multi_scale_attention.7} parent=5 // pred_fallthru
      _
    %p180 = scmp.lt.s32.totalorder %s10, 2
    // Predicated region
    $region17: #{multi_scale_attention.7} parent=5 // pred_check
      %p181 = pneg %p180
    $region18: #{multi_scale_attention.7} parent=5 // pred_check_branch
      %183 = sbr.rel (%p181) target = $region20
    $region19: #{multi_scale_attention.7} parent=5 // pred_region
      // Predicated region
      $region21: #{multi_scale_attention.7} parent=19 // pred_check
        %p184 = pneg %p51
      $region22: #{multi_scale_attention.7} parent=19 // pred_check_branch
        %186 = sbr.rel (%p184) target = $region24
      $region23: #{multi_scale_attention.7} parent=19 // pred_region
        %p187 = scmp.lt.s32.totalorder %s17, 1
        %s188 = scalar_select %p187, %s17, 1
        %p189 = scmp.lt.s32.totalorder %s18, 0
        %s190 = scalar_select %p189, %s18, 0
        %s191 = smul.addr %s188, 4
        %s192 = sadd.s32 %s190, %s191
        %s193 = smul.addr %s192, 8
        %s194 = scalar_lea.vmem %s0, %s193
      $region24: #{multi_scale_attention.7} parent=19 // pred_fallthru
        _
      // Predicated region
      $region25: #{multi_scale_attention.7} parent=19 // pred_check
        %p195 = pneg %p79
      $region26: #{multi_scale_attention.7} parent=19 // pred_check_branch
        %197 = sbr.rel (%p195) target = $region28
      $region27: #{multi_scale_attention.7} parent=19 // pred_region
        %p198 = scmp.lt.s32.totalorder %s17, 1
        %s199 = scalar_select %p198, %s17, 1
        %p200 = scmp.lt.s32.totalorder %s19, 0
        %s201 = scalar_select %p200, %s19, 0
        %s202 = smul.addr %s199, 4
        %s203 = sadd.s32 %s201, %s202
        %s204 = smul.addr %s203, 8
        %s205 = scalar_lea.vmem %s1, %s204
      $region28: #{multi_scale_attention.7} parent=19 // pred_fallthru
        _
      // Predicated region
      $region29: #{multi_scale_attention.7} parent=19 // pred_check
        %p206 = pneg %p107
      $region30: #{multi_scale_attention.7} parent=19 // pred_check_branch
        %208 = sbr.rel (%p206) target = $region32
      $region31: #{multi_scale_attention.7} parent=19 // pred_region
        %p209 = scmp.lt.s32.totalorder %s17, 1
        %s210 = scalar_select %p209, %s17, 1
        %p211 = scmp.lt.s32.totalorder %s19, 0
        %s212 = scalar_select %p211, %s19, 0
        %s213 = smul.addr %s210, 4
        %s214 = sadd.s32 %s212, %s213
        %s215 = smul.addr %s214, 8
        %s216 = scalar_lea.vmem %s2, %s215
      $region32: #{multi_scale_attention.7} parent=19 // pred_fallthru
        _
    $region20: #{multi_scale_attention.7} parent=5 // pred_fallthru
      _
    %p217 = scmp.le.s32.totalorder 1, %s10
    %p218 = scmp.lt.s32.totalorder %s10, 3
    %p219 = pnand %p217, %p218
    %p220 = pneg %p219
    // Predicated region
    $region33: #{multi_scale_attention.7} parent=5 // pred_check
      _
    $region34: #{multi_scale_attention.7} parent=5 // pred_check_branch
      %222 = sbr.rel (%p219) target = $region36
    $region35: #{multi_scale_attention.7} parent=5 // pred_region
      %s223 = ssub.s32 %s10, 1
      %p224 = scmp.lt.s32.totalorder %s20, 1
      %s225 = scalar_select %p224, %s20, 1
      %p226 = scmp.lt.s32.totalorder %s21, 0
      %s227 = scalar_select %p226, %s21, 0
      %s228 = smul.addr %s225, 4
      %s229 = sadd.s32 %s227, %s228
      %s230 = smul.addr %s229, 8
      %s231 = scalar_lea.vmem %s0, %s230
      %p232 = pneg %p57
      %p233 = pneg %p54
      %p234 = scmp.lt.s32.totalorder %s20, 1
      %s235 = scalar_select %p234, %s20, 1
      %p236 = scmp.lt.s32.totalorder %s22, 0
      %s237 = scalar_select %p236, %s22, 0
      %s238 = smul.addr %s235, 4
      %s239 = sadd.s32 %s237, %s238
      %s240 = smul.addr %s239, 8
      %s241 = scalar_lea.vmem %s1, %s240
      %p242 = pneg %p85
      %p243 = pneg %p82
      %p244 = scmp.lt.s32.totalorder %s20, 1
      %s245 = scalar_select %p244, %s20, 1
      %p246 = scmp.lt.s32.totalorder %s22, 0
      %s247 = scalar_select %p246, %s22, 0
      %s248 = smul.addr %s245, 4
      %s249 = sadd.s32 %s247, %s248
      %s250 = smul.addr %s249, 8
      %s251 = scalar_lea.vmem %s2, %s250
      %p252 = pneg %p113
      %p253 = pneg %p110
      %p254 = pneg %p134
      %p255 = pneg %p131
      %p256 = pneg %p162
      %p257 = pneg %p159
      %p258 = scmp.lt.s32.totalorder %s20, 1
      %s259 = scalar_select %p258, %s20, 1
      %p260 = scmp.lt.s32.totalorder %s21, 0
      %s261 = scalar_select %p260, %s21, 0
      %s262 = sadd.s32 %s261, %s259
      %s263 = smul.addr %s262, 8
      %s264 = scalar_lea.vmem %s4, %s263
      %p265 = scmp.lt.s32.totalorder %s20, 1
      %s266 = scalar_select %p265, %s20, 1
      %p267 = scmp.lt.s32.totalorder %s21, 0
      %s268 = scalar_select %p267, %s21, 0
      %s269 = smul.addr %s266, 4
      %s270 = sadd.s32 %s268, %s269
      %s271 = smul.addr %s270, 8
      %s272 = scalar_lea.vmem %s0, %s271
      %p273 = scmp.lt.s32.totalorder %s20, 1
      %s274 = scalar_select %p273, %s20, 1
      %p275 = scmp.lt.s32.totalorder %s22, 0
      %s276 = scalar_select %p275, %s22, 0
      %s277 = smul.addr %s274, 4
      %s278 = sadd.s32 %s276, %s277
      %s279 = smul.addr %s278, 8
      %s280 = scalar_lea.vmem %s1, %s279
      %p281 = scmp.lt.s32.totalorder %s20, 1
      %s282 = scalar_select %p281, %s20, 1
      %p283 = scmp.lt.s32.totalorder %s22, 0
      %s284 = scalar_select %p283, %s22, 0
      %s285 = smul.addr %s282, 4
      %s286 = sadd.s32 %s284, %s285
      %s287 = smul.addr %s286, 8
      %s288 = scalar_lea.vmem %s2, %s287
      %p289 = scmp.lt.s32.totalorder %s20, 1
      %s290 = scalar_select %p289, %s20, 1
      %p291 = scmp.lt.s32.totalorder %s21, 0
      %s292 = scalar_select %p291, %s21, 0
      %s293 = sadd.s32 %s292, %s290
      %s294 = smul.addr %s293, 8
      %s295 = scalar_lea.vmem %s4, %s294
      %p296 = scmp.eq.s32.totalorder %s22, 0
      // Predicated region
      $region37: #{multi_scale_attention.7} parent=35 // pred_check
        %p297 = pneg %p296
      $region38: #{multi_scale_attention.7} parent=35 // pred_check_branch
        %299 = sbr.rel (%p297) target = $region40
      $region39: #{multi_scale_attention.7} parent=35 // pred_region
        %vm300 = vcmask 7168
        %301 = vst.msk [vmem:[#allocation2] sm:$0xff] %vm300, -1e+30
        %302 = vst.msk [vmem:[#allocation2 + $0x8] sm:$0xff] %vm300, -1e+30
        %303 = vst.msk [vmem:[#allocation2 + $0x10] sm:$0xff] %vm300, -1e+30
        %304 = vst.msk [vmem:[#allocation2 + $0x18] sm:$0xff] %vm300, -1e+30
        %305 = vst.msk [vmem:[#allocation3] sm:$0xff] %vm300, 0.0
        %306 = vst.msk [vmem:[#allocation3 + $0x8] sm:$0xff] %vm300, 0.0
        %307 = vst.msk [vmem:[#allocation3 + $0x10] sm:$0xff] %vm300, 0.0
        %308 = vst.msk [vmem:[#allocation3 + $0x18] sm:$0xff] %vm300, 0.0
        %vm309 = vcmask 64512
        %310 = vst.msk [vmem:[#allocation4] sm:$0xff] %vm309, 0.0
        %311 = vst.msk [vmem:[#allocation4 + $0x8] sm:$0xff] %vm309, 0.0
        %312 = vst.msk [vmem:[#allocation4 + $0x10] sm:$0xff] %vm309, 0.0
        %313 = vst.msk [vmem:[#allocation4 + $0x18] sm:$0xff] %vm309, 0.0
      $region40: #{multi_scale_attention.7} parent=35 // pred_fallthru
        _
      %p314 = scmp.le.s32.totalorder %s22, %s21
      // Predicated region
      $region41: #{multi_scale_attention.7} parent=35 // pred_check
        %p315 = pneg %p314
      $region42: #{multi_scale_attention.7} parent=35 // pred_check_branch
        %317 = sbr.rel (%p315) target = $region44
      $region43: #{multi_scale_attention.7} parent=35 // pred_region
        %v318 = vld [vmem:[%s272] sm:$0xff]
        %v319 = vld [vmem:[%s272 + $0x8] sm:$0xff]
        %v320 = vld [vmem:[%s272 + $0x10] sm:$0xff]
        %v321 = vld [vmem:[%s272 + $0x18] sm:$0xff]
        %v322 = vld [vmem:[%s280] sm:$0xff]
        %v323 = vld [vmem:[%s280 + $0x8] sm:$0xff]
        %v324 = vld [vmem:[%s280 + $0x10] sm:$0xff]
        %v325 = vld [vmem:[%s280 + $0x18] sm:$0xff]
        %v326 = vld [vmem:[%s288] sm:$0xff]
        %v327 = vld [vmem:[%s288 + $0x8] sm:$0xff]
        %v328 = vld [vmem:[%s288 + $0x10] sm:$0xff]
        %v329 = vld [vmem:[%s288 + $0x18] sm:$0xff]
        %vm330 = vcmask 64512
        %v332 = vsel %vm330, %v318, 0
        %v335 = vsel %vm330, %v322, 0
        %337 = vmatprep.subr.mxu0 0.0
        %338 = vmatpush1.xpose.msra.mxu0 0.0
        %339 = vmatprep.subr.mxu0 0.0
        %340 = vmatpush1.xpose.msra.mxu0 0.0
        %341 = vmatprep.subr.mxu0 0.0
        %342 = vmatpush1.xpose.msra.mxu0 0.0
        %343 = vmatprep.subr.mxu0 0.0
        %344 = vmatpush1.xpose.msra.mxu0 0.0
        %345 = vmatprep.subr.mxu0 0.0
        %346 = vmatpush1.xpose.msra.mxu0 0.0
        %347 = vmatprep.subr.mxu0 0.0
        %348 = vmatpush1.xpose.msra.mxu0 0.0
        %349 = vmatprep.subr.mxu0 0.0
        %350 = vmatpush1.xpose.msra.mxu0 0.0
        %351 = vmatprep.subr.mxu0 0.0
        %352 = vmatpush1.xpose.msra.mxu0 0.0
        %353 = vmatprep.subr.mxu0 0.0
        %354 = vmatpush1.xpose.msra.mxu0 0.0
        %355 = vmatprep.subr.mxu0 0.0
        %356 = vmatpush1.xpose.msra.mxu0 0.0
        %357 = vmatprep.subr.mxu0 0.0
        %358 = vmatpush1.xpose.msra.mxu0 0.0
        %359 = vmatprep.subr.mxu0 0.0
        %360 = vmatpush1.xpose.msra.mxu0 0.0
        %361 = vmatprep.subr.mxu0 0.0
        %362 = vmatpush1.xpose.msra.mxu0 0.0
        %363 = vmatprep.subr.mxu0 0.0
        %364 = vmatpush1.xpose.msra.mxu0 0.0
        %365 = vmatprep.subr.mxu0 0.0
        %366 = vmatpush1.xpose.msra.mxu0 0.0
        %367 = vmatprep.subr.mxu0 0.0
        %368 = vmatpush1.xpose.msra.mxu0 %v335
        %369 = vmatprep.subr.mxu0 0.0
        %370 = vmatpush2.xpose.msra.mxu0 0.0
        %371 = vmatprep.subr.mxu0 0.0
        %372 = vmatpush2.xpose.msra.mxu0 0.0
        %373 = vmatprep.subr.mxu0 0.0
        %374 = vmatpush2.xpose.msra.mxu0 0.0
        %375 = vmatprep.subr.mxu0 0.0
        %376 = vmatpush2.xpose.msra.mxu0 0.0
        %377 = vmatprep.subr.mxu0 0.0
        %378 = vmatpush2.xpose.msra.mxu0 0.0
        %379 = vmatprep.subr.mxu0 0.0
        %380 = vmatpush2.xpose.msra.mxu0 0.0
        %381 = vmatprep.subr.mxu0 0.0
        %382 = vmatpush2.xpose.msra.mxu0 0.0
        %383 = vmatprep.subr.mxu0 0.0
        %384 = vmatpush2.xpose.msra.mxu0 0.0
        %385 = vmatprep.subr.mxu0 0.0
        %386 = vmatpush2.xpose.msra.mxu0 0.0
        %387 = vmatprep.subr.mxu0 0.0
        %388 = vmatpush2.xpose.msra.mxu0 0.0
        %389 = vmatprep.subr.mxu0 0.0
        %390 = vmatpush2.xpose.msra.mxu0 0.0
        %391 = vmatprep.subr.mxu0 0.0
        %392 = vmatpush2.xpose.msra.mxu0 0.0
        %393 = vmatprep.subr.mxu0 0.0
        %394 = vmatpush2.xpose.msra.mxu0 0.0
        %395 = vmatprep.subr.mxu0 0.0
        %396 = vmatpush2.xpose.msra.mxu0 0.0
        %397 = vmatprep.subr.mxu0 0.0
        %398 = vmatpush2.xpose.msra.mxu0 0.0
        %399 = vmatprep.subr.mxu0 0.0
        %400 = vmatpush2.xpose.msra.mxu0 0.0
        %401 = vmatprep.mubr.f32.mxu0 0.0
        %402 = vmatmul.mubr.f32.gmra.mxu0 %v332
        %v403 = vpop.f32.mrf.mxu0
        %v404 = vadd.f32 0.0, %v403
        %v405 = vpop.f32.mrf.mxu0
        %406 = vdwg.mxu0
        %v408 = vsel %vm330, %v319, 0
        %v411 = vsel %vm330, %v323, 0
        %413 = vmatprep.subr.mxu0 0.0
        %414 = vmatpush1.xpose.msra.mxu0 0.0
        %415 = vmatprep.subr.mxu0 0.0
        %416 = vmatpush1.xpose.msra.mxu0 0.0
        %417 = vmatprep.subr.mxu0 0.0
        %418 = vmatpush1.xpose.msra.mxu0 0.0
        %419 = vmatprep.subr.mxu0 0.0
        %420 = vmatpush1.xpose.msra.mxu0 0.0
        %421 = vmatprep.subr.mxu0 0.0
        %422 = vmatpush1.xpose.msra.mxu0 0.0
        %423 = vmatprep.subr.mxu0 0.0
        %424 = vmatpush1.xpose.msra.mxu0 0.0
        %425 = vmatprep.subr.mxu0 0.0
        %426 = vmatpush1.xpose.msra.mxu0 0.0
        %427 = vmatprep.subr.mxu0 0.0
        %428 = vmatpush1.xpose.msra.mxu0 0.0
        %429 = vmatprep.subr.mxu0 0.0
        %430 = vmatpush1.xpose.msra.mxu0 0.0
        %431 = vmatprep.subr.mxu0 0.0
        %432 = vmatpush1.xpose.msra.mxu0 0.0
        %433 = vmatprep.subr.mxu0 0.0
        %434 = vmatpush1.xpose.msra.mxu0 0.0
        %435 = vmatprep.subr.mxu0 0.0
        %436 = vmatpush1.xpose.msra.mxu0 0.0
        %437 = vmatprep.subr.mxu0 0.0
        %438 = vmatpush1.xpose.msra.mxu0 0.0
        %439 = vmatprep.subr.mxu0 0.0
        %440 = vmatpush1.xpose.msra.mxu0 0.0
        %441 = vmatprep.subr.mxu0 0.0
        %442 = vmatpush1.xpose.msra.mxu0 0.0
        %443 = vmatprep.subr.mxu0 0.0
        %444 = vmatpush1.xpose.msra.mxu0 %v411
        %445 = vmatprep.subr.mxu0 0.0
        %446 = vmatpush2.xpose.msra.mxu0 0.0
        %447 = vmatprep.subr.mxu0 0.0
        %448 = vmatpush2.xpose.msra.mxu0 0.0
        %449 = vmatprep.subr.mxu0 0.0
        %450 = vmatpush2.xpose.msra.mxu0 0.0
        %451 = vmatprep.subr.mxu0 0.0
        %452 = vmatpush2.xpose.msra.mxu0 0.0
        %453 = vmatprep.subr.mxu0 0.0
        %454 = vmatpush2.xpose.msra.mxu0 0.0
        %455 = vmatprep.subr.mxu0 0.0
        %456 = vmatpush2.xpose.msra.mxu0 0.0
        %457 = vmatprep.subr.mxu0 0.0
        %458 = vmatpush2.xpose.msra.mxu0 0.0
        %459 = vmatprep.subr.mxu0 0.0
        %460 = vmatpush2.xpose.msra.mxu0 0.0
        %461 = vmatprep.subr.mxu0 0.0
        %462 = vmatpush2.xpose.msra.mxu0 0.0
        %463 = vmatprep.subr.mxu0 0.0
        %464 = vmatpush2.xpose.msra.mxu0 0.0
        %465 = vmatprep.subr.mxu0 0.0
        %466 = vmatpush2.xpose.msra.mxu0 0.0
        %467 = vmatprep.subr.mxu0 0.0
        %468 = vmatpush2.xpose.msra.mxu0 0.0
        %469 = vmatprep.subr.mxu0 0.0
        %470 = vmatpush2.xpose.msra.mxu0 0.0
        %471 = vmatprep.subr.mxu0 0.0
        %472 = vmatpush2.xpose.msra.mxu0 0.0
        %473 = vmatprep.subr.mxu0 0.0
        %474 = vmatpush2.xpose.msra.mxu0 0.0
        %475 = vmatprep.subr.mxu0 0.0
        %476 = vmatpush2.xpose.msra.mxu0 0.0
        %477 = vmatprep.mubr.f32.mxu0 0.0
        %478 = vmatmul.mubr.f32.gmra.mxu0 %v408
        %v479 = vpop.f32.mrf.mxu0
        %v480 = vadd.f32 0.0, %v479
        %v481 = vpop.f32.mrf.mxu0
        %482 = vdwg.mxu0
        %v484 = vsel %vm330, %v320, 0
        %v487 = vsel %vm330, %v324, 0
        %489 = vmatprep.subr.mxu0 0.0
        %490 = vmatpush1.xpose.msra.mxu0 0.0
        %491 = vmatprep.subr.mxu0 0.0
        %492 = vmatpush1.xpose.msra.mxu0 0.0
        %493 = vmatprep.subr.mxu0 0.0
        %494 = vmatpush1.xpose.msra.mxu0 0.0
        %495 = vmatprep.subr.mxu0 0.0
        %496 = vmatpush1.xpose.msra.mxu0 0.0
        %497 = vmatprep.subr.mxu0 0.0
        %498 = vmatpush1.xpose.msra.mxu0 0.0
        %499 = vmatprep.subr.mxu0 0.0
        %500 = vmatpush1.xpose.msra.mxu0 0.0
        %501 = vmatprep.subr.mxu0 0.0
        %502 = vmatpush1.xpose.msra.mxu0 0.0
        %503 = vmatprep.subr.mxu0 0.0
        %504 = vmatpush1.xpose.msra.mxu0 0.0
        %505 = vmatprep.subr.mxu0 0.0
        %506 = vmatpush1.xpose.msra.mxu0 0.0
        %507 = vmatprep.subr.mxu0 0.0
        %508 = vmatpush1.xpose.msra.mxu0 0.0
        %509 = vmatprep.subr.mxu0 0.0
        %510 = vmatpush1.xpose.msra.mxu0 0.0
        %511 = vmatprep.subr.mxu0 0.0
        %512 = vmatpush1.xpose.msra.mxu0 0.0
        %513 = vmatprep.subr.mxu0 0.0
        %514 = vmatpush1.xpose.msra.mxu0 0.0
        %515 = vmatprep.subr.mxu0 0.0
        %516 = vmatpush1.xpose.msra.mxu0 0.0
        %517 = vmatprep.subr.mxu0 0.0
        %518 = vmatpush1.xpose.msra.mxu0 0.0
        %519 = vmatprep.subr.mxu0 0.0
        %520 = vmatpush1.xpose.msra.mxu0 %v487
        %521 = vmatprep.subr.mxu0 0.0
        %522 = vmatpush2.xpose.msra.mxu0 0.0
        %523 = vmatprep.subr.mxu0 0.0
        %524 = vmatpush2.xpose.msra.mxu0 0.0
        %525 = vmatprep.subr.mxu0 0.0
        %526 = vmatpush2.xpose.msra.mxu0 0.0
        %527 = vmatprep.subr.mxu0 0.0
        %528 = vmatpush2.xpose.msra.mxu0 0.0
        %529 = vmatprep.subr.mxu0 0.0
        %530 = vmatpush2.xpose.msra.mxu0 0.0
        %531 = vmatprep.subr.mxu0 0.0
        %532 = vmatpush2.xpose.msra.mxu0 0.0
        %533 = vmatprep.subr.mxu0 0.0
        %534 = vmatpush2.xpose.msra.mxu0 0.0
        %535 = vmatprep.subr.mxu0 0.0
        %536 = vmatpush2.xpose.msra.mxu0 0.0
        %537 = vmatprep.subr.mxu0 0.0
        %538 = vmatpush2.xpose.msra.mxu0 0.0
        %539 = vmatprep.subr.mxu0 0.0
        %540 = vmatpush2.xpose.msra.mxu0 0.0
        %541 = vmatprep.subr.mxu0 0.0
        %542 = vmatpush2.xpose.msra.mxu0 0.0
        %543 = vmatprep.subr.mxu0 0.0
        %544 = vmatpush2.xpose.msra.mxu0 0.0
        %545 = vmatprep.subr.mxu0 0.0
        %546 = vmatpush2.xpose.msra.mxu0 0.0
        %547 = vmatprep.subr.mxu0 0.0
        %548 = vmatpush2.xpose.msra.mxu0 0.0
        %549 = vmatprep.subr.mxu0 0.0
        %550 = vmatpush2.xpose.msra.mxu0 0.0
        %551 = vmatprep.subr.mxu0 0.0
        %552 = vmatpush2.xpose.msra.mxu0 0.0
        %553 = vmatprep.mubr.f32.mxu0 0.0
        %554 = vmatmul.mubr.f32.gmra.mxu0 %v484
        %v555 = vpop.f32.mrf.mxu0
        %v556 = vadd.f32 0.0, %v555
        %v557 = vpop.f32.mrf.mxu0
        %558 = vdwg.mxu0
        %v560 = vsel %vm330, %v321, 0
        %v563 = vsel %vm330, %v325, 0
        %565 = vmatprep.subr.mxu0 0.0
        %566 = vmatpush1.xpose.msra.mxu0 0.0
        %567 = vmatprep.subr.mxu0 0.0
        %568 = vmatpush1.xpose.msra.mxu0 0.0
        %569 = vmatprep.subr.mxu0 0.0
        %570 = vmatpush1.xpose.msra.mxu0 0.0
        %571 = vmatprep.subr.mxu0 0.0
        %572 = vmatpush1.xpose.msra.mxu0 0.0
        %573 = vmatprep.subr.mxu0 0.0
        %574 = vmatpush1.xpose.msra.mxu0 0.0
        %575 = vmatprep.subr.mxu0 0.0
        %576 = vmatpush1.xpose.msra.mxu0 0.0
        %577 = vmatprep.subr.mxu0 0.0
        %578 = vmatpush1.xpose.msra.mxu0 0.0
        %579 = vmatprep.subr.mxu0 0.0
        %580 = vmatpush1.xpose.msra.mxu0 0.0
        %581 = vmatprep.subr.mxu0 0.0
        %582 = vmatpush1.xpose.msra.mxu0 0.0
        %583 = vmatprep.subr.mxu0 0.0
        %584 = vmatpush1.xpose.msra.mxu0 0.0
        %585 = vmatprep.subr.mxu0 0.0
        %586 = vmatpush1.xpose.msra.mxu0 0.0
        %587 = vmatprep.subr.mxu0 0.0
        %588 = vmatpush1.xpose.msra.mxu0 0.0
        %589 = vmatprep.subr.mxu0 0.0
        %590 = vmatpush1.xpose.msra.mxu0 0.0
        %591 = vmatprep.subr.mxu0 0.0
        %592 = vmatpush1.xpose.msra.mxu0 0.0
        %593 = vmatprep.subr.mxu0 0.0
        %594 = vmatpush1.xpose.msra.mxu0 0.0
        %595 = vmatprep.subr.mxu0 0.0
        %596 = vmatpush1.xpose.msra.mxu0 %v563
        %597 = vmatprep.subr.mxu0 0.0
        %598 = vmatpush2.xpose.msra.mxu0 0.0
        %599 = vmatprep.subr.mxu0 0.0
        %600 = vmatpush2.xpose.msra.mxu0 0.0
        %601 = vmatprep.subr.mxu0 0.0
        %602 = vmatpush2.xpose.msra.mxu0 0.0
        %603 = vmatprep.subr.mxu0 0.0
        %604 = vmatpush2.xpose.msra.mxu0 0.0
        %605 = vmatprep.subr.mxu0 0.0
        %606 = vmatpush2.xpose.msra.mxu0 0.0
        %607 = vmatprep.subr.mxu0 0.0
        %608 = vmatpush2.xpose.msra.mxu0 0.0
        %609 = vmatprep.subr.mxu0 0.0
        %610 = vmatpush2.xpose.msra.mxu0 0.0
        %611 = vmatprep.subr.mxu0 0.0
        %612 = vmatpush2.xpose.msra.mxu0 0.0
        %613 = vmatprep.subr.mxu0 0.0
        %614 = vmatpush2.xpose.msra.mxu0 0.0
        %615 = vmatprep.subr.mxu0 0.0
        %616 = vmatpush2.xpose.msra.mxu0 0.0
        %617 = vmatprep.subr.mxu0 0.0
        %618 = vmatpush2.xpose.msra.mxu0 0.0
        %619 = vmatprep.subr.mxu0 0.0
        %620 = vmatpush2.xpose.msra.mxu0 0.0
        %621 = vmatprep.subr.mxu0 0.0
        %622 = vmatpush2.xpose.msra.mxu0 0.0
        %623 = vmatprep.subr.mxu0 0.0
        %624 = vmatpush2.xpose.msra.mxu0 0.0
        %625 = vmatprep.subr.mxu0 0.0
        %626 = vmatpush2.xpose.msra.mxu0 0.0
        %627 = vmatprep.subr.mxu0 0.0
        %628 = vmatpush2.xpose.msra.mxu0 0.0
        %629 = vmatprep.mubr.f32.mxu0 0.0
        %630 = vmatmul.mubr.f32.gmra.mxu0 %v560
        %v631 = vpop.f32.mrf.mxu0
        %v632 = vadd.f32 0.0, %v631
        %v633 = vpop.f32.mrf.mxu0
        %634 = vdwg.mxu0
        %v635 = vlaneseq
        %v636 = vshrl.u32 %v635, 7
        %s637 = smul.u32 %s21, 8
        %v638 = vstv %s637
        %v639 = vadd.s32 %v636, %v638
        %v640 = vlaneseq
        %v641 = vand.u32 %v640, 127
        %s642 = smul.u32 %s22, 8
        %v643 = vstv %s642
        %v644 = vadd.s32 %v641, %v643
        %vm645 = vcmp.le.s32.totalorder %v644, %v639
        %v646 = vsel %vm645, 1, 0
        %vm647 = vcmp.eq.s32.totalorder %v646, 1
        %v648 = vsel %vm647, %v404, -1e+30
        %v649 = vsel %vm647, %v480, -1e+30
        %v650 = vsel %vm647, %v556, -1e+30
        %v651 = vsel %vm647, %v632, -1e+30
        %v652 = vld [vmem:[#allocation2] sm:$0xff]
        %v653 = vld [vmem:[#allocation2 + $0x8] sm:$0xff]
        %v654 = vld [vmem:[#allocation2 + $0x10] sm:$0xff]
        %v655 = vld [vmem:[#allocation2 + $0x18] sm:$0xff]
        %v656 = vsel %vm330, %v648, -inf
        %657 = vmax.xlane.f32.xlu0 %v656
        %v658 = vpop.xlane.xlu0 %657
        %v659 = vsel %vm330, %v649, -inf
        %660 = vmax.xlane.f32.xlu0 %v659
        %v661 = vpop.xlane.xlu0 %660
        %v662 = vsel %vm330, %v650, -inf
        %663 = vmax.xlane.f32.xlu0 %v662
        %v664 = vpop.xlane.xlu0 %663
        %v665 = vsel %vm330, %v651, -inf
        %666 = vmax.xlane.f32.xlu0 %v665
        %v667 = vpop.xlane.xlu0 %666
        %v668 = vmax.f32 %v652, %v658
        %v669 = vmax.f32 %v653, %v661
        %v670 = vmax.f32 %v654, %v664
        %v671 = vmax.f32 %v655, %v667
        %v672 = vsub.f32 %v652, %v668
        %v673 = vsub.f32 %v653, %v669
        %v674 = vsub.f32 %v654, %v670
        %v675 = vsub.f32 %v655, %v671
        %v676 = vmul.f32 %v672, 1.442695
        %v677 = vpow.pop %v676
        %v678 = vmul.f32 %v673, 1.442695
        %v679 = vpow.pop %v678
        %v680 = vmul.f32 %v674, 1.442695
        %v681 = vpow.pop %v680
        %v682 = vmul.f32 %v675, 1.442695
        %v683 = vpow.pop %v682
        %685 = vset.pattern.permute.xlu0 0
        %686 = vperm.xlu0 %685, %v668
        %v687 = vpop.permute.xlu0 %686
        %690 = vset.pattern.permute.xlu0 0
        %691 = vperm.xlu0 %690, %v669
        %v692 = vpop.permute.xlu0 %691
        %695 = vset.pattern.permute.xlu0 0
        %696 = vperm.xlu0 %695, %v670
        %v697 = vpop.permute.xlu0 %696
        %700 = vset.pattern.permute.xlu0 0
        %701 = vperm.xlu0 %700, %v671
        %v702 = vpop.permute.xlu0 %701
        %v704 = vsub.f32 %v648, %v687
        %v705 = vsub.f32 %v649, %v692
        %v706 = vsub.f32 %v650, %v697
        %v707 = vsub.f32 %v651, %v702
        %v708 = vmul.f32 %v704, 1.442695
        %v709 = vpow.pop %v708
        %v710 = vmul.f32 %v705, 1.442695
        %v711 = vpow.pop %v710
        %v712 = vmul.f32 %v706, 1.442695
        %v713 = vpow.pop %v712
        %v714 = vmul.f32 %v707, 1.442695
        %v715 = vpow.pop %v714
        %v716 = vld [vmem:[#allocation3] sm:$0xff]
        %v717 = vld [vmem:[#allocation3 + $0x8] sm:$0xff]
        %v718 = vld [vmem:[#allocation3 + $0x10] sm:$0xff]
        %v719 = vld [vmem:[#allocation3 + $0x18] sm:$0xff]
        %v720 = vmul.f32 %v677, %v716
        %v721 = vmul.f32 %v679, %v717
        %v722 = vmul.f32 %v681, %v718
        %v723 = vmul.f32 %v683, %v719
        %v724 = vsel %vm330, %v709, 0.0
        %725 = vadd.xlane.f32.xlu0 %v724
        %v726 = vpop.xlane.xlu0 %725
        %v727 = vsel %vm330, %v711, 0.0
        %728 = vadd.xlane.f32.xlu0 %v727
        %v729 = vpop.xlane.xlu0 %728
        %v730 = vsel %vm330, %v713, 0.0
        %731 = vadd.xlane.f32.xlu0 %v730
        %v732 = vpop.xlane.xlu0 %731
        %v733 = vsel %vm330, %v715, 0.0
        %734 = vadd.xlane.f32.xlu0 %v733
        %v735 = vpop.xlane.xlu0 %734
        %v736 = vadd.f32 %v720, %v726
        %v737 = vadd.f32 %v721, %v729
        %v738 = vadd.f32 %v722, %v732
        %v739 = vadd.f32 %v723, %v735
        %vm740 = vcmask 7168
        %741 = vst.msk [vmem:[#allocation3] sm:$0xff] %vm740, %v736
        %742 = vst.msk [vmem:[#allocation3 + $0x8] sm:$0xff] %vm740, %v737
        %743 = vst.msk [vmem:[#allocation3 + $0x10] sm:$0xff] %vm740, %v738
        %744 = vst.msk [vmem:[#allocation3 + $0x18] sm:$0xff] %vm740, %v739
        %v745 = vld [vmem:[#allocation4] sm:$0xff]
        %v746 = vld [vmem:[#allocation4 + $0x8] sm:$0xff]
        %v747 = vld [vmem:[#allocation4 + $0x10] sm:$0xff]
        %v748 = vld [vmem:[#allocation4 + $0x18] sm:$0xff]
        %750 = vset.pattern.permute.xlu0 0
        %751 = vperm.xlu0 %750, %v677
        %v752 = vpop.permute.xlu0 %751
        %755 = vset.pattern.permute.xlu0 0
        %756 = vperm.xlu0 %755, %v679
        %v757 = vpop.permute.xlu0 %756
        %760 = vset.pattern.permute.xlu0 0
        %761 = vperm.xlu0 %760, %v681
        %v762 = vpop.permute.xlu0 %761
        %765 = vset.pattern.permute.xlu0 0
        %766 = vperm.xlu0 %765, %v683
        %v767 = vpop.permute.xlu0 %766
        %v769 = vmul.f32 %v752, %v745
        %v770 = vmul.f32 %v757, %v746
        %v771 = vmul.f32 %v762, %v747
        %v772 = vmul.f32 %v767, %v748
        %v774 = vsel %vm330, %v709, 0
        %776 = vmatprep.subr.mxu0 0.0
        %777 = vmatpush1.msra.mxu0 0.0
        %778 = vmatprep.subr.mxu0 0.0
        %779 = vmatpush1.msra.mxu0 0.0
        %780 = vmatprep.subr.mxu0 0.0
        %781 = vmatpush1.msra.mxu0 0.0
        %782 = vmatprep.subr.mxu0 0.0
        %783 = vmatpush1.msra.mxu0 0.0
        %784 = vmatprep.subr.mxu0 0.0
        %785 = vmatpush1.msra.mxu0 0.0
        %786 = vmatprep.subr.mxu0 0.0
        %787 = vmatpush1.msra.mxu0 0.0
        %788 = vmatprep.subr.mxu0 0.0
        %789 = vmatpush1.msra.mxu0 0.0
        %790 = vmatprep.subr.mxu0 0.0
        %791 = vmatpush1.msra.mxu0 0.0
        %792 = vmatprep.subr.mxu0 0.0
        %793 = vmatpush1.msra.mxu0 0.0
        %794 = vmatprep.subr.mxu0 0.0
        %795 = vmatpush1.msra.mxu0 0.0
        %796 = vmatprep.subr.mxu0 0.0
        %797 = vmatpush1.msra.mxu0 0.0
        %798 = vmatprep.subr.mxu0 0.0
        %799 = vmatpush1.msra.mxu0 0.0
        %800 = vmatprep.subr.mxu0 0.0
        %801 = vmatpush1.msra.mxu0 0.0
        %802 = vmatprep.subr.mxu0 0.0
        %803 = vmatpush1.msra.mxu0 0.0
        %804 = vmatprep.subr.mxu0 0.0
        %805 = vmatpush1.msra.mxu0 0.0
        %806 = vmatprep.subr.mxu0 0.0
        %807 = vmatpush1.msra.mxu0 %v326
        %808 = vmatprep.subr.mxu0 0.0
        %809 = vmatpush2.msra.mxu0 0.0
        %810 = vmatprep.subr.mxu0 0.0
        %811 = vmatpush2.msra.mxu0 0.0
        %812 = vmatprep.subr.mxu0 0.0
        %813 = vmatpush2.msra.mxu0 0.0
        %814 = vmatprep.subr.mxu0 0.0
        %815 = vmatpush2.msra.mxu0 0.0
        %816 = vmatprep.subr.mxu0 0.0
        %817 = vmatpush2.msra.mxu0 0.0
        %818 = vmatprep.subr.mxu0 0.0
        %819 = vmatpush2.msra.mxu0 0.0
        %820 = vmatprep.subr.mxu0 0.0
        %821 = vmatpush2.msra.mxu0 0.0
        %822 = vmatprep.subr.mxu0 0.0
        %823 = vmatpush2.msra.mxu0 0.0
        %824 = vmatprep.subr.mxu0 0.0
        %825 = vmatpush2.msra.mxu0 0.0
        %826 = vmatprep.subr.mxu0 0.0
        %827 = vmatpush2.msra.mxu0 0.0
        %828 = vmatprep.subr.mxu0 0.0
        %829 = vmatpush2.msra.mxu0 0.0
        %830 = vmatprep.subr.mxu0 0.0
        %831 = vmatpush2.msra.mxu0 0.0
        %832 = vmatprep.subr.mxu0 0.0
        %833 = vmatpush2.msra.mxu0 0.0
        %834 = vmatprep.subr.mxu0 0.0
        %835 = vmatpush2.msra.mxu0 0.0
        %836 = vmatprep.subr.mxu0 0.0
        %837 = vmatpush2.msra.mxu0 0.0
        %838 = vmatprep.subr.mxu0 0.0
        %839 = vmatpush2.msra.mxu0 0.0
        %840 = vmatprep.mubr.f32.mxu0 0.0
        %841 = vmatmul.mubr.f32.gmra.mxu0 %v774
        %v842 = vpop.f32.mrf.mxu0
        %v843 = vadd.f32 0.0, %v842
        %v844 = vpop.f32.mrf.mxu0
        %845 = vdwg.mxu0
        %v847 = vsel %vm330, %v711, 0
        %849 = vmatprep.subr.mxu0 0.0
        %850 = vmatpush1.msra.mxu0 0.0
        %851 = vmatprep.subr.mxu0 0.0
        %852 = vmatpush1.msra.mxu0 0.0
        %853 = vmatprep.subr.mxu0 0.0
        %854 = vmatpush1.msra.mxu0 0.0
        %855 = vmatprep.subr.mxu0 0.0
        %856 = vmatpush1.msra.mxu0 0.0
        %857 = vmatprep.subr.mxu0 0.0
        %858 = vmatpush1.msra.mxu0 0.0
        %859 = vmatprep.subr.mxu0 0.0
        %860 = vmatpush1.msra.mxu0 0.0
        %861 = vmatprep.subr.mxu0 0.0
        %862 = vmatpush1.msra.mxu0 0.0
        %863 = vmatprep.subr.mxu0 0.0
        %864 = vmatpush1.msra.mxu0 0.0
        %865 = vmatprep.subr.mxu0 0.0
        %866 = vmatpush1.msra.mxu0 0.0
        %867 = vmatprep.subr.mxu0 0.0
        %868 = vmatpush1.msra.mxu0 0.0
        %869 = vmatprep.subr.mxu0 0.0
        %870 = vmatpush1.msra.mxu0 0.0
        %871 = vmatprep.subr.mxu0 0.0
        %872 = vmatpush1.msra.mxu0 0.0
        %873 = vmatprep.subr.mxu0 0.0
        %874 = vmatpush1.msra.mxu0 0.0
        %875 = vmatprep.subr.mxu0 0.0
        %876 = vmatpush1.msra.mxu0 0.0
        %877 = vmatprep.subr.mxu0 0.0
        %878 = vmatpush1.msra.mxu0 0.0
        %879 = vmatprep.subr.mxu0 0.0
        %880 = vmatpush1.msra.mxu0 %v327
        %881 = vmatprep.subr.mxu0 0.0
        %882 = vmatpush2.msra.mxu0 0.0
        %883 = vmatprep.subr.mxu0 0.0
        %884 = vmatpush2.msra.mxu0 0.0
        %885 = vmatprep.subr.mxu0 0.0
        %886 = vmatpush2.msra.mxu0 0.0
        %887 = vmatprep.subr.mxu0 0.0
        %888 = vmatpush2.msra.mxu0 0.0
        %889 = vmatprep.subr.mxu0 0.0
        %890 = vmatpush2.msra.mxu0 0.0
        %891 = vmatprep.subr.mxu0 0.0
        %892 = vmatpush2.msra.mxu0 0.0
        %893 = vmatprep.subr.mxu0 0.0
        %894 = vmatpush2.msra.mxu0 0.0
        %895 = vmatprep.subr.mxu0 0.0
        %896 = vmatpush2.msra.mxu0 0.0
        %897 = vmatprep.subr.mxu0 0.0
        %898 = vmatpush2.msra.mxu0 0.0
        %899 = vmatprep.subr.mxu0 0.0
        %900 = vmatpush2.msra.mxu0 0.0
        %901 = vmatprep.subr.mxu0 0.0
        %902 = vmatpush2.msra.mxu0 0.0
        %903 = vmatprep.subr.mxu0 0.0
        %904 = vmatpush2.msra.mxu0 0.0
        %905 = vmatprep.subr.mxu0 0.0
        %906 = vmatpush2.msra.mxu0 0.0
        %907 = vmatprep.subr.mxu0 0.0
        %908 = vmatpush2.msra.mxu0 0.0
        %909 = vmatprep.subr.mxu0 0.0
        %910 = vmatpush2.msra.mxu0 0.0
        %911 = vmatprep.subr.mxu0 0.0
        %912 = vmatpush2.msra.mxu0 0.0
        %913 = vmatprep.mubr.f32.mxu0 0.0
        %914 = vmatmul.mubr.f32.gmra.mxu0 %v847
        %v915 = vpop.f32.mrf.mxu0
        %v916 = vadd.f32 0.0, %v915
        %v917 = vpop.f32.mrf.mxu0
        %918 = vdwg.mxu0
        %v920 = vsel %vm330, %v713, 0
        %922 = vmatprep.subr.mxu0 0.0
        %923 = vmatpush1.msra.mxu0 0.0
        %924 = vmatprep.subr.mxu0 0.0
        %925 = vmatpush1.msra.mxu0 0.0
        %926 = vmatprep.subr.mxu0 0.0
        %927 = vmatpush1.msra.mxu0 0.0
        %928 = vmatprep.subr.mxu0 0.0
        %929 = vmatpush1.msra.mxu0 0.0
        %930 = vmatprep.subr.mxu0 0.0
        %931 = vmatpush1.msra.mxu0 0.0
        %932 = vmatprep.subr.mxu0 0.0
        %933 = vmatpush1.msra.mxu0 0.0
        %934 = vmatprep.subr.mxu0 0.0
        %935 = vmatpush1.msra.mxu0 0.0
        %936 = vmatprep.subr.mxu0 0.0
        %937 = vmatpush1.msra.mxu0 0.0
        %938 = vmatprep.subr.mxu0 0.0
        %939 = vmatpush1.msra.mxu0 0.0
        %940 = vmatprep.subr.mxu0 0.0
        %941 = vmatpush1.msra.mxu0 0.0
        %942 = vmatprep.subr.mxu0 0.0
        %943 = vmatpush1.msra.mxu0 0.0
        %944 = vmatprep.subr.mxu0 0.0
        %945 = vmatpush1.msra.mxu0 0.0
        %946 = vmatprep.subr.mxu0 0.0
        %947 = vmatpush1.msra.mxu0 0.0
        %948 = vmatprep.subr.mxu0 0.0
        %949 = vmatpush1.msra.mxu0 0.0
        %950 = vmatprep.subr.mxu0 0.0
        %951 = vmatpush1.msra.mxu0 0.0
        %952 = vmatprep.subr.mxu0 0.0
        %953 = vmatpush1.msra.mxu0 %v328
        %954 = vmatprep.subr.mxu0 0.0
        %955 = vmatpush2.msra.mxu0 0.0
        %956 = vmatprep.subr.mxu0 0.0
        %957 = vmatpush2.msra.mxu0 0.0
        %958 = vmatprep.subr.mxu0 0.0
        %959 = vmatpush2.msra.mxu0 0.0
        %960 = vmatprep.subr.mxu0 0.0
        %961 = vmatpush2.msra.mxu0 0.0
        %962 = vmatprep.subr.mxu0 0.0
        %963 = vmatpush2.msra.mxu0 0.0
        %964 = vmatprep.subr.mxu0 0.0
        %965 = vmatpush2.msra.mxu0 0.0
        %966 = vmatprep.subr.mxu0 0.0
        %967 = vmatpush2.msra.mxu0 0.0
        %968 = vmatprep.subr.mxu0 0.0
        %969 = vmatpush2.msra.mxu0 0.0
        %970 = vmatprep.subr.mxu0 0.0
        %971 = vmatpush2.msra.mxu0 0.0
        %972 = vmatprep.subr.mxu0 0.0
        %973 = vmatpush2.msra.mxu0 0.0
        %974 = vmatprep.subr.mxu0 0.0
        %975 = vmatpush2.msra.mxu0 0.0
        %976 = vmatprep.subr.mxu0 0.0
        %977 = vmatpush2.msra.mxu0 0.0
        %978 = vmatprep.subr.mxu0 0.0
        %979 = vmatpush2.msra.mxu0 0.0
        %980 = vmatprep.subr.mxu0 0.0
        %981 = vmatpush2.msra.mxu0 0.0
        %982 = vmatprep.subr.mxu0 0.0
        %983 = vmatpush2.msra.mxu0 0.0
        %984 = vmatprep.subr.mxu0 0.0
        %985 = vmatpush2.msra.mxu0 0.0
        %986 = vmatprep.mubr.f32.mxu0 0.0
        %987 = vmatmul.mubr.f32.gmra.mxu0 %v920
        %v988 = vpop.f32.mrf.mxu0
        %v989 = vadd.f32 0.0, %v988
        %v990 = vpop.f32.mrf.mxu0
        %991 = vdwg.mxu0
        %v993 = vsel %vm330, %v715, 0
        %995 = vmatprep.subr.mxu0 0.0
        %996 = vmatpush1.msra.mxu0 0.0
        %997 = vmatprep.subr.mxu0 0.0
        %998 = vmatpush1.msra.mxu0 0.0
        %999 = vmatprep.subr.mxu0 0.0
        %1000 = vmatpush1.msra.mxu0 0.0
        %1001 = vmatprep.subr.mxu0 0.0
        %1002 = vmatpush1.msra.mxu0 0.0
        %1003 = vmatprep.subr.mxu0 0.0
        %1004 = vmatpush1.msra.mxu0 0.0
        %1005 = vmatprep.subr.mxu0 0.0
        %1006 = vmatpush1.msra.mxu0 0.0
        %1007 = vmatprep.subr.mxu0 0.0
        %1008 = vmatpush1.msra.mxu0 0.0
        %1009 = vmatprep.subr.mxu0 0.0
        %1010 = vmatpush1.msra.mxu0 0.0
        %1011 = vmatprep.subr.mxu0 0.0
        %1012 = vmatpush1.msra.mxu0 0.0
        %1013 = vmatprep.subr.mxu0 0.0
        %1014 = vmatpush1.msra.mxu0 0.0
        %1015 = vmatprep.subr.mxu0 0.0
        %1016 = vmatpush1.msra.mxu0 0.0
        %1017 = vmatprep.subr.mxu0 0.0
        %1018 = vmatpush1.msra.mxu0 0.0
        %1019 = vmatprep.subr.mxu0 0.0
        %1020 = vmatpush1.msra.mxu0 0.0
        %1021 = vmatprep.subr.mxu0 0.0
        %1022 = vmatpush1.msra.mxu0 0.0
        %1023 = vmatprep.subr.mxu0 0.0
        %1024 = vmatpush1.msra.mxu0 0.0
        %1025 = vmatprep.subr.mxu0 0.0
        %1026 = vmatpush1.msra.mxu0 %v329
        %1027 = vmatprep.subr.mxu0 0.0
        %1028 = vmatpush2.msra.mxu0 0.0
        %1029 = vmatprep.subr.mxu0 0.0
        %1030 = vmatpush2.msra.mxu0 0.0
        %1031 = vmatprep.subr.mxu0 0.0
        %1032 = vmatpush2.msra.mxu0 0.0
        %1033 = vmatprep.subr.mxu0 0.0
        %1034 = vmatpush2.msra.mxu0 0.0
        %1035 = vmatprep.subr.mxu0 0.0
        %1036 = vmatpush2.msra.mxu0 0.0
        %1037 = vmatprep.subr.mxu0 0.0
        %1038 = vmatpush2.msra.mxu0 0.0
        %1039 = vmatprep.subr.mxu0 0.0
        %1040 = vmatpush2.msra.mxu0 0.0
        %1041 = vmatprep.subr.mxu0 0.0
        %1042 = vmatpush2.msra.mxu0 0.0
        %1043 = vmatprep.subr.mxu0 0.0
        %1044 = vmatpush2.msra.mxu0 0.0
        %1045 = vmatprep.subr.mxu0 0.0
        %1046 = vmatpush2.msra.mxu0 0.0
        %1047 = vmatprep.subr.mxu0 0.0
        %1048 = vmatpush2.msra.mxu0 0.0
        %1049 = vmatprep.subr.mxu0 0.0
        %1050 = vmatpush2.msra.mxu0 0.0
        %1051 = vmatprep.subr.mxu0 0.0
        %1052 = vmatpush2.msra.mxu0 0.0
        %1053 = vmatprep.subr.mxu0 0.0
        %1054 = vmatpush2.msra.mxu0 0.0
        %1055 = vmatprep.subr.mxu0 0.0
        %1056 = vmatpush2.msra.mxu0 0.0
        %1057 = vmatprep.subr.mxu0 0.0
        %1058 = vmatpush2.msra.mxu0 0.0
        %1059 = vmatprep.mubr.f32.mxu0 0.0
        %1060 = vmatmul.mubr.f32.gmra.mxu0 %v993
        %v1061 = vpop.f32.mrf.mxu0
        %v1062 = vadd.f32 0.0, %v1061
        %v1063 = vpop.f32.mrf.mxu0
        %1064 = vdwg.mxu0
        %v1065 = vadd.f32 %v769, %v843
        %v1066 = vadd.f32 %v770, %v916
        %v1067 = vadd.f32 %v771, %v989
        %v1068 = vadd.f32 %v772, %v1062
        %1069 = vst.msk [vmem:[#allocation4] sm:$0xff] %vm330, %v1065
        %1070 = vst.msk [vmem:[#allocation4 + $0x8] sm:$0xff] %vm330, %v1066
        %1071 = vst.msk [vmem:[#allocation4 + $0x10] sm:$0xff] %vm330, %v1067
        %1072 = vst.msk [vmem:[#allocation4 + $0x18] sm:$0xff] %vm330, %v1068
        %1073 = vst.msk [vmem:[#allocation2] sm:$0xff] %vm740, %v668
        %1074 = vst.msk [vmem:[#allocation2 + $0x8] sm:$0xff] %vm740, %v669
        %1075 = vst.msk [vmem:[#allocation2 + $0x10] sm:$0xff] %vm740, %v670
        %1076 = vst.msk [vmem:[#allocation2 + $0x18] sm:$0xff] %vm740, %v671
      $region44: #{multi_scale_attention.7} parent=35 // pred_fallthru
        _
      // Predicated region
      $region45: #{multi_scale_attention.7} parent=35 // pred_check
        %p1077 = pneg %p296
      $region46: #{multi_scale_attention.7} parent=35 // pred_check_branch
        %1079 = sbr.rel (%p1077) target = $region48
      $region47: #{multi_scale_attention.7} parent=35 // pred_region
        %v1080 = vld [vmem:[#allocation3] sm:$0xff]
        %v1081 = vld [vmem:[#allocation3 + $0x8] sm:$0xff]
        %v1082 = vld [vmem:[#allocation3 + $0x10] sm:$0xff]
        %v1083 = vld [vmem:[#allocation3 + $0x18] sm:$0xff]
        %v1084 = vrcp.pop %v1080
        %v1085 = vrcp.pop %v1081
        %v1086 = vrcp.pop %v1082
        %v1087 = vrcp.pop %v1083
        %v1088 = vld [vmem:[#allocation4] sm:$0xff]
        %v1089 = vld [vmem:[#allocation4 + $0x8] sm:$0xff]
        %v1090 = vld [vmem:[#allocation4 + $0x10] sm:$0xff]
        %v1091 = vld [vmem:[#allocation4 + $0x18] sm:$0xff]
        %1093 = vset.pattern.permute.xlu0 0
        %1094 = vperm.xlu0 %1093, %v1084
        %v1095 = vpop.permute.xlu0 %1094
        %1098 = vset.pattern.permute.xlu0 0
        %1099 = vperm.xlu0 %1098, %v1085
        %v1100 = vpop.permute.xlu0 %1099
        %1103 = vset.pattern.permute.xlu0 0
        %1104 = vperm.xlu0 %1103, %v1086
        %v1105 = vpop.permute.xlu0 %1104
        %1108 = vset.pattern.permute.xlu0 0
        %1109 = vperm.xlu0 %1108, %v1087
        %v1110 = vpop.permute.xlu0 %1109
        %v1112 = vmul.f32 %v1088, %v1095
        %v1113 = vmul.f32 %v1089, %v1100
        %v1114 = vmul.f32 %v1090, %v1105
        %v1115 = vmul.f32 %v1091, %v1110
        %v1116 = vld [vmem:[%s3] sm:$0xff]
        %v1117 = vld [vmem:[%s3 + $0x8] sm:$0xff]
        %vm1118 = vcmask 64512
        %v1120 = vsel %vm1118, %v1113, 0
        %1122 = vmatprep.subr.mxu0 0.0
        %1123 = vmatpush1.msra.mxu0 0.0
        %1124 = vmatprep.subr.mxu0 0.0
        %1125 = vmatpush1.msra.mxu0 0.0
        %1126 = vmatprep.subr.mxu0 0.0
        %1127 = vmatpush1.msra.mxu0 0.0
        %1128 = vmatprep.subr.mxu0 0.0
        %1129 = vmatpush1.msra.mxu0 0.0
        %1130 = vmatprep.subr.mxu0 0.0
        %1131 = vmatpush1.msra.mxu0 0.0
        %1132 = vmatprep.subr.mxu0 0.0
        %1133 = vmatpush1.msra.mxu0 0.0
        %1134 = vmatprep.subr.mxu0 0.0
        %1135 = vmatpush1.msra.mxu0 0.0
        %1136 = vmatprep.subr.mxu0 0.0
        %1137 = vmatpush1.msra.mxu0 0.0
        %1138 = vmatprep.subr.mxu0 0.0
        %1139 = vmatpush1.msra.mxu0 0.0
        %1140 = vmatprep.subr.mxu0 0.0
        %1141 = vmatpush1.msra.mxu0 0.0
        %1142 = vmatprep.subr.mxu0 0.0
        %1143 = vmatpush1.msra.mxu0 0.0
        %1144 = vmatprep.subr.mxu0 0.0
        %1145 = vmatpush1.msra.mxu0 0.0
        %1146 = vmatprep.subr.mxu0 0.0
        %1147 = vmatpush1.msra.mxu0 0.0
        %1148 = vmatprep.subr.mxu0 0.0
        %1149 = vmatpush1.msra.mxu0 0.0
        %1150 = vmatprep.subr.mxu0 0.0
        %1151 = vmatpush1.msra.mxu0 0.0
        %1152 = vmatprep.subr.mxu0 0.0
        %1153 = vmatpush1.msra.mxu0 %v1117
        %1154 = vmatprep.subr.mxu0 0.0
        %1155 = vmatpush2.msra.mxu0 0.0
        %1156 = vmatprep.subr.mxu0 0.0
        %1157 = vmatpush2.msra.mxu0 0.0
        %1158 = vmatprep.subr.mxu0 0.0
        %1159 = vmatpush2.msra.mxu0 0.0
        %1160 = vmatprep.subr.mxu0 0.0
        %1161 = vmatpush2.msra.mxu0 0.0
        %1162 = vmatprep.subr.mxu0 0.0
        %1163 = vmatpush2.msra.mxu0 0.0
        %1164 = vmatprep.subr.mxu0 0.0
        %1165 = vmatpush2.msra.mxu0 0.0
        %1166 = vmatprep.subr.mxu0 0.0
        %1167 = vmatpush2.msra.mxu0 0.0
        %1168 = vmatprep.subr.mxu0 0.0
        %1169 = vmatpush2.msra.mxu0 0.0
        %1170 = vmatprep.subr.mxu0 0.0
        %1171 = vmatpush2.msra.mxu0 0.0
        %1172 = vmatprep.subr.mxu0 0.0
        %1173 = vmatpush2.msra.mxu0 0.0
        %1174 = vmatprep.subr.mxu0 0.0
        %1175 = vmatpush2.msra.mxu0 0.0
        %1176 = vmatprep.subr.mxu0 0.0
        %1177 = vmatpush2.msra.mxu0 0.0
        %1178 = vmatprep.subr.mxu0 0.0
        %1179 = vmatpush2.msra.mxu0 0.0
        %1180 = vmatprep.subr.mxu0 0.0
        %1181 = vmatpush2.msra.mxu0 0.0
        %1182 = vmatprep.subr.mxu0 0.0
        %1183 = vmatpush2.msra.mxu0 0.0
        %1184 = vmatprep.subr.mxu0 0.0
        %1185 = vmatpush2.msra.mxu0 0.0
        %1186 = vmatprep.mubr.f32.mxu0 0.0
        %1187 = vmatmul.mubr.f32.gmra.mxu0 %v1120
        %v1188 = vpop.f32.mrf.mxu0
        %v1189 = vadd.f32 0.0, %v1188
        %v1190 = vpop.f32.mrf.mxu0
        %1191 = vdwg.mxu0
        %v1193 = vsel %vm1118, %v1112, 0
        %1195 = vmatprep.subr.mxu0 0.0
        %1196 = vmatpush1.msra.mxu0 0.0
        %1197 = vmatprep.subr.mxu0 0.0
        %1198 = vmatpush1.msra.mxu0 0.0
        %1199 = vmatprep.subr.mxu0 0.0
        %1200 = vmatpush1.msra.mxu0 0.0
        %1201 = vmatprep.subr.mxu0 0.0
        %1202 = vmatpush1.msra.mxu0 0.0
        %1203 = vmatprep.subr.mxu0 0.0
        %1204 = vmatpush1.msra.mxu0 0.0
        %1205 = vmatprep.subr.mxu0 0.0
        %1206 = vmatpush1.msra.mxu0 0.0
        %1207 = vmatprep.subr.mxu0 0.0
        %1208 = vmatpush1.msra.mxu0 0.0
        %1209 = vmatprep.subr.mxu0 0.0
        %1210 = vmatpush1.msra.mxu0 0.0
        %1211 = vmatprep.subr.mxu0 0.0
        %1212 = vmatpush1.msra.mxu0 0.0
        %1213 = vmatprep.subr.mxu0 0.0
        %1214 = vmatpush1.msra.mxu0 0.0
        %1215 = vmatprep.subr.mxu0 0.0
        %1216 = vmatpush1.msra.mxu0 0.0
        %1217 = vmatprep.subr.mxu0 0.0
        %1218 = vmatpush1.msra.mxu0 0.0
        %1219 = vmatprep.subr.mxu0 0.0
        %1220 = vmatpush1.msra.mxu0 0.0
        %1221 = vmatprep.subr.mxu0 0.0
        %1222 = vmatpush1.msra.mxu0 0.0
        %1223 = vmatprep.subr.mxu0 0.0
        %1224 = vmatpush1.msra.mxu0 0.0
        %1225 = vmatprep.subr.mxu0 0.0
        %1226 = vmatpush1.msra.mxu0 %v1116
        %1227 = vmatprep.subr.mxu0 0.0
        %1228 = vmatpush2.msra.mxu0 0.0
        %1229 = vmatprep.subr.mxu0 0.0
        %1230 = vmatpush2.msra.mxu0 0.0
        %1231 = vmatprep.subr.mxu0 0.0
        %1232 = vmatpush2.msra.mxu0 0.0
        %1233 = vmatprep.subr.mxu0 0.0
        %1234 = vmatpush2.msra.mxu0 0.0
        %1235 = vmatprep.subr.mxu0 0.0
        %1236 = vmatpush2.msra.mxu0 0.0
        %1237 = vmatprep.subr.mxu0 0.0
        %1238 = vmatpush2.msra.mxu0 0.0
        %1239 = vmatprep.subr.mxu0 0.0
        %1240 = vmatpush2.msra.mxu0 0.0
        %1241 = vmatprep.subr.mxu0 0.0
        %1242 = vmatpush2.msra.mxu0 0.0
        %1243 = vmatprep.subr.mxu0 0.0
        %1244 = vmatpush2.msra.mxu0 0.0
        %1245 = vmatprep.subr.mxu0 0.0
        %1246 = vmatpush2.msra.mxu0 0.0
        %1247 = vmatprep.subr.mxu0 0.0
        %1248 = vmatpush2.msra.mxu0 0.0
        %1249 = vmatprep.subr.mxu0 0.0
        %1250 = vmatpush2.msra.mxu0 0.0
        %1251 = vmatprep.subr.mxu0 0.0
        %1252 = vmatpush2.msra.mxu0 0.0
        %1253 = vmatprep.subr.mxu0 0.0
        %1254 = vmatpush2.msra.mxu0 0.0
        %1255 = vmatprep.subr.mxu0 0.0
        %1256 = vmatpush2.msra.mxu0 0.0
        %1257 = vmatprep.subr.mxu0 0.0
        %1258 = vmatpush2.msra.mxu0 0.0
        %1259 = vmatprep.mubr.f32.mxu0 0.0
        %1260 = vmatmul.mubr.f32.gmra.mxu0 %v1193
        %v1261 = vpop.f32.mrf.mxu0
        %v1262 = vadd.f32 %v1189, %v1261
        %v1263 = vpop.f32.mrf.mxu0
        %1264 = vdwg.mxu0
        %v1265 = vld [vmem:[%s3 + $0x10] sm:$0xff]
        %v1267 = vsel %vm1118, %v1114, 0
        %1269 = vmatprep.subr.mxu0 0.0
        %1270 = vmatpush1.msra.mxu0 0.0
        %1271 = vmatprep.subr.mxu0 0.0
        %1272 = vmatpush1.msra.mxu0 0.0
        %1273 = vmatprep.subr.mxu0 0.0
        %1274 = vmatpush1.msra.mxu0 0.0
        %1275 = vmatprep.subr.mxu0 0.0
        %1276 = vmatpush1.msra.mxu0 0.0
        %1277 = vmatprep.subr.mxu0 0.0
        %1278 = vmatpush1.msra.mxu0 0.0
        %1279 = vmatprep.subr.mxu0 0.0
        %1280 = vmatpush1.msra.mxu0 0.0
        %1281 = vmatprep.subr.mxu0 0.0
        %1282 = vmatpush1.msra.mxu0 0.0
        %1283 = vmatprep.subr.mxu0 0.0
        %1284 = vmatpush1.msra.mxu0 0.0
        %1285 = vmatprep.subr.mxu0 0.0
        %1286 = vmatpush1.msra.mxu0 0.0
        %1287 = vmatprep.subr.mxu0 0.0
        %1288 = vmatpush1.msra.mxu0 0.0
        %1289 = vmatprep.subr.mxu0 0.0
        %1290 = vmatpush1.msra.mxu0 0.0
        %1291 = vmatprep.subr.mxu0 0.0
        %1292 = vmatpush1.msra.mxu0 0.0
        %1293 = vmatprep.subr.mxu0 0.0
        %1294 = vmatpush1.msra.mxu0 0.0
        %1295 = vmatprep.subr.mxu0 0.0
        %1296 = vmatpush1.msra.mxu0 0.0
        %1297 = vmatprep.subr.mxu0 0.0
        %1298 = vmatpush1.msra.mxu0 0.0
        %1299 = vmatprep.subr.mxu0 0.0
        %1300 = vmatpush1.msra.mxu0 %v1265
        %1301 = vmatprep.subr.mxu0 0.0
        %1302 = vmatpush2.msra.mxu0 0.0
        %1303 = vmatprep.subr.mxu0 0.0
        %1304 = vmatpush2.msra.mxu0 0.0
        %1305 = vmatprep.subr.mxu0 0.0
        %1306 = vmatpush2.msra.mxu0 0.0
        %1307 = vmatprep.subr.mxu0 0.0
        %1308 = vmatpush2.msra.mxu0 0.0
        %1309 = vmatprep.subr.mxu0 0.0
        %1310 = vmatpush2.msra.mxu0 0.0
        %1311 = vmatprep.subr.mxu0 0.0
        %1312 = vmatpush2.msra.mxu0 0.0
        %1313 = vmatprep.subr.mxu0 0.0
        %1314 = vmatpush2.msra.mxu0 0.0
        %1315 = vmatprep.subr.mxu0 0.0
        %1316 = vmatpush2.msra.mxu0 0.0
        %1317 = vmatprep.subr.mxu0 0.0
        %1318 = vmatpush2.msra.mxu0 0.0
        %1319 = vmatprep.subr.mxu0 0.0
        %1320 = vmatpush2.msra.mxu0 0.0
        %1321 = vmatprep.subr.mxu0 0.0
        %1322 = vmatpush2.msra.mxu0 0.0
        %1323 = vmatprep.subr.mxu0 0.0
        %1324 = vmatpush2.msra.mxu0 0.0
        %1325 = vmatprep.subr.mxu0 0.0
        %1326 = vmatpush2.msra.mxu0 0.0
        %1327 = vmatprep.subr.mxu0 0.0
        %1328 = vmatpush2.msra.mxu0 0.0
        %1329 = vmatprep.subr.mxu0 0.0
        %1330 = vmatpush2.msra.mxu0 0.0
        %1331 = vmatprep.subr.mxu0 0.0
        %1332 = vmatpush2.msra.mxu0 0.0
        %1333 = vmatprep.mubr.f32.mxu0 0.0
        %1334 = vmatmul.mubr.f32.gmra.mxu0 %v1267
        %v1335 = vpop.f32.mrf.mxu0
        %v1336 = vadd.f32 0.0, %v1335
        %v1337 = vpop.f32.mrf.mxu0
        %1338 = vdwg.mxu0
        %v1339 = vadd.f32 %v1262, %v1336
        %v1340 = vld [vmem:[%s3 + $0x18] sm:$0xff]
        %v1342 = vsel %vm1118, %v1115, 0
        %1344 = vmatprep.subr.mxu0 0.0
        %1345 = vmatpush1.msra.mxu0 0.0
        %1346 = vmatprep.subr.mxu0 0.0
        %1347 = vmatpush1.msra.mxu0 0.0
        %1348 = vmatprep.subr.mxu0 0.0
        %1349 = vmatpush1.msra.mxu0 0.0
        %1350 = vmatprep.subr.mxu0 0.0
        %1351 = vmatpush1.msra.mxu0 0.0
        %1352 = vmatprep.subr.mxu0 0.0
        %1353 = vmatpush1.msra.mxu0 0.0
        %1354 = vmatprep.subr.mxu0 0.0
        %1355 = vmatpush1.msra.mxu0 0.0
        %1356 = vmatprep.subr.mxu0 0.0
        %1357 = vmatpush1.msra.mxu0 0.0
        %1358 = vmatprep.subr.mxu0 0.0
        %1359 = vmatpush1.msra.mxu0 0.0
        %1360 = vmatprep.subr.mxu0 0.0
        %1361 = vmatpush1.msra.mxu0 0.0
        %1362 = vmatprep.subr.mxu0 0.0
        %1363 = vmatpush1.msra.mxu0 0.0
        %1364 = vmatprep.subr.mxu0 0.0
        %1365 = vmatpush1.msra.mxu0 0.0
        %1366 = vmatprep.subr.mxu0 0.0
        %1367 = vmatpush1.msra.mxu0 0.0
        %1368 = vmatprep.subr.mxu0 0.0
        %1369 = vmatpush1.msra.mxu0 0.0
        %1370 = vmatprep.subr.mxu0 0.0
        %1371 = vmatpush1.msra.mxu0 0.0
        %1372 = vmatprep.subr.mxu0 0.0
        %1373 = vmatpush1.msra.mxu0 0.0
        %1374 = vmatprep.subr.mxu0 0.0
        %1375 = vmatpush1.msra.mxu0 %v1340
        %1376 = vmatprep.subr.mxu0 0.0
        %1377 = vmatpush2.msra.mxu0 0.0
        %1378 = vmatprep.subr.mxu0 0.0
        %1379 = vmatpush2.msra.mxu0 0.0
        %1380 = vmatprep.subr.mxu0 0.0
        %1381 = vmatpush2.msra.mxu0 0.0
        %1382 = vmatprep.subr.mxu0 0.0
        %1383 = vmatpush2.msra.mxu0 0.0
        %1384 = vmatprep.subr.mxu0 0.0
        %1385 = vmatpush2.msra.mxu0 0.0
        %1386 = vmatprep.subr.mxu0 0.0
        %1387 = vmatpush2.msra.mxu0 0.0
        %1388 = vmatprep.subr.mxu0 0.0
        %1389 = vmatpush2.msra.mxu0 0.0
        %1390 = vmatprep.subr.mxu0 0.0
        %1391 = vmatpush2.msra.mxu0 0.0
        %1392 = vmatprep.subr.mxu0 0.0
        %1393 = vmatpush2.msra.mxu0 0.0
        %1394 = vmatprep.subr.mxu0 0.0
        %1395 = vmatpush2.msra.mxu0 0.0
        %1396 = vmatprep.subr.mxu0 0.0
        %1397 = vmatpush2.msra.mxu0 0.0
        %1398 = vmatprep.subr.mxu0 0.0
        %1399 = vmatpush2.msra.mxu0 0.0
        %1400 = vmatprep.subr.mxu0 0.0
        %1401 = vmatpush2.msra.mxu0 0.0
        %1402 = vmatprep.subr.mxu0 0.0
        %1403 = vmatpush2.msra.mxu0 0.0
        %1404 = vmatprep.subr.mxu0 0.0
        %1405 = vmatpush2.msra.mxu0 0.0
        %1406 = vmatprep.subr.mxu0 0.0
        %1407 = vmatpush2.msra.mxu0 0.0
        %1408 = vmatprep.mubr.f32.mxu0 0.0
        %1409 = vmatmul.mubr.f32.gmra.mxu0 %v1342
        %v1410 = vpop.f32.mrf.mxu0
        %v1411 = vadd.f32 0.0, %v1410
        %v1412 = vpop.f32.mrf.mxu0
        %1413 = vdwg.mxu0
        %v1414 = vadd.f32 %v1339, %v1411
        %vm1415 = vcmask 261120
        %1416 = vst.msk [vmem:[%s295] sm:$0xff] %vm1415, %v1414
      $region48: #{multi_scale_attention.7} parent=35 // pred_fallthru
        _
      %p1417 = scmp.lt.s32.totalorder %s20, 1
      %s1418 = scalar_select %p1417, %s20, 1
      %p1419 = scmp.lt.s32.totalorder %s21, 0
      %s1420 = scalar_select %p1419, %s21, 0
      %s1421 = sadd.s32 %s1420, %s1418
      %s1422 = smul.addr %s1421, 8
      %s1423 = scalar_lea.vmem %s4, %s1422
      // Predicated region
      $region49: #{multi_scale_attention.7} parent=35 // pred_check
        %p1424 = pneg %p159
      $region50: #{multi_scale_attention.7} parent=35 // pred_check_branch
        %1426 = sbr.rel (%p1424) target = $region52
      $region51: #{multi_scale_attention.7} parent=35 // pred_region
        _
      $region52: #{multi_scale_attention.7} parent=35 // pred_fallthru
        _
    $region36: #{multi_scale_attention.7} parent=5 // pred_fallthru
      _
    %p1427 = scmp.le.s32.totalorder 2, %s10
    // Predicated region
    $region53: #{multi_scale_attention.7} parent=5 // pred_check
      %p1428 = pneg %p1427
    $region54: #{multi_scale_attention.7} parent=5 // pred_check_branch
      %1430 = sbr.rel (%p1428) target = $region56
    $region55: #{multi_scale_attention.7} parent=5 // pred_region
      %s1431 = ssub.s32 %s10, 2
      // Predicated region
      $region57: #{multi_scale_attention.7} parent=55 // pred_check
        %p1432 = pneg %p165
      $region58: #{multi_scale_attention.7} parent=55 // pred_check_branch
        %1434 = sbr.rel (%p1432) target = $region60
      $region59: #{multi_scale_attention.7} parent=55 // pred_region
        %p1435 = scmp.lt.s32.totalorder %s23, 1
        %s1436 = scalar_select %p1435, %s23, 1
        %p1437 = scmp.lt.s32.totalorder %s24, 0
        %s1438 = scalar_select %p1437, %s24, 0
        %s1439 = sadd.s32 %s1438, %s1436
        %s1440 = smul.addr %s1439, 8
        %s1441 = scalar_lea.vmem %s4, %s1440
      $region60: #{multi_scale_attention.7} parent=55 // pred_fallthru
        _
    $region56: #{multi_scale_attention.7} parent=5 // pred_fallthru
      _
  $region6: #{multi_scale_attention.7} parent=0 // loop_footer
    %s14 = sadd.s32 1, %s10
  $region7: #{multi_scale_attention.7} parent=0 // loop_footer_branch
    %9 = sbr.rel target = $region3
  $region8: #{multi_scale_attention.7} parent=0 // loop_exit
    _

// kernel: multi_scale_attention.9
$region0: #{multi_scale_attention.9}
  #allocation0 [shape = 'u32[]', space=smem, size = 0x4, offset = 0x4, fixed_abs, tag = 'smem constant byte address 0x4 - core index']
  #allocation1 [shape = 'u32[144,128]{1,0:T(1,128)}', space=vmem, size = 0x12000, scoped, tag = 'internal scratch']
  #allocation2 [shape = 'f32[4,4,1]{2,1,0:T(4,128)}', space=vmem, size = 0x2000, scoped, tag = 'scratch operand']
  #allocation3 [shape = 'f32[4,4,1]{2,1,0:T(4,128)}', space=vmem, size = 0x2000, scoped, tag = 'scratch operand']
  #allocation4 [shape = 'f32[4,4,8]{2,1,0:T(4,128)}', space=vmem, size = 0x2000, scoped, tag = 'scratch operand']
  %s0 = inlined_call_operand.vmem [shape: f32[2,4,4,8], index: 0, kind: input, shape index: {}]
  %s1 = inlined_call_operand.vmem [shape: f32[2,4,4,8], index: 1, kind: input, shape index: {}]
  %s2 = inlined_call_operand.vmem [shape: f32[2,4,4,8], index: 2, kind: input, shape index: {}]
  %s3 = inlined_call_operand.vmem [shape: f32[32,32], index: 3, kind: input, shape index: {}]
  %s4 = inlined_call_operand.vmem [shape: f32[2,4,32], index: 4, kind: output, shape index: {}]
  %s5 = sld [smem:[#allocation0]]
  $region61: #{multi_scale_attention.9} parent=0
    _
  %s7 = ssub.s32 1, %s5
  %s8 = scalar_select 0, %s7, %s5
  loop: start=0, step=1, limit=4
  $region2: #{multi_scale_attention.9} parent=0 // loop_pre_header
    _
  $region3: #{multi_scale_attention.9} parent=0 // loop_header
    %s10 = sphi 0, %s14
    %p11 = scmp.ge.s32.totalorder %s10, 4
    %s17 = sphi 0, %s36
    %s18 = sphi 0, %s32
    %s19 = sphi 0, %s28
    %s20 = sphi 0, %s17
    %s21 = sphi 0, %s18
    %s22 = sphi 0, %s19
    %s23 = sphi 0, %s20
    %s24 = sphi 0, %s21
    %s25 = sphi 0, %s22
    %s41 = sphi 0, %s43
    %s44 = sphi 0, %s41
    %s45 = sphi 0, %s44
    %s61 = sphi 0, %s45
    %s69 = sphi 0, %s71
    %s72 = sphi 0, %s69
    %s73 = sphi 0, %s72
    %s89 = sphi 0, %s73
    %s97 = sphi 0, %s99
    %s100 = sphi 0, %s97
    %s101 = sphi 0, %s100
    %s117 = sphi 0, %s101
    %s121 = sphi 0, %s121
    %s123 = sphi 0, %s121
    %s124 = sphi 0, %s123
    %s138 = sphi 0, %s124
    %s146 = sphi 0, %s148
    %s149 = sphi 0, %s146
    %s150 = sphi 0, %s149
    %s166 = sphi 0, %s150
  $region4: #{multi_scale_attention.9} parent=0 // loop_header_branch
    %13 = sbr.rel (%p11) target = $region8
  $region5: #{multi_scale_attention.9} parent=0 // loop_body
    %s15 = ssub.s32 %s10, 1
    %s16 = ssub.s32 %s10, 2
    %s26 = sadd.s32 1, %s19
    %p27 = scmp.ge.s32.totalorder %s26, 1
    %s28 = scalar_select %p27, 0, %s26
    %s29 = sadd.s32 1, %s18
    %s30 = scalar_select %p27, %s29, %s18
    %p31 = scmp.ge.s32.totalorder %s30, 1
    %s32 = scalar_select %p31, 0, %s30
    %s33 = sadd.s32 1, %s17
    %s34 = scalar_select %p31, %s33, %s17
    %p35 = scmp.ge.s32.totalorder %s34, 2
    %s36 = scalar_select %p35, 0, %s34
    %s37 = ssub.s32 %s17, %s36
    %s38 = ssub.s32 %s18, %s32
    %s39 = sor.u32 %s37, %s38
    %p40 = scmp.eq.s32.totalorder %s39, 0
    %s42 = sadd.s32 %s41, 1
    %s43 = scalar_select %p40, %s41, %s42
    %p46 = pneg %p40
    %p47 = scmp.eq.s32.totalorder %s10, 1
    %p48 = por %p46, %p47
    %p49 = scmp.ne.s32.totalorder %s41, %s44
    %p50 = scmp.eq.s32.totalorder %s10, 0
    %p51 = por %p49, %p50
    %p52 = scmp.ne.s32.totalorder %s41, %s44
    %p53 = scmp.eq.s32.totalorder %s15, 1
    %p54 = por %p52, %p53
    %p55 = scmp.ne.s32.totalorder %s44, %s45
    %p56 = scmp.eq.s32.totalorder %s15, 0
    %p57 = por %p55, %p56
    %p58 = scmp.ne.s32.totalorder %s44, %s45
    %p59 = scmp.eq.s32.totalorder %s16, 1
    %p60 = por %p58, %p59
    %p62 = scmp.ne.s32.totalorder %s45, %s61
    %p63 = scmp.eq.s32.totalorder %s16, 0
    %p64 = por %p62, %p63
    %s65 = ssub.s32 %s17, %s36
    %s66 = ssub.s32 %s19, %s28
    %s67 = sor.u32 %s65, %s66
    %p68 = scmp.eq.s32.totalorder %s67, 0
    %s70 = sadd.s32 %s69, 1
    %s71 = scalar_select %p68, %s69, %s70
    %p74 = pneg %p68
    %p75 = scmp.eq.s32.totalorder %s10, 1
    %p76 = por %p74, %p75
    %p77 = scmp.ne.s32.totalorder %s69, %s72
    %p78 = scmp.eq.s32.totalorder %s10, 0
    %p79 = por %p77, %p78
    %p80 = scmp.ne.s32.totalorder %s69, %s72
    %p81 = scmp.eq.s32.totalorder %s15, 1
    %p82 = por %p80, %p81
    %p83 = scmp.ne.s32.totalorder %s72, %s73
    %p84 = scmp.eq.s32.totalorder %s15, 0
    %p85 = por %p83, %p84
    %p86 = scmp.ne.s32.totalorder %s72, %s73
    %p87 = scmp.eq.s32.totalorder %s16, 1
    %p88 = por %p86, %p87
    %p90 = scmp.ne.s32.totalorder %s73, %s89
    %p91 = scmp.eq.s32.totalorder %s16, 0
    %p92 = por %p90, %p91
    %s93 = ssub.s32 %s17, %s36
    %s94 = ssub.s32 %s19, %s28
    %s95 = sor.u32 %s93, %s94
    %p96 = scmp.eq.s32.totalorder %s95, 0
    %s98 = sadd.s32 %s97, 1
    %s99 = scalar_select %p96, %s97, %s98
    %p102 = pneg %p96
    %p103 = scmp.eq.s32.totalorder %s10, 1
    %p104 = por %p102, %p103
    %p105 = scmp.ne.s32.totalorder %s97, %s100
    %p106 = scmp.eq.s32.totalorder %s10, 0
    %p107 = por %p105, %p106
    %p108 = scmp.ne.s32.totalorder %s97, %s100
    %p109 = scmp.eq.s32.totalorder %s15, 1
    %p110 = por %p108, %p109
    %p111 = scmp.ne.s32.totalorder %s100, %s101
    %p112 = scmp.eq.s32.totalorder %s15, 0
    %p113 = por %p111, %p112
    %p114 = scmp.ne.s32.totalorder %s100, %s101
    %p115 = scmp.eq.s32.totalorder %s16, 1
    %p116 = por %p114, %p115
    %p118 = scmp.ne.s32.totalorder %s101, %s117
    %p119 = scmp.eq.s32.totalorder %s16, 0
    %p120 = por %p118, %p119
    %s122 = sadd.s32 %s121, 1
    %p125 = scmp.eq.s32.totalorder %s10, 1
    %p126 = scmp.ne.s32.totalorder %s121, %s123
    %p127 = scmp.eq.s32.totalorder %s10, 0
    %p128 = por %p126, %p127
    %p129 = scmp.ne.s32.totalorder %s121, %s123
    %p130 = scmp.eq.s32.totalorder %s15, 1
    %p131 = por %p129, %p130
    %p132 = scmp.ne.s32.totalorder %s123, %s124
    %p133 = scmp.eq.s32.totalorder %s15, 0
    %p134 = por %p132, %p133
    %p135 = scmp.ne.s32.totalorder %s123, %s124
    %p136 = scmp.eq.s32.totalorder %s16, 1
    %p137 = por %p135, %p136
    %p139 = scmp.ne.s32.totalorder %s124, %s138
    %p140 = scmp.eq.s32.totalorder %s16, 0
    %p141 = por %p139, %p140
    %s142 = ssub.s32 %s17, %s36
    %s143 = ssub.s32 %s18, %s32
    %s144 = sor.u32 %s142, %s143
    %p145 = scmp.eq.s32.totalorder %s144, 0
    %s147 = sadd.s32 %s146, 1
    %s148 = scalar_select %p145, %s146, %s147
    %p151 = pneg %p145
    %p152 = scmp.eq.s32.totalorder %s10, 1
    %p153 = por %p151, %p152
    %p154 = scmp.ne.s32.totalorder %s146, %s149
    %p155 = scmp.eq.s32.totalorder %s10, 0
    %p156 = por %p154, %p155
    %p157 = scmp.ne.s32.totalorder %s146, %s149
    %p158 = scmp.eq.s32.totalorder %s15, 1
    %p159 = por %p157, %p158
    %p160 = scmp.ne.s32.totalorder %s149, %s150
    %p161 = scmp.eq.s32.totalorder %s15, 0
    %p162 = por %p160, %p161
    %p163 = scmp.ne.s32.totalorder %s149, %s150
    %p164 = scmp.eq.s32.totalorder %s16, 1
    %p165 = por %p163, %p164
    %p167 = scmp.ne.s32.totalorder %s150, %s166
    %p168 = scmp.eq.s32.totalorder %s16, 0
    %p169 = por %p167, %p168
    %p170 = scmp.le.s32.totalorder 1, %s10
    %p171 = scmp.lt.s32.totalorder %s10, 3
    %p172 = pnand %p170, %p171
    %p173 = pneg %p172
    // Predicated region
    $region9: #{multi_scale_attention.9} parent=5 // pred_check
      _
    $region10: #{multi_scale_attention.9} parent=5 // pred_check_branch
      %175 = sbr.rel (%p172) target = $region12
    $region11: #{multi_scale_attention.9} parent=5 // pred_region
      %s176 = ssub.s32 %s10, 1
      // Predicated region
      $region13: #{multi_scale_attention.9} parent=11 // pred_check
        %p177 = pneg %p134
      $region14: #{multi_scale_attention.9} parent=11 // pred_check_branch
        %179 = sbr.rel (%p177) target = $region16
      $region15: #{multi_scale_attention.9} parent=11 // pred_region
        _
      $region16: #{multi_scale_attention.9} parent=11 // pred_fallthru
        _
    $region12: #{multi_scale_attention.9} parent=5 // pred_fallthru
      _
    %p180 = scmp.lt.s32.totalorder %s10, 2
    // Predicated region
    $region17: #{multi_scale_attention.9} parent=5 // pred_check
      %p181 = pneg %p180
    $region18: #{multi_scale_attention.9} parent=5 // pred_check_branch
      %183 = sbr.rel (%p181) target = $region20
    $region19: #{multi_scale_attention.9} parent=5 // pred_region
      // Predicated region
      $region21: #{multi_scale_attention.9} parent=19 // pred_check
        %p184 = pneg %p51
      $region22: #{multi_scale_attention.9} parent=19 // pred_check_branch
        %186 = sbr.rel (%p184) target = $region24
      $region23: #{multi_scale_attention.9} parent=19 // pred_region
        %p187 = scmp.lt.s32.totalorder %s17, 1
        %s188 = scalar_select %p187, %s17, 1
        %p189 = scmp.lt.s32.totalorder %s18, 0
        %s190 = scalar_select %p189, %s18, 0
        %s191 = smul.addr %s188, 4
        %s192 = sadd.s32 %s190, %s191
        %s193 = smul.addr %s192, 4
        %s194 = scalar_lea.vmem %s0, %s193
      $region24: #{multi_scale_attention.9} parent=19 // pred_fallthru
        _
      // Predicated region
      $region25: #{multi_scale_attention.9} parent=19 // pred_check
        %p195 = pneg %p79
      $region26: #{multi_scale_attention.9} parent=19 // pred_check_branch
        %197 = sbr.rel (%p195) target = $region28
      $region27: #{multi_scale_attention.9} parent=19 // pred_region
        %p198 = scmp.lt.s32.totalorder %s17, 1
        %s199 = scalar_select %p198, %s17, 1
        %p200 = scmp.lt.s32.totalorder %s19, 0
        %s201 = scalar_select %p200, %s19, 0
        %s202 = smul.addr %s199, 4
        %s203 = sadd.s32 %s201, %s202
        %s204 = smul.addr %s203, 4
        %s205 = scalar_lea.vmem %s1, %s204
      $region28: #{multi_scale_attention.9} parent=19 // pred_fallthru
        _
      // Predicated region
      $region29: #{multi_scale_attention.9} parent=19 // pred_check
        %p206 = pneg %p107
      $region30: #{multi_scale_attention.9} parent=19 // pred_check_branch
        %208 = sbr.rel (%p206) target = $region32
      $region31: #{multi_scale_attention.9} parent=19 // pred_region
        %p209 = scmp.lt.s32.totalorder %s17, 1
        %s210 = scalar_select %p209, %s17, 1
        %p211 = scmp.lt.s32.totalorder %s19, 0
        %s212 = scalar_select %p211, %s19, 0
        %s213 = smul.addr %s210, 4
        %s214 = sadd.s32 %s212, %s213
        %s215 = smul.addr %s214, 4
        %s216 = scalar_lea.vmem %s2, %s215
      $region32: #{multi_scale_attention.9} parent=19 // pred_fallthru
        _
    $region20: #{multi_scale_attention.9} parent=5 // pred_fallthru
      _
    %p217 = scmp.le.s32.totalorder 1, %s10
    %p218 = scmp.lt.s32.totalorder %s10, 3
    %p219 = pnand %p217, %p218
    %p220 = pneg %p219
    // Predicated region
    $region33: #{multi_scale_attention.9} parent=5 // pred_check
      _
    $region34: #{multi_scale_attention.9} parent=5 // pred_check_branch
      %222 = sbr.rel (%p219) target = $region36
    $region35: #{multi_scale_attention.9} parent=5 // pred_region
      %s223 = ssub.s32 %s10, 1
      %p224 = scmp.lt.s32.totalorder %s20, 1
      %s225 = scalar_select %p224, %s20, 1
      %p226 = scmp.lt.s32.totalorder %s21, 0
      %s227 = scalar_select %p226, %s21, 0
      %s228 = smul.addr %s225, 4
      %s229 = sadd.s32 %s227, %s228
      %s230 = smul.addr %s229, 4
      %s231 = scalar_lea.vmem %s0, %s230
      %p232 = pneg %p57
      %p233 = pneg %p54
      %p234 = scmp.lt.s32.totalorder %s20, 1
      %s235 = scalar_select %p234, %s20, 1
      %p236 = scmp.lt.s32.totalorder %s22, 0
      %s237 = scalar_select %p236, %s22, 0
      %s238 = smul.addr %s235, 4
      %s239 = sadd.s32 %s237, %s238
      %s240 = smul.addr %s239, 4
      %s241 = scalar_lea.vmem %s1, %s240
      %p242 = pneg %p85
      %p243 = pneg %p82
      %p244 = scmp.lt.s32.totalorder %s20, 1
      %s245 = scalar_select %p244, %s20, 1
      %p246 = scmp.lt.s32.totalorder %s22, 0
      %s247 = scalar_select %p246, %s22, 0
      %s248 = smul.addr %s245, 4
      %s249 = sadd.s32 %s247, %s248
      %s250 = smul.addr %s249, 4
      %s251 = scalar_lea.vmem %s2, %s250
      %p252 = pneg %p113
      %p253 = pneg %p110
      %p254 = pneg %p134
      %p255 = pneg %p131
      %p256 = pneg %p162
      %p257 = pneg %p159
      %p258 = scmp.lt.s32.totalorder %s20, 1
      %s259 = scalar_select %p258, %s20, 1
      %p260 = scmp.lt.s32.totalorder %s21, 0
      %s261 = scalar_select %p260, %s21, 0
      %s262 = sadd.s32 %s261, %s259
      %s263 = smul.addr %s262, 4
      %s264 = scalar_lea.vmem %s4, %s263
      %p265 = scmp.lt.s32.totalorder %s20, 1
      %s266 = scalar_select %p265, %s20, 1
      %p267 = scmp.lt.s32.totalorder %s21, 0
      %s268 = scalar_select %p267, %s21, 0
      %s269 = smul.addr %s266, 4
      %s270 = sadd.s32 %s268, %s269
      %s271 = smul.addr %s270, 4
      %s272 = scalar_lea.vmem %s0, %s271
      %p273 = scmp.lt.s32.totalorder %s20, 1
      %s274 = scalar_select %p273, %s20, 1
      %p275 = scmp.lt.s32.totalorder %s22, 0
      %s276 = scalar_select %p275, %s22, 0
      %s277 = smul.addr %s274, 4
      %s278 = sadd.s32 %s276, %s277
      %s279 = smul.addr %s278, 4
      %s280 = scalar_lea.vmem %s1, %s279
      %p281 = scmp.lt.s32.totalorder %s20, 1
      %s282 = scalar_select %p281, %s20, 1
      %p283 = scmp.lt.s32.totalorder %s22, 0
      %s284 = scalar_select %p283, %s22, 0
      %s285 = smul.addr %s282, 4
      %s286 = sadd.s32 %s284, %s285
      %s287 = smul.addr %s286, 4
      %s288 = scalar_lea.vmem %s2, %s287
      %p289 = scmp.lt.s32.totalorder %s20, 1
      %s290 = scalar_select %p289, %s20, 1
      %p291 = scmp.lt.s32.totalorder %s21, 0
      %s292 = scalar_select %p291, %s21, 0
      %s293 = sadd.s32 %s292, %s290
      %s294 = smul.addr %s293, 4
      %s295 = scalar_lea.vmem %s4, %s294
      %p296 = scmp.eq.s32.totalorder %s22, 0
      // Predicated region
      $region37: #{multi_scale_attention.9} parent=35 // pred_check
        %p297 = pneg %p296
      $region38: #{multi_scale_attention.9} parent=35 // pred_check_branch
        %299 = sbr.rel (%p297) target = $region40
      $region39: #{multi_scale_attention.9} parent=35 // pred_region
        %vm300 = vcmask 3072
        %301 = vst.msk [vmem:[#allocation2] sm:$0xf] %vm300, -1e+30
        %302 = vst.msk [vmem:[#allocation2 + $0x4] sm:$0xf] %vm300, -1e+30
        %303 = vst.msk [vmem:[#allocation2 + $0x8] sm:$0xf] %vm300, -1e+30
        %304 = vst.msk [vmem:[#allocation2 + $0xc] sm:$0xf] %vm300, -1e+30
        %305 = vst.msk [vmem:[#allocation3] sm:$0xf] %vm300, 0.0
        %306 = vst.msk [vmem:[#allocation3 + $0x4] sm:$0xf] %vm300, 0.0
        %307 = vst.msk [vmem:[#allocation3 + $0x8] sm:$0xf] %vm300, 0.0
        %308 = vst.msk [vmem:[#allocation3 + $0xc] sm:$0xf] %vm300, 0.0
        %vm309 = vcmask 60416
        %310 = vst.msk [vmem:[#allocation4] sm:$0xf] %vm309, 0.0
        %311 = vst.msk [vmem:[#allocation4 + $0x4] sm:$0xf] %vm309, 0.0
        %312 = vst.msk [vmem:[#allocation4 + $0x8] sm:$0xf] %vm309, 0.0
        %313 = vst.msk [vmem:[#allocation4 + $0xc] sm:$0xf] %vm309, 0.0
      $region40: #{multi_scale_attention.9} parent=35 // pred_fallthru
        _
      %p314 = scmp.le.s32.totalorder %s22, %s21
      // Predicated region
      $region41: #{multi_scale_attention.9} parent=35 // pred_check
        %p315 = pneg %p314
      $region42: #{multi_scale_attention.9} parent=35 // pred_check_branch
        %317 = sbr.rel (%p315) target = $region44
      $region43: #{multi_scale_attention.9} parent=35 // pred_region
        %v318 = vld [vmem:[%s272] sm:$0xf]
        %v319 = vld [vmem:[%s272 + $0x4] sm:$0xf]
        %v320 = vld [vmem:[%s272 + $0x8] sm:$0xf]
        %v321 = vld [vmem:[%s272 + $0xc] sm:$0xf]
        %v322 = vld [vmem:[%s280] sm:$0xf]
        %v323 = vld [vmem:[%s280 + $0x4] sm:$0xf]
        %v324 = vld [vmem:[%s280 + $0x8] sm:$0xf]
        %v325 = vld [vmem:[%s280 + $0xc] sm:$0xf]
        %v326 = vld [vmem:[%s288] sm:$0xf]
        %v327 = vld [vmem:[%s288 + $0x4] sm:$0xf]
        %v328 = vld [vmem:[%s288 + $0x8] sm:$0xf]
        %v329 = vld [vmem:[%s288 + $0xc] sm:$0xf]
        %vm330 = vcmask 64512
        %v332 = vsel %vm330, %v318, 0
        %v335 = vsel %vm330, %v322, 0
        %337 = vmatprep.subr.mxu0 0.0
        %338 = vmatpush1.xpose.msra.mxu0 0.0
        %339 = vmatprep.subr.mxu0 0.0
        %340 = vmatpush1.xpose.msra.mxu0 0.0
        %341 = vmatprep.subr.mxu0 0.0
        %342 = vmatpush1.xpose.msra.mxu0 0.0
        %343 = vmatprep.subr.mxu0 0.0
        %344 = vmatpush1.xpose.msra.mxu0 0.0
        %345 = vmatprep.subr.mxu0 0.0
        %346 = vmatpush1.xpose.msra.mxu0 0.0
        %347 = vmatprep.subr.mxu0 0.0
        %348 = vmatpush1.xpose.msra.mxu0 0.0
        %349 = vmatprep.subr.mxu0 0.0
        %350 = vmatpush1.xpose.msra.mxu0 0.0
        %351 = vmatprep.subr.mxu0 0.0
        %352 = vmatpush1.xpose.msra.mxu0 0.0
        %353 = vmatprep.subr.mxu0 0.0
        %354 = vmatpush1.xpose.msra.mxu0 0.0
        %355 = vmatprep.subr.mxu0 0.0
        %356 = vmatpush1.xpose.msra.mxu0 0.0
        %357 = vmatprep.subr.mxu0 0.0
        %358 = vmatpush1.xpose.msra.mxu0 0.0
        %359 = vmatprep.subr.mxu0 0.0
        %360 = vmatpush1.xpose.msra.mxu0 0.0
        %361 = vmatprep.subr.mxu0 0.0
        %362 = vmatpush1.xpose.msra.mxu0 0.0
        %363 = vmatprep.subr.mxu0 0.0
        %364 = vmatpush1.xpose.msra.mxu0 0.0
        %365 = vmatprep.subr.mxu0 0.0
        %366 = vmatpush1.xpose.msra.mxu0 0.0
        %367 = vmatprep.subr.mxu0 0.0
        %368 = vmatpush1.xpose.msra.mxu0 %v335
        %369 = vmatprep.subr.mxu0 0.0
        %370 = vmatpush2.xpose.msra.mxu0 0.0
        %371 = vmatprep.subr.mxu0 0.0
        %372 = vmatpush2.xpose.msra.mxu0 0.0
        %373 = vmatprep.subr.mxu0 0.0
        %374 = vmatpush2.xpose.msra.mxu0 0.0
        %375 = vmatprep.subr.mxu0 0.0
        %376 = vmatpush2.xpose.msra.mxu0 0.0
        %377 = vmatprep.subr.mxu0 0.0
        %378 = vmatpush2.xpose.msra.mxu0 0.0
        %379 = vmatprep.subr.mxu0 0.0
        %380 = vmatpush2.xpose.msra.mxu0 0.0
        %381 = vmatprep.subr.mxu0 0.0
        %382 = vmatpush2.xpose.msra.mxu0 0.0
        %383 = vmatprep.subr.mxu0 0.0
        %384 = vmatpush2.xpose.msra.mxu0 0.0
        %385 = vmatprep.subr.mxu0 0.0
        %386 = vmatpush2.xpose.msra.mxu0 0.0
        %387 = vmatprep.subr.mxu0 0.0
        %388 = vmatpush2.xpose.msra.mxu0 0.0
        %389 = vmatprep.subr.mxu0 0.0
        %390 = vmatpush2.xpose.msra.mxu0 0.0
        %391 = vmatprep.subr.mxu0 0.0
        %392 = vmatpush2.xpose.msra.mxu0 0.0
        %393 = vmatprep.subr.mxu0 0.0
        %394 = vmatpush2.xpose.msra.mxu0 0.0
        %395 = vmatprep.subr.mxu0 0.0
        %396 = vmatpush2.xpose.msra.mxu0 0.0
        %397 = vmatprep.subr.mxu0 0.0
        %398 = vmatpush2.xpose.msra.mxu0 0.0
        %399 = vmatprep.subr.mxu0 0.0
        %400 = vmatpush2.xpose.msra.mxu0 0.0
        %401 = vmatprep.mubr.f32.mxu0 0.0
        %402 = vmatmul.mubr.f32.gmra.mxu0 %v332
        %v403 = vpop.f32.mrf.mxu0
        %v404 = vadd.f32 0.0, %v403
        %v405 = vpop.f32.mrf.mxu0
        %406 = vdwg.mxu0
        %v408 = vsel %vm330, %v319, 0
        %v411 = vsel %vm330, %v323, 0
        %413 = vmatprep.subr.mxu0 0.0
        %414 = vmatpush1.xpose.msra.mxu0 0.0
        %415 = vmatprep.subr.mxu0 0.0
        %416 = vmatpush1.xpose.msra.mxu0 0.0
        %417 = vmatprep.subr.mxu0 0.0
        %418 = vmatpush1.xpose.msra.mxu0 0.0
        %419 = vmatprep.subr.mxu0 0.0
        %420 = vmatpush1.xpose.msra.mxu0 0.0
        %421 = vmatprep.subr.mxu0 0.0
        %422 = vmatpush1.xpose.msra.mxu0 0.0
        %423 = vmatprep.subr.mxu0 0.0
        %424 = vmatpush1.xpose.msra.mxu0 0.0
        %425 = vmatprep.subr.mxu0 0.0
        %426 = vmatpush1.xpose.msra.mxu0 0.0
        %427 = vmatprep.subr.mxu0 0.0
        %428 = vmatpush1.xpose.msra.mxu0 0.0
        %429 = vmatprep.subr.mxu0 0.0
        %430 = vmatpush1.xpose.msra.mxu0 0.0
        %431 = vmatprep.subr.mxu0 0.0
        %432 = vmatpush1.xpose.msra.mxu0 0.0
        %433 = vmatprep.subr.mxu0 0.0
        %434 = vmatpush1.xpose.msra.mxu0 0.0
        %435 = vmatprep.subr.mxu0 0.0
        %436 = vmatpush1.xpose.msra.mxu0 0.0
        %437 = vmatprep.subr.mxu0 0.0
        %438 = vmatpush1.xpose.msra.mxu0 0.0
        %439 = vmatprep.subr.mxu0 0.0
        %440 = vmatpush1.xpose.msra.mxu0 0.0
        %441 = vmatprep.subr.mxu0 0.0
        %442 = vmatpush1.xpose.msra.mxu0 0.0
        %443 = vmatprep.subr.mxu0 0.0
        %444 = vmatpush1.xpose.msra.mxu0 %v411
        %445 = vmatprep.subr.mxu0 0.0
        %446 = vmatpush2.xpose.msra.mxu0 0.0
        %447 = vmatprep.subr.mxu0 0.0
        %448 = vmatpush2.xpose.msra.mxu0 0.0
        %449 = vmatprep.subr.mxu0 0.0
        %450 = vmatpush2.xpose.msra.mxu0 0.0
        %451 = vmatprep.subr.mxu0 0.0
        %452 = vmatpush2.xpose.msra.mxu0 0.0
        %453 = vmatprep.subr.mxu0 0.0
        %454 = vmatpush2.xpose.msra.mxu0 0.0
        %455 = vmatprep.subr.mxu0 0.0
        %456 = vmatpush2.xpose.msra.mxu0 0.0
        %457 = vmatprep.subr.mxu0 0.0
        %458 = vmatpush2.xpose.msra.mxu0 0.0
        %459 = vmatprep.subr.mxu0 0.0
        %460 = vmatpush2.xpose.msra.mxu0 0.0
        %461 = vmatprep.subr.mxu0 0.0
        %462 = vmatpush2.xpose.msra.mxu0 0.0
        %463 = vmatprep.subr.mxu0 0.0
        %464 = vmatpush2.xpose.msra.mxu0 0.0
        %465 = vmatprep.subr.mxu0 0.0
        %466 = vmatpush2.xpose.msra.mxu0 0.0
        %467 = vmatprep.subr.mxu0 0.0
        %468 = vmatpush2.xpose.msra.mxu0 0.0
        %469 = vmatprep.subr.mxu0 0.0
        %470 = vmatpush2.xpose.msra.mxu0 0.0
        %471 = vmatprep.subr.mxu0 0.0
        %472 = vmatpush2.xpose.msra.mxu0 0.0
        %473 = vmatprep.subr.mxu0 0.0
        %474 = vmatpush2.xpose.msra.mxu0 0.0
        %475 = vmatprep.subr.mxu0 0.0
        %476 = vmatpush2.xpose.msra.mxu0 0.0
        %477 = vmatprep.mubr.f32.mxu0 0.0
        %478 = vmatmul.mubr.f32.gmra.mxu0 %v408
        %v479 = vpop.f32.mrf.mxu0
        %v480 = vadd.f32 0.0, %v479
        %v481 = vpop.f32.mrf.mxu0
        %482 = vdwg.mxu0
        %v484 = vsel %vm330, %v320, 0
        %v487 = vsel %vm330, %v324, 0
        %489 = vmatprep.subr.mxu0 0.0
        %490 = vmatpush1.xpose.msra.mxu0 0.0
        %491 = vmatprep.subr.mxu0 0.0
        %492 = vmatpush1.xpose.msra.mxu0 0.0
        %493 = vmatprep.subr.mxu0 0.0
        %494 = vmatpush1.xpose.msra.mxu0 0.0
        %495 = vmatprep.subr.mxu0 0.0
        %496 = vmatpush1.xpose.msra.mxu0 0.0
        %497 = vmatprep.subr.mxu0 0.0
        %498 = vmatpush1.xpose.msra.mxu0 0.0
        %499 = vmatprep.subr.mxu0 0.0
        %500 = vmatpush1.xpose.msra.mxu0 0.0
        %501 = vmatprep.subr.mxu0 0.0
        %502 = vmatpush1.xpose.msra.mxu0 0.0
        %503 = vmatprep.subr.mxu0 0.0
        %504 = vmatpush1.xpose.msra.mxu0 0.0
        %505 = vmatprep.subr.mxu0 0.0
        %506 = vmatpush1.xpose.msra.mxu0 0.0
        %507 = vmatprep.subr.mxu0 0.0
        %508 = vmatpush1.xpose.msra.mxu0 0.0
        %509 = vmatprep.subr.mxu0 0.0
        %510 = vmatpush1.xpose.msra.mxu0 0.0
        %511 = vmatprep.subr.mxu0 0.0
        %512 = vmatpush1.xpose.msra.mxu0 0.0
        %513 = vmatprep.subr.mxu0 0.0
        %514 = vmatpush1.xpose.msra.mxu0 0.0
        %515 = vmatprep.subr.mxu0 0.0
        %516 = vmatpush1.xpose.msra.mxu0 0.0
        %517 = vmatprep.subr.mxu0 0.0
        %518 = vmatpush1.xpose.msra.mxu0 0.0
        %519 = vmatprep.subr.mxu0 0.0
        %520 = vmatpush1.xpose.msra.mxu0 %v487
        %521 = vmatprep.subr.mxu0 0.0
        %522 = vmatpush2.xpose.msra.mxu0 0.0
        %523 = vmatprep.subr.mxu0 0.0
        %524 = vmatpush2.xpose.msra.mxu0 0.0
        %525 = vmatprep.subr.mxu0 0.0
        %526 = vmatpush2.xpose.msra.mxu0 0.0
        %527 = vmatprep.subr.mxu0 0.0
        %528 = vmatpush2.xpose.msra.mxu0 0.0
        %529 = vmatprep.subr.mxu0 0.0
        %530 = vmatpush2.xpose.msra.mxu0 0.0
        %531 = vmatprep.subr.mxu0 0.0
        %532 = vmatpush2.xpose.msra.mxu0 0.0
        %533 = vmatprep.subr.mxu0 0.0
        %534 = vmatpush2.xpose.msra.mxu0 0.0
        %535 = vmatprep.subr.mxu0 0.0
        %536 = vmatpush2.xpose.msra.mxu0 0.0
        %537 = vmatprep.subr.mxu0 0.0
        %538 = vmatpush2.xpose.msra.mxu0 0.0
        %539 = vmatprep.subr.mxu0 0.0
        %540 = vmatpush2.xpose.msra.mxu0 0.0
        %541 = vmatprep.subr.mxu0 0.0
        %542 = vmatpush2.xpose.msra.mxu0 0.0
        %543 = vmatprep.subr.mxu0 0.0
        %544 = vmatpush2.xpose.msra.mxu0 0.0
        %545 = vmatprep.subr.mxu0 0.0
        %546 = vmatpush2.xpose.msra.mxu0 0.0
        %547 = vmatprep.subr.mxu0 0.0
        %548 = vmatpush2.xpose.msra.mxu0 0.0
        %549 = vmatprep.subr.mxu0 0.0
        %550 = vmatpush2.xpose.msra.mxu0 0.0
        %551 = vmatprep.subr.mxu0 0.0
        %552 = vmatpush2.xpose.msra.mxu0 0.0
        %553 = vmatprep.mubr.f32.mxu0 0.0
        %554 = vmatmul.mubr.f32.gmra.mxu0 %v484
        %v555 = vpop.f32.mrf.mxu0
        %v556 = vadd.f32 0.0, %v555
        %v557 = vpop.f32.mrf.mxu0
        %558 = vdwg.mxu0
        %v560 = vsel %vm330, %v321, 0
        %v563 = vsel %vm330, %v325, 0
        %565 = vmatprep.subr.mxu0 0.0
        %566 = vmatpush1.xpose.msra.mxu0 0.0
        %567 = vmatprep.subr.mxu0 0.0
        %568 = vmatpush1.xpose.msra.mxu0 0.0
        %569 = vmatprep.subr.mxu0 0.0
        %570 = vmatpush1.xpose.msra.mxu0 0.0
        %571 = vmatprep.subr.mxu0 0.0
        %572 = vmatpush1.xpose.msra.mxu0 0.0
        %573 = vmatprep.subr.mxu0 0.0
        %574 = vmatpush1.xpose.msra.mxu0 0.0
        %575 = vmatprep.subr.mxu0 0.0
        %576 = vmatpush1.xpose.msra.mxu0 0.0
        %577 = vmatprep.subr.mxu0 0.0
        %578 = vmatpush1.xpose.msra.mxu0 0.0
        %579 = vmatprep.subr.mxu0 0.0
        %580 = vmatpush1.xpose.msra.mxu0 0.0
        %581 = vmatprep.subr.mxu0 0.0
        %582 = vmatpush1.xpose.msra.mxu0 0.0
        %583 = vmatprep.subr.mxu0 0.0
        %584 = vmatpush1.xpose.msra.mxu0 0.0
        %585 = vmatprep.subr.mxu0 0.0
        %586 = vmatpush1.xpose.msra.mxu0 0.0
        %587 = vmatprep.subr.mxu0 0.0
        %588 = vmatpush1.xpose.msra.mxu0 0.0
        %589 = vmatprep.subr.mxu0 0.0
        %590 = vmatpush1.xpose.msra.mxu0 0.0
        %591 = vmatprep.subr.mxu0 0.0
        %592 = vmatpush1.xpose.msra.mxu0 0.0
        %593 = vmatprep.subr.mxu0 0.0
        %594 = vmatpush1.xpose.msra.mxu0 0.0
        %595 = vmatprep.subr.mxu0 0.0
        %596 = vmatpush1.xpose.msra.mxu0 %v563
        %597 = vmatprep.subr.mxu0 0.0
        %598 = vmatpush2.xpose.msra.mxu0 0.0
        %599 = vmatprep.subr.mxu0 0.0
        %600 = vmatpush2.xpose.msra.mxu0 0.0
        %601 = vmatprep.subr.mxu0 0.0
        %602 = vmatpush2.xpose.msra.mxu0 0.0
        %603 = vmatprep.subr.mxu0 0.0
        %604 = vmatpush2.xpose.msra.mxu0 0.0
        %605 = vmatprep.subr.mxu0 0.0
        %606 = vmatpush2.xpose.msra.mxu0 0.0
        %607 = vmatprep.subr.mxu0 0.0
        %608 = vmatpush2.xpose.msra.mxu0 0.0
        %609 = vmatprep.subr.mxu0 0.0
        %610 = vmatpush2.xpose.msra.mxu0 0.0
        %611 = vmatprep.subr.mxu0 0.0
        %612 = vmatpush2.xpose.msra.mxu0 0.0
        %613 = vmatprep.subr.mxu0 0.0
        %614 = vmatpush2.xpose.msra.mxu0 0.0
        %615 = vmatprep.subr.mxu0 0.0
        %616 = vmatpush2.xpose.msra.mxu0 0.0
        %617 = vmatprep.subr.mxu0 0.0
        %618 = vmatpush2.xpose.msra.mxu0 0.0
        %619 = vmatprep.subr.mxu0 0.0
        %620 = vmatpush2.xpose.msra.mxu0 0.0
        %621 = vmatprep.subr.mxu0 0.0
        %622 = vmatpush2.xpose.msra.mxu0 0.0
        %623 = vmatprep.subr.mxu0 0.0
        %624 = vmatpush2.xpose.msra.mxu0 0.0
        %625 = vmatprep.subr.mxu0 0.0
        %626 = vmatpush2.xpose.msra.mxu0 0.0
        %627 = vmatprep.subr.mxu0 0.0
        %628 = vmatpush2.xpose.msra.mxu0 0.0
        %629 = vmatprep.mubr.f32.mxu0 0.0
        %630 = vmatmul.mubr.f32.gmra.mxu0 %v560
        %v631 = vpop.f32.mrf.mxu0
        %v632 = vadd.f32 0.0, %v631
        %v633 = vpop.f32.mrf.mxu0
        %634 = vdwg.mxu0
        %v635 = vlaneseq
        %v636 = vshrl.u32 %v635, 7
        %s637 = smul.u32 %s21, 4
        %v638 = vstv %s637
        %v639 = vadd.s32 %v636, %v638
        %v640 = vlaneseq
        %v641 = vand.u32 %v640, 127
        %s642 = smul.u32 %s22, 4
        %v643 = vstv %s642
        %v644 = vadd.s32 %v641, %v643
        %vm645 = vcmp.le.s32.totalorder %v644, %v639
        %v646 = vsel %vm645, 1, 0
        %vm647 = vcmp.eq.s32.totalorder %v646, 1
        %v648 = vsel %vm647, %v404, -1e+30
        %v649 = vsel %vm647, %v480, -1e+30
        %v650 = vsel %vm647, %v556, -1e+30
        %v651 = vsel %vm647, %v632, -1e+30
        %v652 = vld [vmem:[#allocation2] sm:$0xf]
        %v653 = vld [vmem:[#allocation2 + $0x4] sm:$0xf]
        %v654 = vld [vmem:[#allocation2 + $0x8] sm:$0xf]
        %v655 = vld [vmem:[#allocation2 + $0xc] sm:$0xf]
        %vm656 = vcmask 27648
        %v657 = vsel %vm656, %v648, -inf
        %658 = vmax.xlane.f32.xlu0 %v657
        %v659 = vpop.xlane.xlu0 %658
        %v660 = vsel %vm656, %v649, -inf
        %661 = vmax.xlane.f32.xlu0 %v660
        %v662 = vpop.xlane.xlu0 %661
        %v663 = vsel %vm656, %v650, -inf
        %664 = vmax.xlane.f32.xlu0 %v663
        %v665 = vpop.xlane.xlu0 %664
        %v666 = vsel %vm656, %v651, -inf
        %667 = vmax.xlane.f32.xlu0 %v666
        %v668 = vpop.xlane.xlu0 %667
        %v669 = vmax.f32 %v652, %v659
        %v670 = vmax.f32 %v653, %v662
        %v671 = vmax.f32 %v654, %v665
        %v672 = vmax.f32 %v655, %v668
        %v673 = vsub.f32 %v652, %v669
        %v674 = vsub.f32 %v653, %v670
        %v675 = vsub.f32 %v654, %v671
        %v676 = vsub.f32 %v655, %v672
        %v677 = vmul.f32 %v673, 1.442695
        %v678 = vpow.pop %v677
        %v679 = vmul.f32 %v674, 1.442695
        %v680 = vpow.pop %v679
        %v681 = vmul.f32 %v675, 1.442695
        %v682 = vpow.pop %v681
        %v683 = vmul.f32 %v676, 1.442695
        %v684 = vpow.pop %v683
        %686 = vset.pattern.permute.xlu0 0
        %687 = vperm.xlu0 %686, %v669
        %v688 = vpop.permute.xlu0 %687
        %691 = vset.pattern.permute.xlu0 0
        %692 = vperm.xlu0 %691, %v670
        %v693 = vpop.permute.xlu0 %692
        %696 = vset.pattern.permute.xlu0 0
        %697 = vperm.xlu0 %696, %v671
        %v698 = vpop.permute.xlu0 %697
        %701 = vset.pattern.permute.xlu0 0
        %702 = vperm.xlu0 %701, %v672
        %v703 = vpop.permute.xlu0 %702
        %v705 = vsub.f32 %v648, %v688
        %v706 = vsub.f32 %v649, %v693
        %v707 = vsub.f32 %v650, %v698
        %v708 = vsub.f32 %v651, %v703
        %v709 = vmul.f32 %v705, 1.442695
        %v710 = vpow.pop %v709
        %v711 = vmul.f32 %v706, 1.442695
        %v712 = vpow.pop %v711
        %v713 = vmul.f32 %v707, 1.442695
        %v714 = vpow.pop %v713
        %v715 = vmul.f32 %v708, 1.442695
        %v716 = vpow.pop %v715
        %v717 = vld [vmem:[#allocation3] sm:$0xf]
        %v718 = vld [vmem:[#allocation3 + $0x4] sm:$0xf]
        %v719 = vld [vmem:[#allocation3 + $0x8] sm:$0xf]
        %v720 = vld [vmem:[#allocation3 + $0xc] sm:$0xf]
        %v721 = vmul.f32 %v678, %v717
        %v722 = vmul.f32 %v680, %v718
        %v723 = vmul.f32 %v682, %v719
        %v724 = vmul.f32 %v684, %v720
        %v725 = vsel %vm656, %v710, 0.0
        %726 = vadd.xlane.f32.xlu0 %v725
        %v727 = vpop.xlane.xlu0 %726
        %v728 = vsel %vm656, %v712, 0.0
        %729 = vadd.xlane.f32.xlu0 %v728
        %v730 = vpop.xlane.xlu0 %729
        %v731 = vsel %vm656, %v714, 0.0
        %732 = vadd.xlane.f32.xlu0 %v731
        %v733 = vpop.xlane.xlu0 %732
        %v734 = vsel %vm656, %v716, 0.0
        %735 = vadd.xlane.f32.xlu0 %v734
        %v736 = vpop.xlane.xlu0 %735
        %v737 = vadd.f32 %v721, %v727
        %v738 = vadd.f32 %v722, %v730
        %v739 = vadd.f32 %v723, %v733
        %v740 = vadd.f32 %v724, %v736
        %vm741 = vcmask 3072
        %742 = vst.msk [vmem:[#allocation3] sm:$0xf] %vm741, %v737
        %743 = vst.msk [vmem:[#allocation3 + $0x4] sm:$0xf] %vm741, %v738
        %744 = vst.msk [vmem:[#allocation3 + $0x8] sm:$0xf] %vm741, %v739
        %745 = vst.msk [vmem:[#allocation3 + $0xc] sm:$0xf] %vm741, %v740
        %v746 = vld [vmem:[#allocation4] sm:$0xf]
        %v747 = vld [vmem:[#allocation4 + $0x4] sm:$0xf]
        %v748 = vld [vmem:[#allocation4 + $0x8] sm:$0xf]
        %v749 = vld [vmem:[#allocation4 + $0xc] sm:$0xf]
        %751 = vset.pattern.permute.xlu0 0
        %752 = vperm.xlu0 %751, %v678
        %v753 = vpop.permute.xlu0 %752
        %756 = vset.pattern.permute.xlu0 0
        %757 = vperm.xlu0 %756, %v680
        %v758 = vpop.permute.xlu0 %757
        %761 = vset.pattern.permute.xlu0 0
        %762 = vperm.xlu0 %761, %v682
        %v763 = vpop.permute.xlu0 %762
        %766 = vset.pattern.permute.xlu0 0
        %767 = vperm.xlu0 %766, %v684
        %v768 = vpop.permute.xlu0 %767
        %v770 = vmul.f32 %v753, %v746
        %v771 = vmul.f32 %v758, %v747
        %v772 = vmul.f32 %v763, %v748
        %v773 = vmul.f32 %v768, %v749
        %vm774 = vcmask 31744
        %v776 = vsel %vm774, %v710, 0
        %vm778 = vcmask 1043456
        %v780 = vsel %vm778, %v326, 0
        %782 = vmatprep.subr.mxu0 0.0
        %783 = vmatpush1.msra.mxu0 0.0
        %784 = vmatprep.subr.mxu0 0.0
        %785 = vmatpush1.msra.mxu0 0.0
        %786 = vmatprep.subr.mxu0 0.0
        %787 = vmatpush1.msra.mxu0 0.0
        %788 = vmatprep.subr.mxu0 0.0
        %789 = vmatpush1.msra.mxu0 0.0
        %790 = vmatprep.subr.mxu0 0.0
        %791 = vmatpush1.msra.mxu0 0.0
        %792 = vmatprep.subr.mxu0 0.0
        %793 = vmatpush1.msra.mxu0 0.0
        %794 = vmatprep.subr.mxu0 0.0
        %795 = vmatpush1.msra.mxu0 0.0
        %796 = vmatprep.subr.mxu0 0.0
        %797 = vmatpush1.msra.mxu0 0.0
        %798 = vmatprep.subr.mxu0 0.0
        %799 = vmatpush1.msra.mxu0 0.0
        %800 = vmatprep.subr.mxu0 0.0
        %801 = vmatpush1.msra.mxu0 0.0
        %802 = vmatprep.subr.mxu0 0.0
        %803 = vmatpush1.msra.mxu0 0.0
        %804 = vmatprep.subr.mxu0 0.0
        %805 = vmatpush1.msra.mxu0 0.0
        %806 = vmatprep.subr.mxu0 0.0
        %807 = vmatpush1.msra.mxu0 0.0
        %808 = vmatprep.subr.mxu0 0.0
        %809 = vmatpush1.msra.mxu0 0.0
        %810 = vmatprep.subr.mxu0 0.0
        %811 = vmatpush1.msra.mxu0 0.0
        %812 = vmatprep.subr.mxu0 0.0
        %813 = vmatpush1.msra.mxu0 %v780
        %814 = vmatprep.subr.mxu0 0.0
        %815 = vmatpush2.msra.mxu0 0.0
        %816 = vmatprep.subr.mxu0 0.0
        %817 = vmatpush2.msra.mxu0 0.0
        %818 = vmatprep.subr.mxu0 0.0
        %819 = vmatpush2.msra.mxu0 0.0
        %820 = vmatprep.subr.mxu0 0.0
        %821 = vmatpush2.msra.mxu0 0.0
        %822 = vmatprep.subr.mxu0 0.0
        %823 = vmatpush2.msra.mxu0 0.0
        %824 = vmatprep.subr.mxu0 0.0
        %825 = vmatpush2.msra.mxu0 0.0
        %826 = vmatprep.subr.mxu0 0.0
        %827 = vmatpush2.msra.mxu0 0.0
        %828 = vmatprep.subr.mxu0 0.0
        %829 = vmatpush2.msra.mxu0 0.0
        %830 = vmatprep.subr.mxu0 0.0
        %831 = vmatpush2.msra.mxu0 0.0
        %832 = vmatprep.subr.mxu0 0.0
        %833 = vmatpush2.msra.mxu0 0.0
        %834 = vmatprep.subr.mxu0 0.0
        %835 = vmatpush2.msra.mxu0 0.0
        %836 = vmatprep.subr.mxu0 0.0
        %837 = vmatpush2.msra.mxu0 0.0
        %838 = vmatprep.subr.mxu0 0.0
        %839 = vmatpush2.msra.mxu0 0.0
        %840 = vmatprep.subr.mxu0 0.0
        %841 = vmatpush2.msra.mxu0 0.0
        %842 = vmatprep.subr.mxu0 0.0
        %843 = vmatpush2.msra.mxu0 0.0
        %844 = vmatprep.subr.mxu0 0.0
        %845 = vmatpush2.msra.mxu0 0.0
        %846 = vmatprep.mubr.f32.mxu0 0.0
        %847 = vmatmul.mubr.f32.gmra.mxu0 %v776
        %v848 = vpop.f32.mrf.mxu0
        %v849 = vadd.f32 0.0, %v848
        %v850 = vpop.f32.mrf.mxu0
        %851 = vdwg.mxu0
        %v853 = vsel %vm774, %v712, 0
        %v856 = vsel %vm778, %v327, 0
        %858 = vmatprep.subr.mxu0 0.0
        %859 = vmatpush1.msra.mxu0 0.0
        %860 = vmatprep.subr.mxu0 0.0
        %861 = vmatpush1.msra.mxu0 0.0
        %862 = vmatprep.subr.mxu0 0.0
        %863 = vmatpush1.msra.mxu0 0.0
        %864 = vmatprep.subr.mxu0 0.0
        %865 = vmatpush1.msra.mxu0 0.0
        %866 = vmatprep.subr.mxu0 0.0
        %867 = vmatpush1.msra.mxu0 0.0
        %868 = vmatprep.subr.mxu0 0.0
        %869 = vmatpush1.msra.mxu0 0.0
        %870 = vmatprep.subr.mxu0 0.0
        %871 = vmatpush1.msra.mxu0 0.0
        %872 = vmatprep.subr.mxu0 0.0
        %873 = vmatpush1.msra.mxu0 0.0
        %874 = vmatprep.subr.mxu0 0.0
        %875 = vmatpush1.msra.mxu0 0.0
        %876 = vmatprep.subr.mxu0 0.0
        %877 = vmatpush1.msra.mxu0 0.0
        %878 = vmatprep.subr.mxu0 0.0
        %879 = vmatpush1.msra.mxu0 0.0
        %880 = vmatprep.subr.mxu0 0.0
        %881 = vmatpush1.msra.mxu0 0.0
        %882 = vmatprep.subr.mxu0 0.0
        %883 = vmatpush1.msra.mxu0 0.0
        %884 = vmatprep.subr.mxu0 0.0
        %885 = vmatpush1.msra.mxu0 0.0
        %886 = vmatprep.subr.mxu0 0.0
        %887 = vmatpush1.msra.mxu0 0.0
        %888 = vmatprep.subr.mxu0 0.0
        %889 = vmatpush1.msra.mxu0 %v856
        %890 = vmatprep.subr.mxu0 0.0
        %891 = vmatpush2.msra.mxu0 0.0
        %892 = vmatprep.subr.mxu0 0.0
        %893 = vmatpush2.msra.mxu0 0.0
        %894 = vmatprep.subr.mxu0 0.0
        %895 = vmatpush2.msra.mxu0 0.0
        %896 = vmatprep.subr.mxu0 0.0
        %897 = vmatpush2.msra.mxu0 0.0
        %898 = vmatprep.subr.mxu0 0.0
        %899 = vmatpush2.msra.mxu0 0.0
        %900 = vmatprep.subr.mxu0 0.0
        %901 = vmatpush2.msra.mxu0 0.0
        %902 = vmatprep.subr.mxu0 0.0
        %903 = vmatpush2.msra.mxu0 0.0
        %904 = vmatprep.subr.mxu0 0.0
        %905 = vmatpush2.msra.mxu0 0.0
        %906 = vmatprep.subr.mxu0 0.0
        %907 = vmatpush2.msra.mxu0 0.0
        %908 = vmatprep.subr.mxu0 0.0
        %909 = vmatpush2.msra.mxu0 0.0
        %910 = vmatprep.subr.mxu0 0.0
        %911 = vmatpush2.msra.mxu0 0.0
        %912 = vmatprep.subr.mxu0 0.0
        %913 = vmatpush2.msra.mxu0 0.0
        %914 = vmatprep.subr.mxu0 0.0
        %915 = vmatpush2.msra.mxu0 0.0
        %916 = vmatprep.subr.mxu0 0.0
        %917 = vmatpush2.msra.mxu0 0.0
        %918 = vmatprep.subr.mxu0 0.0
        %919 = vmatpush2.msra.mxu0 0.0
        %920 = vmatprep.subr.mxu0 0.0
        %921 = vmatpush2.msra.mxu0 0.0
        %922 = vmatprep.mubr.f32.mxu0 0.0
        %923 = vmatmul.mubr.f32.gmra.mxu0 %v853
        %v924 = vpop.f32.mrf.mxu0
        %v925 = vadd.f32 0.0, %v924
        %v926 = vpop.f32.mrf.mxu0
        %927 = vdwg.mxu0
        %v929 = vsel %vm774, %v714, 0
        %v932 = vsel %vm778, %v328, 0
        %934 = vmatprep.subr.mxu0 0.0
        %935 = vmatpush1.msra.mxu0 0.0
        %936 = vmatprep.subr.mxu0 0.0
        %937 = vmatpush1.msra.mxu0 0.0
        %938 = vmatprep.subr.mxu0 0.0
        %939 = vmatpush1.msra.mxu0 0.0
        %940 = vmatprep.subr.mxu0 0.0
        %941 = vmatpush1.msra.mxu0 0.0
        %942 = vmatprep.subr.mxu0 0.0
        %943 = vmatpush1.msra.mxu0 0.0
        %944 = vmatprep.subr.mxu0 0.0
        %945 = vmatpush1.msra.mxu0 0.0
        %946 = vmatprep.subr.mxu0 0.0
        %947 = vmatpush1.msra.mxu0 0.0
        %948 = vmatprep.subr.mxu0 0.0
        %949 = vmatpush1.msra.mxu0 0.0
        %950 = vmatprep.subr.mxu0 0.0
        %951 = vmatpush1.msra.mxu0 0.0
        %952 = vmatprep.subr.mxu0 0.0
        %953 = vmatpush1.msra.mxu0 0.0
        %954 = vmatprep.subr.mxu0 0.0
        %955 = vmatpush1.msra.mxu0 0.0
        %956 = vmatprep.subr.mxu0 0.0
        %957 = vmatpush1.msra.mxu0 0.0
        %958 = vmatprep.subr.mxu0 0.0
        %959 = vmatpush1.msra.mxu0 0.0
        %960 = vmatprep.subr.mxu0 0.0
        %961 = vmatpush1.msra.mxu0 0.0
        %962 = vmatprep.subr.mxu0 0.0
        %963 = vmatpush1.msra.mxu0 0.0
        %964 = vmatprep.subr.mxu0 0.0
        %965 = vmatpush1.msra.mxu0 %v932
        %966 = vmatprep.subr.mxu0 0.0
        %967 = vmatpush2.msra.mxu0 0.0
        %968 = vmatprep.subr.mxu0 0.0
        %969 = vmatpush2.msra.mxu0 0.0
        %970 = vmatprep.subr.mxu0 0.0
        %971 = vmatpush2.msra.mxu0 0.0
        %972 = vmatprep.subr.mxu0 0.0
        %973 = vmatpush2.msra.mxu0 0.0
        %974 = vmatprep.subr.mxu0 0.0
        %975 = vmatpush2.msra.mxu0 0.0
        %976 = vmatprep.subr.mxu0 0.0
        %977 = vmatpush2.msra.mxu0 0.0
        %978 = vmatprep.subr.mxu0 0.0
        %979 = vmatpush2.msra.mxu0 0.0
        %980 = vmatprep.subr.mxu0 0.0
        %981 = vmatpush2.msra.mxu0 0.0
        %982 = vmatprep.subr.mxu0 0.0
        %983 = vmatpush2.msra.mxu0 0.0
        %984 = vmatprep.subr.mxu0 0.0
        %985 = vmatpush2.msra.mxu0 0.0
        %986 = vmatprep.subr.mxu0 0.0
        %987 = vmatpush2.msra.mxu0 0.0
        %988 = vmatprep.subr.mxu0 0.0
        %989 = vmatpush2.msra.mxu0 0.0
        %990 = vmatprep.subr.mxu0 0.0
        %991 = vmatpush2.msra.mxu0 0.0
        %992 = vmatprep.subr.mxu0 0.0
        %993 = vmatpush2.msra.mxu0 0.0
        %994 = vmatprep.subr.mxu0 0.0
        %995 = vmatpush2.msra.mxu0 0.0
        %996 = vmatprep.subr.mxu0 0.0
        %997 = vmatpush2.msra.mxu0 0.0
        %998 = vmatprep.mubr.f32.mxu0 0.0
        %999 = vmatmul.mubr.f32.gmra.mxu0 %v929
        %v1000 = vpop.f32.mrf.mxu0
        %v1001 = vadd.f32 0.0, %v1000
        %v1002 = vpop.f32.mrf.mxu0
        %1003 = vdwg.mxu0
        %v1005 = vsel %vm774, %v716, 0
        %v1008 = vsel %vm778, %v329, 0
        %1010 = vmatprep.subr.mxu0 0.0
        %1011 = vmatpush1.msra.mxu0 0.0
        %1012 = vmatprep.subr.mxu0 0.0
        %1013 = vmatpush1.msra.mxu0 0.0
        %1014 = vmatprep.subr.mxu0 0.0
        %1015 = vmatpush1.msra.mxu0 0.0
        %1016 = vmatprep.subr.mxu0 0.0
        %1017 = vmatpush1.msra.mxu0 0.0
        %1018 = vmatprep.subr.mxu0 0.0
        %1019 = vmatpush1.msra.mxu0 0.0
        %1020 = vmatprep.subr.mxu0 0.0
        %1021 = vmatpush1.msra.mxu0 0.0
        %1022 = vmatprep.subr.mxu0 0.0
        %1023 = vmatpush1.msra.mxu0 0.0
        %1024 = vmatprep.subr.mxu0 0.0
        %1025 = vmatpush1.msra.mxu0 0.0
        %1026 = vmatprep.subr.mxu0 0.0
        %1027 = vmatpush1.msra.mxu0 0.0
        %1028 = vmatprep.subr.mxu0 0.0
        %1029 = vmatpush1.msra.mxu0 0.0
        %1030 = vmatprep.subr.mxu0 0.0
        %1031 = vmatpush1.msra.mxu0 0.0
        %1032 = vmatprep.subr.mxu0 0.0
        %1033 = vmatpush1.msra.mxu0 0.0
        %1034 = vmatprep.subr.mxu0 0.0
        %1035 = vmatpush1.msra.mxu0 0.0
        %1036 = vmatprep.subr.mxu0 0.0
        %1037 = vmatpush1.msra.mxu0 0.0
        %1038 = vmatprep.subr.mxu0 0.0
        %1039 = vmatpush1.msra.mxu0 0.0
        %1040 = vmatprep.subr.mxu0 0.0
        %1041 = vmatpush1.msra.mxu0 %v1008
        %1042 = vmatprep.subr.mxu0 0.0
        %1043 = vmatpush2.msra.mxu0 0.0
        %1044 = vmatprep.subr.mxu0 0.0
        %1045 = vmatpush2.msra.mxu0 0.0
        %1046 = vmatprep.subr.mxu0 0.0
        %1047 = vmatpush2.msra.mxu0 0.0
        %1048 = vmatprep.subr.mxu0 0.0
        %1049 = vmatpush2.msra.mxu0 0.0
        %1050 = vmatprep.subr.mxu0 0.0
        %1051 = vmatpush2.msra.mxu0 0.0
        %1052 = vmatprep.subr.mxu0 0.0
        %1053 = vmatpush2.msra.mxu0 0.0
        %1054 = vmatprep.subr.mxu0 0.0
        %1055 = vmatpush2.msra.mxu0 0.0
        %1056 = vmatprep.subr.mxu0 0.0
        %1057 = vmatpush2.msra.mxu0 0.0
        %1058 = vmatprep.subr.mxu0 0.0
        %1059 = vmatpush2.msra.mxu0 0.0
        %1060 = vmatprep.subr.mxu0 0.0
        %1061 = vmatpush2.msra.mxu0 0.0
        %1062 = vmatprep.subr.mxu0 0.0
        %1063 = vmatpush2.msra.mxu0 0.0
        %1064 = vmatprep.subr.mxu0 0.0
        %1065 = vmatpush2.msra.mxu0 0.0
        %1066 = vmatprep.subr.mxu0 0.0
        %1067 = vmatpush2.msra.mxu0 0.0
        %1068 = vmatprep.subr.mxu0 0.0
        %1069 = vmatpush2.msra.mxu0 0.0
        %1070 = vmatprep.subr.mxu0 0.0
        %1071 = vmatpush2.msra.mxu0 0.0
        %1072 = vmatprep.subr.mxu0 0.0
        %1073 = vmatpush2.msra.mxu0 0.0
        %1074 = vmatprep.mubr.f32.mxu0 0.0
        %1075 = vmatmul.mubr.f32.gmra.mxu0 %v1005
        %v1076 = vpop.f32.mrf.mxu0
        %v1077 = vadd.f32 0.0, %v1076
        %v1078 = vpop.f32.mrf.mxu0
        %1079 = vdwg.mxu0
        %v1080 = vadd.f32 %v770, %v849
        %v1081 = vadd.f32 %v771, %v925
        %v1082 = vadd.f32 %v772, %v1001
        %v1083 = vadd.f32 %v773, %v1077
        %vm1084 = vcmask 60416
        %1085 = vst.msk [vmem:[#allocation4] sm:$0xf] %vm1084, %v1080
        %1086 = vst.msk [vmem:[#allocation4 + $0x4] sm:$0xf] %vm1084, %v1081
        %1087 = vst.msk [vmem:[#allocation4 + $0x8] sm:$0xf] %vm1084, %v1082
        %1088 = vst.msk [vmem:[#allocation4 + $0xc] sm:$0xf] %vm1084, %v1083
        %1089 = vst.msk [vmem:[#allocation2] sm:$0xf] %vm741, %v669
        %1090 = vst.msk [vmem:[#allocation2 + $0x4] sm:$0xf] %vm741, %v670
        %1091 = vst.msk [vmem:[#allocation2 + $0x8] sm:$0xf] %vm741, %v671
        %1092 = vst.msk [vmem:[#allocation2 + $0xc] sm:$0xf] %vm741, %v672
      $region44: #{multi_scale_attention.9} parent=35 // pred_fallthru
        _
      // Predicated region
      $region45: #{multi_scale_attention.9} parent=35 // pred_check
        %p1093 = pneg %p296
      $region46: #{multi_scale_attention.9} parent=35 // pred_check_branch
        %1095 = sbr.rel (%p1093) target = $region48
      $region47: #{multi_scale_attention.9} parent=35 // pred_region
        %v1096 = vld [vmem:[#allocation3] sm:$0xf]
        %v1097 = vld [vmem:[#allocation3 + $0x4] sm:$0xf]
        %v1098 = vld [vmem:[#allocation3 + $0x8] sm:$0xf]
        %v1099 = vld [vmem:[#allocation3 + $0xc] sm:$0xf]
        %v1100 = vrcp.pop %v1096
        %v1101 = vrcp.pop %v1097
        %v1102 = vrcp.pop %v1098
        %v1103 = vrcp.pop %v1099
        %v1104 = vld [vmem:[#allocation4] sm:$0xf]
        %v1105 = vld [vmem:[#allocation4 + $0x4] sm:$0xf]
        %v1106 = vld [vmem:[#allocation4 + $0x8] sm:$0xf]
        %v1107 = vld [vmem:[#allocation4 + $0xc] sm:$0xf]
        %1109 = vset.pattern.permute.xlu0 0
        %1110 = vperm.xlu0 %1109, %v1100
        %v1111 = vpop.permute.xlu0 %1110
        %1114 = vset.pattern.permute.xlu0 0
        %1115 = vperm.xlu0 %1114, %v1101
        %v1116 = vpop.permute.xlu0 %1115
        %1119 = vset.pattern.permute.xlu0 0
        %1120 = vperm.xlu0 %1119, %v1102
        %v1121 = vpop.permute.xlu0 %1120
        %1124 = vset.pattern.permute.xlu0 0
        %1125 = vperm.xlu0 %1124, %v1103
        %v1126 = vpop.permute.xlu0 %1125
        %v1128 = vmul.f32 %v1104, %v1111
        %v1129 = vmul.f32 %v1105, %v1116
        %v1130 = vmul.f32 %v1106, %v1121
        %v1131 = vmul.f32 %v1107, %v1126
        %v1132 = vld [vmem:[%s3] sm:$0xff]
        %v1133 = vld [vmem:[%s3 + $0x8] sm:$0xff]
        %vm1134 = vcmask 64512
        %v1136 = vsel %vm1134, %v1129, 0
        %1138 = vmatprep.subr.mxu0 0.0
        %1139 = vmatpush1.msra.mxu0 0.0
        %1140 = vmatprep.subr.mxu0 0.0
        %1141 = vmatpush1.msra.mxu0 0.0
        %1142 = vmatprep.subr.mxu0 0.0
        %1143 = vmatpush1.msra.mxu0 0.0
        %1144 = vmatprep.subr.mxu0 0.0
        %1145 = vmatpush1.msra.mxu0 0.0
        %1146 = vmatprep.subr.mxu0 0.0
        %1147 = vmatpush1.msra.mxu0 0.0
        %1148 = vmatprep.subr.mxu0 0.0
        %1149 = vmatpush1.msra.mxu0 0.0
        %1150 = vmatprep.subr.mxu0 0.0
        %1151 = vmatpush1.msra.mxu0 0.0
        %1152 = vmatprep.subr.mxu0 0.0
        %1153 = vmatpush1.msra.mxu0 0.0
        %1154 = vmatprep.subr.mxu0 0.0
        %1155 = vmatpush1.msra.mxu0 0.0
        %1156 = vmatprep.subr.mxu0 0.0
        %1157 = vmatpush1.msra.mxu0 0.0
        %1158 = vmatprep.subr.mxu0 0.0
        %1159 = vmatpush1.msra.mxu0 0.0
        %1160 = vmatprep.subr.mxu0 0.0
        %1161 = vmatpush1.msra.mxu0 0.0
        %1162 = vmatprep.subr.mxu0 0.0
        %1163 = vmatpush1.msra.mxu0 0.0
        %1164 = vmatprep.subr.mxu0 0.0
        %1165 = vmatpush1.msra.mxu0 0.0
        %1166 = vmatprep.subr.mxu0 0.0
        %1167 = vmatpush1.msra.mxu0 0.0
        %1168 = vmatprep.subr.mxu0 0.0
        %1169 = vmatpush1.msra.mxu0 %v1133
        %1170 = vmatprep.subr.mxu0 0.0
        %1171 = vmatpush2.msra.mxu0 0.0
        %1172 = vmatprep.subr.mxu0 0.0
        %1173 = vmatpush2.msra.mxu0 0.0
        %1174 = vmatprep.subr.mxu0 0.0
        %1175 = vmatpush2.msra.mxu0 0.0
        %1176 = vmatprep.subr.mxu0 0.0
        %1177 = vmatpush2.msra.mxu0 0.0
        %1178 = vmatprep.subr.mxu0 0.0
        %1179 = vmatpush2.msra.mxu0 0.0
        %1180 = vmatprep.subr.mxu0 0.0
        %1181 = vmatpush2.msra.mxu0 0.0
        %1182 = vmatprep.subr.mxu0 0.0
        %1183 = vmatpush2.msra.mxu0 0.0
        %1184 = vmatprep.subr.mxu0 0.0
        %1185 = vmatpush2.msra.mxu0 0.0
        %1186 = vmatprep.subr.mxu0 0.0
        %1187 = vmatpush2.msra.mxu0 0.0
        %1188 = vmatprep.subr.mxu0 0.0
        %1189 = vmatpush2.msra.mxu0 0.0
        %1190 = vmatprep.subr.mxu0 0.0
        %1191 = vmatpush2.msra.mxu0 0.0
        %1192 = vmatprep.subr.mxu0 0.0
        %1193 = vmatpush2.msra.mxu0 0.0
        %1194 = vmatprep.subr.mxu0 0.0
        %1195 = vmatpush2.msra.mxu0 0.0
        %1196 = vmatprep.subr.mxu0 0.0
        %1197 = vmatpush2.msra.mxu0 0.0
        %1198 = vmatprep.subr.mxu0 0.0
        %1199 = vmatpush2.msra.mxu0 0.0
        %1200 = vmatprep.subr.mxu0 0.0
        %1201 = vmatpush2.msra.mxu0 0.0
        %1202 = vmatprep.mubr.f32.mxu0 0.0
        %1203 = vmatmul.mubr.f32.gmra.mxu0 %v1136
        %v1204 = vpop.f32.mrf.mxu0
        %v1205 = vadd.f32 0.0, %v1204
        %v1206 = vpop.f32.mrf.mxu0
        %1207 = vdwg.mxu0
        %v1209 = vsel %vm1134, %v1128, 0
        %1211 = vmatprep.subr.mxu0 0.0
        %1212 = vmatpush1.msra.mxu0 0.0
        %1213 = vmatprep.subr.mxu0 0.0
        %1214 = vmatpush1.msra.mxu0 0.0
        %1215 = vmatprep.subr.mxu0 0.0
        %1216 = vmatpush1.msra.mxu0 0.0
        %1217 = vmatprep.subr.mxu0 0.0
        %1218 = vmatpush1.msra.mxu0 0.0
        %1219 = vmatprep.subr.mxu0 0.0
        %1220 = vmatpush1.msra.mxu0 0.0
        %1221 = vmatprep.subr.mxu0 0.0
        %1222 = vmatpush1.msra.mxu0 0.0
        %1223 = vmatprep.subr.mxu0 0.0
        %1224 = vmatpush1.msra.mxu0 0.0
        %1225 = vmatprep.subr.mxu0 0.0
        %1226 = vmatpush1.msra.mxu0 0.0
        %1227 = vmatprep.subr.mxu0 0.0
        %1228 = vmatpush1.msra.mxu0 0.0
        %1229 = vmatprep.subr.mxu0 0.0
        %1230 = vmatpush1.msra.mxu0 0.0
        %1231 = vmatprep.subr.mxu0 0.0
        %1232 = vmatpush1.msra.mxu0 0.0
        %1233 = vmatprep.subr.mxu0 0.0
        %1234 = vmatpush1.msra.mxu0 0.0
        %1235 = vmatprep.subr.mxu0 0.0
        %1236 = vmatpush1.msra.mxu0 0.0
        %1237 = vmatprep.subr.mxu0 0.0
        %1238 = vmatpush1.msra.mxu0 0.0
        %1239 = vmatprep.subr.mxu0 0.0
        %1240 = vmatpush1.msra.mxu0 0.0
        %1241 = vmatprep.subr.mxu0 0.0
        %1242 = vmatpush1.msra.mxu0 %v1132
        %1243 = vmatprep.subr.mxu0 0.0
        %1244 = vmatpush2.msra.mxu0 0.0
        %1245 = vmatprep.subr.mxu0 0.0
        %1246 = vmatpush2.msra.mxu0 0.0
        %1247 = vmatprep.subr.mxu0 0.0
        %1248 = vmatpush2.msra.mxu0 0.0
        %1249 = vmatprep.subr.mxu0 0.0
        %1250 = vmatpush2.msra.mxu0 0.0
        %1251 = vmatprep.subr.mxu0 0.0
        %1252 = vmatpush2.msra.mxu0 0.0
        %1253 = vmatprep.subr.mxu0 0.0
        %1254 = vmatpush2.msra.mxu0 0.0
        %1255 = vmatprep.subr.mxu0 0.0
        %1256 = vmatpush2.msra.mxu0 0.0
        %1257 = vmatprep.subr.mxu0 0.0
        %1258 = vmatpush2.msra.mxu0 0.0
        %1259 = vmatprep.subr.mxu0 0.0
        %1260 = vmatpush2.msra.mxu0 0.0
        %1261 = vmatprep.subr.mxu0 0.0
        %1262 = vmatpush2.msra.mxu0 0.0
        %1263 = vmatprep.subr.mxu0 0.0
        %1264 = vmatpush2.msra.mxu0 0.0
        %1265 = vmatprep.subr.mxu0 0.0
        %1266 = vmatpush2.msra.mxu0 0.0
        %1267 = vmatprep.subr.mxu0 0.0
        %1268 = vmatpush2.msra.mxu0 0.0
        %1269 = vmatprep.subr.mxu0 0.0
        %1270 = vmatpush2.msra.mxu0 0.0
        %1271 = vmatprep.subr.mxu0 0.0
        %1272 = vmatpush2.msra.mxu0 0.0
        %1273 = vmatprep.subr.mxu0 0.0
        %1274 = vmatpush2.msra.mxu0 0.0
        %1275 = vmatprep.mubr.f32.mxu0 0.0
        %1276 = vmatmul.mubr.f32.gmra.mxu0 %v1209
        %v1277 = vpop.f32.mrf.mxu0
        %v1278 = vadd.f32 %v1205, %v1277
        %v1279 = vpop.f32.mrf.mxu0
        %1280 = vdwg.mxu0
        %v1281 = vld [vmem:[%s3 + $0x10] sm:$0xff]
        %v1283 = vsel %vm1134, %v1130, 0
        %1285 = vmatprep.subr.mxu0 0.0
        %1286 = vmatpush1.msra.mxu0 0.0
        %1287 = vmatprep.subr.mxu0 0.0
        %1288 = vmatpush1.msra.mxu0 0.0
        %1289 = vmatprep.subr.mxu0 0.0
        %1290 = vmatpush1.msra.mxu0 0.0
        %1291 = vmatprep.subr.mxu0 0.0
        %1292 = vmatpush1.msra.mxu0 0.0
        %1293 = vmatprep.subr.mxu0 0.0
        %1294 = vmatpush1.msra.mxu0 0.0
        %1295 = vmatprep.subr.mxu0 0.0
        %1296 = vmatpush1.msra.mxu0 0.0
        %1297 = vmatprep.subr.mxu0 0.0
        %1298 = vmatpush1.msra.mxu0 0.0
        %1299 = vmatprep.subr.mxu0 0.0
        %1300 = vmatpush1.msra.mxu0 0.0
        %1301 = vmatprep.subr.mxu0 0.0
        %1302 = vmatpush1.msra.mxu0 0.0
        %1303 = vmatprep.subr.mxu0 0.0
        %1304 = vmatpush1.msra.mxu0 0.0
        %1305 = vmatprep.subr.mxu0 0.0
        %1306 = vmatpush1.msra.mxu0 0.0
        %1307 = vmatprep.subr.mxu0 0.0
        %1308 = vmatpush1.msra.mxu0 0.0
        %1309 = vmatprep.subr.mxu0 0.0
        %1310 = vmatpush1.msra.mxu0 0.0
        %1311 = vmatprep.subr.mxu0 0.0
        %1312 = vmatpush1.msra.mxu0 0.0
        %1313 = vmatprep.subr.mxu0 0.0
        %1314 = vmatpush1.msra.mxu0 0.0
        %1315 = vmatprep.subr.mxu0 0.0
        %1316 = vmatpush1.msra.mxu0 %v1281
        %1317 = vmatprep.subr.mxu0 0.0
        %1318 = vmatpush2.msra.mxu0 0.0
        %1319 = vmatprep.subr.mxu0 0.0
        %1320 = vmatpush2.msra.mxu0 0.0
        %1321 = vmatprep.subr.mxu0 0.0
        %1322 = vmatpush2.msra.mxu0 0.0
        %1323 = vmatprep.subr.mxu0 0.0
        %1324 = vmatpush2.msra.mxu0 0.0
        %1325 = vmatprep.subr.mxu0 0.0
        %1326 = vmatpush2.msra.mxu0 0.0
        %1327 = vmatprep.subr.mxu0 0.0
        %1328 = vmatpush2.msra.mxu0 0.0
        %1329 = vmatprep.subr.mxu0 0.0
        %1330 = vmatpush2.msra.mxu0 0.0
        %1331 = vmatprep.subr.mxu0 0.0
        %1332 = vmatpush2.msra.mxu0 0.0
        %1333 = vmatprep.subr.mxu0 0.0
        %1334 = vmatpush2.msra.mxu0 0.0
        %1335 = vmatprep.subr.mxu0 0.0
        %1336 = vmatpush2.msra.mxu0 0.0
        %1337 = vmatprep.subr.mxu0 0.0
        %1338 = vmatpush2.msra.mxu0 0.0
        %1339 = vmatprep.subr.mxu0 0.0
        %1340 = vmatpush2.msra.mxu0 0.0
        %1341 = vmatprep.subr.mxu0 0.0
        %1342 = vmatpush2.msra.mxu0 0.0
        %1343 = vmatprep.subr.mxu0 0.0
        %1344 = vmatpush2.msra.mxu0 0.0
        %1345 = vmatprep.subr.mxu0 0.0
        %1346 = vmatpush2.msra.mxu0 0.0
        %1347 = vmatprep.subr.mxu0 0.0
        %1348 = vmatpush2.msra.mxu0 0.0
        %1349 = vmatprep.mubr.f32.mxu0 0.0
        %1350 = vmatmul.mubr.f32.gmra.mxu0 %v1283
        %v1351 = vpop.f32.mrf.mxu0
        %v1352 = vadd.f32 0.0, %v1351
        %v1353 = vpop.f32.mrf.mxu0
        %1354 = vdwg.mxu0
        %v1355 = vadd.f32 %v1278, %v1352
        %v1356 = vld [vmem:[%s3 + $0x18] sm:$0xff]
        %v1358 = vsel %vm1134, %v1131, 0
        %1360 = vmatprep.subr.mxu0 0.0
        %1361 = vmatpush1.msra.mxu0 0.0
        %1362 = vmatprep.subr.mxu0 0.0
        %1363 = vmatpush1.msra.mxu0 0.0
        %1364 = vmatprep.subr.mxu0 0.0
        %1365 = vmatpush1.msra.mxu0 0.0
        %1366 = vmatprep.subr.mxu0 0.0
        %1367 = vmatpush1.msra.mxu0 0.0
        %1368 = vmatprep.subr.mxu0 0.0
        %1369 = vmatpush1.msra.mxu0 0.0
        %1370 = vmatprep.subr.mxu0 0.0
        %1371 = vmatpush1.msra.mxu0 0.0
        %1372 = vmatprep.subr.mxu0 0.0
        %1373 = vmatpush1.msra.mxu0 0.0
        %1374 = vmatprep.subr.mxu0 0.0
        %1375 = vmatpush1.msra.mxu0 0.0
        %1376 = vmatprep.subr.mxu0 0.0
        %1377 = vmatpush1.msra.mxu0 0.0
        %1378 = vmatprep.subr.mxu0 0.0
        %1379 = vmatpush1.msra.mxu0 0.0
        %1380 = vmatprep.subr.mxu0 0.0
        %1381 = vmatpush1.msra.mxu0 0.0
        %1382 = vmatprep.subr.mxu0 0.0
        %1383 = vmatpush1.msra.mxu0 0.0
        %1384 = vmatprep.subr.mxu0 0.0
        %1385 = vmatpush1.msra.mxu0 0.0
        %1386 = vmatprep.subr.mxu0 0.0
        %1387 = vmatpush1.msra.mxu0 0.0
        %1388 = vmatprep.subr.mxu0 0.0
        %1389 = vmatpush1.msra.mxu0 0.0
        %1390 = vmatprep.subr.mxu0 0.0
        %1391 = vmatpush1.msra.mxu0 %v1356
        %1392 = vmatprep.subr.mxu0 0.0
        %1393 = vmatpush2.msra.mxu0 0.0
        %1394 = vmatprep.subr.mxu0 0.0
        %1395 = vmatpush2.msra.mxu0 0.0
        %1396 = vmatprep.subr.mxu0 0.0
        %1397 = vmatpush2.msra.mxu0 0.0
        %1398 = vmatprep.subr.mxu0 0.0
        %1399 = vmatpush2.msra.mxu0 0.0
        %1400 = vmatprep.subr.mxu0 0.0
        %1401 = vmatpush2.msra.mxu0 0.0
        %1402 = vmatprep.subr.mxu0 0.0
        %1403 = vmatpush2.msra.mxu0 0.0
        %1404 = vmatprep.subr.mxu0 0.0
        %1405 = vmatpush2.msra.mxu0 0.0
        %1406 = vmatprep.subr.mxu0 0.0
        %1407 = vmatpush2.msra.mxu0 0.0
        %1408 = vmatprep.subr.mxu0 0.0
        %1409 = vmatpush2.msra.mxu0 0.0
        %1410 = vmatprep.subr.mxu0 0.0
        %1411 = vmatpush2.msra.mxu0 0.0
        %1412 = vmatprep.subr.mxu0 0.0
        %1413 = vmatpush2.msra.mxu0 0.0
        %1414 = vmatprep.subr.mxu0 0.0
        %1415 = vmatpush2.msra.mxu0 0.0
        %1416 = vmatprep.subr.mxu0 0.0
        %1417 = vmatpush2.msra.mxu0 0.0
        %1418 = vmatprep.subr.mxu0 0.0
        %1419 = vmatpush2.msra.mxu0 0.0
        %1420 = vmatprep.subr.mxu0 0.0
        %1421 = vmatpush2.msra.mxu0 0.0
        %1422 = vmatprep.subr.mxu0 0.0
        %1423 = vmatpush2.msra.mxu0 0.0
        %1424 = vmatprep.mubr.f32.mxu0 0.0
        %1425 = vmatmul.mubr.f32.gmra.mxu0 %v1358
        %v1426 = vpop.f32.mrf.mxu0
        %v1427 = vadd.f32 0.0, %v1426
        %v1428 = vpop.f32.mrf.mxu0
        %1429 = vdwg.mxu0
        %v1430 = vadd.f32 %v1355, %v1427
        %vm1431 = vcmask 257024
        %1432 = vst.msk [vmem:[%s295] sm:$0xf] %vm1431, %v1430
      $region48: #{multi_scale_attention.9} parent=35 // pred_fallthru
        _
      %p1433 = scmp.lt.s32.totalorder %s20, 1
      %s1434 = scalar_select %p1433, %s20, 1
      %p1435 = scmp.lt.s32.totalorder %s21, 0
      %s1436 = scalar_select %p1435, %s21, 0
      %s1437 = sadd.s32 %s1436, %s1434
      %s1438 = smul.addr %s1437, 4
      %s1439 = scalar_lea.vmem %s4, %s1438
      // Predicated region
      $region49: #{multi_scale_attention.9} parent=35 // pred_check
        %p1440 = pneg %p159
      $region50: #{multi_scale_attention.9} parent=35 // pred_check_branch
        %1442 = sbr.rel (%p1440) target = $region52
      $region51: #{multi_scale_attention.9} parent=35 // pred_region
        _
      $region52: #{multi_scale_attention.9} parent=35 // pred_fallthru
        _
    $region36: #{multi_scale_attention.9} parent=5 // pred_fallthru
      _
    %p1443 = scmp.le.s32.totalorder 2, %s10
    // Predicated region
    $region53: #{multi_scale_attention.9} parent=5 // pred_check
      %p1444 = pneg %p1443
    $region54: #{multi_scale_attention.9} parent=5 // pred_check_branch
      %1446 = sbr.rel (%p1444) target = $region56
    $region55: #{multi_scale_attention.9} parent=5 // pred_region
      %s1447 = ssub.s32 %s10, 2
      // Predicated region
      $region57: #{multi_scale_attention.9} parent=55 // pred_check
        %p1448 = pneg %p165
      $region58: #{multi_scale_attention.9} parent=55 // pred_check_branch
        %1450 = sbr.rel (%p1448) target = $region60
      $region59: #{multi_scale_attention.9} parent=55 // pred_region
        %p1451 = scmp.lt.s32.totalorder %s23, 1
        %s1452 = scalar_select %p1451, %s23, 1
        %p1453 = scmp.lt.s32.totalorder %s24, 0
        %s1454 = scalar_select %p1453, %s24, 0
        %s1455 = sadd.s32 %s1454, %s1452
        %s1456 = smul.addr %s1455, 4
        %s1457 = scalar_lea.vmem %s4, %s1456
      $region60: #{multi_scale_attention.9} parent=55 // pred_fallthru
        _
    $region56: #{multi_scale_attention.9} parent=5 // pred_fallthru
      _
  $region6: #{multi_scale_attention.9} parent=0 // loop_footer
    %s14 = sadd.s32 1, %s10
  $region7: #{multi_scale_attention.9} parent=0 // loop_footer_branch
    %9 = sbr.rel target = $region3
  $region8: #{multi_scale_attention.9} parent=0 // loop_exit
    _

// kernel: multi_scale_attention.10
$region0: #{multi_scale_attention.10}
  #allocation0 [shape = 'u32[]', space=smem, size = 0x4, offset = 0x4, fixed_abs, tag = 'smem constant byte address 0x4 - core index']
  #allocation1 [shape = 'u32[144,128]{1,0:T(1,128)}', space=vmem, size = 0x12000, scoped, tag = 'internal scratch']
  %s0 = inlined_call_operand.vmem [shape: f32[2,2,32], index: 0, kind: input, shape index: {}]
  %s1 = inlined_call_operand.vmem [shape: f32[32,32], index: 1, kind: input, shape index: {}]
  %s2 = inlined_call_operand.vmem [shape: f32[32,32], index: 2, kind: input, shape index: {}]
  %s3 = inlined_call_operand.vmem [shape: f32[32,32], index: 3, kind: input, shape index: {}]
  %s4 = inlined_call_operand.vmem [shape: f32[1,32], index: 4, kind: input, shape index: {}]
  %s5 = inlined_call_operand.vmem [shape: f32[1,32], index: 5, kind: input, shape index: {}]
  %s6 = inlined_call_operand.vmem [shape: f32[1,32], index: 6, kind: input, shape index: {}]
  %s7 = inlined_call_operand.vmem [shape: f32[2,4,2,8], index: 7, kind: output, shape index: {0}]
  %s8 = inlined_call_operand.vmem [shape: f32[2,4,2,8], index: 8, kind: output, shape index: {1}]
  %s9 = inlined_call_operand.vmem [shape: f32[2,4,2,8], index: 9, kind: output, shape index: {2}]
  %10 = xla_tuple %s7, %s8, %s9
  %s11 = sld [smem:[#allocation0]]
  $region77: #{multi_scale_attention.10} parent=0
    _
  %s13 = ssub.s32 1, %s11
  %s14 = scalar_select 0, %s13, %s11
  loop: start=0, step=1, limit=4
  $region2: #{multi_scale_attention.10} parent=0 // loop_pre_header
    _
  $region3: #{multi_scale_attention.10} parent=0 // loop_header
    %s16 = sphi 0, %s20
    %p17 = scmp.ge.s32.totalorder %s16, 4
    %s23 = sphi 0, %s35
    %s24 = sphi 0, %s31
    %s25 = sphi 0, %s23
    %s26 = sphi 0, %s24
    %s27 = sphi 0, %s25
    %s28 = sphi 0, %s26
    %s40 = sphi 0, %s42
    %s43 = sphi 0, %s40
    %s44 = sphi 0, %s43
    %s60 = sphi 0, %s44
    %s64 = sphi 0, %s64
    %s66 = sphi 0, %s64
    %s67 = sphi 0, %s66
    %s81 = sphi 0, %s67
    %s85 = sphi 0, %s85
    %s87 = sphi 0, %s85
    %s88 = sphi 0, %s87
    %s102 = sphi 0, %s88
    %s106 = sphi 0, %s106
    %s108 = sphi 0, %s106
    %s109 = sphi 0, %s108
    %s123 = sphi 0, %s109
    %s127 = sphi 0, %s127
    %s129 = sphi 0, %s127
    %s130 = sphi 0, %s129
    %s144 = sphi 0, %s130
    %s148 = sphi 0, %s148
    %s150 = sphi 0, %s148
    %s151 = sphi 0, %s150
    %s165 = sphi 0, %s151
    %s169 = sphi 0, %s169
    %s171 = sphi 0, %s169
    %s172 = sphi 0, %s171
    %s186 = sphi 0, %s172
    %s194 = sphi 0, %s196
    %s197 = sphi 0, %s194
    %s198 = sphi 0, %s197
    %s214 = sphi 0, %s198
    %s222 = sphi 0, %s224
    %s225 = sphi 0, %s222
    %s226 = sphi 0, %s225
    %s242 = sphi 0, %s226
    %s250 = sphi 0, %s252
    %s253 = sphi 0, %s250
    %s254 = sphi 0, %s253
    %s270 = sphi 0, %s254
  $region4: #{multi_scale_attention.10} parent=0 // loop_header_branch
    %19 = sbr.rel (%p17) target = $region8
  $region5: #{multi_scale_attention.10} parent=0 // loop_body
    %s21 = ssub.s32 %s16, 1
    %s22 = ssub.s32 %s16, 2
    %s29 = sadd.s32 1, %s24
    %p30 = scmp.ge.s32.totalorder %s29, 1
    %s31 = scalar_select %p30, 0, %s29
    %s32 = sadd.s32 1, %s23
    %s33 = scalar_select %p30, %s32, %s23
    %p34 = scmp.ge.s32.totalorder %s33, 2
    %s35 = scalar_select %p34, 0, %s33
    %s36 = ssub.s32 %s23, %s35
    %s37 = ssub.s32 %s24, %s31
    %s38 = sor.u32 %s36, %s37
    %p39 = scmp.eq.s32.totalorder %s38, 0
    %s41 = sadd.s32 %s40, 1
    %s42 = scalar_select %p39, %s40, %s41
    %p45 = pneg %p39
    %p46 = scmp.eq.s32.totalorder %s16, 1
    %p47 = por %p45, %p46
    %p48 = scmp.ne.s32.totalorder %s40, %s43
    %p49 = scmp.eq.s32.totalorder %s16, 0
    %p50 = por %p48, %p49
    %p51 = scmp.ne.s32.totalorder %s40, %s43
    %p52 = scmp.eq.s32.totalorder %s21, 1
    %p53 = por %p51, %p52
    %p54 = scmp.ne.s32.totalorder %s43, %s44
    %p55 = scmp.eq.s32.totalorder %s21, 0
    %p56 = por %p54, %p55
    %p57 = scmp.ne.s32.totalorder %s43, %s44
    %p58 = scmp.eq.s32.totalorder %s22, 1
    %p59 = por %p57, %p58
    %p61 = scmp.ne.s32.totalorder %s44, %s60
    %p62 = scmp.eq.s32.totalorder %s22, 0
    %p63 = por %p61, %p62
    %s65 = sadd.s32 %s64, 1
    %p68 = scmp.eq.s32.totalorder %s16, 1
    %p69 = scmp.ne.s32.totalorder %s64, %s66
    %p70 = scmp.eq.s32.totalorder %s16, 0
    %p71 = por %p69, %p70
    %p72 = scmp.ne.s32.totalorder %s64, %s66
    %p73 = scmp.eq.s32.totalorder %s21, 1
    %p74 = por %p72, %p73
    %p75 = scmp.ne.s32.totalorder %s66, %s67
    %p76 = scmp.eq.s32.totalorder %s21, 0
    %p77 = por %p75, %p76
    %p78 = scmp.ne.s32.totalorder %s66, %s67
    %p79 = scmp.eq.s32.totalorder %s22, 1
    %p80 = por %p78, %p79
    %p82 = scmp.ne.s32.totalorder %s67, %s81
    %p83 = scmp.eq.s32.totalorder %s22, 0
    %p84 = por %p82, %p83
    %s86 = sadd.s32 %s85, 1
    %p89 = scmp.eq.s32.totalorder %s16, 1
    %p90 = scmp.ne.s32.totalorder %s85, %s87
    %p91 = scmp.eq.s32.totalorder %s16, 0
    %p92 = por %p90, %p91
    %p93 = scmp.ne.s32.totalorder %s85, %s87
    %p94 = scmp.eq.s32.totalorder %s21, 1
    %p95 = por %p93, %p94
    %p96 = scmp.ne.s32.totalorder %s87, %s88
    %p97 = scmp.eq.s32.totalorder %s21, 0
    %p98 = por %p96, %p97
    %p99 = scmp.ne.s32.totalorder %s87, %s88
    %p100 = scmp.eq.s32.totalorder %s22, 1
    %p101 = por %p99, %p100
    %p103 = scmp.ne.s32.totalorder %s88, %s102
    %p104 = scmp.eq.s32.totalorder %s22, 0
    %p105 = por %p103, %p104
    %s107 = sadd.s32 %s106, 1
    %p110 = scmp.eq.s32.totalorder %s16, 1
    %p111 = scmp.ne.s32.totalorder %s106, %s108
    %p112 = scmp.eq.s32.totalorder %s16, 0
    %p113 = por %p111, %p112
    %p114 = scmp.ne.s32.totalorder %s106, %s108
    %p115 = scmp.eq.s32.totalorder %s21, 1
    %p116 = por %p114, %p115
    %p117 = scmp.ne.s32.totalorder %s108, %s109
    %p118 = scmp.eq.s32.totalorder %s21, 0
    %p119 = por %p117, %p118
    %p120 = scmp.ne.s32.totalorder %s108, %s109
    %p121 = scmp.eq.s32.totalorder %s22, 1
    %p122 = por %p120, %p121
    %p124 = scmp.ne.s32.totalorder %s109, %s123
    %p125 = scmp.eq.s32.totalorder %s22, 0
    %p126 = por %p124, %p125
    %s128 = sadd.s32 %s127, 1
    %p131 = scmp.eq.s32.totalorder %s16, 1
    %p132 = scmp.ne.s32.totalorder %s127, %s129
    %p133 = scmp.eq.s32.totalorder %s16, 0
    %p134 = por %p132, %p133
    %p135 = scmp.ne.s32.totalorder %s127, %s129
    %p136 = scmp.eq.s32.totalorder %s21, 1
    %p137 = por %p135, %p136
    %p138 = scmp.ne.s32.totalorder %s129, %s130
    %p139 = scmp.eq.s32.totalorder %s21, 0
    %p140 = por %p138, %p139
    %p141 = scmp.ne.s32.totalorder %s129, %s130
    %p142 = scmp.eq.s32.totalorder %s22, 1
    %p143 = por %p141, %p142
    %p145 = scmp.ne.s32.totalorder %s130, %s144
    %p146 = scmp.eq.s32.totalorder %s22, 0
    %p147 = por %p145, %p146
    %s149 = sadd.s32 %s148, 1
    %p152 = scmp.eq.s32.totalorder %s16, 1
    %p153 = scmp.ne.s32.totalorder %s148, %s150
    %p154 = scmp.eq.s32.totalorder %s16, 0
    %p155 = por %p153, %p154
    %p156 = scmp.ne.s32.totalorder %s148, %s150
    %p157 = scmp.eq.s32.totalorder %s21, 1
    %p158 = por %p156, %p157
    %p159 = scmp.ne.s32.totalorder %s150, %s151
    %p160 = scmp.eq.s32.totalorder %s21, 0
    %p161 = por %p159, %p160
    %p162 = scmp.ne.s32.totalorder %s150, %s151
    %p163 = scmp.eq.s32.totalorder %s22, 1
    %p164 = por %p162, %p163
    %p166 = scmp.ne.s32.totalorder %s151, %s165
    %p167 = scmp.eq.s32.totalorder %s22, 0
    %p168 = por %p166, %p167
    %s170 = sadd.s32 %s169, 1
    %p173 = scmp.eq.s32.totalorder %s16, 1
    %p174 = scmp.ne.s32.totalorder %s169, %s171
    %p175 = scmp.eq.s32.totalorder %s16, 0
    %p176 = por %p174, %p175
    %p177 = scmp.ne.s32.totalorder %s169, %s171
    %p178 = scmp.eq.s32.totalorder %s21, 1
    %p179 = por %p177, %p178
    %p180 = scmp.ne.s32.totalorder %s171, %s172
    %p181 = scmp.eq.s32.totalorder %s21, 0
    %p182 = por %p180, %p181
    %p183 = scmp.ne.s32.totalorder %s171, %s172
    %p184 = scmp.eq.s32.totalorder %s22, 1
    %p185 = por %p183, %p184
    %p187 = scmp.ne.s32.totalorder %s172, %s186
    %p188 = scmp.eq.s32.totalorder %s22, 0
    %p189 = por %p187, %p188
    %s190 = ssub.s32 %s23, %s35
    %s191 = ssub.s32 %s24, %s31
    %s192 = sor.u32 %s190, %s191
    %p193 = scmp.eq.s32.totalorder %s192, 0
    %s195 = sadd.s32 %s194, 1
    %s196 = scalar_select %p193, %s194, %s195
    %p199 = pneg %p193
    %p200 = scmp.eq.s32.totalorder %s16, 1
    %p201 = por %p199, %p200
    %p202 = scmp.ne.s32.totalorder %s194, %s197
    %p203 = scmp.eq.s32.totalorder %s16, 0
    %p204 = por %p202, %p203
    %p205 = scmp.ne.s32.totalorder %s194, %s197
    %p206 = scmp.eq.s32.totalorder %s21, 1
    %p207 = por %p205, %p206
    %p208 = scmp.ne.s32.totalorder %s197, %s198
    %p209 = scmp.eq.s32.totalorder %s21, 0
    %p210 = por %p208, %p209
    %p211 = scmp.ne.s32.totalorder %s197, %s198
    %p212 = scmp.eq.s32.totalorder %s22, 1
    %p213 = por %p211, %p212
    %p215 = scmp.ne.s32.totalorder %s198, %s214
    %p216 = scmp.eq.s32.totalorder %s22, 0
    %p217 = por %p215, %p216
    %s218 = ssub.s32 %s23, %s35
    %s219 = ssub.s32 %s24, %s31
    %s220 = sor.u32 %s218, %s219
    %p221 = scmp.eq.s32.totalorder %s220, 0
    %s223 = sadd.s32 %s222, 1
    %s224 = scalar_select %p221, %s222, %s223
    %p227 = pneg %p221
    %p228 = scmp.eq.s32.totalorder %s16, 1
    %p229 = por %p227, %p228
    %p230 = scmp.ne.s32.totalorder %s222, %s225
    %p231 = scmp.eq.s32.totalorder %s16, 0
    %p232 = por %p230, %p231
    %p233 = scmp.ne.s32.totalorder %s222, %s225
    %p234 = scmp.eq.s32.totalorder %s21, 1
    %p235 = por %p233, %p234
    %p236 = scmp.ne.s32.totalorder %s225, %s226
    %p237 = scmp.eq.s32.totalorder %s21, 0
    %p238 = por %p236, %p237
    %p239 = scmp.ne.s32.totalorder %s225, %s226
    %p240 = scmp.eq.s32.totalorder %s22, 1
    %p241 = por %p239, %p240
    %p243 = scmp.ne.s32.totalorder %s226, %s242
    %p244 = scmp.eq.s32.totalorder %s22, 0
    %p245 = por %p243, %p244
    %s246 = ssub.s32 %s23, %s35
    %s247 = ssub.s32 %s24, %s31
    %s248 = sor.u32 %s246, %s247
    %p249 = scmp.eq.s32.totalorder %s248, 0
    %s251 = sadd.s32 %s250, 1
    %s252 = scalar_select %p249, %s250, %s251
    %p255 = pneg %p249
    %p256 = scmp.eq.s32.totalorder %s16, 1
    %p257 = por %p255, %p256
    %p258 = scmp.ne.s32.totalorder %s250, %s253
    %p259 = scmp.eq.s32.totalorder %s16, 0
    %p260 = por %p258, %p259
    %p261 = scmp.ne.s32.totalorder %s250, %s253
    %p262 = scmp.eq.s32.totalorder %s21, 1
    %p263 = por %p261, %p262
    %p264 = scmp.ne.s32.totalorder %s253, %s254
    %p265 = scmp.eq.s32.totalorder %s21, 0
    %p266 = por %p264, %p265
    %p267 = scmp.ne.s32.totalorder %s253, %s254
    %p268 = scmp.eq.s32.totalorder %s22, 1
    %p269 = por %p267, %p268
    %p271 = scmp.ne.s32.totalorder %s254, %s270
    %p272 = scmp.eq.s32.totalorder %s22, 0
    %p273 = por %p271, %p272
    %p274 = scmp.le.s32.totalorder 1, %s16
    %p275 = scmp.lt.s32.totalorder %s16, 3
    %p276 = pnand %p274, %p275
    %p277 = pneg %p276
    // Predicated region
    $region9: #{multi_scale_attention.10} parent=5 // pred_check
      _
    $region10: #{multi_scale_attention.10} parent=5 // pred_check_branch
      %279 = sbr.rel (%p276) target = $region12
    $region11: #{multi_scale_attention.10} parent=5 // pred_region
      %s280 = ssub.s32 %s16, 1
      // Predicated region
      $region13: #{multi_scale_attention.10} parent=11 // pred_check
        %p281 = pneg %p77
      $region14: #{multi_scale_attention.10} parent=11 // pred_check_branch
        %283 = sbr.rel (%p281) target = $region16
      $region15: #{multi_scale_attention.10} parent=11 // pred_region
        _
      $region16: #{multi_scale_attention.10} parent=11 // pred_fallthru
        _
      // Predicated region
      $region17: #{multi_scale_attention.10} parent=11 // pred_check
        %p284 = pneg %p98
      $region18: #{multi_scale_attention.10} parent=11 // pred_check_branch
        %286 = sbr.rel (%p284) target = $region20
      $region19: #{multi_scale_attention.10} parent=11 // pred_region
        _
      $region20: #{multi_scale_attention.10} parent=11 // pred_fallthru
        _
      // Predicated region
      $region21: #{multi_scale_attention.10} parent=11 // pred_check
        %p287 = pneg %p119
      $region22: #{multi_scale_attention.10} parent=11 // pred_check_branch
        %289 = sbr.rel (%p287) target = $region24
      $region23: #{multi_scale_attention.10} parent=11 // pred_region
        _
      $region24: #{multi_scale_attention.10} parent=11 // pred_fallthru
        _
      // Predicated region
      $region25: #{multi_scale_attention.10} parent=11 // pred_check
        %p290 = pneg %p140
      $region26: #{multi_scale_attention.10} parent=11 // pred_check_branch
        %292 = sbr.rel (%p290) target = $region28
      $region27: #{multi_scale_attention.10} parent=11 // pred_region
        _
      $region28: #{multi_scale_attention.10} parent=11 // pred_fallthru
        _
      // Predicated region
      $region29: #{multi_scale_attention.10} parent=11 // pred_check
        %p293 = pneg %p161
      $region30: #{multi_scale_attention.10} parent=11 // pred_check_branch
        %295 = sbr.rel (%p293) target = $region32
      $region31: #{multi_scale_attention.10} parent=11 // pred_region
        _
      $region32: #{multi_scale_attention.10} parent=11 // pred_fallthru
        _
      // Predicated region
      $region33: #{multi_scale_attention.10} parent=11 // pred_check
        %p296 = pneg %p182
      $region34: #{multi_scale_attention.10} parent=11 // pred_check_branch
        %298 = sbr.rel (%p296) target = $region36
      $region35: #{multi_scale_attention.10} parent=11 // pred_region
        _
      $region36: #{multi_scale_attention.10} parent=11 // pred_fallthru
        _
    $region12: #{multi_scale_attention.10} parent=5 // pred_fallthru
      _
    %p299 = scmp.lt.s32.totalorder %s16, 2
    // Predicated region
    $region37: #{multi_scale_attention.10} parent=5 // pred_check
      %p300 = pneg %p299
    $region38: #{multi_scale_attention.10} parent=5 // pred_check_branch
      %302 = sbr.rel (%p300) target = $region40
    $region39: #{multi_scale_attention.10} parent=5 // pred_region
      // Predicated region
      $region41: #{multi_scale_attention.10} parent=39 // pred_check
        %p303 = pneg %p50
      $region42: #{multi_scale_attention.10} parent=39 // pred_check_branch
        %305 = sbr.rel (%p303) target = $region44
      $region43: #{multi_scale_attention.10} parent=39 // pred_region
        %p306 = scmp.lt.s32.totalorder %s23, 1
        %s307 = scalar_select %p306, %s23, 1
        %p308 = scmp.lt.s32.totalorder %s24, 0
        %s309 = scalar_select %p308, %s24, 0
        %s310 = sadd.s32 %s309, %s307
        %s311 = smul.addr %s310, 2
        %s312 = scalar_lea.vmem %s0, %s311
      $region44: #{multi_scale_attention.10} parent=39 // pred_fallthru
        _
    $region40: #{multi_scale_attention.10} parent=5 // pred_fallthru
      _
    %p313 = scmp.le.s32.totalorder 1, %s16
    %p314 = scmp.lt.s32.totalorder %s16, 3
    %p315 = pnand %p313, %p314
    %p316 = pneg %p315
    // Predicated region
    $region45: #{multi_scale_attention.10} parent=5 // pred_check
      _
    $region46: #{multi_scale_attention.10} parent=5 // pred_check_branch
      %318 = sbr.rel (%p315) target = $region48
    $region47: #{multi_scale_attention.10} parent=5 // pred_region
      %s319 = ssub.s32 %s16, 1
      %p320 = scmp.lt.s32.totalorder %s25, 1
      %s321 = scalar_select %p320, %s25, 1
      %p322 = scmp.lt.s32.totalorder %s26, 0
      %s323 = scalar_select %p322, %s26, 0
      %s324 = sadd.s32 %s323, %s321
      %s325 = smul.addr %s324, 2
      %s326 = scalar_lea.vmem %s0, %s325
      %p327 = pneg %p56
      %p328 = pneg %p53
      %p329 = pneg %p77
      %p330 = pneg %p74
      %p331 = pneg %p98
      %p332 = pneg %p95
      %p333 = pneg %p119
      %p334 = pneg %p116
      %p335 = pneg %p140
      %p336 = pneg %p137
      %p337 = pneg %p161
      %p338 = pneg %p158
      %p339 = pneg %p182
      %p340 = pneg %p179
      %p341 = pneg %p210
      %p342 = pneg %p207
      %p343 = scmp.lt.s32.totalorder %s25, 1
      %s344 = scalar_select %p343, %s25, 1
      %p345 = scmp.lt.s32.totalorder %s26, 0
      %s346 = scalar_select %p345, %s26, 0
      %s347 = smul.addr %s344, 4
      %s348 = sadd.s32 %s346, %s347
      %s349 = smul.addr %s348, 2
      %s350 = scalar_lea.vmem %s7, %s349
      %p351 = pneg %p238
      %p352 = pneg %p235
      %p353 = scmp.lt.s32.totalorder %s25, 1
      %s354 = scalar_select %p353, %s25, 1
      %p355 = scmp.lt.s32.totalorder %s26, 0
      %s356 = scalar_select %p355, %s26, 0
      %s357 = smul.addr %s354, 4
      %s358 = sadd.s32 %s356, %s357
      %s359 = smul.addr %s358, 2
      %s360 = scalar_lea.vmem %s8, %s359
      %p361 = pneg %p266
      %p362 = pneg %p263
      %p363 = scmp.lt.s32.totalorder %s25, 1
      %s364 = scalar_select %p363, %s25, 1
      %p365 = scmp.lt.s32.totalorder %s26, 0
      %s366 = scalar_select %p365, %s26, 0
      %s367 = smul.addr %s364, 4
      %s368 = sadd.s32 %s366, %s367
      %s369 = smul.addr %s368, 2
      %s370 = scalar_lea.vmem %s9, %s369
      %p371 = scmp.lt.s32.totalorder %s25, 1
      %s372 = scalar_select %p371, %s25, 1
      %p373 = scmp.lt.s32.totalorder %s26, 0
      %s374 = scalar_select %p373, %s26, 0
      %s375 = sadd.s32 %s374, %s372
      %s376 = smul.addr %s375, 2
      %s377 = scalar_lea.vmem %s0, %s376
      %p378 = scmp.lt.s32.totalorder %s25, 1
      %s379 = scalar_select %p378, %s25, 1
      %p380 = scmp.lt.s32.totalorder %s26, 0
      %s381 = scalar_select %p380, %s26, 0
      %s382 = smul.addr %s379, 4
      %s383 = sadd.s32 %s381, %s382
      %s384 = smul.addr %s383, 2
      %s385 = scalar_lea.vmem %s7, %s384
      %p386 = scmp.lt.s32.totalorder %s25, 1
      %s387 = scalar_select %p386, %s25, 1
      %p388 = scmp.lt.s32.totalorder %s26, 0
      %s389 = scalar_select %p388, %s26, 0
      %s390 = smul.addr %s387, 4
      %s391 = sadd.s32 %s389, %s390
      %s392 = smul.addr %s391, 2
      %s393 = scalar_lea.vmem %s8, %s392
      %p394 = scmp.lt.s32.totalorder %s25, 1
      %s395 = scalar_select %p394, %s25, 1
      %p396 = scmp.lt.s32.totalorder %s26, 0
      %s397 = scalar_select %p396, %s26, 0
      %s398 = smul.addr %s395, 4
      %s399 = sadd.s32 %s397, %s398
      %s400 = smul.addr %s399, 2
      %s401 = scalar_lea.vmem %s9, %s400
      %v402 = vld [vmem:[%s377] sm:$0x3]
      %v403 = vld [vmem:[%s1] sm:$0xff]
      %v404 = vld [vmem:[%s1 + $0x8] sm:$0xff]
      %v405 = vld [vmem:[%s1 + $0x10] sm:$0xff]
      %v406 = vld [vmem:[%s1 + $0x18] sm:$0xff]
      %v407 = vld [vmem:[%s4] sm:$0x1]
      %v409 = vlaneseq
      %v410 = vshrl.u32 %v409, 7
      %v411 = vsub.s32 0, %v410
      %v412 = vrot.slane %v407, %v411
      %vm414 = vcmask 261120
      %v416 = vsel %vm414, %v402, 0
      %418 = vmatprep.subr.mxu0 0.0
      %419 = vmatpush1.msra.mxu0 0.0
      %420 = vmatprep.subr.mxu0 0.0
      %421 = vmatpush1.msra.mxu0 0.0
      %422 = vmatprep.subr.mxu0 0.0
      %423 = vmatpush1.msra.mxu0 0.0
      %424 = vmatprep.subr.mxu0 0.0
      %425 = vmatpush1.msra.mxu0 0.0
      %426 = vmatprep.subr.mxu0 0.0
      %427 = vmatpush1.msra.mxu0 0.0
      %428 = vmatprep.subr.mxu0 0.0
      %429 = vmatpush1.msra.mxu0 0.0
      %430 = vmatprep.subr.mxu0 0.0
      %431 = vmatpush1.msra.mxu0 0.0
      %432 = vmatprep.subr.mxu0 0.0
      %433 = vmatpush1.msra.mxu0 0.0
      %434 = vmatprep.subr.mxu0 0.0
      %435 = vmatpush1.msra.mxu0 0.0
      %436 = vmatprep.subr.mxu0 0.0
      %437 = vmatpush1.msra.mxu0 0.0
      %438 = vmatprep.subr.mxu0 0.0
      %439 = vmatpush1.msra.mxu0 0.0
      %440 = vmatprep.subr.mxu0 0.0
      %441 = vmatpush1.msra.mxu0 0.0
      %442 = vmatprep.subr.mxu0 0.0
      %443 = vmatpush1.msra.mxu0 %v406
      %444 = vmatprep.subr.mxu0 0.0
      %445 = vmatpush1.msra.mxu0 %v405
      %446 = vmatprep.subr.mxu0 0.0
      %447 = vmatpush1.msra.mxu0 %v404
      %448 = vmatprep.subr.mxu0 0.0
      %449 = vmatpush1.msra.mxu0 %v403
      %450 = vmatprep.subr.mxu0 0.0
      %451 = vmatpush2.msra.mxu0 0.0
      %452 = vmatprep.subr.mxu0 0.0
      %453 = vmatpush2.msra.mxu0 0.0
      %454 = vmatprep.subr.mxu0 0.0
      %455 = vmatpush2.msra.mxu0 0.0
      %456 = vmatprep.subr.mxu0 0.0
      %457 = vmatpush2.msra.mxu0 0.0
      %458 = vmatprep.subr.mxu0 0.0
      %459 = vmatpush2.msra.mxu0 0.0
      %460 = vmatprep.subr.mxu0 0.0
      %461 = vmatpush2.msra.mxu0 0.0
      %462 = vmatprep.subr.mxu0 0.0
      %463 = vmatpush2.msra.mxu0 0.0
      %464 = vmatprep.subr.mxu0 0.0
      %465 = vmatpush2.msra.mxu0 0.0
      %466 = vmatprep.subr.mxu0 0.0
      %467 = vmatpush2.msra.mxu0 0.0
      %468 = vmatprep.subr.mxu0 0.0
      %469 = vmatpush2.msra.mxu0 0.0
      %470 = vmatprep.subr.mxu0 0.0
      %471 = vmatpush2.msra.mxu0 0.0
      %472 = vmatprep.subr.mxu0 0.0
      %473 = vmatpush2.msra.mxu0 0.0
      %474 = vmatprep.subr.mxu0 0.0
      %475 = vmatpush2.msra.mxu0 0.0
      %476 = vmatprep.subr.mxu0 0.0
      %477 = vmatpush2.msra.mxu0 0.0
      %478 = vmatprep.subr.mxu0 0.0
      %479 = vmatpush2.msra.mxu0 0.0
      %480 = vmatprep.subr.mxu0 0.0
      %481 = vmatpush2.msra.mxu0 0.0
      %482 = vmatprep.mubr.f32.mxu0 0.0
      %483 = vmatmul.mubr.f32.gmra.mxu0 %v416
      %v484 = vpop.f32.mrf.mxu0
      %v485 = vadd.f32 %v412, %v484
      %v486 = vpop.f32.mrf.mxu0
      %487 = vdwg.mxu0
      %vm488 = vcmask 58368
      %489 = vst.msk [vmem:[%s385] sm:$0x3] %vm488, %v485
      %491 = vrot.lane.b32.xlu0 %v485, 120
      %v492 = vpop.permute.xlu0 %491
      %s494 = scalar_lea.vmem %s385, 2
      %495 = vst.msk [vmem:[%s494] sm:$0x3] %vm488, %v492
      %496 = vrot.lane.b32.xlu0 %v485, 112
      %v497 = vpop.permute.xlu0 %496
      %s499 = scalar_lea.vmem %s385, 4
      %500 = vst.msk [vmem:[%s499] sm:$0x3] %vm488, %v497
      %501 = vrot.lane.b32.xlu0 %v485, 104
      %v502 = vpop.permute.xlu0 %501
      %s504 = scalar_lea.vmem %s385, 6
      %505 = vst.msk [vmem:[%s504] sm:$0x3] %vm488, %v502
      %v506 = vld [vmem:[%s2] sm:$0xff]
      %v507 = vld [vmem:[%s2 + $0x8] sm:$0xff]
      %v508 = vld [vmem:[%s2 + $0x10] sm:$0xff]
      %v509 = vld [vmem:[%s2 + $0x18] sm:$0xff]
      %v510 = vld [vmem:[%s5] sm:$0x1]
      %v512 = vlaneseq
      %v513 = vshrl.u32 %v512, 7
      %v514 = vsub.s32 0, %v513
      %v515 = vrot.slane %v510, %v514
      %517 = vmatprep.subr.mxu0 0.0
      %518 = vmatpush1.msra.mxu0 0.0
      %519 = vmatprep.subr.mxu0 0.0
      %520 = vmatpush1.msra.mxu0 0.0
      %521 = vmatprep.subr.mxu0 0.0
      %522 = vmatpush1.msra.mxu0 0.0
      %523 = vmatprep.subr.mxu0 0.0
      %524 = vmatpush1.msra.mxu0 0.0
      %525 = vmatprep.subr.mxu0 0.0
      %526 = vmatpush1.msra.mxu0 0.0
      %527 = vmatprep.subr.mxu0 0.0
      %528 = vmatpush1.msra.mxu0 0.0
      %529 = vmatprep.subr.mxu0 0.0
      %530 = vmatpush1.msra.mxu0 0.0
      %531 = vmatprep.subr.mxu0 0.0
      %532 = vmatpush1.msra.mxu0 0.0
      %533 = vmatprep.subr.mxu0 0.0
      %534 = vmatpush1.msra.mxu0 0.0
      %535 = vmatprep.subr.mxu0 0.0
      %536 = vmatpush1.msra.mxu0 0.0
      %537 = vmatprep.subr.mxu0 0.0
      %538 = vmatpush1.msra.mxu0 0.0
      %539 = vmatprep.subr.mxu0 0.0
      %540 = vmatpush1.msra.mxu0 0.0
      %541 = vmatprep.subr.mxu0 0.0
      %542 = vmatpush1.msra.mxu0 %v509
      %543 = vmatprep.subr.mxu0 0.0
      %544 = vmatpush1.msra.mxu0 %v508
      %545 = vmatprep.subr.mxu0 0.0
      %546 = vmatpush1.msra.mxu0 %v507
      %547 = vmatprep.subr.mxu0 0.0
      %548 = vmatpush1.msra.mxu0 %v506
      %549 = vmatprep.subr.mxu0 0.0
      %550 = vmatpush2.msra.mxu0 0.0
      %551 = vmatprep.subr.mxu0 0.0
      %552 = vmatpush2.msra.mxu0 0.0
      %553 = vmatprep.subr.mxu0 0.0
      %554 = vmatpush2.msra.mxu0 0.0
      %555 = vmatprep.subr.mxu0 0.0
      %556 = vmatpush2.msra.mxu0 0.0
      %557 = vmatprep.subr.mxu0 0.0
      %558 = vmatpush2.msra.mxu0 0.0
      %559 = vmatprep.subr.mxu0 0.0
      %560 = vmatpush2.msra.mxu0 0.0
      %561 = vmatprep.subr.mxu0 0.0
      %562 = vmatpush2.msra.mxu0 0.0
      %563 = vmatprep.subr.mxu0 0.0
      %564 = vmatpush2.msra.mxu0 0.0
      %565 = vmatprep.subr.mxu0 0.0
      %566 = vmatpush2.msra.mxu0 0.0
      %567 = vmatprep.subr.mxu0 0.0
      %568 = vmatpush2.msra.mxu0 0.0
      %569 = vmatprep.subr.mxu0 0.0
      %570 = vmatpush2.msra.mxu0 0.0
      %571 = vmatprep.subr.mxu0 0.0
      %572 = vmatpush2.msra.mxu0 0.0
      %573 = vmatprep.subr.mxu0 0.0
      %574 = vmatpush2.msra.mxu0 0.0
      %575 = vmatprep.subr.mxu0 0.0
      %576 = vmatpush2.msra.mxu0 0.0
      %577 = vmatprep.subr.mxu0 0.0
      %578 = vmatpush2.msra.mxu0 0.0
      %579 = vmatprep.subr.mxu0 0.0
      %580 = vmatpush2.msra.mxu0 0.0
      %581 = vmatprep.mubr.f32.mxu0 0.0
      %582 = vmatmul.mubr.f32.gmra.mxu0 %v416
      %v583 = vpop.f32.mrf.mxu0
      %v584 = vadd.f32 %v515, %v583
      %v585 = vpop.f32.mrf.mxu0
      %586 = vdwg.mxu0
      %587 = vst.msk [vmem:[%s393] sm:$0x3] %vm488, %v584
      %589 = vrot.lane.b32.xlu0 %v584, 120
      %v590 = vpop.permute.xlu0 %589
      %s592 = scalar_lea.vmem %s393, 2
      %593 = vst.msk [vmem:[%s592] sm:$0x3] %vm488, %v590
      %594 = vrot.lane.b32.xlu0 %v584, 112
      %v595 = vpop.permute.xlu0 %594
      %s597 = scalar_lea.vmem %s393, 4
      %598 = vst.msk [vmem:[%s597] sm:$0x3] %vm488, %v595
      %599 = vrot.lane.b32.xlu0 %v584, 104
      %v600 = vpop.permute.xlu0 %599
      %s602 = scalar_lea.vmem %s393, 6
      %603 = vst.msk [vmem:[%s602] sm:$0x3] %vm488, %v600
      %v604 = vld [vmem:[%s3] sm:$0xff]
      %v605 = vld [vmem:[%s3 + $0x8] sm:$0xff]
      %v606 = vld [vmem:[%s3 + $0x10] sm:$0xff]
      %v607 = vld [vmem:[%s3 + $0x18] sm:$0xff]
      %v608 = vld [vmem:[%s6] sm:$0x1]
      %v610 = vlaneseq
      %v611 = vshrl.u32 %v610, 7
      %v612 = vsub.s32 0, %v611
      %v613 = vrot.slane %v608, %v612
      %615 = vmatprep.subr.mxu0 0.0
      %616 = vmatpush1.msra.mxu0 0.0
      %617 = vmatprep.subr.mxu0 0.0
      %618 = vmatpush1.msra.mxu0 0.0
      %619 = vmatprep.subr.mxu0 0.0
      %620 = vmatpush1.msra.mxu0 0.0
      %621 = vmatprep.subr.mxu0 0.0
      %622 = vmatpush1.msra.mxu0 0.0
      %623 = vmatprep.subr.mxu0 0.0
      %624 = vmatpush1.msra.mxu0 0.0
      %625 = vmatprep.subr.mxu0 0.0
      %626 = vmatpush1.msra.mxu0 0.0
      %627 = vmatprep.subr.mxu0 0.0
      %628 = vmatpush1.msra.mxu0 0.0
      %629 = vmatprep.subr.mxu0 0.0
      %630 = vmatpush1.msra.mxu0 0.0
      %631 = vmatprep.subr.mxu0 0.0
      %632 = vmatpush1.msra.mxu0 0.0
      %633 = vmatprep.subr.mxu0 0.0
      %634 = vmatpush1.msra.mxu0 0.0
      %635 = vmatprep.subr.mxu0 0.0
      %636 = vmatpush1.msra.mxu0 0.0
      %637 = vmatprep.subr.mxu0 0.0
      %638 = vmatpush1.msra.mxu0 0.0
      %639 = vmatprep.subr.mxu0 0.0
      %640 = vmatpush1.msra.mxu0 %v607
      %641 = vmatprep.subr.mxu0 0.0
      %642 = vmatpush1.msra.mxu0 %v606
      %643 = vmatprep.subr.mxu0 0.0
      %644 = vmatpush1.msra.mxu0 %v605
      %645 = vmatprep.subr.mxu0 0.0
      %646 = vmatpush1.msra.mxu0 %v604
      %647 = vmatprep.subr.mxu0 0.0
      %648 = vmatpush2.msra.mxu0 0.0
      %649 = vmatprep.subr.mxu0 0.0
      %650 = vmatpush2.msra.mxu0 0.0
      %651 = vmatprep.subr.mxu0 0.0
      %652 = vmatpush2.msra.mxu0 0.0
      %653 = vmatprep.subr.mxu0 0.0
      %654 = vmatpush2.msra.mxu0 0.0
      %655 = vmatprep.subr.mxu0 0.0
      %656 = vmatpush2.msra.mxu0 0.0
      %657 = vmatprep.subr.mxu0 0.0
      %658 = vmatpush2.msra.mxu0 0.0
      %659 = vmatprep.subr.mxu0 0.0
      %660 = vmatpush2.msra.mxu0 0.0
      %661 = vmatprep.subr.mxu0 0.0
      %662 = vmatpush2.msra.mxu0 0.0
      %663 = vmatprep.subr.mxu0 0.0
      %664 = vmatpush2.msra.mxu0 0.0
      %665 = vmatprep.subr.mxu0 0.0
      %666 = vmatpush2.msra.mxu0 0.0
      %667 = vmatprep.subr.mxu0 0.0
      %668 = vmatpush2.msra.mxu0 0.0
      %669 = vmatprep.subr.mxu0 0.0
      %670 = vmatpush2.msra.mxu0 0.0
      %671 = vmatprep.subr.mxu0 0.0
      %672 = vmatpush2.msra.mxu0 0.0
      %673 = vmatprep.subr.mxu0 0.0
      %674 = vmatpush2.msra.mxu0 0.0
      %675 = vmatprep.subr.mxu0 0.0
      %676 = vmatpush2.msra.mxu0 0.0
      %677 = vmatprep.subr.mxu0 0.0
      %678 = vmatpush2.msra.mxu0 0.0
      %679 = vmatprep.mubr.f32.mxu0 0.0
      %680 = vmatmul.mubr.f32.gmra.mxu0 %v416
      %v681 = vpop.f32.mrf.mxu0
      %v682 = vadd.f32 %v613, %v681
      %v683 = vpop.f32.mrf.mxu0
      %684 = vdwg.mxu0
      %685 = vst.msk [vmem:[%s401] sm:$0x3] %vm488, %v682
      %687 = vrot.lane.b32.xlu0 %v682, 120
      %v688 = vpop.permute.xlu0 %687
      %s690 = scalar_lea.vmem %s401, 2
      %691 = vst.msk [vmem:[%s690] sm:$0x3] %vm488, %v688
      %692 = vrot.lane.b32.xlu0 %v682, 112
      %v693 = vpop.permute.xlu0 %692
      %s695 = scalar_lea.vmem %s401, 4
      %696 = vst.msk [vmem:[%s695] sm:$0x3] %vm488, %v693
      %697 = vrot.lane.b32.xlu0 %v682, 104
      %v698 = vpop.permute.xlu0 %697
      %s700 = scalar_lea.vmem %s401, 6
      %701 = vst.msk [vmem:[%s700] sm:$0x3] %vm488, %v698
      %p702 = scmp.lt.s32.totalorder %s25, 1
      %s703 = scalar_select %p702, %s25, 1
      %p704 = scmp.lt.s32.totalorder %s26, 0
      %s705 = scalar_select %p704, %s26, 0
      %s706 = smul.addr %s703, 4
      %s707 = sadd.s32 %s705, %s706
      %s708 = smul.addr %s707, 2
      %s709 = scalar_lea.vmem %s7, %s708
      %p710 = scmp.lt.s32.totalorder %s25, 1
      %s711 = scalar_select %p710, %s25, 1
      %p712 = scmp.lt.s32.totalorder %s26, 0
      %s713 = scalar_select %p712, %s26, 0
      %s714 = smul.addr %s711, 4
      %s715 = sadd.s32 %s713, %s714
      %s716 = smul.addr %s715, 2
      %s717 = scalar_lea.vmem %s8, %s716
      %p718 = scmp.lt.s32.totalorder %s25, 1
      %s719 = scalar_select %p718, %s25, 1
      %p720 = scmp.lt.s32.totalorder %s26, 0
      %s721 = scalar_select %p720, %s26, 0
      %s722 = smul.addr %s719, 4
      %s723 = sadd.s32 %s721, %s722
      %s724 = smul.addr %s723, 2
      %s725 = scalar_lea.vmem %s9, %s724
      // Predicated region
      $region49: #{multi_scale_attention.10} parent=47 // pred_check
        %p726 = pneg %p207
      $region50: #{multi_scale_attention.10} parent=47 // pred_check_branch
        %728 = sbr.rel (%p726) target = $region52
      $region51: #{multi_scale_attention.10} parent=47 // pred_region
        _
      $region52: #{multi_scale_attention.10} parent=47 // pred_fallthru
        _
      // Predicated region
      $region53: #{multi_scale_attention.10} parent=47 // pred_check
        %p729 = pneg %p235
      $region54: #{multi_scale_attention.10} parent=47 // pred_check_branch
        %731 = sbr.rel (%p729) target = $region56
      $region55: #{multi_scale_attention.10} parent=47 // pred_region
        _
      $region56: #{multi_scale_attention.10} parent=47 // pred_fallthru
        _
      // Predicated region
      $region57: #{multi_scale_attention.10} parent=47 // pred_check
        %p732 = pneg %p263
      $region58: #{multi_scale_attention.10} parent=47 // pred_check_branch
        %734 = sbr.rel (%p732) target = $region60
      $region59: #{multi_scale_attention.10} parent=47 // pred_region
        _
      $region60: #{multi_scale_attention.10} parent=47 // pred_fallthru
        _
    $region48: #{multi_scale_attention.10} parent=5 // pred_fallthru
      _
    %p735 = scmp.le.s32.totalorder 2, %s16
    // Predicated region
    $region61: #{multi_scale_attention.10} parent=5 // pred_check
      %p736 = pneg %p735
    $region62: #{multi_scale_attention.10} parent=5 // pred_check_branch
      %738 = sbr.rel (%p736) target = $region64
    $region63: #{multi_scale_attention.10} parent=5 // pred_region
      %s739 = ssub.s32 %s16, 2
      // Predicated region
      $region65: #{multi_scale_attention.10} parent=63 // pred_check
        %p740 = pneg %p213
      $region66: #{multi_scale_attention.10} parent=63 // pred_check_branch
        %742 = sbr.rel (%p740) target = $region68
      $region67: #{multi_scale_attention.10} parent=63 // pred_region
        %p743 = scmp.lt.s32.totalorder %s27, 1
        %s744 = scalar_select %p743, %s27, 1
        %p745 = scmp.lt.s32.totalorder %s28, 0
        %s746 = scalar_select %p745, %s28, 0
        %s747 = smul.addr %s744, 4
        %s748 = sadd.s32 %s746, %s747
        %s749 = smul.addr %s748, 2
        %s750 = scalar_lea.vmem %s7, %s749
      $region68: #{multi_scale_attention.10} parent=63 // pred_fallthru
        _
      // Predicated region
      $region69: #{multi_scale_attention.10} parent=63 // pred_check
        %p751 = pneg %p241
      $region70: #{multi_scale_attention.10} parent=63 // pred_check_branch
        %753 = sbr.rel (%p751) target = $region72
      $region71: #{multi_scale_attention.10} parent=63 // pred_region
        %p754 = scmp.lt.s32.totalorder %s27, 1
        %s755 = scalar_select %p754, %s27, 1
        %p756 = scmp.lt.s32.totalorder %s28, 0
        %s757 = scalar_select %p756, %s28, 0
        %s758 = smul.addr %s755, 4
        %s759 = sadd.s32 %s757, %s758
        %s760 = smul.addr %s759, 2
        %s761 = scalar_lea.vmem %s8, %s760
      $region72: #{multi_scale_attention.10} parent=63 // pred_fallthru
        _
      // Predicated region
      $region73: #{multi_scale_attention.10} parent=63 // pred_check
        %p762 = pneg %p269
      $region74: #{multi_scale_attention.10} parent=63 // pred_check_branch
        %764 = sbr.rel (%p762) target = $region76
      $region75: #{multi_scale_attention.10} parent=63 // pred_region
        %p765 = scmp.lt.s32.totalorder %s27, 1
        %s766 = scalar_select %p765, %s27, 1
        %p767 = scmp.lt.s32.totalorder %s28, 0
        %s768 = scalar_select %p767, %s28, 0
        %s769 = smul.addr %s766, 4
        %s770 = sadd.s32 %s768, %s769
        %s771 = smul.addr %s770, 2
        %s772 = scalar_lea.vmem %s9, %s771
      $region76: #{multi_scale_attention.10} parent=63 // pred_fallthru
        _
    $region64: #{multi_scale_attention.10} parent=5 // pred_fallthru
      _
  $region6: #{multi_scale_attention.10} parent=0 // loop_footer
    %s20 = sadd.s32 1, %s16
  $region7: #{multi_scale_attention.10} parent=0 // loop_footer_branch
    %15 = sbr.rel target = $region3
  $region8: #{multi_scale_attention.10} parent=0 // loop_exit
    _

// kernel: multi_scale_attention.11
$region0: #{multi_scale_attention.11}
  #allocation0 [shape = 'u32[]', space=smem, size = 0x4, offset = 0x4, fixed_abs, tag = 'smem constant byte address 0x4 - core index']
  #allocation1 [shape = 'u32[144,128]{1,0:T(1,128)}', space=vmem, size = 0x12000, scoped, tag = 'internal scratch']
  #allocation2 [shape = 'f32[4,2,1]{2,1,0:T(2,128)}', space=vmem, size = 0x1000, scoped, tag = 'scratch operand']
  #allocation3 [shape = 'f32[4,2,1]{2,1,0:T(2,128)}', space=vmem, size = 0x1000, scoped, tag = 'scratch operand']
  #allocation4 [shape = 'f32[4,2,8]{2,1,0:T(2,128)}', space=vmem, size = 0x1000, scoped, tag = 'scratch operand']
  %s0 = inlined_call_operand.vmem [shape: f32[2,4,2,8], index: 0, kind: input, shape index: {}]
  %s1 = inlined_call_operand.vmem [shape: f32[2,4,2,8], index: 1, kind: input, shape index: {}]
  %s2 = inlined_call_operand.vmem [shape: f32[2,4,2,8], index: 2, kind: input, shape index: {}]
  %s3 = inlined_call_operand.vmem [shape: f32[32,32], index: 3, kind: input, shape index: {}]
  %s4 = inlined_call_operand.vmem [shape: f32[2,2,32], index: 4, kind: output, shape index: {}]
  %s5 = sld [smem:[#allocation0]]
  $region61: #{multi_scale_attention.11} parent=0
    _
  %s7 = ssub.s32 1, %s5
  %s8 = scalar_select 0, %s7, %s5
  loop: start=0, step=1, limit=4
  $region2: #{multi_scale_attention.11} parent=0 // loop_pre_header
    _
  $region3: #{multi_scale_attention.11} parent=0 // loop_header
    %s10 = sphi 0, %s14
    %p11 = scmp.ge.s32.totalorder %s10, 4
    %s17 = sphi 0, %s36
    %s18 = sphi 0, %s32
    %s19 = sphi 0, %s28
    %s20 = sphi 0, %s17
    %s21 = sphi 0, %s18
    %s22 = sphi 0, %s19
    %s23 = sphi 0, %s20
    %s24 = sphi 0, %s21
    %s25 = sphi 0, %s22
    %s41 = sphi 0, %s43
    %s44 = sphi 0, %s41
    %s45 = sphi 0, %s44
    %s61 = sphi 0, %s45
    %s69 = sphi 0, %s71
    %s72 = sphi 0, %s69
    %s73 = sphi 0, %s72
    %s89 = sphi 0, %s73
    %s97 = sphi 0, %s99
    %s100 = sphi 0, %s97
    %s101 = sphi 0, %s100
    %s117 = sphi 0, %s101
    %s121 = sphi 0, %s121
    %s123 = sphi 0, %s121
    %s124 = sphi 0, %s123
    %s138 = sphi 0, %s124
    %s146 = sphi 0, %s148
    %s149 = sphi 0, %s146
    %s150 = sphi 0, %s149
    %s166 = sphi 0, %s150
  $region4: #{multi_scale_attention.11} parent=0 // loop_header_branch
    %13 = sbr.rel (%p11) target = $region8
  $region5: #{multi_scale_attention.11} parent=0 // loop_body
    %s15 = ssub.s32 %s10, 1
    %s16 = ssub.s32 %s10, 2
    %s26 = sadd.s32 1, %s19
    %p27 = scmp.ge.s32.totalorder %s26, 1
    %s28 = scalar_select %p27, 0, %s26
    %s29 = sadd.s32 1, %s18
    %s30 = scalar_select %p27, %s29, %s18
    %p31 = scmp.ge.s32.totalorder %s30, 1
    %s32 = scalar_select %p31, 0, %s30
    %s33 = sadd.s32 1, %s17
    %s34 = scalar_select %p31, %s33, %s17
    %p35 = scmp.ge.s32.totalorder %s34, 2
    %s36 = scalar_select %p35, 0, %s34
    %s37 = ssub.s32 %s17, %s36
    %s38 = ssub.s32 %s18, %s32
    %s39 = sor.u32 %s37, %s38
    %p40 = scmp.eq.s32.totalorder %s39, 0
    %s42 = sadd.s32 %s41, 1
    %s43 = scalar_select %p40, %s41, %s42
    %p46 = pneg %p40
    %p47 = scmp.eq.s32.totalorder %s10, 1
    %p48 = por %p46, %p47
    %p49 = scmp.ne.s32.totalorder %s41, %s44
    %p50 = scmp.eq.s32.totalorder %s10, 0
    %p51 = por %p49, %p50
    %p52 = scmp.ne.s32.totalorder %s41, %s44
    %p53 = scmp.eq.s32.totalorder %s15, 1
    %p54 = por %p52, %p53
    %p55 = scmp.ne.s32.totalorder %s44, %s45
    %p56 = scmp.eq.s32.totalorder %s15, 0
    %p57 = por %p55, %p56
    %p58 = scmp.ne.s32.totalorder %s44, %s45
    %p59 = scmp.eq.s32.totalorder %s16, 1
    %p60 = por %p58, %p59
    %p62 = scmp.ne.s32.totalorder %s45, %s61
    %p63 = scmp.eq.s32.totalorder %s16, 0
    %p64 = por %p62, %p63
    %s65 = ssub.s32 %s17, %s36
    %s66 = ssub.s32 %s19, %s28
    %s67 = sor.u32 %s65, %s66
    %p68 = scmp.eq.s32.totalorder %s67, 0
    %s70 = sadd.s32 %s69, 1
    %s71 = scalar_select %p68, %s69, %s70
    %p74 = pneg %p68
    %p75 = scmp.eq.s32.totalorder %s10, 1
    %p76 = por %p74, %p75
    %p77 = scmp.ne.s32.totalorder %s69, %s72
    %p78 = scmp.eq.s32.totalorder %s10, 0
    %p79 = por %p77, %p78
    %p80 = scmp.ne.s32.totalorder %s69, %s72
    %p81 = scmp.eq.s32.totalorder %s15, 1
    %p82 = por %p80, %p81
    %p83 = scmp.ne.s32.totalorder %s72, %s73
    %p84 = scmp.eq.s32.totalorder %s15, 0
    %p85 = por %p83, %p84
    %p86 = scmp.ne.s32.totalorder %s72, %s73
    %p87 = scmp.eq.s32.totalorder %s16, 1
    %p88 = por %p86, %p87
    %p90 = scmp.ne.s32.totalorder %s73, %s89
    %p91 = scmp.eq.s32.totalorder %s16, 0
    %p92 = por %p90, %p91
    %s93 = ssub.s32 %s17, %s36
    %s94 = ssub.s32 %s19, %s28
    %s95 = sor.u32 %s93, %s94
    %p96 = scmp.eq.s32.totalorder %s95, 0
    %s98 = sadd.s32 %s97, 1
    %s99 = scalar_select %p96, %s97, %s98
    %p102 = pneg %p96
    %p103 = scmp.eq.s32.totalorder %s10, 1
    %p104 = por %p102, %p103
    %p105 = scmp.ne.s32.totalorder %s97, %s100
    %p106 = scmp.eq.s32.totalorder %s10, 0
    %p107 = por %p105, %p106
    %p108 = scmp.ne.s32.totalorder %s97, %s100
    %p109 = scmp.eq.s32.totalorder %s15, 1
    %p110 = por %p108, %p109
    %p111 = scmp.ne.s32.totalorder %s100, %s101
    %p112 = scmp.eq.s32.totalorder %s15, 0
    %p113 = por %p111, %p112
    %p114 = scmp.ne.s32.totalorder %s100, %s101
    %p115 = scmp.eq.s32.totalorder %s16, 1
    %p116 = por %p114, %p115
    %p118 = scmp.ne.s32.totalorder %s101, %s117
    %p119 = scmp.eq.s32.totalorder %s16, 0
    %p120 = por %p118, %p119
    %s122 = sadd.s32 %s121, 1
    %p125 = scmp.eq.s32.totalorder %s10, 1
    %p126 = scmp.ne.s32.totalorder %s121, %s123
    %p127 = scmp.eq.s32.totalorder %s10, 0
    %p128 = por %p126, %p127
    %p129 = scmp.ne.s32.totalorder %s121, %s123
    %p130 = scmp.eq.s32.totalorder %s15, 1
    %p131 = por %p129, %p130
    %p132 = scmp.ne.s32.totalorder %s123, %s124
    %p133 = scmp.eq.s32.totalorder %s15, 0
    %p134 = por %p132, %p133
    %p135 = scmp.ne.s32.totalorder %s123, %s124
    %p136 = scmp.eq.s32.totalorder %s16, 1
    %p137 = por %p135, %p136
    %p139 = scmp.ne.s32.totalorder %s124, %s138
    %p140 = scmp.eq.s32.totalorder %s16, 0
    %p141 = por %p139, %p140
    %s142 = ssub.s32 %s17, %s36
    %s143 = ssub.s32 %s18, %s32
    %s144 = sor.u32 %s142, %s143
    %p145 = scmp.eq.s32.totalorder %s144, 0
    %s147 = sadd.s32 %s146, 1
    %s148 = scalar_select %p145, %s146, %s147
    %p151 = pneg %p145
    %p152 = scmp.eq.s32.totalorder %s10, 1
    %p153 = por %p151, %p152
    %p154 = scmp.ne.s32.totalorder %s146, %s149
    %p155 = scmp.eq.s32.totalorder %s10, 0
    %p156 = por %p154, %p155
    %p157 = scmp.ne.s32.totalorder %s146, %s149
    %p158 = scmp.eq.s32.totalorder %s15, 1
    %p159 = por %p157, %p158
    %p160 = scmp.ne.s32.totalorder %s149, %s150
    %p161 = scmp.eq.s32.totalorder %s15, 0
    %p162 = por %p160, %p161
    %p163 = scmp.ne.s32.totalorder %s149, %s150
    %p164 = scmp.eq.s32.totalorder %s16, 1
    %p165 = por %p163, %p164
    %p167 = scmp.ne.s32.totalorder %s150, %s166
    %p168 = scmp.eq.s32.totalorder %s16, 0
    %p169 = por %p167, %p168
    %p170 = scmp.le.s32.totalorder 1, %s10
    %p171 = scmp.lt.s32.totalorder %s10, 3
    %p172 = pnand %p170, %p171
    %p173 = pneg %p172
    // Predicated region
    $region9: #{multi_scale_attention.11} parent=5 // pred_check
      _
    $region10: #{multi_scale_attention.11} parent=5 // pred_check_branch
      %175 = sbr.rel (%p172) target = $region12
    $region11: #{multi_scale_attention.11} parent=5 // pred_region
      %s176 = ssub.s32 %s10, 1
      // Predicated region
      $region13: #{multi_scale_attention.11} parent=11 // pred_check
        %p177 = pneg %p134
      $region14: #{multi_scale_attention.11} parent=11 // pred_check_branch
        %179 = sbr.rel (%p177) target = $region16
      $region15: #{multi_scale_attention.11} parent=11 // pred_region
        _
      $region16: #{multi_scale_attention.11} parent=11 // pred_fallthru
        _
    $region12: #{multi_scale_attention.11} parent=5 // pred_fallthru
      _
    %p180 = scmp.lt.s32.totalorder %s10, 2
    // Predicated region
    $region17: #{multi_scale_attention.11} parent=5 // pred_check
      %p181 = pneg %p180
    $region18: #{multi_scale_attention.11} parent=5 // pred_check_branch
      %183 = sbr.rel (%p181) target = $region20
    $region19: #{multi_scale_attention.11} parent=5 // pred_region
      // Predicated region
      $region21: #{multi_scale_attention.11} parent=19 // pred_check
        %p184 = pneg %p51
      $region22: #{multi_scale_attention.11} parent=19 // pred_check_branch
        %186 = sbr.rel (%p184) target = $region24
      $region23: #{multi_scale_attention.11} parent=19 // pred_region
        %p187 = scmp.lt.s32.totalorder %s17, 1
        %s188 = scalar_select %p187, %s17, 1
        %p189 = scmp.lt.s32.totalorder %s18, 0
        %s190 = scalar_select %p189, %s18, 0
        %s191 = smul.addr %s188, 4
        %s192 = sadd.s32 %s190, %s191
        %s193 = smul.addr %s192, 2
        %s194 = scalar_lea.vmem %s0, %s193
      $region24: #{multi_scale_attention.11} parent=19 // pred_fallthru
        _
      // Predicated region
      $region25: #{multi_scale_attention.11} parent=19 // pred_check
        %p195 = pneg %p79
      $region26: #{multi_scale_attention.11} parent=19 // pred_check_branch
        %197 = sbr.rel (%p195) target = $region28
      $region27: #{multi_scale_attention.11} parent=19 // pred_region
        %p198 = scmp.lt.s32.totalorder %s17, 1
        %s199 = scalar_select %p198, %s17, 1
        %p200 = scmp.lt.s32.totalorder %s19, 0
        %s201 = scalar_select %p200, %s19, 0
        %s202 = smul.addr %s199, 4
        %s203 = sadd.s32 %s201, %s202
        %s204 = smul.addr %s203, 2
        %s205 = scalar_lea.vmem %s1, %s204
      $region28: #{multi_scale_attention.11} parent=19 // pred_fallthru
        _
      // Predicated region
      $region29: #{multi_scale_attention.11} parent=19 // pred_check
        %p206 = pneg %p107
      $region30: #{multi_scale_attention.11} parent=19 // pred_check_branch
        %208 = sbr.rel (%p206) target = $region32
      $region31: #{multi_scale_attention.11} parent=19 // pred_region
        %p209 = scmp.lt.s32.totalorder %s17, 1
        %s210 = scalar_select %p209, %s17, 1
        %p211 = scmp.lt.s32.totalorder %s19, 0
        %s212 = scalar_select %p211, %s19, 0
        %s213 = smul.addr %s210, 4
        %s214 = sadd.s32 %s212, %s213
        %s215 = smul.addr %s214, 2
        %s216 = scalar_lea.vmem %s2, %s215
      $region32: #{multi_scale_attention.11} parent=19 // pred_fallthru
        _
    $region20: #{multi_scale_attention.11} parent=5 // pred_fallthru
      _
    %p217 = scmp.le.s32.totalorder 1, %s10
    %p218 = scmp.lt.s32.totalorder %s10, 3
    %p219 = pnand %p217, %p218
    %p220 = pneg %p219
    // Predicated region
    $region33: #{multi_scale_attention.11} parent=5 // pred_check
      _
    $region34: #{multi_scale_attention.11} parent=5 // pred_check_branch
      %222 = sbr.rel (%p219) target = $region36
    $region35: #{multi_scale_attention.11} parent=5 // pred_region
      %s223 = ssub.s32 %s10, 1
      %p224 = scmp.lt.s32.totalorder %s20, 1
      %s225 = scalar_select %p224, %s20, 1
      %p226 = scmp.lt.s32.totalorder %s21, 0
      %s227 = scalar_select %p226, %s21, 0
      %s228 = smul.addr %s225, 4
      %s229 = sadd.s32 %s227, %s228
      %s230 = smul.addr %s229, 2
      %s231 = scalar_lea.vmem %s0, %s230
      %p232 = pneg %p57
      %p233 = pneg %p54
      %p234 = scmp.lt.s32.totalorder %s20, 1
      %s235 = scalar_select %p234, %s20, 1
      %p236 = scmp.lt.s32.totalorder %s22, 0
      %s237 = scalar_select %p236, %s22, 0
      %s238 = smul.addr %s235, 4
      %s239 = sadd.s32 %s237, %s238
      %s240 = smul.addr %s239, 2
      %s241 = scalar_lea.vmem %s1, %s240
      %p242 = pneg %p85
      %p243 = pneg %p82
      %p244 = scmp.lt.s32.totalorder %s20, 1
      %s245 = scalar_select %p244, %s20, 1
      %p246 = scmp.lt.s32.totalorder %s22, 0
      %s247 = scalar_select %p246, %s22, 0
      %s248 = smul.addr %s245, 4
      %s249 = sadd.s32 %s247, %s248
      %s250 = smul.addr %s249, 2
      %s251 = scalar_lea.vmem %s2, %s250
      %p252 = pneg %p113
      %p253 = pneg %p110
      %p254 = pneg %p134
      %p255 = pneg %p131
      %p256 = pneg %p162
      %p257 = pneg %p159
      %p258 = scmp.lt.s32.totalorder %s20, 1
      %s259 = scalar_select %p258, %s20, 1
      %p260 = scmp.lt.s32.totalorder %s21, 0
      %s261 = scalar_select %p260, %s21, 0
      %s262 = sadd.s32 %s261, %s259
      %s263 = smul.addr %s262, 2
      %s264 = scalar_lea.vmem %s4, %s263
      %p265 = scmp.lt.s32.totalorder %s20, 1
      %s266 = scalar_select %p265, %s20, 1
      %p267 = scmp.lt.s32.totalorder %s21, 0
      %s268 = scalar_select %p267, %s21, 0
      %s269 = smul.addr %s266, 4
      %s270 = sadd.s32 %s268, %s269
      %s271 = smul.addr %s270, 2
      %s272 = scalar_lea.vmem %s0, %s271
      %p273 = scmp.lt.s32.totalorder %s20, 1
      %s274 = scalar_select %p273, %s20, 1
      %p275 = scmp.lt.s32.totalorder %s22, 0
      %s276 = scalar_select %p275, %s22, 0
      %s277 = smul.addr %s274, 4
      %s278 = sadd.s32 %s276, %s277
      %s279 = smul.addr %s278, 2
      %s280 = scalar_lea.vmem %s1, %s279
      %p281 = scmp.lt.s32.totalorder %s20, 1
      %s282 = scalar_select %p281, %s20, 1
      %p283 = scmp.lt.s32.totalorder %s22, 0
      %s284 = scalar_select %p283, %s22, 0
      %s285 = smul.addr %s282, 4
      %s286 = sadd.s32 %s284, %s285
      %s287 = smul.addr %s286, 2
      %s288 = scalar_lea.vmem %s2, %s287
      %p289 = scmp.lt.s32.totalorder %s20, 1
      %s290 = scalar_select %p289, %s20, 1
      %p291 = scmp.lt.s32.totalorder %s21, 0
      %s292 = scalar_select %p291, %s21, 0
      %s293 = sadd.s32 %s292, %s290
      %s294 = smul.addr %s293, 2
      %s295 = scalar_lea.vmem %s4, %s294
      %p296 = scmp.eq.s32.totalorder %s22, 0
      // Predicated region
      $region37: #{multi_scale_attention.11} parent=35 // pred_check
        %p297 = pneg %p296
      $region38: #{multi_scale_attention.11} parent=35 // pred_check_branch
        %299 = sbr.rel (%p297) target = $region40
      $region39: #{multi_scale_attention.11} parent=35 // pred_region
        %vm300 = vcmask 1024
        %301 = vst.msk [vmem:[#allocation2] sm:$0x3] %vm300, -1e+30
        %302 = vst.msk [vmem:[#allocation2 + $0x2] sm:$0x3] %vm300, -1e+30
        %303 = vst.msk [vmem:[#allocation2 + $0x4] sm:$0x3] %vm300, -1e+30
        %304 = vst.msk [vmem:[#allocation2 + $0x6] sm:$0x3] %vm300, -1e+30
        %305 = vst.msk [vmem:[#allocation3] sm:$0x3] %vm300, 0.0
        %306 = vst.msk [vmem:[#allocation3 + $0x2] sm:$0x3] %vm300, 0.0
        %307 = vst.msk [vmem:[#allocation3 + $0x4] sm:$0x3] %vm300, 0.0
        %308 = vst.msk [vmem:[#allocation3 + $0x6] sm:$0x3] %vm300, 0.0
        %vm309 = vcmask 58368
        %310 = vst.msk [vmem:[#allocation4] sm:$0x3] %vm309, 0.0
        %311 = vst.msk [vmem:[#allocation4 + $0x2] sm:$0x3] %vm309, 0.0
        %312 = vst.msk [vmem:[#allocation4 + $0x4] sm:$0x3] %vm309, 0.0
        %313 = vst.msk [vmem:[#allocation4 + $0x6] sm:$0x3] %vm309, 0.0
      $region40: #{multi_scale_attention.11} parent=35 // pred_fallthru
        _
      %p314 = scmp.le.s32.totalorder %s22, %s21
      // Predicated region
      $region41: #{multi_scale_attention.11} parent=35 // pred_check
        %p315 = pneg %p314
      $region42: #{multi_scale_attention.11} parent=35 // pred_check_branch
        %317 = sbr.rel (%p315) target = $region44
      $region43: #{multi_scale_attention.11} parent=35 // pred_region
        %v318 = vld [vmem:[%s272] sm:$0x3]
        %v319 = vld [vmem:[%s272 + $0x2] sm:$0x3]
        %v320 = vld [vmem:[%s272 + $0x4] sm:$0x3]
        %v321 = vld [vmem:[%s272 + $0x6] sm:$0x3]
        %v322 = vld [vmem:[%s280] sm:$0x3]
        %v323 = vld [vmem:[%s280 + $0x2] sm:$0x3]
        %v324 = vld [vmem:[%s280 + $0x4] sm:$0x3]
        %v325 = vld [vmem:[%s280 + $0x6] sm:$0x3]
        %v326 = vld [vmem:[%s288] sm:$0x3]
        %v327 = vld [vmem:[%s288 + $0x2] sm:$0x3]
        %v328 = vld [vmem:[%s288 + $0x4] sm:$0x3]
        %v329 = vld [vmem:[%s288 + $0x6] sm:$0x3]
        %vm330 = vcmask 64512
        %v332 = vsel %vm330, %v318, 0
        %v335 = vsel %vm330, %v322, 0
        %337 = vmatprep.subr.mxu0 0.0
        %338 = vmatpush1.xpose.msra.mxu0 0.0
        %339 = vmatprep.subr.mxu0 0.0
        %340 = vmatpush1.xpose.msra.mxu0 0.0
        %341 = vmatprep.subr.mxu0 0.0
        %342 = vmatpush1.xpose.msra.mxu0 0.0
        %343 = vmatprep.subr.mxu0 0.0
        %344 = vmatpush1.xpose.msra.mxu0 0.0
        %345 = vmatprep.subr.mxu0 0.0
        %346 = vmatpush1.xpose.msra.mxu0 0.0
        %347 = vmatprep.subr.mxu0 0.0
        %348 = vmatpush1.xpose.msra.mxu0 0.0
        %349 = vmatprep.subr.mxu0 0.0
        %350 = vmatpush1.xpose.msra.mxu0 0.0
        %351 = vmatprep.subr.mxu0 0.0
        %352 = vmatpush1.xpose.msra.mxu0 0.0
        %353 = vmatprep.subr.mxu0 0.0
        %354 = vmatpush1.xpose.msra.mxu0 0.0
        %355 = vmatprep.subr.mxu0 0.0
        %356 = vmatpush1.xpose.msra.mxu0 0.0
        %357 = vmatprep.subr.mxu0 0.0
        %358 = vmatpush1.xpose.msra.mxu0 0.0
        %359 = vmatprep.subr.mxu0 0.0
        %360 = vmatpush1.xpose.msra.mxu0 0.0
        %361 = vmatprep.subr.mxu0 0.0
        %362 = vmatpush1.xpose.msra.mxu0 0.0
        %363 = vmatprep.subr.mxu0 0.0
        %364 = vmatpush1.xpose.msra.mxu0 0.0
        %365 = vmatprep.subr.mxu0 0.0
        %366 = vmatpush1.xpose.msra.mxu0 0.0
        %367 = vmatprep.subr.mxu0 0.0
        %368 = vmatpush1.xpose.msra.mxu0 %v335
        %369 = vmatprep.subr.mxu0 0.0
        %370 = vmatpush2.xpose.msra.mxu0 0.0
        %371 = vmatprep.subr.mxu0 0.0
        %372 = vmatpush2.xpose.msra.mxu0 0.0
        %373 = vmatprep.subr.mxu0 0.0
        %374 = vmatpush2.xpose.msra.mxu0 0.0
        %375 = vmatprep.subr.mxu0 0.0
        %376 = vmatpush2.xpose.msra.mxu0 0.0
        %377 = vmatprep.subr.mxu0 0.0
        %378 = vmatpush2.xpose.msra.mxu0 0.0
        %379 = vmatprep.subr.mxu0 0.0
        %380 = vmatpush2.xpose.msra.mxu0 0.0
        %381 = vmatprep.subr.mxu0 0.0
        %382 = vmatpush2.xpose.msra.mxu0 0.0
        %383 = vmatprep.subr.mxu0 0.0
        %384 = vmatpush2.xpose.msra.mxu0 0.0
        %385 = vmatprep.subr.mxu0 0.0
        %386 = vmatpush2.xpose.msra.mxu0 0.0
        %387 = vmatprep.subr.mxu0 0.0
        %388 = vmatpush2.xpose.msra.mxu0 0.0
        %389 = vmatprep.subr.mxu0 0.0
        %390 = vmatpush2.xpose.msra.mxu0 0.0
        %391 = vmatprep.subr.mxu0 0.0
        %392 = vmatpush2.xpose.msra.mxu0 0.0
        %393 = vmatprep.subr.mxu0 0.0
        %394 = vmatpush2.xpose.msra.mxu0 0.0
        %395 = vmatprep.subr.mxu0 0.0
        %396 = vmatpush2.xpose.msra.mxu0 0.0
        %397 = vmatprep.subr.mxu0 0.0
        %398 = vmatpush2.xpose.msra.mxu0 0.0
        %399 = vmatprep.subr.mxu0 0.0
        %400 = vmatpush2.xpose.msra.mxu0 0.0
        %401 = vmatprep.mubr.f32.mxu0 0.0
        %402 = vmatmul.mubr.f32.gmra.mxu0 %v332
        %v403 = vpop.f32.mrf.mxu0
        %v404 = vadd.f32 0.0, %v403
        %v405 = vpop.f32.mrf.mxu0
        %406 = vdwg.mxu0
        %v408 = vsel %vm330, %v319, 0
        %v411 = vsel %vm330, %v323, 0
        %413 = vmatprep.subr.mxu0 0.0
        %414 = vmatpush1.xpose.msra.mxu0 0.0
        %415 = vmatprep.subr.mxu0 0.0
        %416 = vmatpush1.xpose.msra.mxu0 0.0
        %417 = vmatprep.subr.mxu0 0.0
        %418 = vmatpush1.xpose.msra.mxu0 0.0
        %419 = vmatprep.subr.mxu0 0.0
        %420 = vmatpush1.xpose.msra.mxu0 0.0
        %421 = vmatprep.subr.mxu0 0.0
        %422 = vmatpush1.xpose.msra.mxu0 0.0
        %423 = vmatprep.subr.mxu0 0.0
        %424 = vmatpush1.xpose.msra.mxu0 0.0
        %425 = vmatprep.subr.mxu0 0.0
        %426 = vmatpush1.xpose.msra.mxu0 0.0
        %427 = vmatprep.subr.mxu0 0.0
        %428 = vmatpush1.xpose.msra.mxu0 0.0
        %429 = vmatprep.subr.mxu0 0.0
        %430 = vmatpush1.xpose.msra.mxu0 0.0
        %431 = vmatprep.subr.mxu0 0.0
        %432 = vmatpush1.xpose.msra.mxu0 0.0
        %433 = vmatprep.subr.mxu0 0.0
        %434 = vmatpush1.xpose.msra.mxu0 0.0
        %435 = vmatprep.subr.mxu0 0.0
        %436 = vmatpush1.xpose.msra.mxu0 0.0
        %437 = vmatprep.subr.mxu0 0.0
        %438 = vmatpush1.xpose.msra.mxu0 0.0
        %439 = vmatprep.subr.mxu0 0.0
        %440 = vmatpush1.xpose.msra.mxu0 0.0
        %441 = vmatprep.subr.mxu0 0.0
        %442 = vmatpush1.xpose.msra.mxu0 0.0
        %443 = vmatprep.subr.mxu0 0.0
        %444 = vmatpush1.xpose.msra.mxu0 %v411
        %445 = vmatprep.subr.mxu0 0.0
        %446 = vmatpush2.xpose.msra.mxu0 0.0
        %447 = vmatprep.subr.mxu0 0.0
        %448 = vmatpush2.xpose.msra.mxu0 0.0
        %449 = vmatprep.subr.mxu0 0.0
        %450 = vmatpush2.xpose.msra.mxu0 0.0
        %451 = vmatprep.subr.mxu0 0.0
        %452 = vmatpush2.xpose.msra.mxu0 0.0
        %453 = vmatprep.subr.mxu0 0.0
        %454 = vmatpush2.xpose.msra.mxu0 0.0
        %455 = vmatprep.subr.mxu0 0.0
        %456 = vmatpush2.xpose.msra.mxu0 0.0
        %457 = vmatprep.subr.mxu0 0.0
        %458 = vmatpush2.xpose.msra.mxu0 0.0
        %459 = vmatprep.subr.mxu0 0.0
        %460 = vmatpush2.xpose.msra.mxu0 0.0
        %461 = vmatprep.subr.mxu0 0.0
        %462 = vmatpush2.xpose.msra.mxu0 0.0
        %463 = vmatprep.subr.mxu0 0.0
        %464 = vmatpush2.xpose.msra.mxu0 0.0
        %465 = vmatprep.subr.mxu0 0.0
        %466 = vmatpush2.xpose.msra.mxu0 0.0
        %467 = vmatprep.subr.mxu0 0.0
        %468 = vmatpush2.xpose.msra.mxu0 0.0
        %469 = vmatprep.subr.mxu0 0.0
        %470 = vmatpush2.xpose.msra.mxu0 0.0
        %471 = vmatprep.subr.mxu0 0.0
        %472 = vmatpush2.xpose.msra.mxu0 0.0
        %473 = vmatprep.subr.mxu0 0.0
        %474 = vmatpush2.xpose.msra.mxu0 0.0
        %475 = vmatprep.subr.mxu0 0.0
        %476 = vmatpush2.xpose.msra.mxu0 0.0
        %477 = vmatprep.mubr.f32.mxu0 0.0
        %478 = vmatmul.mubr.f32.gmra.mxu0 %v408
        %v479 = vpop.f32.mrf.mxu0
        %v480 = vadd.f32 0.0, %v479
        %v481 = vpop.f32.mrf.mxu0
        %482 = vdwg.mxu0
        %v484 = vsel %vm330, %v320, 0
        %v487 = vsel %vm330, %v324, 0
        %489 = vmatprep.subr.mxu0 0.0
        %490 = vmatpush1.xpose.msra.mxu0 0.0
        %491 = vmatprep.subr.mxu0 0.0
        %492 = vmatpush1.xpose.msra.mxu0 0.0
        %493 = vmatprep.subr.mxu0 0.0
        %494 = vmatpush1.xpose.msra.mxu0 0.0
        %495 = vmatprep.subr.mxu0 0.0
        %496 = vmatpush1.xpose.msra.mxu0 0.0
        %497 = vmatprep.subr.mxu0 0.0
        %498 = vmatpush1.xpose.msra.mxu0 0.0
        %499 = vmatprep.subr.mxu0 0.0
        %500 = vmatpush1.xpose.msra.mxu0 0.0
        %501 = vmatprep.subr.mxu0 0.0
        %502 = vmatpush1.xpose.msra.mxu0 0.0
        %503 = vmatprep.subr.mxu0 0.0
        %504 = vmatpush1.xpose.msra.mxu0 0.0
        %505 = vmatprep.subr.mxu0 0.0
        %506 = vmatpush1.xpose.msra.mxu0 0.0
        %507 = vmatprep.subr.mxu0 0.0
        %508 = vmatpush1.xpose.msra.mxu0 0.0
        %509 = vmatprep.subr.mxu0 0.0
        %510 = vmatpush1.xpose.msra.mxu0 0.0
        %511 = vmatprep.subr.mxu0 0.0
        %512 = vmatpush1.xpose.msra.mxu0 0.0
        %513 = vmatprep.subr.mxu0 0.0
        %514 = vmatpush1.xpose.msra.mxu0 0.0
        %515 = vmatprep.subr.mxu0 0.0
        %516 = vmatpush1.xpose.msra.mxu0 0.0
        %517 = vmatprep.subr.mxu0 0.0
        %518 = vmatpush1.xpose.msra.mxu0 0.0
        %519 = vmatprep.subr.mxu0 0.0
        %520 = vmatpush1.xpose.msra.mxu0 %v487
        %521 = vmatprep.subr.mxu0 0.0
        %522 = vmatpush2.xpose.msra.mxu0 0.0
        %523 = vmatprep.subr.mxu0 0.0
        %524 = vmatpush2.xpose.msra.mxu0 0.0
        %525 = vmatprep.subr.mxu0 0.0
        %526 = vmatpush2.xpose.msra.mxu0 0.0
        %527 = vmatprep.subr.mxu0 0.0
        %528 = vmatpush2.xpose.msra.mxu0 0.0
        %529 = vmatprep.subr.mxu0 0.0
        %530 = vmatpush2.xpose.msra.mxu0 0.0
        %531 = vmatprep.subr.mxu0 0.0
        %532 = vmatpush2.xpose.msra.mxu0 0.0
        %533 = vmatprep.subr.mxu0 0.0
        %534 = vmatpush2.xpose.msra.mxu0 0.0
        %535 = vmatprep.subr.mxu0 0.0
        %536 = vmatpush2.xpose.msra.mxu0 0.0
        %537 = vmatprep.subr.mxu0 0.0
        %538 = vmatpush2.xpose.msra.mxu0 0.0
        %539 = vmatprep.subr.mxu0 0.0
        %540 = vmatpush2.xpose.msra.mxu0 0.0
        %541 = vmatprep.subr.mxu0 0.0
        %542 = vmatpush2.xpose.msra.mxu0 0.0
        %543 = vmatprep.subr.mxu0 0.0
        %544 = vmatpush2.xpose.msra.mxu0 0.0
        %545 = vmatprep.subr.mxu0 0.0
        %546 = vmatpush2.xpose.msra.mxu0 0.0
        %547 = vmatprep.subr.mxu0 0.0
        %548 = vmatpush2.xpose.msra.mxu0 0.0
        %549 = vmatprep.subr.mxu0 0.0
        %550 = vmatpush2.xpose.msra.mxu0 0.0
        %551 = vmatprep.subr.mxu0 0.0
        %552 = vmatpush2.xpose.msra.mxu0 0.0
        %553 = vmatprep.mubr.f32.mxu0 0.0
        %554 = vmatmul.mubr.f32.gmra.mxu0 %v484
        %v555 = vpop.f32.mrf.mxu0
        %v556 = vadd.f32 0.0, %v555
        %v557 = vpop.f32.mrf.mxu0
        %558 = vdwg.mxu0
        %v560 = vsel %vm330, %v321, 0
        %v563 = vsel %vm330, %v325, 0
        %565 = vmatprep.subr.mxu0 0.0
        %566 = vmatpush1.xpose.msra.mxu0 0.0
        %567 = vmatprep.subr.mxu0 0.0
        %568 = vmatpush1.xpose.msra.mxu0 0.0
        %569 = vmatprep.subr.mxu0 0.0
        %570 = vmatpush1.xpose.msra.mxu0 0.0
        %571 = vmatprep.subr.mxu0 0.0
        %572 = vmatpush1.xpose.msra.mxu0 0.0
        %573 = vmatprep.subr.mxu0 0.0
        %574 = vmatpush1.xpose.msra.mxu0 0.0
        %575 = vmatprep.subr.mxu0 0.0
        %576 = vmatpush1.xpose.msra.mxu0 0.0
        %577 = vmatprep.subr.mxu0 0.0
        %578 = vmatpush1.xpose.msra.mxu0 0.0
        %579 = vmatprep.subr.mxu0 0.0
        %580 = vmatpush1.xpose.msra.mxu0 0.0
        %581 = vmatprep.subr.mxu0 0.0
        %582 = vmatpush1.xpose.msra.mxu0 0.0
        %583 = vmatprep.subr.mxu0 0.0
        %584 = vmatpush1.xpose.msra.mxu0 0.0
        %585 = vmatprep.subr.mxu0 0.0
        %586 = vmatpush1.xpose.msra.mxu0 0.0
        %587 = vmatprep.subr.mxu0 0.0
        %588 = vmatpush1.xpose.msra.mxu0 0.0
        %589 = vmatprep.subr.mxu0 0.0
        %590 = vmatpush1.xpose.msra.mxu0 0.0
        %591 = vmatprep.subr.mxu0 0.0
        %592 = vmatpush1.xpose.msra.mxu0 0.0
        %593 = vmatprep.subr.mxu0 0.0
        %594 = vmatpush1.xpose.msra.mxu0 0.0
        %595 = vmatprep.subr.mxu0 0.0
        %596 = vmatpush1.xpose.msra.mxu0 %v563
        %597 = vmatprep.subr.mxu0 0.0
        %598 = vmatpush2.xpose.msra.mxu0 0.0
        %599 = vmatprep.subr.mxu0 0.0
        %600 = vmatpush2.xpose.msra.mxu0 0.0
        %601 = vmatprep.subr.mxu0 0.0
        %602 = vmatpush2.xpose.msra.mxu0 0.0
        %603 = vmatprep.subr.mxu0 0.0
        %604 = vmatpush2.xpose.msra.mxu0 0.0
        %605 = vmatprep.subr.mxu0 0.0
        %606 = vmatpush2.xpose.msra.mxu0 0.0
        %607 = vmatprep.subr.mxu0 0.0
        %608 = vmatpush2.xpose.msra.mxu0 0.0
        %609 = vmatprep.subr.mxu0 0.0
        %610 = vmatpush2.xpose.msra.mxu0 0.0
        %611 = vmatprep.subr.mxu0 0.0
        %612 = vmatpush2.xpose.msra.mxu0 0.0
        %613 = vmatprep.subr.mxu0 0.0
        %614 = vmatpush2.xpose.msra.mxu0 0.0
        %615 = vmatprep.subr.mxu0 0.0
        %616 = vmatpush2.xpose.msra.mxu0 0.0
        %617 = vmatprep.subr.mxu0 0.0
        %618 = vmatpush2.xpose.msra.mxu0 0.0
        %619 = vmatprep.subr.mxu0 0.0
        %620 = vmatpush2.xpose.msra.mxu0 0.0
        %621 = vmatprep.subr.mxu0 0.0
        %622 = vmatpush2.xpose.msra.mxu0 0.0
        %623 = vmatprep.subr.mxu0 0.0
        %624 = vmatpush2.xpose.msra.mxu0 0.0
        %625 = vmatprep.subr.mxu0 0.0
        %626 = vmatpush2.xpose.msra.mxu0 0.0
        %627 = vmatprep.subr.mxu0 0.0
        %628 = vmatpush2.xpose.msra.mxu0 0.0
        %629 = vmatprep.mubr.f32.mxu0 0.0
        %630 = vmatmul.mubr.f32.gmra.mxu0 %v560
        %v631 = vpop.f32.mrf.mxu0
        %v632 = vadd.f32 0.0, %v631
        %v633 = vpop.f32.mrf.mxu0
        %634 = vdwg.mxu0
        %v635 = vlaneseq
        %v636 = vshrl.u32 %v635, 7
        %s637 = smul.u32 %s21, 2
        %v638 = vstv %s637
        %v639 = vadd.s32 %v636, %v638
        %v640 = vlaneseq
        %v641 = vand.u32 %v640, 127
        %s642 = smul.u32 %s22, 2
        %v643 = vstv %s642
        %v644 = vadd.s32 %v641, %v643
        %vm645 = vcmp.le.s32.totalorder %v644, %v639
        %v646 = vsel %vm645, 1, 0
        %vm647 = vcmp.eq.s32.totalorder %v646, 1
        %v648 = vsel %vm647, %v404, -1e+30
        %v649 = vsel %vm647, %v480, -1e+30
        %v650 = vsel %vm647, %v556, -1e+30
        %v651 = vsel %vm647, %v632, -1e+30
        %v652 = vld [vmem:[#allocation2] sm:$0x3]
        %v653 = vld [vmem:[#allocation2 + $0x2] sm:$0x3]
        %v654 = vld [vmem:[#allocation2 + $0x4] sm:$0x3]
        %v655 = vld [vmem:[#allocation2 + $0x6] sm:$0x3]
        %vm656 = vcmask 9216
        %v657 = vsel %vm656, %v648, -inf
        %658 = vmax.xlane.f32.xlu0 %v657
        %v659 = vpop.xlane.xlu0 %658
        %v660 = vsel %vm656, %v649, -inf
        %661 = vmax.xlane.f32.xlu0 %v660
        %v662 = vpop.xlane.xlu0 %661
        %v663 = vsel %vm656, %v650, -inf
        %664 = vmax.xlane.f32.xlu0 %v663
        %v665 = vpop.xlane.xlu0 %664
        %v666 = vsel %vm656, %v651, -inf
        %667 = vmax.xlane.f32.xlu0 %v666
        %v668 = vpop.xlane.xlu0 %667
        %v669 = vmax.f32 %v652, %v659
        %v670 = vmax.f32 %v653, %v662
        %v671 = vmax.f32 %v654, %v665
        %v672 = vmax.f32 %v655, %v668
        %v673 = vsub.f32 %v652, %v669
        %v674 = vsub.f32 %v653, %v670
        %v675 = vsub.f32 %v654, %v671
        %v676 = vsub.f32 %v655, %v672
        %v677 = vmul.f32 %v673, 1.442695
        %v678 = vpow.pop %v677
        %v679 = vmul.f32 %v674, 1.442695
        %v680 = vpow.pop %v679
        %v681 = vmul.f32 %v675, 1.442695
        %v682 = vpow.pop %v681
        %v683 = vmul.f32 %v676, 1.442695
        %v684 = vpow.pop %v683
        %686 = vset.pattern.permute.xlu0 0
        %687 = vperm.xlu0 %686, %v669
        %v688 = vpop.permute.xlu0 %687
        %691 = vset.pattern.permute.xlu0 0
        %692 = vperm.xlu0 %691, %v670
        %v693 = vpop.permute.xlu0 %692
        %696 = vset.pattern.permute.xlu0 0
        %697 = vperm.xlu0 %696, %v671
        %v698 = vpop.permute.xlu0 %697
        %701 = vset.pattern.permute.xlu0 0
        %702 = vperm.xlu0 %701, %v672
        %v703 = vpop.permute.xlu0 %702
        %v705 = vsub.f32 %v648, %v688
        %v706 = vsub.f32 %v649, %v693
        %v707 = vsub.f32 %v650, %v698
        %v708 = vsub.f32 %v651, %v703
        %v709 = vmul.f32 %v705, 1.442695
        %v710 = vpow.pop %v709
        %v711 = vmul.f32 %v706, 1.442695
        %v712 = vpow.pop %v711
        %v713 = vmul.f32 %v707, 1.442695
        %v714 = vpow.pop %v713
        %v715 = vmul.f32 %v708, 1.442695
        %v716 = vpow.pop %v715
        %v717 = vld [vmem:[#allocation3] sm:$0x3]
        %v718 = vld [vmem:[#allocation3 + $0x2] sm:$0x3]
        %v719 = vld [vmem:[#allocation3 + $0x4] sm:$0x3]
        %v720 = vld [vmem:[#allocation3 + $0x6] sm:$0x3]
        %v721 = vmul.f32 %v678, %v717
        %v722 = vmul.f32 %v680, %v718
        %v723 = vmul.f32 %v682, %v719
        %v724 = vmul.f32 %v684, %v720
        %v725 = vsel %vm656, %v710, 0.0
        %726 = vadd.xlane.f32.xlu0 %v725
        %v727 = vpop.xlane.xlu0 %726
        %v728 = vsel %vm656, %v712, 0.0
        %729 = vadd.xlane.f32.xlu0 %v728
        %v730 = vpop.xlane.xlu0 %729
        %v731 = vsel %vm656, %v714, 0.0
        %732 = vadd.xlane.f32.xlu0 %v731
        %v733 = vpop.xlane.xlu0 %732
        %v734 = vsel %vm656, %v716, 0.0
        %735 = vadd.xlane.f32.xlu0 %v734
        %v736 = vpop.xlane.xlu0 %735
        %v737 = vadd.f32 %v721, %v727
        %v738 = vadd.f32 %v722, %v730
        %v739 = vadd.f32 %v723, %v733
        %v740 = vadd.f32 %v724, %v736
        %vm741 = vcmask 1024
        %742 = vst.msk [vmem:[#allocation3] sm:$0x3] %vm741, %v737
        %743 = vst.msk [vmem:[#allocation3 + $0x2] sm:$0x3] %vm741, %v738
        %744 = vst.msk [vmem:[#allocation3 + $0x4] sm:$0x3] %vm741, %v739
        %745 = vst.msk [vmem:[#allocation3 + $0x6] sm:$0x3] %vm741, %v740
        %v746 = vld [vmem:[#allocation4] sm:$0x3]
        %v747 = vld [vmem:[#allocation4 + $0x2] sm:$0x3]
        %v748 = vld [vmem:[#allocation4 + $0x4] sm:$0x3]
        %v749 = vld [vmem:[#allocation4 + $0x6] sm:$0x3]
        %751 = vset.pattern.permute.xlu0 0
        %752 = vperm.xlu0 %751, %v678
        %v753 = vpop.permute.xlu0 %752
        %756 = vset.pattern.permute.xlu0 0
        %757 = vperm.xlu0 %756, %v680
        %v758 = vpop.permute.xlu0 %757
        %761 = vset.pattern.permute.xlu0 0
        %762 = vperm.xlu0 %761, %v682
        %v763 = vpop.permute.xlu0 %762
        %766 = vset.pattern.permute.xlu0 0
        %767 = vperm.xlu0 %766, %v684
        %v768 = vpop.permute.xlu0 %767
        %v770 = vmul.f32 %v753, %v746
        %v771 = vmul.f32 %v758, %v747
        %v772 = vmul.f32 %v763, %v748
        %v773 = vmul.f32 %v768, %v749
        %vm774 = vcmask 15360
        %v776 = vsel %vm774, %v710, 0
        %vm778 = vcmask 1041408
        %v780 = vsel %vm778, %v326, 0
        %782 = vmatprep.subr.mxu0 0.0
        %783 = vmatpush1.msra.mxu0 0.0
        %784 = vmatprep.subr.mxu0 0.0
        %785 = vmatpush1.msra.mxu0 0.0
        %786 = vmatprep.subr.mxu0 0.0
        %787 = vmatpush1.msra.mxu0 0.0
        %788 = vmatprep.subr.mxu0 0.0
        %789 = vmatpush1.msra.mxu0 0.0
        %790 = vmatprep.subr.mxu0 0.0
        %791 = vmatpush1.msra.mxu0 0.0
        %792 = vmatprep.subr.mxu0 0.0
        %793 = vmatpush1.msra.mxu0 0.0
        %794 = vmatprep.subr.mxu0 0.0
        %795 = vmatpush1.msra.mxu0 0.0
        %796 = vmatprep.subr.mxu0 0.0
        %797 = vmatpush1.msra.mxu0 0.0
        %798 = vmatprep.subr.mxu0 0.0
        %799 = vmatpush1.msra.mxu0 0.0
        %800 = vmatprep.subr.mxu0 0.0
        %801 = vmatpush1.msra.mxu0 0.0
        %802 = vmatprep.subr.mxu0 0.0
        %803 = vmatpush1.msra.mxu0 0.0
        %804 = vmatprep.subr.mxu0 0.0
        %805 = vmatpush1.msra.mxu0 0.0
        %806 = vmatprep.subr.mxu0 0.0
        %807 = vmatpush1.msra.mxu0 0.0
        %808 = vmatprep.subr.mxu0 0.0
        %809 = vmatpush1.msra.mxu0 0.0
        %810 = vmatprep.subr.mxu0 0.0
        %811 = vmatpush1.msra.mxu0 0.0
        %812 = vmatprep.subr.mxu0 0.0
        %813 = vmatpush1.msra.mxu0 %v780
        %814 = vmatprep.subr.mxu0 0.0
        %815 = vmatpush2.msra.mxu0 0.0
        %816 = vmatprep.subr.mxu0 0.0
        %817 = vmatpush2.msra.mxu0 0.0
        %818 = vmatprep.subr.mxu0 0.0
        %819 = vmatpush2.msra.mxu0 0.0
        %820 = vmatprep.subr.mxu0 0.0
        %821 = vmatpush2.msra.mxu0 0.0
        %822 = vmatprep.subr.mxu0 0.0
        %823 = vmatpush2.msra.mxu0 0.0
        %824 = vmatprep.subr.mxu0 0.0
        %825 = vmatpush2.msra.mxu0 0.0
        %826 = vmatprep.subr.mxu0 0.0
        %827 = vmatpush2.msra.mxu0 0.0
        %828 = vmatprep.subr.mxu0 0.0
        %829 = vmatpush2.msra.mxu0 0.0
        %830 = vmatprep.subr.mxu0 0.0
        %831 = vmatpush2.msra.mxu0 0.0
        %832 = vmatprep.subr.mxu0 0.0
        %833 = vmatpush2.msra.mxu0 0.0
        %834 = vmatprep.subr.mxu0 0.0
        %835 = vmatpush2.msra.mxu0 0.0
        %836 = vmatprep.subr.mxu0 0.0
        %837 = vmatpush2.msra.mxu0 0.0
        %838 = vmatprep.subr.mxu0 0.0
        %839 = vmatpush2.msra.mxu0 0.0
        %840 = vmatprep.subr.mxu0 0.0
        %841 = vmatpush2.msra.mxu0 0.0
        %842 = vmatprep.subr.mxu0 0.0
        %843 = vmatpush2.msra.mxu0 0.0
        %844 = vmatprep.subr.mxu0 0.0
        %845 = vmatpush2.msra.mxu0 0.0
        %846 = vmatprep.mubr.f32.mxu0 0.0
        %847 = vmatmul.mubr.f32.gmra.mxu0 %v776
        %v848 = vpop.f32.mrf.mxu0
        %v849 = vadd.f32 0.0, %v848
        %v850 = vpop.f32.mrf.mxu0
        %851 = vdwg.mxu0
        %v853 = vsel %vm774, %v712, 0
        %v856 = vsel %vm778, %v327, 0
        %858 = vmatprep.subr.mxu0 0.0
        %859 = vmatpush1.msra.mxu0 0.0
        %860 = vmatprep.subr.mxu0 0.0
        %861 = vmatpush1.msra.mxu0 0.0
        %862 = vmatprep.subr.mxu0 0.0
        %863 = vmatpush1.msra.mxu0 0.0
        %864 = vmatprep.subr.mxu0 0.0
        %865 = vmatpush1.msra.mxu0 0.0
        %866 = vmatprep.subr.mxu0 0.0
        %867 = vmatpush1.msra.mxu0 0.0
        %868 = vmatprep.subr.mxu0 0.0
        %869 = vmatpush1.msra.mxu0 0.0
        %870 = vmatprep.subr.mxu0 0.0
        %871 = vmatpush1.msra.mxu0 0.0
        %872 = vmatprep.subr.mxu0 0.0
        %873 = vmatpush1.msra.mxu0 0.0
        %874 = vmatprep.subr.mxu0 0.0
        %875 = vmatpush1.msra.mxu0 0.0
        %876 = vmatprep.subr.mxu0 0.0
        %877 = vmatpush1.msra.mxu0 0.0
        %878 = vmatprep.subr.mxu0 0.0
        %879 = vmatpush1.msra.mxu0 0.0
        %880 = vmatprep.subr.mxu0 0.0
        %881 = vmatpush1.msra.mxu0 0.0
        %882 = vmatprep.subr.mxu0 0.0
        %883 = vmatpush1.msra.mxu0 0.0
        %884 = vmatprep.subr.mxu0 0.0
        %885 = vmatpush1.msra.mxu0 0.0
        %886 = vmatprep.subr.mxu0 0.0
        %887 = vmatpush1.msra.mxu0 0.0
        %888 = vmatprep.subr.mxu0 0.0
        %889 = vmatpush1.msra.mxu0 %v856
        %890 = vmatprep.subr.mxu0 0.0
        %891 = vmatpush2.msra.mxu0 0.0
        %892 = vmatprep.subr.mxu0 0.0
        %893 = vmatpush2.msra.mxu0 0.0
        %894 = vmatprep.subr.mxu0 0.0
        %895 = vmatpush2.msra.mxu0 0.0
        %896 = vmatprep.subr.mxu0 0.0
        %897 = vmatpush2.msra.mxu0 0.0
        %898 = vmatprep.subr.mxu0 0.0
        %899 = vmatpush2.msra.mxu0 0.0
        %900 = vmatprep.subr.mxu0 0.0
        %901 = vmatpush2.msra.mxu0 0.0
        %902 = vmatprep.subr.mxu0 0.0
        %903 = vmatpush2.msra.mxu0 0.0
        %904 = vmatprep.subr.mxu0 0.0
        %905 = vmatpush2.msra.mxu0 0.0
        %906 = vmatprep.subr.mxu0 0.0
        %907 = vmatpush2.msra.mxu0 0.0
        %908 = vmatprep.subr.mxu0 0.0
        %909 = vmatpush2.msra.mxu0 0.0
        %910 = vmatprep.subr.mxu0 0.0
        %911 = vmatpush2.msra.mxu0 0.0
        %912 = vmatprep.subr.mxu0 0.0
        %913 = vmatpush2.msra.mxu0 0.0
        %914 = vmatprep.subr.mxu0 0.0
        %915 = vmatpush2.msra.mxu0 0.0
        %916 = vmatprep.subr.mxu0 0.0
        %917 = vmatpush2.msra.mxu0 0.0
        %918 = vmatprep.subr.mxu0 0.0
        %919 = vmatpush2.msra.mxu0 0.0
        %920 = vmatprep.subr.mxu0 0.0
        %921 = vmatpush2.msra.mxu0 0.0
        %922 = vmatprep.mubr.f32.mxu0 0.0
        %923 = vmatmul.mubr.f32.gmra.mxu0 %v853
        %v924 = vpop.f32.mrf.mxu0
        %v925 = vadd.f32 0.0, %v924
        %v926 = vpop.f32.mrf.mxu0
        %927 = vdwg.mxu0
        %v929 = vsel %vm774, %v714, 0
        %v932 = vsel %vm778, %v328, 0
        %934 = vmatprep.subr.mxu0 0.0
        %935 = vmatpush1.msra.mxu0 0.0
        %936 = vmatprep.subr.mxu0 0.0
        %937 = vmatpush1.msra.mxu0 0.0
        %938 = vmatprep.subr.mxu0 0.0
        %939 = vmatpush1.msra.mxu0 0.0
        %940 = vmatprep.subr.mxu0 0.0
        %941 = vmatpush1.msra.mxu0 0.0
        %942 = vmatprep.subr.mxu0 0.0
        %943 = vmatpush1.msra.mxu0 0.0
        %944 = vmatprep.subr.mxu0 0.0
        %945 = vmatpush1.msra.mxu0 0.0
        %946 = vmatprep.subr.mxu0 0.0
        %947 = vmatpush1.msra.mxu0 0.0
        %948 = vmatprep.subr.mxu0 0.0
        %949 = vmatpush1.msra.mxu0 0.0
        %950 = vmatprep.subr.mxu0 0.0
        %951 = vmatpush1.msra.mxu0 0.0
        %952 = vmatprep.subr.mxu0 0.0
        %953 = vmatpush1.msra.mxu0 0.0
        %954 = vmatprep.subr.mxu0 0.0
        %955 = vmatpush1.msra.mxu0 0.0
        %956 = vmatprep.subr.mxu0 0.0
        %957 = vmatpush1.msra.mxu0 0.0
        %958 = vmatprep.subr.mxu0 0.0
        %959 = vmatpush1.msra.mxu0 0.0
        %960 = vmatprep.subr.mxu0 0.0
        %961 = vmatpush1.msra.mxu0 0.0
        %962 = vmatprep.subr.mxu0 0.0
        %963 = vmatpush1.msra.mxu0 0.0
        %964 = vmatprep.subr.mxu0 0.0
        %965 = vmatpush1.msra.mxu0 %v932
        %966 = vmatprep.subr.mxu0 0.0
        %967 = vmatpush2.msra.mxu0 0.0
        %968 = vmatprep.subr.mxu0 0.0
        %969 = vmatpush2.msra.mxu0 0.0
        %970 = vmatprep.subr.mxu0 0.0
        %971 = vmatpush2.msra.mxu0 0.0
        %972 = vmatprep.subr.mxu0 0.0
        %973 = vmatpush2.msra.mxu0 0.0
        %974 = vmatprep.subr.mxu0 0.0
        %975 = vmatpush2.msra.mxu0 0.0
        %976 = vmatprep.subr.mxu0 0.0
        %977 = vmatpush2.msra.mxu0 0.0
        %978 = vmatprep.subr.mxu0 0.0
        %979 = vmatpush2.msra.mxu0 0.0
        %980 = vmatprep.subr.mxu0 0.0
        %981 = vmatpush2.msra.mxu0 0.0
        %982 = vmatprep.subr.mxu0 0.0
        %983 = vmatpush2.msra.mxu0 0.0
        %984 = vmatprep.subr.mxu0 0.0
        %985 = vmatpush2.msra.mxu0 0.0
        %986 = vmatprep.subr.mxu0 0.0
        %987 = vmatpush2.msra.mxu0 0.0
        %988 = vmatprep.subr.mxu0 0.0
        %989 = vmatpush2.msra.mxu0 0.0
        %990 = vmatprep.subr.mxu0 0.0
        %991 = vmatpush2.msra.mxu0 0.0
        %992 = vmatprep.subr.mxu0 0.0
        %993 = vmatpush2.msra.mxu0 0.0
        %994 = vmatprep.subr.mxu0 0.0
        %995 = vmatpush2.msra.mxu0 0.0
        %996 = vmatprep.subr.mxu0 0.0
        %997 = vmatpush2.msra.mxu0 0.0
        %998 = vmatprep.mubr.f32.mxu0 0.0
        %999 = vmatmul.mubr.f32.gmra.mxu0 %v929
        %v1000 = vpop.f32.mrf.mxu0
        %v1001 = vadd.f32 0.0, %v1000
        %v1002 = vpop.f32.mrf.mxu0
        %1003 = vdwg.mxu0
        %v1005 = vsel %vm774, %v716, 0
        %v1008 = vsel %vm778, %v329, 0
        %1010 = vmatprep.subr.mxu0 0.0
        %1011 = vmatpush1.msra.mxu0 0.0
        %1012 = vmatprep.subr.mxu0 0.0
        %1013 = vmatpush1.msra.mxu0 0.0
        %1014 = vmatprep.subr.mxu0 0.0
        %1015 = vmatpush1.msra.mxu0 0.0
        %1016 = vmatprep.subr.mxu0 0.0
        %1017 = vmatpush1.msra.mxu0 0.0
        %1018 = vmatprep.subr.mxu0 0.0
        %1019 = vmatpush1.msra.mxu0 0.0
        %1020 = vmatprep.subr.mxu0 0.0
        %1021 = vmatpush1.msra.mxu0 0.0
        %1022 = vmatprep.subr.mxu0 0.0
        %1023 = vmatpush1.msra.mxu0 0.0
        %1024 = vmatprep.subr.mxu0 0.0
        %1025 = vmatpush1.msra.mxu0 0.0
        %1026 = vmatprep.subr.mxu0 0.0
        %1027 = vmatpush1.msra.mxu0 0.0
        %1028 = vmatprep.subr.mxu0 0.0
        %1029 = vmatpush1.msra.mxu0 0.0
        %1030 = vmatprep.subr.mxu0 0.0
        %1031 = vmatpush1.msra.mxu0 0.0
        %1032 = vmatprep.subr.mxu0 0.0
        %1033 = vmatpush1.msra.mxu0 0.0
        %1034 = vmatprep.subr.mxu0 0.0
        %1035 = vmatpush1.msra.mxu0 0.0
        %1036 = vmatprep.subr.mxu0 0.0
        %1037 = vmatpush1.msra.mxu0 0.0
        %1038 = vmatprep.subr.mxu0 0.0
        %1039 = vmatpush1.msra.mxu0 0.0
        %1040 = vmatprep.subr.mxu0 0.0
        %1041 = vmatpush1.msra.mxu0 %v1008
        %1042 = vmatprep.subr.mxu0 0.0
        %1043 = vmatpush2.msra.mxu0 0.0
        %1044 = vmatprep.subr.mxu0 0.0
        %1045 = vmatpush2.msra.mxu0 0.0
        %1046 = vmatprep.subr.mxu0 0.0
        %1047 = vmatpush2.msra.mxu0 0.0
        %1048 = vmatprep.subr.mxu0 0.0
        %1049 = vmatpush2.msra.mxu0 0.0
        %1050 = vmatprep.subr.mxu0 0.0
        %1051 = vmatpush2.msra.mxu0 0.0
        %1052 = vmatprep.subr.mxu0 0.0
        %1053 = vmatpush2.msra.mxu0 0.0
        %1054 = vmatprep.subr.mxu0 0.0
        %1055 = vmatpush2.msra.mxu0 0.0
        %1056 = vmatprep.subr.mxu0 0.0
        %1057 = vmatpush2.msra.mxu0 0.0
        %1058 = vmatprep.subr.mxu0 0.0
        %1059 = vmatpush2.msra.mxu0 0.0
        %1060 = vmatprep.subr.mxu0 0.0
        %1061 = vmatpush2.msra.mxu0 0.0
        %1062 = vmatprep.subr.mxu0 0.0
        %1063 = vmatpush2.msra.mxu0 0.0
        %1064 = vmatprep.subr.mxu0 0.0
        %1065 = vmatpush2.msra.mxu0 0.0
        %1066 = vmatprep.subr.mxu0 0.0
        %1067 = vmatpush2.msra.mxu0 0.0
        %1068 = vmatprep.subr.mxu0 0.0
        %1069 = vmatpush2.msra.mxu0 0.0
        %1070 = vmatprep.subr.mxu0 0.0
        %1071 = vmatpush2.msra.mxu0 0.0
        %1072 = vmatprep.subr.mxu0 0.0
        %1073 = vmatpush2.msra.mxu0 0.0
        %1074 = vmatprep.mubr.f32.mxu0 0.0
        %1075 = vmatmul.mubr.f32.gmra.mxu0 %v1005
        %v1076 = vpop.f32.mrf.mxu0
        %v1077 = vadd.f32 0.0, %v1076
        %v1078 = vpop.f32.mrf.mxu0
        %1079 = vdwg.mxu0
        %v1080 = vadd.f32 %v770, %v849
        %v1081 = vadd.f32 %v771, %v925
        %v1082 = vadd.f32 %v772, %v1001
        %v1083 = vadd.f32 %v773, %v1077
        %vm1084 = vcmask 58368
        %1085 = vst.msk [vmem:[#allocation4] sm:$0x3] %vm1084, %v1080
        %1086 = vst.msk [vmem:[#allocation4 + $0x2] sm:$0x3] %vm1084, %v1081
        %1087 = vst.msk [vmem:[#allocation4 + $0x4] sm:$0x3] %vm1084, %v1082
        %1088 = vst.msk [vmem:[#allocation4 + $0x6] sm:$0x3] %vm1084, %v1083
        %1089 = vst.msk [vmem:[#allocation2] sm:$0x3] %vm741, %v669
        %1090 = vst.msk [vmem:[#allocation2 + $0x2] sm:$0x3] %vm741, %v670
        %1091 = vst.msk [vmem:[#allocation2 + $0x4] sm:$0x3] %vm741, %v671
        %1092 = vst.msk [vmem:[#allocation2 + $0x6] sm:$0x3] %vm741, %v672
      $region44: #{multi_scale_attention.11} parent=35 // pred_fallthru
        _
      // Predicated region
      $region45: #{multi_scale_attention.11} parent=35 // pred_check
        %p1093 = pneg %p296
      $region46: #{multi_scale_attention.11} parent=35 // pred_check_branch
        %1095 = sbr.rel (%p1093) target = $region48
      $region47: #{multi_scale_attention.11} parent=35 // pred_region
        %v1096 = vld [vmem:[#allocation3] sm:$0x3]
        %v1097 = vld [vmem:[#allocation3 + $0x2] sm:$0x3]
        %v1098 = vld [vmem:[#allocation3 + $0x4] sm:$0x3]
        %v1099 = vld [vmem:[#allocation3 + $0x6] sm:$0x3]
        %v1100 = vrcp.pop %v1096
        %v1101 = vrcp.pop %v1097
        %v1102 = vrcp.pop %v1098
        %v1103 = vrcp.pop %v1099
        %v1104 = vld [vmem:[#allocation4] sm:$0x3]
        %v1105 = vld [vmem:[#allocation4 + $0x2] sm:$0x3]
        %v1106 = vld [vmem:[#allocation4 + $0x4] sm:$0x3]
        %v1107 = vld [vmem:[#allocation4 + $0x6] sm:$0x3]
        %1109 = vset.pattern.permute.xlu0 0
        %1110 = vperm.xlu0 %1109, %v1100
        %v1111 = vpop.permute.xlu0 %1110
        %1114 = vset.pattern.permute.xlu0 0
        %1115 = vperm.xlu0 %1114, %v1101
        %v1116 = vpop.permute.xlu0 %1115
        %1119 = vset.pattern.permute.xlu0 0
        %1120 = vperm.xlu0 %1119, %v1102
        %v1121 = vpop.permute.xlu0 %1120
        %1124 = vset.pattern.permute.xlu0 0
        %1125 = vperm.xlu0 %1124, %v1103
        %v1126 = vpop.permute.xlu0 %1125
        %v1128 = vmul.f32 %v1104, %v1111
        %v1129 = vmul.f32 %v1105, %v1116
        %v1130 = vmul.f32 %v1106, %v1121
        %v1131 = vmul.f32 %v1107, %v1126
        %v1132 = vld [vmem:[%s3] sm:$0xff]
        %v1133 = vld [vmem:[%s3 + $0x8] sm:$0xff]
        %vm1134 = vcmask 64512
        %v1136 = vsel %vm1134, %v1129, 0
        %1138 = vmatprep.subr.mxu0 0.0
        %1139 = vmatpush1.msra.mxu0 0.0
        %1140 = vmatprep.subr.mxu0 0.0
        %1141 = vmatpush1.msra.mxu0 0.0
        %1142 = vmatprep.subr.mxu0 0.0
        %1143 = vmatpush1.msra.mxu0 0.0
        %1144 = vmatprep.subr.mxu0 0.0
        %1145 = vmatpush1.msra.mxu0 0.0
        %1146 = vmatprep.subr.mxu0 0.0
        %1147 = vmatpush1.msra.mxu0 0.0
        %1148 = vmatprep.subr.mxu0 0.0
        %1149 = vmatpush1.msra.mxu0 0.0
        %1150 = vmatprep.subr.mxu0 0.0
        %1151 = vmatpush1.msra.mxu0 0.0
        %1152 = vmatprep.subr.mxu0 0.0
        %1153 = vmatpush1.msra.mxu0 0.0
        %1154 = vmatprep.subr.mxu0 0.0
        %1155 = vmatpush1.msra.mxu0 0.0
        %1156 = vmatprep.subr.mxu0 0.0
        %1157 = vmatpush1.msra.mxu0 0.0
        %1158 = vmatprep.subr.mxu0 0.0
        %1159 = vmatpush1.msra.mxu0 0.0
        %1160 = vmatprep.subr.mxu0 0.0
        %1161 = vmatpush1.msra.mxu0 0.0
        %1162 = vmatprep.subr.mxu0 0.0
        %1163 = vmatpush1.msra.mxu0 0.0
        %1164 = vmatprep.subr.mxu0 0.0
        %1165 = vmatpush1.msra.mxu0 0.0
        %1166 = vmatprep.subr.mxu0 0.0
        %1167 = vmatpush1.msra.mxu0 0.0
        %1168 = vmatprep.subr.mxu0 0.0
        %1169 = vmatpush1.msra.mxu0 %v1133
        %1170 = vmatprep.subr.mxu0 0.0
        %1171 = vmatpush2.msra.mxu0 0.0
        %1172 = vmatprep.subr.mxu0 0.0
        %1173 = vmatpush2.msra.mxu0 0.0
        %1174 = vmatprep.subr.mxu0 0.0
        %1175 = vmatpush2.msra.mxu0 0.0
        %1176 = vmatprep.subr.mxu0 0.0
        %1177 = vmatpush2.msra.mxu0 0.0
        %1178 = vmatprep.subr.mxu0 0.0
        %1179 = vmatpush2.msra.mxu0 0.0
        %1180 = vmatprep.subr.mxu0 0.0
        %1181 = vmatpush2.msra.mxu0 0.0
        %1182 = vmatprep.subr.mxu0 0.0
        %1183 = vmatpush2.msra.mxu0 0.0
        %1184 = vmatprep.subr.mxu0 0.0
        %1185 = vmatpush2.msra.mxu0 0.0
        %1186 = vmatprep.subr.mxu0 0.0
        %1187 = vmatpush2.msra.mxu0 0.0
        %1188 = vmatprep.subr.mxu0 0.0
        %1189 = vmatpush2.msra.mxu0 0.0
        %1190 = vmatprep.subr.mxu0 0.0
        %1191 = vmatpush2.msra.mxu0 0.0
        %1192 = vmatprep.subr.mxu0 0.0
        %1193 = vmatpush2.msra.mxu0 0.0
        %1194 = vmatprep.subr.mxu0 0.0
        %1195 = vmatpush2.msra.mxu0 0.0
        %1196 = vmatprep.subr.mxu0 0.0
        %1197 = vmatpush2.msra.mxu0 0.0
        %1198 = vmatprep.subr.mxu0 0.0
        %1199 = vmatpush2.msra.mxu0 0.0
        %1200 = vmatprep.subr.mxu0 0.0
        %1201 = vmatpush2.msra.mxu0 0.0
        %1202 = vmatprep.mubr.f32.mxu0 0.0
        %1203 = vmatmul.mubr.f32.gmra.mxu0 %v1136
        %v1204 = vpop.f32.mrf.mxu0
        %v1205 = vadd.f32 0.0, %v1204
        %v1206 = vpop.f32.mrf.mxu0
        %1207 = vdwg.mxu0
        %v1209 = vsel %vm1134, %v1128, 0
        %1211 = vmatprep.subr.mxu0 0.0
        %1212 = vmatpush1.msra.mxu0 0.0
        %1213 = vmatprep.subr.mxu0 0.0
        %1214 = vmatpush1.msra.mxu0 0.0
        %1215 = vmatprep.subr.mxu0 0.0
        %1216 = vmatpush1.msra.mxu0 0.0
        %1217 = vmatprep.subr.mxu0 0.0
        %1218 = vmatpush1.msra.mxu0 0.0
        %1219 = vmatprep.subr.mxu0 0.0
        %1220 = vmatpush1.msra.mxu0 0.0
        %1221 = vmatprep.subr.mxu0 0.0
        %1222 = vmatpush1.msra.mxu0 0.0
        %1223 = vmatprep.subr.mxu0 0.0
        %1224 = vmatpush1.msra.mxu0 0.0
        %1225 = vmatprep.subr.mxu0 0.0
        %1226 = vmatpush1.msra.mxu0 0.0
        %1227 = vmatprep.subr.mxu0 0.0
        %1228 = vmatpush1.msra.mxu0 0.0
        %1229 = vmatprep.subr.mxu0 0.0
        %1230 = vmatpush1.msra.mxu0 0.0
        %1231 = vmatprep.subr.mxu0 0.0
        %1232 = vmatpush1.msra.mxu0 0.0
        %1233 = vmatprep.subr.mxu0 0.0
        %1234 = vmatpush1.msra.mxu0 0.0
        %1235 = vmatprep.subr.mxu0 0.0
        %1236 = vmatpush1.msra.mxu0 0.0
        %1237 = vmatprep.subr.mxu0 0.0
        %1238 = vmatpush1.msra.mxu0 0.0
        %1239 = vmatprep.subr.mxu0 0.0
        %1240 = vmatpush1.msra.mxu0 0.0
        %1241 = vmatprep.subr.mxu0 0.0
        %1242 = vmatpush1.msra.mxu0 %v1132
        %1243 = vmatprep.subr.mxu0 0.0
        %1244 = vmatpush2.msra.mxu0 0.0
        %1245 = vmatprep.subr.mxu0 0.0
        %1246 = vmatpush2.msra.mxu0 0.0
        %1247 = vmatprep.subr.mxu0 0.0
        %1248 = vmatpush2.msra.mxu0 0.0
        %1249 = vmatprep.subr.mxu0 0.0
        %1250 = vmatpush2.msra.mxu0 0.0
        %1251 = vmatprep.subr.mxu0 0.0
        %1252 = vmatpush2.msra.mxu0 0.0
        %1253 = vmatprep.subr.mxu0 0.0
        %1254 = vmatpush2.msra.mxu0 0.0
        %1255 = vmatprep.subr.mxu0 0.0
        %1256 = vmatpush2.msra.mxu0 0.0
        %1257 = vmatprep.subr.mxu0 0.0
        %1258 = vmatpush2.msra.mxu0 0.0
        %1259 = vmatprep.subr.mxu0 0.0
        %1260 = vmatpush2.msra.mxu0 0.0
        %1261 = vmatprep.subr.mxu0 0.0
        %1262 = vmatpush2.msra.mxu0 0.0
        %1263 = vmatprep.subr.mxu0 0.0
        %1264 = vmatpush2.msra.mxu0 0.0
        %1265 = vmatprep.subr.mxu0 0.0
        %1266 = vmatpush2.msra.mxu0 0.0
        %1267 = vmatprep.subr.mxu0 0.0
        %1268 = vmatpush2.msra.mxu0 0.0
        %1269 = vmatprep.subr.mxu0 0.0
        %1270 = vmatpush2.msra.mxu0 0.0
        %1271 = vmatprep.subr.mxu0 0.0
        %1272 = vmatpush2.msra.mxu0 0.0
        %1273 = vmatprep.subr.mxu0 0.0
        %1274 = vmatpush2.msra.mxu0 0.0
        %1275 = vmatprep.mubr.f32.mxu0 0.0
        %1276 = vmatmul.mubr.f32.gmra.mxu0 %v1209
        %v1277 = vpop.f32.mrf.mxu0
        %v1278 = vadd.f32 %v1205, %v1277
        %v1279 = vpop.f32.mrf.mxu0
        %1280 = vdwg.mxu0
        %v1281 = vld [vmem:[%s3 + $0x10] sm:$0xff]
        %v1283 = vsel %vm1134, %v1130, 0
        %1285 = vmatprep.subr.mxu0 0.0
        %1286 = vmatpush1.msra.mxu0 0.0
        %1287 = vmatprep.subr.mxu0 0.0
        %1288 = vmatpush1.msra.mxu0 0.0
        %1289 = vmatprep.subr.mxu0 0.0
        %1290 = vmatpush1.msra.mxu0 0.0
        %1291 = vmatprep.subr.mxu0 0.0
        %1292 = vmatpush1.msra.mxu0 0.0
        %1293 = vmatprep.subr.mxu0 0.0
        %1294 = vmatpush1.msra.mxu0 0.0
        %1295 = vmatprep.subr.mxu0 0.0
        %1296 = vmatpush1.msra.mxu0 0.0
        %1297 = vmatprep.subr.mxu0 0.0
        %1298 = vmatpush1.msra.mxu0 0.0
        %1299 = vmatprep.subr.mxu0 0.0
        %1300 = vmatpush1.msra.mxu0 0.0
        %1301 = vmatprep.subr.mxu0 0.0
        %1302 = vmatpush1.msra.mxu0 0.0
        %1303 = vmatprep.subr.mxu0 0.0
        %1304 = vmatpush1.msra.mxu0 0.0
        %1305 = vmatprep.subr.mxu0 0.0
        %1306 = vmatpush1.msra.mxu0 0.0
        %1307 = vmatprep.subr.mxu0 0.0
        %1308 = vmatpush1.msra.mxu0 0.0
        %1309 = vmatprep.subr.mxu0 0.0
        %1310 = vmatpush1.msra.mxu0 0.0
        %1311 = vmatprep.subr.mxu0 0.0
        %1312 = vmatpush1.msra.mxu0 0.0
        %1313 = vmatprep.subr.mxu0 0.0
        %1314 = vmatpush1.msra.mxu0 0.0
        %1315 = vmatprep.subr.mxu0 0.0
        %1316 = vmatpush1.msra.mxu0 %v1281
        %1317 = vmatprep.subr.mxu0 0.0
        %1318 = vmatpush2.msra.mxu0 0.0
        %1319 = vmatprep.subr.mxu0 0.0
        %1320 = vmatpush2.msra.mxu0 0.0
        %1321 = vmatprep.subr.mxu0 0.0
        %1322 = vmatpush2.msra.mxu0 0.0
        %1323 = vmatprep.subr.mxu0 0.0
        %1324 = vmatpush2.msra.mxu0 0.0
        %1325 = vmatprep.subr.mxu0 0.0
        %1326 = vmatpush2.msra.mxu0 0.0
        %1327 = vmatprep.subr.mxu0 0.0
        %1328 = vmatpush2.msra.mxu0 0.0
        %1329 = vmatprep.subr.mxu0 0.0
        %1330 = vmatpush2.msra.mxu0 0.0
        %1331 = vmatprep.subr.mxu0 0.0
        %1332 = vmatpush2.msra.mxu0 0.0
        %1333 = vmatprep.subr.mxu0 0.0
        %1334 = vmatpush2.msra.mxu0 0.0
        %1335 = vmatprep.subr.mxu0 0.0
        %1336 = vmatpush2.msra.mxu0 0.0
        %1337 = vmatprep.subr.mxu0 0.0
        %1338 = vmatpush2.msra.mxu0 0.0
        %1339 = vmatprep.subr.mxu0 0.0
        %1340 = vmatpush2.msra.mxu0 0.0
        %1341 = vmatprep.subr.mxu0 0.0
        %1342 = vmatpush2.msra.mxu0 0.0
        %1343 = vmatprep.subr.mxu0 0.0
        %1344 = vmatpush2.msra.mxu0 0.0
        %1345 = vmatprep.subr.mxu0 0.0
        %1346 = vmatpush2.msra.mxu0 0.0
        %1347 = vmatprep.subr.mxu0 0.0
        %1348 = vmatpush2.msra.mxu0 0.0
        %1349 = vmatprep.mubr.f32.mxu0 0.0
        %1350 = vmatmul.mubr.f32.gmra.mxu0 %v1283
        %v1351 = vpop.f32.mrf.mxu0
        %v1352 = vadd.f32 0.0, %v1351
        %v1353 = vpop.f32.mrf.mxu0
        %1354 = vdwg.mxu0
        %v1355 = vadd.f32 %v1278, %v1352
        %v1356 = vld [vmem:[%s3 + $0x18] sm:$0xff]
        %v1358 = vsel %vm1134, %v1131, 0
        %1360 = vmatprep.subr.mxu0 0.0
        %1361 = vmatpush1.msra.mxu0 0.0
        %1362 = vmatprep.subr.mxu0 0.0
        %1363 = vmatpush1.msra.mxu0 0.0
        %1364 = vmatprep.subr.mxu0 0.0
        %1365 = vmatpush1.msra.mxu0 0.0
        %1366 = vmatprep.subr.mxu0 0.0
        %1367 = vmatpush1.msra.mxu0 0.0
        %1368 = vmatprep.subr.mxu0 0.0
        %1369 = vmatpush1.msra.mxu0 0.0
        %1370 = vmatprep.subr.mxu0 0.0
        %1371 = vmatpush1.msra.mxu0 0.0
        %1372 = vmatprep.subr.mxu0 0.0
        %1373 = vmatpush1.msra.mxu0 0.0
        %1374 = vmatprep.subr.mxu0 0.0
        %1375 = vmatpush1.msra.mxu0 0.0
        %1376 = vmatprep.subr.mxu0 0.0
        %1377 = vmatpush1.msra.mxu0 0.0
        %1378 = vmatprep.subr.mxu0 0.0
        %1379 = vmatpush1.msra.mxu0 0.0
        %1380 = vmatprep.subr.mxu0 0.0
        %1381 = vmatpush1.msra.mxu0 0.0
        %1382 = vmatprep.subr.mxu0 0.0
        %1383 = vmatpush1.msra.mxu0 0.0
        %1384 = vmatprep.subr.mxu0 0.0
        %1385 = vmatpush1.msra.mxu0 0.0
        %1386 = vmatprep.subr.mxu0 0.0
        %1387 = vmatpush1.msra.mxu0 0.0
        %1388 = vmatprep.subr.mxu0 0.0
        %1389 = vmatpush1.msra.mxu0 0.0
        %1390 = vmatprep.subr.mxu0 0.0
        %1391 = vmatpush1.msra.mxu0 %v1356
        %1392 = vmatprep.subr.mxu0 0.0
        %1393 = vmatpush2.msra.mxu0 0.0
        %1394 = vmatprep.subr.mxu0 0.0
        %1395 = vmatpush2.msra.mxu0 0.0
        %1396 = vmatprep.subr.mxu0 0.0
        %1397 = vmatpush2.msra.mxu0 0.0
        %1398 = vmatprep.subr.mxu0 0.0
        %1399 = vmatpush2.msra.mxu0 0.0
        %1400 = vmatprep.subr.mxu0 0.0
        %1401 = vmatpush2.msra.mxu0 0.0
        %1402 = vmatprep.subr.mxu0 0.0
        %1403 = vmatpush2.msra.mxu0 0.0
        %1404 = vmatprep.subr.mxu0 0.0
        %1405 = vmatpush2.msra.mxu0 0.0
        %1406 = vmatprep.subr.mxu0 0.0
        %1407 = vmatpush2.msra.mxu0 0.0
        %1408 = vmatprep.subr.mxu0 0.0
        %1409 = vmatpush2.msra.mxu0 0.0
        %1410 = vmatprep.subr.mxu0 0.0
        %1411 = vmatpush2.msra.mxu0 0.0
        %1412 = vmatprep.subr.mxu0 0.0
        %1413 = vmatpush2.msra.mxu0 0.0
        %1414 = vmatprep.subr.mxu0 0.0
        %1415 = vmatpush2.msra.mxu0 0.0
        %1416 = vmatprep.subr.mxu0 0.0
        %1417 = vmatpush2.msra.mxu0 0.0
        %1418 = vmatprep.subr.mxu0 0.0
        %1419 = vmatpush2.msra.mxu0 0.0
        %1420 = vmatprep.subr.mxu0 0.0
        %1421 = vmatpush2.msra.mxu0 0.0
        %1422 = vmatprep.subr.mxu0 0.0
        %1423 = vmatpush2.msra.mxu0 0.0
        %1424 = vmatprep.mubr.f32.mxu0 0.0
        %1425 = vmatmul.mubr.f32.gmra.mxu0 %v1358
        %v1426 = vpop.f32.mrf.mxu0
        %v1427 = vadd.f32 0.0, %v1426
        %v1428 = vpop.f32.mrf.mxu0
        %1429 = vdwg.mxu0
        %v1430 = vadd.f32 %v1355, %v1427
        %vm1431 = vcmask 254976
        %1432 = vst.msk [vmem:[%s295] sm:$0x3] %vm1431, %v1430
      $region48: #{multi_scale_attention.11} parent=35 // pred_fallthru
        _
      %p1433 = scmp.lt.s32.totalorder %s20, 1
      %s1434 = scalar_select %p1433, %s20, 1
      %p1435 = scmp.lt.s32.totalorder %s21, 0
      %s1436 = scalar_select %p1435, %s21, 0
      %s1437 = sadd.s32 %s1436, %s1434
      %s1438 = smul.addr %s1437, 2
      %s1439 = scalar_lea.vmem %s4, %s1438
      // Predicated region
      $region49: #{multi_scale_attention.11} parent=35 // pred_check
        %p1440 = pneg %p159
      $region50: #{multi_scale_attention.11} parent=35 // pred_check_branch
        %1442 = sbr.rel (%p1440) target = $region52
      $region51: #{multi_scale_attention.11} parent=35 // pred_region
        _
      $region52: #{multi_scale_attention.11} parent=35 // pred_fallthru
        _
    $region36: #{multi_scale_attention.11} parent=5 // pred_fallthru
      _
    %p1443 = scmp.le.s32.totalorder 2, %s10
    // Predicated region
    $region53: #{multi_scale_attention.11} parent=5 // pred_check
      %p1444 = pneg %p1443
    $region54: #{multi_scale_attention.11} parent=5 // pred_check_branch
      %1446 = sbr.rel (%p1444) target = $region56
    $region55: #{multi_scale_attention.11} parent=5 // pred_region
      %s1447 = ssub.s32 %s10, 2
      // Predicated region
      $region57: #{multi_scale_attention.11} parent=55 // pred_check
        %p1448 = pneg %p165
      $region58: #{multi_scale_attention.11} parent=55 // pred_check_branch
        %1450 = sbr.rel (%p1448) target = $region60
      $region59: #{multi_scale_attention.11} parent=55 // pred_region
        %p1451 = scmp.lt.s32.totalorder %s23, 1
        %s1452 = scalar_select %p1451, %s23, 1
        %p1453 = scmp.lt.s32.totalorder %s24, 0
        %s1454 = scalar_select %p1453, %s24, 0
        %s1455 = sadd.s32 %s1454, %s1452
        %s1456 = smul.addr %s1455, 2
        %s1457 = scalar_lea.vmem %s4, %s1456
      $region60: #{multi_scale_attention.11} parent=55 // pred_fallthru
        _
    $region56: #{multi_scale_attention.11} parent=5 // pred_fallthru
      _
  $region6: #{multi_scale_attention.11} parent=0 // loop_footer
    %s14 = sadd.s32 1, %s10
  $region7: #{multi_scale_attention.11} parent=0 // loop_footer_branch
    %9 = sbr.rel target = $region3
  $region8: #{multi_scale_attention.11} parent=0 // loop_exit
    _

</llo_original>
